<compile_context>
chip_gen: v7x
topology: tpu7x:2x2x1
jax: 0.10.0
libtpu: 0.0.40
codegen_flags: <defaults>
</compile_context>

<pallas_src>
import jax
import jax.numpy as jnp
from jax.experimental import pallas as pl
from jax.experimental.pallas import tpu as pltpu

H = W = 32
CIN = 3
COUT = 16
NCLS = 10
HW = H * W                 # 1024 (lane axis)
KTAP = CIN * 9             # 27 conv taps, ordered (ci, ky, kx)
KPAD = 32                  # taps zero-padded to a multiple of 8 sublanes
FLAT = COUT * HW           # 16384
MAX_BB = 8                 # images per grid step


def make_fused_kernel(bb: int):
    def kernel(x_ref, wc_ref, bc_ref, wt_ref, bt_ref, o_ref, act_scr):
        # x_ref:  (bb, KPAD, HW)    im2col taps (zero-padded 27 -> 32)
        # wc_ref: (COUT, KPAD)      conv weight (zero-padded)
        # bc_ref: (COUT, 1)         conv bias
        # wt_ref: (NCLS, COUT, HW)  top weight, resident in VMEM (640 KB)
        # bt_ref: (1, NCLS)         top bias
        # o_ref:  (bb, NCLS)        logits
        # act_scr: VMEM (bb, COUT, HW) ReLU activations (never leave VMEM)

        # Conv + bias + ReLU: one lane-dense (COUT,KPAD)@(KPAD,HW) matmul/img.
        for b in range(bb):
            act_scr[b] = jnp.maximum(
                jnp.dot(wc_ref[...], x_ref[b],
                        preferred_element_type=jnp.float32) + bc_ref[...],
                0.0)

        # Fused Linear: logits[b,j] = sum_c sum_p act[b,c,p]*wt[j,c,p] + bt[j]
        # (contraction over p=HW on the MXU, 16 channel chunks, M = bb rows)
        acc = jnp.zeros((bb, NCLS), dtype=jnp.float32) + bt_ref[...]
        for c in range(COUT):
            acc = acc + jax.lax.dot_general(
                act_scr[:, c, :], wt_ref[:, c, :],
                dimension_numbers=(((1,), (1,)), ((), ())),
                preferred_element_type=jnp.float32)
        o_ref[...] = acc

    return kernel


def fused_forward(taps, wc, bc, wt, bt, bb):
    n_pad = taps.shape[0]
    return pl.pallas_call(
        make_fused_kernel(bb),
        out_shape=jax.ShapeDtypeStruct((n_pad, NCLS), jnp.float32),
        grid=(n_pad // bb,),
        in_specs=[
            pl.BlockSpec((bb, KPAD, HW), lambda i: (i, 0, 0)),
            pl.BlockSpec((COUT, KPAD), lambda i: (0, 0)),
            pl.BlockSpec((COUT, 1), lambda i: (0, 0)),
            pl.BlockSpec((NCLS, COUT, HW), lambda i: (0, 0, 0)),
            pl.BlockSpec((1, NCLS), lambda i: (0, 0)),
        ],
        out_specs=pl.BlockSpec((bb, NCLS), lambda i: (i, 0)),
        scratch_shapes=[pltpu.VMEM((bb, COUT, HW), jnp.float32)],
        compiler_params=pltpu.CompilerParams(
            dimension_semantics=("parallel",)),
    )(taps, wc, bc, wt, bt)


def shallow_cnn_forward(x_nchw, w_conv, b_conv, w_top, b_top):
    """x_nchw: (N, 3, 32, 32) float32. Returns (N, 10) float32."""
    n = x_nchw.shape[0]

    # --- glue: im2col -> (N, 27, HW) with HW on the lane axis ---
    x_pad = jnp.pad(x_nchw, ((0, 0), (0, 0), (1, 1), (1, 1)))    # (N,3,34,34)
    shifts = [x_pad[:, :, ky:ky + H, kx:kx + W]                  # (N,3,32,32)
              for ky in range(3) for kx in range(3)]
    taps = jnp.stack(shifts, axis=2)                             # (N,3,9,32,32)
    taps = taps.reshape(n, KTAP, HW)                # tap index = ci*9+ky*3+kx
    taps = jnp.pad(taps, ((0, 0), (0, KPAD - KTAP), (0, 0)))     # (N,32,HW)

    # batch blocking: bb images per grid step (pad N up to a multiple of bb)
    if n <= MAX_BB:
        bb, n_pad = n, n
    else:
        bb = MAX_BB
        n_pad = ((n + bb - 1) // bb) * bb
        taps = jnp.pad(taps, ((0, n_pad - n), (0, 0), (0, 0)))

    # --- weights in kernel-friendly layouts (reshape / zero-pad only) ---
    wc = jnp.pad(w_conv.reshape(COUT, KTAP), ((0, 0), (0, KPAD - KTAP)))
    bc = b_conv.reshape(COUT, 1)
    wt = w_top.reshape(NCLS, COUT, HW)   # matches PyTorch flatten order (c,h*w)
    bt = b_top.reshape(1, NCLS)

    out = fused_forward(taps, wc, bc, wt, bt, bb)
    return out[:n]
    # TODO(synk): taps could be built in-kernel from the padded image
    # (13.6 KB/img vs 108 KB/img HBM reads) with manual pl.ds slicing; kept as
    # XLA glue here for simplicity.


# ---------------- reference (plain JAX, full f32) for sanity check ----------

def reference_forward(x_nchw, w_conv, b_conv, w_top, b_top):
    y = jax.lax.conv_general_dilated(
        x_nchw, w_conv, window_strides=(1, 1), padding=((1, 1), (1, 1)),
        dimension_numbers=("NCHW", "OIHW", "NCHW"),
        precision=jax.lax.Precision.HIGHEST)
    y = jnp.maximum(y + b_conv[None, :, None, None], 0.0)
    y = y.reshape(y.shape[0], -1)                 # PyTorch flatten order
    return jnp.dot(y, w_top.T, precision=jax.lax.Precision.HIGHEST) + b_top


if __name__ == "__main__":
    N = 2
    key = jax.random.PRNGKey(0)
    kx_, kw1, kb1, kw2, kb2 = jax.random.split(key, 5)

    x = jax.random.normal(kx_, (N, CIN, H, W), dtype=jnp.float32)
    w_conv = 0.05 * jax.random.normal(kw1, (COUT, CIN, 3, 3), dtype=jnp.float32)
    b_conv = 0.05 * jax.random.normal(kb1, (COUT,), dtype=jnp.float32)
    w_top = 0.02 * jax.random.normal(kw2, (NCLS, FLAT), dtype=jnp.float32)
    b_top = 0.02 * jax.random.normal(kb2, (NCLS,), dtype=jnp.float32)

    total_params = w_conv.size + b_conv.size + w_top.size + b_top.size
    print(f"total params: {total_params}")

    out = jax.jit(shallow_cnn_forward)(x, w_conv, b_conv, w_top, b_top)
    out = jax.block_until_ready(out)
    assert out.shape == (N, NCLS)

    ref = reference_forward(x, w_conv, b_conv, w_top, b_top)
    max_diff = float(jnp.max(jnp.abs(out - ref)))
    assert jnp.allclose(out, ref, rtol=2e-4, atol=2e-4), (
        f"max abs diff {max_diff}")

    print("KERNEL_OK")
</pallas_src>

<mosaic_0001>
module attributes {stable_mosaic.version = 11 : i64} {
  func.func @kernel(%arg0: i32, %arg1: memref<2x32x1024xf32, #tpu.memory_space<vmem>>, %arg2: memref<16x32xf32, #tpu.memory_space<vmem>>, %arg3: memref<16x1xf32, #tpu.memory_space<vmem>>, %arg4: memref<10x16x1024xf32, #tpu.memory_space<vmem>>, %arg5: memref<1x10xf32, #tpu.memory_space<vmem>>, %arg6: memref<2x10xf32, #tpu.memory_space<vmem>>, %arg7: memref<2x16x1024xf32, #tpu.memory_space<vmem>>) attributes {dimension_semantics = [#tpu.dimension_semantics<parallel>], iteration_bounds = array<i64: 1>, scalar_prefetch = 0 : i64, scratch_operands = 1 : i64, tpu.core_type = #tpu.core_type<tc>, window_params = [{transform_indices = @transform_0, window_bounds = array<i64: 2, 32, 1024>}, {pipeline_mode = #tpu.pipeline_mode<synchronous>, transform_indices = @transform_1, window_bounds = array<i64: 16, 32>}, {pipeline_mode = #tpu.pipeline_mode<synchronous>, transform_indices = @transform_2, window_bounds = array<i64: 16, 1>}, {pipeline_mode = #tpu.pipeline_mode<synchronous>, transform_indices = @transform_3, window_bounds = array<i64: 10, 16, 1024>}, {pipeline_mode = #tpu.pipeline_mode<synchronous>, transform_indices = @transform_4, window_bounds = array<i64: 1, 10>}, {transform_indices = @transform_5, window_bounds = array<i64: 2, 10>}]} {
    %c0 = arith.constant 0 : index
    %c0_0 = arith.constant 0 : index
    %0 = vector.load %arg2[%c0, %c0_0] : memref<16x32xf32, #tpu.memory_space<vmem>>, vector<16x32xf32>
    %c0_1 = arith.constant 0 : index
    %c0_2 = arith.constant 0 : index
    %c0_3 = arith.constant 0 : index
    %1 = vector.load %arg1[%c0_1, %c0_2, %c0_3] : memref<2x32x1024xf32, #tpu.memory_space<vmem>>, vector<1x32x1024xf32>
    %2 = vector.shape_cast %1 : vector<1x32x1024xf32> to vector<32x1024xf32>
    %cst = arith.constant dense<0.000000e+00> : vector<16x1024xf32>
    %3 = tpu.matmul %0, %2, %cst {dimension_numbers = #tpu.dot_dimension_numbers<[1], [0], [0], [1], [0, 0, 1, 1], [], []>} : vector<16x32xf32>, vector<32x1024xf32>, vector<16x1024xf32> -> vector<16x1024xf32>
    %c0_4 = arith.constant 0 : index
    %c0_5 = arith.constant 0 : index
    %4 = vector.load %arg3[%c0_4, %c0_5] : memref<16x1xf32, #tpu.memory_space<vmem>>, vector<16x1xf32>
    %5 = vector.broadcast %4 : vector<16x1xf32> to vector<16x1024xf32>
    %6 = arith.addf %3, %5 : vector<16x1024xf32>
    %cst_6 = arith.constant 0.000000e+00 : f32
    %7 = vector.broadcast %cst_6 : f32 to vector<16x1024xf32>
    %8 = arith.maximumf %6, %7 : vector<16x1024xf32>
    %c0_7 = arith.constant 0 : index
    %c0_8 = arith.constant 0 : index
    %c0_9 = arith.constant 0 : index
    %9 = vector.load %arg7[%c0_7, %c0_8, %c0_9] : memref<2x16x1024xf32, #tpu.memory_space<vmem>>, vector<1x16x1024xf32>
    %10 = vector.shape_cast %9 : vector<1x16x1024xf32> to vector<16x1024xf32>
    %11 = vector.shape_cast %8 : vector<16x1024xf32> to vector<1x16x1024xf32>
    tpu.vector_store %arg7[%c0_7, %c0_8, %c0_9], %11 {strides = array<i32>} : memref<2x16x1024xf32, #tpu.memory_space<vmem>>, vector<1x16x1024xf32>,
    %c0_10 = arith.constant 0 : index
    %c0_11 = arith.constant 0 : index
    %12 = vector.load %arg2[%c0_10, %c0_11] : memref<16x32xf32, #tpu.memory_space<vmem>>, vector<16x32xf32>
    %c1 = arith.constant 1 : index
    %c0_12 = arith.constant 0 : index
    %c0_13 = arith.constant 0 : index
    %13 = vector.load %arg1[%c1, %c0_12, %c0_13] : memref<2x32x1024xf32, #tpu.memory_space<vmem>>, vector<1x32x1024xf32>
    %14 = vector.shape_cast %13 : vector<1x32x1024xf32> to vector<32x1024xf32>
    %cst_14 = arith.constant dense<0.000000e+00> : vector<16x1024xf32>
    %15 = tpu.matmul %12, %14, %cst_14 {dimension_numbers = #tpu.dot_dimension_numbers<[1], [0], [0], [1], [0, 0, 1, 1], [], []>} : vector<16x32xf32>, vector<32x1024xf32>, vector<16x1024xf32> -> vector<16x1024xf32>
    %c0_15 = arith.constant 0 : index
    %c0_16 = arith.constant 0 : index
    %16 = vector.load %arg3[%c0_15, %c0_16] : memref<16x1xf32, #tpu.memory_space<vmem>>, vector<16x1xf32>
    %17 = vector.broadcast %16 : vector<16x1xf32> to vector<16x1024xf32>
    %18 = arith.addf %15, %17 : vector<16x1024xf32>
    %cst_17 = arith.constant 0.000000e+00 : f32
    %19 = vector.broadcast %cst_17 : f32 to vector<16x1024xf32>
    %20 = arith.maximumf %18, %19 : vector<16x1024xf32>
    %c1_18 = arith.constant 1 : index
    %c0_19 = arith.constant 0 : index
    %c0_20 = arith.constant 0 : index
    %21 = vector.load %arg7[%c1_18, %c0_19, %c0_20] : memref<2x16x1024xf32, #tpu.memory_space<vmem>>, vector<1x16x1024xf32>
    %22 = vector.shape_cast %21 : vector<1x16x1024xf32> to vector<16x1024xf32>
    %23 = vector.shape_cast %20 : vector<16x1024xf32> to vector<1x16x1024xf32>
    tpu.vector_store %arg7[%c1_18, %c0_19, %c0_20], %23 {strides = array<i32>} : memref<2x16x1024xf32, #tpu.memory_space<vmem>>, vector<1x16x1024xf32>,
    %cst_21 = arith.constant 0.000000e+00 : f32
    %24 = vector.broadcast %cst_21 : f32 to vector<2x10xf32>
    %c0_22 = arith.constant 0 : index
    %c0_23 = arith.constant 0 : index
    %25 = vector.load %arg5[%c0_22, %c0_23] : memref<1x10xf32, #tpu.memory_space<vmem>>, vector<1x10xf32>
    %26 = vector.broadcast %25 : vector<1x10xf32> to vector<2x10xf32>
    %27 = arith.addf %24, %26 : vector<2x10xf32>
    %c0_24 = arith.constant 0 : index
    %c0_25 = arith.constant 0 : index
    %c0_26 = arith.constant 0 : index
    %28 = vector.load %arg7[%c0_24, %c0_25, %c0_26] : memref<2x16x1024xf32, #tpu.memory_space<vmem>>, vector<2x1x1024xf32>
    %29 = vector.shape_cast %28 : vector<2x1x1024xf32> to vector<2x1024xf32>
    %c0_27 = arith.constant 0 : index
    %c0_28 = arith.constant 0 : index
    %c0_29 = arith.constant 0 : index
    %30 = vector.load %arg4[%c0_27, %c0_28, %c0_29] : memref<10x16x1024xf32, #tpu.memory_space<vmem>>, vector<10x1x1024xf32>
    %31 = vector.shape_cast %30 : vector<10x1x1024xf32> to vector<10x1024xf32>
    %cst_30 = arith.constant dense<0.000000e+00> : vector<2x10xf32>
    %32 = tpu.matmul %29, %31, %cst_30 {dimension_numbers = #tpu.dot_dimension_numbers<[1], [1], [0], [0], [0, 0, 1, 0], [], []>} : vector<2x1024xf32>, vector<10x1024xf32>, vector<2x10xf32> -> vector<2x10xf32>
    %33 = arith.addf %27, %32 : vector<2x10xf32>
    %c0_31 = arith.constant 0 : index
    %c1_32 = arith.constant 1 : index
    %c0_33 = arith.constant 0 : index
    %34 = vector.load %arg7[%c0_31, %c1_32, %c0_33] : memref<2x16x1024xf32, #tpu.memory_space<vmem>>, vector<2x1x1024xf32>
    %35 = vector.shape_cast %34 : vector<2x1x1024xf32> to vector<2x1024xf32>
    %c0_34 = arith.constant 0 : index
    %c1_35 = arith.constant 1 : index
    %c0_36 = arith.constant 0 : index
    %36 = vector.load %arg4[%c0_34, %c1_35, %c0_36] : memref<10x16x1024xf32, #tpu.memory_space<vmem>>, vector<10x1x1024xf32>
    %37 = vector.shape_cast %36 : vector<10x1x1024xf32> to vector<10x1024xf32>
    %cst_37 = arith.constant dense<0.000000e+00> : vector<2x10xf32>
    %38 = tpu.matmul %35, %37, %cst_37 {dimension_numbers = #tpu.dot_dimension_numbers<[1], [1], [0], [0], [0, 0, 1, 0], [], []>} : vector<2x1024xf32>, vector<10x1024xf32>, vector<2x10xf32> -> vector<2x10xf32>
    %39 = arith.addf %33, %38 : vector<2x10xf32>
    %c0_38 = arith.constant 0 : index
    %c2 = arith.constant 2 : index
    %c0_39 = arith.constant 0 : index
    %40 = vector.load %arg7[%c0_38, %c2, %c0_39] : memref<2x16x1024xf32, #tpu.memory_space<vmem>>, vector<2x1x1024xf32>
    %41 = vector.shape_cast %40 : vector<2x1x1024xf32> to vector<2x1024xf32>
    %c0_40 = arith.constant 0 : index
    %c2_41 = arith.constant 2 : index
    %c0_42 = arith.constant 0 : index
    %42 = vector.load %arg4[%c0_40, %c2_41, %c0_42] : memref<10x16x1024xf32, #tpu.memory_space<vmem>>, vector<10x1x1024xf32>
    %43 = vector.shape_cast %42 : vector<10x1x1024xf32> to vector<10x1024xf32>
    %cst_43 = arith.constant dense<0.000000e+00> : vector<2x10xf32>
    %44 = tpu.matmul %41, %43, %cst_43 {dimension_numbers = #tpu.dot_dimension_numbers<[1], [1], [0], [0], [0, 0, 1, 0], [], []>} : vector<2x1024xf32>, vector<10x1024xf32>, vector<2x10xf32> -> vector<2x10xf32>
    %45 = arith.addf %39, %44 : vector<2x10xf32>
    %c0_44 = arith.constant 0 : index
    %c3 = arith.constant 3 : index
    %c0_45 = arith.constant 0 : index
    %46 = vector.load %arg7[%c0_44, %c3, %c0_45] : memref<2x16x1024xf32, #tpu.memory_space<vmem>>, vector<2x1x1024xf32>
    %47 = vector.shape_cast %46 : vector<2x1x1024xf32> to vector<2x1024xf32>
    %c0_46 = arith.constant 0 : index
    %c3_47 = arith.constant 3 : index
    %c0_48 = arith.constant 0 : index
    %48 = vector.load %arg4[%c0_46, %c3_47, %c0_48] : memref<10x16x1024xf32, #tpu.memory_space<vmem>>, vector<10x1x1024xf32>
    %49 = vector.shape_cast %48 : vector<10x1x1024xf32> to vector<10x1024xf32>
    %cst_49 = arith.constant dense<0.000000e+00> : vector<2x10xf32>
    %50 = tpu.matmul %47, %49, %cst_49 {dimension_numbers = #tpu.dot_dimension_numbers<[1], [1], [0], [0], [0, 0, 1, 0], [], []>} : vector<2x1024xf32>, vector<10x1024xf32>, vector<2x10xf32> -> vector<2x10xf32>
    %51 = arith.addf %45, %50 : vector<2x10xf32>
    %c0_50 = arith.constant 0 : index
    %c4 = arith.constant 4 : index
    %c0_51 = arith.constant 0 : index
    %52 = vector.load %arg7[%c0_50, %c4, %c0_51] : memref<2x16x1024xf32, #tpu.memory_space<vmem>>, vector<2x1x1024xf32>
    %53 = vector.shape_cast %52 : vector<2x1x1024xf32> to vector<2x1024xf32>
    %c0_52 = arith.constant 0 : index
    %c4_53 = arith.constant 4 : index
    %c0_54 = arith.constant 0 : index
    %54 = vector.load %arg4[%c0_52, %c4_53, %c0_54] : memref<10x16x1024xf32, #tpu.memory_space<vmem>>, vector<10x1x1024xf32>
    %55 = vector.shape_cast %54 : vector<10x1x1024xf32> to vector<10x1024xf32>
    %cst_55 = arith.constant dense<0.000000e+00> : vector<2x10xf32>
    %56 = tpu.matmul %53, %55, %cst_55 {dimension_numbers = #tpu.dot_dimension_numbers<[1], [1], [0], [0], [0, 0, 1, 0], [], []>} : vector<2x1024xf32>, vector<10x1024xf32>, vector<2x10xf32> -> vector<2x10xf32>
    %57 = arith.addf %51, %56 : vector<2x10xf32>
    %c0_56 = arith.constant 0 : index
    %c5 = arith.constant 5 : index
    %c0_57 = arith.constant 0 : index
    %58 = vector.load %arg7[%c0_56, %c5, %c0_57] : memref<2x16x1024xf32, #tpu.memory_space<vmem>>, vector<2x1x1024xf32>
    %59 = vector.shape_cast %58 : vector<2x1x1024xf32> to vector<2x1024xf32>
    %c0_58 = arith.constant 0 : index
    %c5_59 = arith.constant 5 : index
    %c0_60 = arith.constant 0 : index
    %60 = vector.load %arg4[%c0_58, %c5_59, %c0_60] : memref<10x16x1024xf32, #tpu.memory_space<vmem>>, vector<10x1x1024xf32>
    %61 = vector.shape_cast %60 : vector<10x1x1024xf32> to vector<10x1024xf32>
    %cst_61 = arith.constant dense<0.000000e+00> : vector<2x10xf32>
    %62 = tpu.matmul %59, %61, %cst_61 {dimension_numbers = #tpu.dot_dimension_numbers<[1], [1], [0], [0], [0, 0, 1, 0], [], []>} : vector<2x1024xf32>, vector<10x1024xf32>, vector<2x10xf32> -> vector<2x10xf32>
    %63 = arith.addf %57, %62 : vector<2x10xf32>
    %c0_62 = arith.constant 0 : index
    %c6 = arith.constant 6 : index
    %c0_63 = arith.constant 0 : index
    %64 = vector.load %arg7[%c0_62, %c6, %c0_63] : memref<2x16x1024xf32, #tpu.memory_space<vmem>>, vector<2x1x1024xf32>
    %65 = vector.shape_cast %64 : vector<2x1x1024xf32> to vector<2x1024xf32>
    %c0_64 = arith.constant 0 : index
    %c6_65 = arith.constant 6 : index
    %c0_66 = arith.constant 0 : index
    %66 = vector.load %arg4[%c0_64, %c6_65, %c0_66] : memref<10x16x1024xf32, #tpu.memory_space<vmem>>, vector<10x1x1024xf32>
    %67 = vector.shape_cast %66 : vector<10x1x1024xf32> to vector<10x1024xf32>
    %cst_67 = arith.constant dense<0.000000e+00> : vector<2x10xf32>
    %68 = tpu.matmul %65, %67, %cst_67 {dimension_numbers = #tpu.dot_dimension_numbers<[1], [1], [0], [0], [0, 0, 1, 0], [], []>} : vector<2x1024xf32>, vector<10x1024xf32>, vector<2x10xf32> -> vector<2x10xf32>
    %69 = arith.addf %63, %68 : vector<2x10xf32>
    %c0_68 = arith.constant 0 : index
    %c7 = arith.constant 7 : index
    %c0_69 = arith.constant 0 : index
    %70 = vector.load %arg7[%c0_68, %c7, %c0_69] : memref<2x16x1024xf32, #tpu.memory_space<vmem>>, vector<2x1x1024xf32>
    %71 = vector.shape_cast %70 : vector<2x1x1024xf32> to vector<2x1024xf32>
    %c0_70 = arith.constant 0 : index
    %c7_71 = arith.constant 7 : index
    %c0_72 = arith.constant 0 : index
    %72 = vector.load %arg4[%c0_70, %c7_71, %c0_72] : memref<10x16x1024xf32, #tpu.memory_space<vmem>>, vector<10x1x1024xf32>
    %73 = vector.shape_cast %72 : vector<10x1x1024xf32> to vector<10x1024xf32>
    %cst_73 = arith.constant dense<0.000000e+00> : vector<2x10xf32>
    %74 = tpu.matmul %71, %73, %cst_73 {dimension_numbers = #tpu.dot_dimension_numbers<[1], [1], [0], [0], [0, 0, 1, 0], [], []>} : vector<2x1024xf32>, vector<10x1024xf32>, vector<2x10xf32> -> vector<2x10xf32>
    %75 = arith.addf %69, %74 : vector<2x10xf32>
    %c0_74 = arith.constant 0 : index
    %c8 = arith.constant 8 : index
    %c0_75 = arith.constant 0 : index
    %76 = vector.load %arg7[%c0_74, %c8, %c0_75] : memref<2x16x1024xf32, #tpu.memory_space<vmem>>, vector<2x1x1024xf32>
    %77 = vector.shape_cast %76 : vector<2x1x1024xf32> to vector<2x1024xf32>
    %c0_76 = arith.constant 0 : index
    %c8_77 = arith.constant 8 : index
    %c0_78 = arith.constant 0 : index
    %78 = vector.load %arg4[%c0_76, %c8_77, %c0_78] : memref<10x16x1024xf32, #tpu.memory_space<vmem>>, vector<10x1x1024xf32>
    %79 = vector.shape_cast %78 : vector<10x1x1024xf32> to vector<10x1024xf32>
    %cst_79 = arith.constant dense<0.000000e+00> : vector<2x10xf32>
    %80 = tpu.matmul %77, %79, %cst_79 {dimension_numbers = #tpu.dot_dimension_numbers<[1], [1], [0], [0], [0, 0, 1, 0], [], []>} : vector<2x1024xf32>, vector<10x1024xf32>, vector<2x10xf32> -> vector<2x10xf32>
    %81 = arith.addf %75, %80 : vector<2x10xf32>
    %c0_80 = arith.constant 0 : index
    %c9 = arith.constant 9 : index
    %c0_81 = arith.constant 0 : index
    %82 = vector.load %arg7[%c0_80, %c9, %c0_81] : memref<2x16x1024xf32, #tpu.memory_space<vmem>>, vector<2x1x1024xf32>
    %83 = vector.shape_cast %82 : vector<2x1x1024xf32> to vector<2x1024xf32>
    %c0_82 = arith.constant 0 : index
    %c9_83 = arith.constant 9 : index
    %c0_84 = arith.constant 0 : index
    %84 = vector.load %arg4[%c0_82, %c9_83, %c0_84] : memref<10x16x1024xf32, #tpu.memory_space<vmem>>, vector<10x1x1024xf32>
    %85 = vector.shape_cast %84 : vector<10x1x1024xf32> to vector<10x1024xf32>
    %cst_85 = arith.constant dense<0.000000e+00> : vector<2x10xf32>
    %86 = tpu.matmul %83, %85, %cst_85 {dimension_numbers = #tpu.dot_dimension_numbers<[1], [1], [0], [0], [0, 0, 1, 0], [], []>} : vector<2x1024xf32>, vector<10x1024xf32>, vector<2x10xf32> -> vector<2x10xf32>
    %87 = arith.addf %81, %86 : vector<2x10xf32>
    %c0_86 = arith.constant 0 : index
    %c10 = arith.constant 10 : index
    %c0_87 = arith.constant 0 : index
    %88 = vector.load %arg7[%c0_86, %c10, %c0_87] : memref<2x16x1024xf32, #tpu.memory_space<vmem>>, vector<2x1x1024xf32>
    %89 = vector.shape_cast %88 : vector<2x1x1024xf32> to vector<2x1024xf32>
    %c0_88 = arith.constant 0 : index
    %c10_89 = arith.constant 10 : index
    %c0_90 = arith.constant 0 : index
    %90 = vector.load %arg4[%c0_88, %c10_89, %c0_90] : memref<10x16x1024xf32, #tpu.memory_space<vmem>>, vector<10x1x1024xf32>
    %91 = vector.shape_cast %90 : vector<10x1x1024xf32> to vector<10x1024xf32>
    %cst_91 = arith.constant dense<0.000000e+00> : vector<2x10xf32>
    %92 = tpu.matmul %89, %91, %cst_91 {dimension_numbers = #tpu.dot_dimension_numbers<[1], [1], [0], [0], [0, 0, 1, 0], [], []>} : vector<2x1024xf32>, vector<10x1024xf32>, vector<2x10xf32> -> vector<2x10xf32>
    %93 = arith.addf %87, %92 : vector<2x10xf32>
    %c0_92 = arith.constant 0 : index
    %c11 = arith.constant 11 : index
    %c0_93 = arith.constant 0 : index
    %94 = vector.load %arg7[%c0_92, %c11, %c0_93] : memref<2x16x1024xf32, #tpu.memory_space<vmem>>, vector<2x1x1024xf32>
    %95 = vector.shape_cast %94 : vector<2x1x1024xf32> to vector<2x1024xf32>
    %c0_94 = arith.constant 0 : index
    %c11_95 = arith.constant 11 : index
    %c0_96 = arith.constant 0 : index
    %96 = vector.load %arg4[%c0_94, %c11_95, %c0_96] : memref<10x16x1024xf32, #tpu.memory_space<vmem>>, vector<10x1x1024xf32>
    %97 = vector.shape_cast %96 : vector<10x1x1024xf32> to vector<10x1024xf32>
    %cst_97 = arith.constant dense<0.000000e+00> : vector<2x10xf32>
    %98 = tpu.matmul %95, %97, %cst_97 {dimension_numbers = #tpu.dot_dimension_numbers<[1], [1], [0], [0], [0, 0, 1, 0], [], []>} : vector<2x1024xf32>, vector<10x1024xf32>, vector<2x10xf32> -> vector<2x10xf32>
    %99 = arith.addf %93, %98 : vector<2x10xf32>
    %c0_98 = arith.constant 0 : index
    %c12 = arith.constant 12 : index
    %c0_99 = arith.constant 0 : index
    %100 = vector.load %arg7[%c0_98, %c12, %c0_99] : memref<2x16x1024xf32, #tpu.memory_space<vmem>>, vector<2x1x1024xf32>
    %101 = vector.shape_cast %100 : vector<2x1x1024xf32> to vector<2x1024xf32>
    %c0_100 = arith.constant 0 : index
    %c12_101 = arith.constant 12 : index
    %c0_102 = arith.constant 0 : index
    %102 = vector.load %arg4[%c0_100, %c12_101, %c0_102] : memref<10x16x1024xf32, #tpu.memory_space<vmem>>, vector<10x1x1024xf32>
    %103 = vector.shape_cast %102 : vector<10x1x1024xf32> to vector<10x1024xf32>
    %cst_103 = arith.constant dense<0.000000e+00> : vector<2x10xf32>
    %104 = tpu.matmul %101, %103, %cst_103 {dimension_numbers = #tpu.dot_dimension_numbers<[1], [1], [0], [0], [0, 0, 1, 0], [], []>} : vector<2x1024xf32>, vector<10x1024xf32>, vector<2x10xf32> -> vector<2x10xf32>
    %105 = arith.addf %99, %104 : vector<2x10xf32>
    %c0_104 = arith.constant 0 : index
    %c13 = arith.constant 13 : index
    %c0_105 = arith.constant 0 : index
    %106 = vector.load %arg7[%c0_104, %c13, %c0_105] : memref<2x16x1024xf32, #tpu.memory_space<vmem>>, vector<2x1x1024xf32>
    %107 = vector.shape_cast %106 : vector<2x1x1024xf32> to vector<2x1024xf32>
    %c0_106 = arith.constant 0 : index
    %c13_107 = arith.constant 13 : index
    %c0_108 = arith.constant 0 : index
    %108 = vector.load %arg4[%c0_106, %c13_107, %c0_108] : memref<10x16x1024xf32, #tpu.memory_space<vmem>>, vector<10x1x1024xf32>
    %109 = vector.shape_cast %108 : vector<10x1x1024xf32> to vector<10x1024xf32>
    %cst_109 = arith.constant dense<0.000000e+00> : vector<2x10xf32>
    %110 = tpu.matmul %107, %109, %cst_109 {dimension_numbers = #tpu.dot_dimension_numbers<[1], [1], [0], [0], [0, 0, 1, 0], [], []>} : vector<2x1024xf32>, vector<10x1024xf32>, vector<2x10xf32> -> vector<2x10xf32>
    %111 = arith.addf %105, %110 : vector<2x10xf32>
    %c0_110 = arith.constant 0 : index
    %c14 = arith.constant 14 : index
    %c0_111 = arith.constant 0 : index
    %112 = vector.load %arg7[%c0_110, %c14, %c0_111] : memref<2x16x1024xf32, #tpu.memory_space<vmem>>, vector<2x1x1024xf32>
    %113 = vector.shape_cast %112 : vector<2x1x1024xf32> to vector<2x1024xf32>
    %c0_112 = arith.constant 0 : index
    %c14_113 = arith.constant 14 : index
    %c0_114 = arith.constant 0 : index
    %114 = vector.load %arg4[%c0_112, %c14_113, %c0_114] : memref<10x16x1024xf32, #tpu.memory_space<vmem>>, vector<10x1x1024xf32>
    %115 = vector.shape_cast %114 : vector<10x1x1024xf32> to vector<10x1024xf32>
    %cst_115 = arith.constant dense<0.000000e+00> : vector<2x10xf32>
    %116 = tpu.matmul %113, %115, %cst_115 {dimension_numbers = #tpu.dot_dimension_numbers<[1], [1], [0], [0], [0, 0, 1, 0], [], []>} : vector<2x1024xf32>, vector<10x1024xf32>, vector<2x10xf32> -> vector<2x10xf32>
    %117 = arith.addf %111, %116 : vector<2x10xf32>
    %c0_116 = arith.constant 0 : index
    %c15 = arith.constant 15 : index
    %c0_117 = arith.constant 0 : index
    %118 = vector.load %arg7[%c0_116, %c15, %c0_117] : memref<2x16x1024xf32, #tpu.memory_space<vmem>>, vector<2x1x1024xf32>
    %119 = vector.shape_cast %118 : vector<2x1x1024xf32> to vector<2x1024xf32>
    %c0_118 = arith.constant 0 : index
    %c15_119 = arith.constant 15 : index
    %c0_120 = arith.constant 0 : index
    %120 = vector.load %arg4[%c0_118, %c15_119, %c0_120] : memref<10x16x1024xf32, #tpu.memory_space<vmem>>, vector<10x1x1024xf32>
    %121 = vector.shape_cast %120 : vector<10x1x1024xf32> to vector<10x1024xf32>
    %cst_121 = arith.constant dense<0.000000e+00> : vector<2x10xf32>
    %122 = tpu.matmul %119, %121, %cst_121 {dimension_numbers = #tpu.dot_dimension_numbers<[1], [1], [0], [0], [0, 0, 1, 0], [], []>} : vector<2x1024xf32>, vector<10x1024xf32>, vector<2x10xf32> -> vector<2x10xf32>
    %123 = arith.addf %117, %122 : vector<2x10xf32>
    %c0_122 = arith.constant 0 : index
    %c0_123 = arith.constant 0 : index
    %124 = vector.load %arg6[%c0_122, %c0_123] : memref<2x10xf32, #tpu.memory_space<vmem>>, vector<2x10xf32>
    tpu.vector_store %arg6[%c0_122, %c0_123], %123 {strides = array<i32>} : memref<2x10xf32, #tpu.memory_space<vmem>>, vector<2x10xf32>,
    return
  }
  func.func @transform_0(%arg0: i32) -> (i32, i32, i32) {
    %c0_i32 = arith.constant 0 : i32
    %c0_i32_0 = arith.constant 0 : i32
    %c0_i32_1 = arith.constant 0 : i32
    return %arg0, %c0_i32, %c0_i32_0 : i32, i32, i32
  }
  func.func @transform_1(%arg0: i32) -> (i32, i32) {
    %c0_i32 = arith.constant 0 : i32
    %c0_i32_0 = arith.constant 0 : i32
    %c0_i32_1 = arith.constant 0 : i32
    return %c0_i32, %c0_i32_0 : i32, i32
  }
  func.func @transform_2(%arg0: i32) -> (i32, i32) {
    %c0_i32 = arith.constant 0 : i32
    %c0_i32_0 = arith.constant 0 : i32
    %c0_i32_1 = arith.constant 0 : i32
    return %c0_i32, %c0_i32_0 : i32, i32
  }
  func.func @transform_3(%arg0: i32) -> (i32, i32, i32) {
    %c0_i32 = arith.constant 0 : i32
    %c0_i32_0 = arith.constant 0 : i32
    %c0_i32_1 = arith.constant 0 : i32
    %c0_i32_2 = arith.constant 0 : i32
    return %c0_i32, %c0_i32_0, %c0_i32_1 : i32, i32, i32
  }
  func.func @transform_4(%arg0: i32) -> (i32, i32) {
    %c0_i32 = arith.constant 0 : i32
    %c0_i32_0 = arith.constant 0 : i32
    %c0_i32_1 = arith.constant 0 : i32
    return %c0_i32, %c0_i32_0 : i32, i32
  }
  func.func @transform_5(%arg0: i32) -> (i32, i32) {
    %c0_i32 = arith.constant 0 : i32
    %c0_i32_0 = arith.constant 0 : i32
    return %arg0, %c0_i32 : i32, i32
  }
}

</mosaic_0001>

<llo_original>
// kernel: shallow_cnn_forward.1
$region0: #{shallow_cnn_forward.1}
  #allocation0 [shape = 'u32[]', space=smem, size = 0x4, offset = 0x4, fixed_abs, tag = 'smem constant byte address 0x4 - core index']
  #allocation1 [shape = 'u32[144,128]{1,0:T(1,128)}', space=vmem, size = 0x12000, scoped, tag = 'internal scratch']
  #allocation2 [shape = 'f32[2,16,1024]{2,1,0:T(8,128)}', space=vmem, size = 0x20000, scoped, tag = 'scratch operand']
  %s0 = inlined_call_operand.vmem [shape: f32[2,32,1024], index: 0, kind: input, shape index: {}]
  %s1 = inlined_call_operand.vmem [shape: f32[16,32], index: 1, kind: input, shape index: {}]
  %s2 = inlined_call_operand.vmem [shape: f32[16,1], index: 2, kind: input, shape index: {}]
  %s3 = inlined_call_operand.vmem [shape: f32[10,16,1024], index: 3, kind: input, shape index: {}]
  %s4 = inlined_call_operand.vmem [shape: f32[1,10], index: 4, kind: input, shape index: {}]
  %s5 = inlined_call_operand.hbm [shape: f32[2,10], index: 5, kind: output, shape index: {}]
  %s6 = sld [smem:[#allocation0]]
  $region30: #{shallow_cnn_forward.1} parent=0
    _
  %s8 = ssub.s32 1, %s6
  %s9 = scalar_select 0, %s8, %s6
  $region1: #{shallow_cnn_forward.1} parent=0
    #allocation3 [shape = 'u8[1024]{0}', space=vmem, size = 0x400, scoped, tag = 'output window, operand 0, single buffered']
    #allocation4 [shape = 's32[1]{0}', space=sflag, size = 0x4, scoped, tag = 'scoped memory for shallow_cnn_forward.1']
    %10 = vsyncpa [#allocation4], 0
    // Predicated region
    $region2: #{shallow_cnn_forward.1} parent=1 // pred_check
      _
    $region3: #{shallow_cnn_forward.1} parent=1 // pred_check_branch
      %12 = sbr.rel (0) target = $region5
    $region4: #{shallow_cnn_forward.1} parent=1 // pred_region
      _
    $region5: #{shallow_cnn_forward.1} parent=1 // pred_fallthru
      _
    // Predicated region
    $region6: #{shallow_cnn_forward.1} parent=1 // pred_check
      _
    $region7: #{shallow_cnn_forward.1} parent=1 // pred_check_branch
      %14 = sbr.rel (0) target = $region9
    $region8: #{shallow_cnn_forward.1} parent=1 // pred_region
      _
    $region9: #{shallow_cnn_forward.1} parent=1 // pred_fallthru
      _
    // Predicated region
    $region10: #{shallow_cnn_forward.1} parent=1 // pred_check
      _
    $region11: #{shallow_cnn_forward.1} parent=1 // pred_check_branch
      %16 = sbr.rel (0) target = $region13
    $region12: #{shallow_cnn_forward.1} parent=1 // pred_region
      _
    $region13: #{shallow_cnn_forward.1} parent=1 // pred_fallthru
      _
    // Predicated region
    $region14: #{shallow_cnn_forward.1} parent=1 // pred_check
      _
    $region15: #{shallow_cnn_forward.1} parent=1 // pred_check_branch
      %18 = sbr.rel (0) target = $region17
    $region16: #{shallow_cnn_forward.1} parent=1 // pred_region
      _
    $region17: #{shallow_cnn_forward.1} parent=1 // pred_fallthru
      _
    // Predicated region
    $region18: #{shallow_cnn_forward.1} parent=1 // pred_check
      _
    $region19: #{shallow_cnn_forward.1} parent=1 // pred_check_branch
      %20 = sbr.rel (0) target = $region21
    $region20: #{shallow_cnn_forward.1} parent=1 // pred_region
      _
    $region21: #{shallow_cnn_forward.1} parent=1 // pred_fallthru
      _
    %v21 = vld [vmem:[%s1] sm:$0xff]
    %v22 = vld [vmem:[%s1 + $0x8] sm:$0xff]
    %v23 = vld [vmem:[%s0] sm:$0xff]
    %v24 = vld [vmem:[%s0 + $0x8] sm:$0xff]
    %v25 = vld [vmem:[%s0 + $0x10] sm:$0xff]
    %v26 = vld [vmem:[%s0 + $0x18] sm:$0xff]
    %v27 = vld [vmem:[%s0 + $0x20] sm:$0xff]
    %v28 = vld [vmem:[%s0 + $0x28] sm:$0xff]
    %v29 = vld [vmem:[%s0 + $0x30] sm:$0xff]
    %v30 = vld [vmem:[%s0 + $0x38] sm:$0xff]
    %v31 = vld [vmem:[%s0 + $0x40] sm:$0xff]
    %v32 = vld [vmem:[%s0 + $0x48] sm:$0xff]
    %v33 = vld [vmem:[%s0 + $0x50] sm:$0xff]
    %v34 = vld [vmem:[%s0 + $0x58] sm:$0xff]
    %v35 = vld [vmem:[%s0 + $0x60] sm:$0xff]
    %v36 = vld [vmem:[%s0 + $0x68] sm:$0xff]
    %v37 = vld [vmem:[%s0 + $0x70] sm:$0xff]
    %v38 = vld [vmem:[%s0 + $0x78] sm:$0xff]
    %v39 = vld [vmem:[%s0 + $0x80] sm:$0xff]
    %v40 = vld [vmem:[%s0 + $0x88] sm:$0xff]
    %v41 = vld [vmem:[%s0 + $0x90] sm:$0xff]
    %v42 = vld [vmem:[%s0 + $0x98] sm:$0xff]
    %v43 = vld [vmem:[%s0 + $0xa0] sm:$0xff]
    %v44 = vld [vmem:[%s0 + $0xa8] sm:$0xff]
    %v45 = vld [vmem:[%s0 + $0xb0] sm:$0xff]
    %v46 = vld [vmem:[%s0 + $0xb8] sm:$0xff]
    %v47 = vld [vmem:[%s0 + $0xc0] sm:$0xff]
    %v48 = vld [vmem:[%s0 + $0xc8] sm:$0xff]
    %v49 = vld [vmem:[%s0 + $0xd0] sm:$0xff]
    %v50 = vld [vmem:[%s0 + $0xd8] sm:$0xff]
    %v51 = vld [vmem:[%s0 + $0xe0] sm:$0xff]
    %v52 = vld [vmem:[%s0 + $0xe8] sm:$0xff]
    %v53 = vld [vmem:[%s0 + $0xf0] sm:$0xff]
    %v54 = vld [vmem:[%s0 + $0xf8] sm:$0xff]
    %v55 = vld [vmem:[%s2] sm:$0xff]
    %v56 = vld [vmem:[%s2 + $0x8] sm:$0xff]
    %58 = vset.pattern.permute.xlu0 0
    %59 = vperm.xlu0 %58, %v55
    %v60 = vpop.permute.xlu0 %59
    %63 = vset.pattern.permute.xlu0 0
    %64 = vperm.xlu0 %63, %v56
    %v65 = vpop.permute.xlu0 %64
    %vm67 = vcmask 261120
    %v69 = vsel %vm67, %v21, 0
    %v72 = vsel %vm67, %v22, 0
    %74 = vmatprep.subr.mxu0 %v24
    %75 = vmatpush1.msra.mxu0 %v23
    %76 = vmatprep.subr.mxu0 %v32
    %77 = vmatpush1.msra.mxu0 %v31
    %78 = vmatprep.subr.mxu0 %v40
    %79 = vmatpush1.msra.mxu0 %v39
    %80 = vmatprep.subr.mxu0 %v48
    %81 = vmatpush1.msra.mxu0 %v47
    %82 = vmatprep.subr.mxu0 0.0
    %83 = vmatpush1.msra.mxu0 0.0
    %84 = vmatprep.subr.mxu0 0.0
    %85 = vmatpush1.msra.mxu0 0.0
    %86 = vmatprep.subr.mxu0 0.0
    %87 = vmatpush1.msra.mxu0 0.0
    %88 = vmatprep.subr.mxu0 0.0
    %89 = vmatpush1.msra.mxu0 0.0
    %90 = vmatprep.subr.mxu0 0.0
    %91 = vmatpush1.msra.mxu0 0.0
    %92 = vmatprep.subr.mxu0 0.0
    %93 = vmatpush1.msra.mxu0 0.0
    %94 = vmatprep.subr.mxu0 0.0
    %95 = vmatpush1.msra.mxu0 0.0
    %96 = vmatprep.subr.mxu0 0.0
    %97 = vmatpush1.msra.mxu0 0.0
    %98 = vmatprep.subr.mxu0 0.0
    %99 = vmatpush1.msra.mxu0 0.0
    %100 = vmatprep.subr.mxu0 0.0
    %101 = vmatpush1.msra.mxu0 0.0
    %102 = vmatprep.subr.mxu0 0.0
    %103 = vmatpush1.msra.mxu0 0.0
    %104 = vmatprep.subr.mxu0 0.0
    %105 = vmatpush1.msra.mxu0 0.0
    %106 = vmatprep.subr.mxu0 0.0
    %107 = vmatpush1.msra.mxu0 0.0
    %108 = vmatprep.subr.mxu0 0.0
    %109 = vmatpush1.msra.mxu0 0.0
    %110 = vmatprep.subr.mxu0 0.0
    %111 = vmatpush1.msra.mxu0 0.0
    %112 = vmatprep.subr.mxu0 0.0
    %113 = vmatpush1.msra.mxu0 0.0
    %114 = vmatprep.subr.mxu0 0.0
    %115 = vmatpush1.msra.mxu0 0.0
    %116 = vmatprep.subr.mxu0 0.0
    %117 = vmatpush1.msra.mxu0 0.0
    %118 = vmatprep.subr.mxu0 0.0
    %119 = vmatpush1.msra.mxu0 0.0
    %120 = vmatprep.subr.mxu0 0.0
    %121 = vmatpush1.msra.mxu0 0.0
    %122 = vmatprep.subr.mxu0 0.0
    %123 = vmatpush1.msra.mxu0 0.0
    %124 = vmatprep.subr.mxu0 0.0
    %125 = vmatpush1.msra.mxu0 0.0
    %126 = vmatprep.subr.mxu0 0.0
    %127 = vmatpush1.msra.mxu0 0.0
    %128 = vmatprep.subr.mxu0 0.0
    %129 = vmatpush1.msra.mxu0 0.0
    %130 = vmatprep.subr.mxu0 0.0
    %131 = vmatpush1.msra.mxu0 0.0
    %132 = vmatprep.subr.mxu0 0.0
    %133 = vmatpush1.msra.mxu0 0.0
    %134 = vmatprep.subr.mxu0 0.0
    %135 = vmatpush1.msra.mxu0 0.0
    %136 = vmatprep.subr.mxu0 0.0
    %137 = vmatpush1.msra.mxu0 0.0
    %138 = vmatprep.mubr.f32.mxu0 0.0
    %139 = vmatmul.mubr.f32.gmra.mrb[0].mxu0 %v69
    %v140 = vpop.f32.mrb[0].mxu0
    %v141 = vadd.f32 %v60, %v140
    %v142 = vpop.f32.mrb[0].mxu0
    %v143 = vadd.f32 %v60, %v142
    %144 = vmatprep.mubr.f32.mxu0 0.0
    %145 = vmatmul.mubr.f32.gmra.mrb[0].mxu0 %v72
    %v146 = vpop.f32.mrb[0].mxu0
    %v147 = vadd.f32 %v65, %v146
    %v148 = vpop.f32.mrb[0].mxu0
    %v149 = vadd.f32 %v65, %v148
    %150 = vdwg.mxu0
    %151 = vmatprep.subr.mxu0 %v26
    %152 = vmatpush1.msra.mxu0 %v25
    %153 = vmatprep.subr.mxu0 %v34
    %154 = vmatpush1.msra.mxu0 %v33
    %155 = vmatprep.subr.mxu0 %v42
    %156 = vmatpush1.msra.mxu0 %v41
    %157 = vmatprep.subr.mxu0 %v50
    %158 = vmatpush1.msra.mxu0 %v49
    %159 = vmatprep.subr.mxu0 0.0
    %160 = vmatpush1.msra.mxu0 0.0
    %161 = vmatprep.subr.mxu0 0.0
    %162 = vmatpush1.msra.mxu0 0.0
    %163 = vmatprep.subr.mxu0 0.0
    %164 = vmatpush1.msra.mxu0 0.0
    %165 = vmatprep.subr.mxu0 0.0
    %166 = vmatpush1.msra.mxu0 0.0
    %167 = vmatprep.subr.mxu0 0.0
    %168 = vmatpush1.msra.mxu0 0.0
    %169 = vmatprep.subr.mxu0 0.0
    %170 = vmatpush1.msra.mxu0 0.0
    %171 = vmatprep.subr.mxu0 0.0
    %172 = vmatpush1.msra.mxu0 0.0
    %173 = vmatprep.subr.mxu0 0.0
    %174 = vmatpush1.msra.mxu0 0.0
    %175 = vmatprep.subr.mxu0 0.0
    %176 = vmatpush1.msra.mxu0 0.0
    %177 = vmatprep.subr.mxu0 0.0
    %178 = vmatpush1.msra.mxu0 0.0
    %179 = vmatprep.subr.mxu0 0.0
    %180 = vmatpush1.msra.mxu0 0.0
    %181 = vmatprep.subr.mxu0 0.0
    %182 = vmatpush1.msra.mxu0 0.0
    %183 = vmatprep.subr.mxu0 0.0
    %184 = vmatpush1.msra.mxu0 0.0
    %185 = vmatprep.subr.mxu0 0.0
    %186 = vmatpush1.msra.mxu0 0.0
    %187 = vmatprep.subr.mxu0 0.0
    %188 = vmatpush1.msra.mxu0 0.0
    %189 = vmatprep.subr.mxu0 0.0
    %190 = vmatpush1.msra.mxu0 0.0
    %191 = vmatprep.subr.mxu0 0.0
    %192 = vmatpush1.msra.mxu0 0.0
    %193 = vmatprep.subr.mxu0 0.0
    %194 = vmatpush1.msra.mxu0 0.0
    %195 = vmatprep.subr.mxu0 0.0
    %196 = vmatpush1.msra.mxu0 0.0
    %197 = vmatprep.subr.mxu0 0.0
    %198 = vmatpush1.msra.mxu0 0.0
    %199 = vmatprep.subr.mxu0 0.0
    %200 = vmatpush1.msra.mxu0 0.0
    %201 = vmatprep.subr.mxu0 0.0
    %202 = vmatpush1.msra.mxu0 0.0
    %203 = vmatprep.subr.mxu0 0.0
    %204 = vmatpush1.msra.mxu0 0.0
    %205 = vmatprep.subr.mxu0 0.0
    %206 = vmatpush1.msra.mxu0 0.0
    %207 = vmatprep.subr.mxu0 0.0
    %208 = vmatpush1.msra.mxu0 0.0
    %209 = vmatprep.subr.mxu0 0.0
    %210 = vmatpush1.msra.mxu0 0.0
    %211 = vmatprep.subr.mxu0 0.0
    %212 = vmatpush1.msra.mxu0 0.0
    %213 = vmatprep.subr.mxu0 0.0
    %214 = vmatpush1.msra.mxu0 0.0
    %215 = vmatprep.mubr.f32.mxu0 0.0
    %216 = vmatmul.mubr.f32.gmra.mrb[0].mxu0 %v69
    %v217 = vpop.f32.mrb[0].mxu0
    %v218 = vadd.f32 %v60, %v217
    %v219 = vpop.f32.mrb[0].mxu0
    %v220 = vadd.f32 %v60, %v219
    %221 = vmatprep.mubr.f32.mxu0 0.0
    %222 = vmatmul.mubr.f32.gmra.mrb[0].mxu0 %v72
    %v223 = vpop.f32.mrb[0].mxu0
    %v224 = vadd.f32 %v65, %v223
    %v225 = vpop.f32.mrb[0].mxu0
    %v226 = vadd.f32 %v65, %v225
    %227 = vdwg.mxu0
    %228 = vmatprep.subr.mxu0 %v28
    %229 = vmatpush1.msra.mxu0 %v27
    %230 = vmatprep.subr.mxu0 %v36
    %231 = vmatpush1.msra.mxu0 %v35
    %232 = vmatprep.subr.mxu0 %v44
    %233 = vmatpush1.msra.mxu0 %v43
    %234 = vmatprep.subr.mxu0 %v52
    %235 = vmatpush1.msra.mxu0 %v51
    %236 = vmatprep.subr.mxu0 0.0
    %237 = vmatpush1.msra.mxu0 0.0
    %238 = vmatprep.subr.mxu0 0.0
    %239 = vmatpush1.msra.mxu0 0.0
    %240 = vmatprep.subr.mxu0 0.0
    %241 = vmatpush1.msra.mxu0 0.0
    %242 = vmatprep.subr.mxu0 0.0
    %243 = vmatpush1.msra.mxu0 0.0
    %244 = vmatprep.subr.mxu0 0.0
    %245 = vmatpush1.msra.mxu0 0.0
    %246 = vmatprep.subr.mxu0 0.0
    %247 = vmatpush1.msra.mxu0 0.0
    %248 = vmatprep.subr.mxu0 0.0
    %249 = vmatpush1.msra.mxu0 0.0
    %250 = vmatprep.subr.mxu0 0.0
    %251 = vmatpush1.msra.mxu0 0.0
    %252 = vmatprep.subr.mxu0 0.0
    %253 = vmatpush1.msra.mxu0 0.0
    %254 = vmatprep.subr.mxu0 0.0
    %255 = vmatpush1.msra.mxu0 0.0
    %256 = vmatprep.subr.mxu0 0.0
    %257 = vmatpush1.msra.mxu0 0.0
    %258 = vmatprep.subr.mxu0 0.0
    %259 = vmatpush1.msra.mxu0 0.0
    %260 = vmatprep.subr.mxu0 0.0
    %261 = vmatpush1.msra.mxu0 0.0
    %262 = vmatprep.subr.mxu0 0.0
    %263 = vmatpush1.msra.mxu0 0.0
    %264 = vmatprep.subr.mxu0 0.0
    %265 = vmatpush1.msra.mxu0 0.0
    %266 = vmatprep.subr.mxu0 0.0
    %267 = vmatpush1.msra.mxu0 0.0
    %268 = vmatprep.subr.mxu0 0.0
    %269 = vmatpush1.msra.mxu0 0.0
    %270 = vmatprep.subr.mxu0 0.0
    %271 = vmatpush1.msra.mxu0 0.0
    %272 = vmatprep.subr.mxu0 0.0
    %273 = vmatpush1.msra.mxu0 0.0
    %274 = vmatprep.subr.mxu0 0.0
    %275 = vmatpush1.msra.mxu0 0.0
    %276 = vmatprep.subr.mxu0 0.0
    %277 = vmatpush1.msra.mxu0 0.0
    %278 = vmatprep.subr.mxu0 0.0
    %279 = vmatpush1.msra.mxu0 0.0
    %280 = vmatprep.subr.mxu0 0.0
    %281 = vmatpush1.msra.mxu0 0.0
    %282 = vmatprep.subr.mxu0 0.0
    %283 = vmatpush1.msra.mxu0 0.0
    %284 = vmatprep.subr.mxu0 0.0
    %285 = vmatpush1.msra.mxu0 0.0
    %286 = vmatprep.subr.mxu0 0.0
    %287 = vmatpush1.msra.mxu0 0.0
    %288 = vmatprep.subr.mxu0 0.0
    %289 = vmatpush1.msra.mxu0 0.0
    %290 = vmatprep.subr.mxu0 0.0
    %291 = vmatpush1.msra.mxu0 0.0
    %292 = vmatprep.mubr.f32.mxu0 0.0
    %293 = vmatmul.mubr.f32.gmra.mrb[0].mxu0 %v69
    %v294 = vpop.f32.mrb[0].mxu0
    %v295 = vadd.f32 %v60, %v294
    %v296 = vpop.f32.mrb[0].mxu0
    %v297 = vadd.f32 %v60, %v296
    %298 = vmatprep.mubr.f32.mxu0 0.0
    %299 = vmatmul.mubr.f32.gmra.mrb[0].mxu0 %v72
    %v300 = vpop.f32.mrb[0].mxu0
    %v301 = vadd.f32 %v65, %v300
    %v302 = vpop.f32.mrb[0].mxu0
    %v303 = vadd.f32 %v65, %v302
    %304 = vdwg.mxu0
    %305 = vmatprep.subr.mxu0 %v30
    %306 = vmatpush1.msra.mxu0 %v29
    %307 = vmatprep.subr.mxu0 %v38
    %308 = vmatpush1.msra.mxu0 %v37
    %309 = vmatprep.subr.mxu0 %v46
    %310 = vmatpush1.msra.mxu0 %v45
    %311 = vmatprep.subr.mxu0 %v54
    %312 = vmatpush1.msra.mxu0 %v53
    %313 = vmatprep.subr.mxu0 0.0
    %314 = vmatpush1.msra.mxu0 0.0
    %315 = vmatprep.subr.mxu0 0.0
    %316 = vmatpush1.msra.mxu0 0.0
    %317 = vmatprep.subr.mxu0 0.0
    %318 = vmatpush1.msra.mxu0 0.0
    %319 = vmatprep.subr.mxu0 0.0
    %320 = vmatpush1.msra.mxu0 0.0
    %321 = vmatprep.subr.mxu0 0.0
    %322 = vmatpush1.msra.mxu0 0.0
    %323 = vmatprep.subr.mxu0 0.0
    %324 = vmatpush1.msra.mxu0 0.0
    %325 = vmatprep.subr.mxu0 0.0
    %326 = vmatpush1.msra.mxu0 0.0
    %327 = vmatprep.subr.mxu0 0.0
    %328 = vmatpush1.msra.mxu0 0.0
    %329 = vmatprep.subr.mxu0 0.0
    %330 = vmatpush1.msra.mxu0 0.0
    %331 = vmatprep.subr.mxu0 0.0
    %332 = vmatpush1.msra.mxu0 0.0
    %333 = vmatprep.subr.mxu0 0.0
    %334 = vmatpush1.msra.mxu0 0.0
    %335 = vmatprep.subr.mxu0 0.0
    %336 = vmatpush1.msra.mxu0 0.0
    %337 = vmatprep.subr.mxu0 0.0
    %338 = vmatpush1.msra.mxu0 0.0
    %339 = vmatprep.subr.mxu0 0.0
    %340 = vmatpush1.msra.mxu0 0.0
    %341 = vmatprep.subr.mxu0 0.0
    %342 = vmatpush1.msra.mxu0 0.0
    %343 = vmatprep.subr.mxu0 0.0
    %344 = vmatpush1.msra.mxu0 0.0
    %345 = vmatprep.subr.mxu0 0.0
    %346 = vmatpush1.msra.mxu0 0.0
    %347 = vmatprep.subr.mxu0 0.0
    %348 = vmatpush1.msra.mxu0 0.0
    %349 = vmatprep.subr.mxu0 0.0
    %350 = vmatpush1.msra.mxu0 0.0
    %351 = vmatprep.subr.mxu0 0.0
    %352 = vmatpush1.msra.mxu0 0.0
    %353 = vmatprep.subr.mxu0 0.0
    %354 = vmatpush1.msra.mxu0 0.0
    %355 = vmatprep.subr.mxu0 0.0
    %356 = vmatpush1.msra.mxu0 0.0
    %357 = vmatprep.subr.mxu0 0.0
    %358 = vmatpush1.msra.mxu0 0.0
    %359 = vmatprep.subr.mxu0 0.0
    %360 = vmatpush1.msra.mxu0 0.0
    %361 = vmatprep.subr.mxu0 0.0
    %362 = vmatpush1.msra.mxu0 0.0
    %363 = vmatprep.subr.mxu0 0.0
    %364 = vmatpush1.msra.mxu0 0.0
    %365 = vmatprep.subr.mxu0 0.0
    %366 = vmatpush1.msra.mxu0 0.0
    %367 = vmatprep.subr.mxu0 0.0
    %368 = vmatpush1.msra.mxu0 0.0
    %369 = vmatprep.mubr.f32.mxu0 0.0
    %370 = vmatmul.mubr.f32.gmra.mrb[0].mxu0 %v69
    %v371 = vpop.f32.mrb[0].mxu0
    %v372 = vadd.f32 %v60, %v371
    %v373 = vpop.f32.mrb[0].mxu0
    %v374 = vadd.f32 %v60, %v373
    %375 = vmatprep.mubr.f32.mxu0 0.0
    %376 = vmatmul.mubr.f32.gmra.mrb[0].mxu0 %v72
    %v377 = vpop.f32.mrb[0].mxu0
    %v378 = vadd.f32 %v65, %v377
    %v379 = vpop.f32.mrb[0].mxu0
    %v380 = vadd.f32 %v65, %v379
    %381 = vdwg.mxu0
    %v382 = vmax.f32 %v141, 0.0
    %v383 = vmax.f32 %v143, 0.0
    %v384 = vmax.f32 %v218, 0.0
    %v385 = vmax.f32 %v220, 0.0
    %v386 = vmax.f32 %v295, 0.0
    %v387 = vmax.f32 %v297, 0.0
    %v388 = vmax.f32 %v372, 0.0
    %v389 = vmax.f32 %v374, 0.0
    %v390 = vmax.f32 %v147, 0.0
    %v391 = vmax.f32 %v149, 0.0
    %v392 = vmax.f32 %v224, 0.0
    %v393 = vmax.f32 %v226, 0.0
    %v394 = vmax.f32 %v301, 0.0
    %v395 = vmax.f32 %v303, 0.0
    %v396 = vmax.f32 %v378, 0.0
    %v397 = vmax.f32 %v380, 0.0
    %398 = vst [vmem:[#allocation2] sm:$0xff] %v382
    %399 = vst [vmem:[#allocation2 + $0x8] sm:$0xff] %v383
    %400 = vst [vmem:[#allocation2 + $0x10] sm:$0xff] %v384
    %401 = vst [vmem:[#allocation2 + $0x18] sm:$0xff] %v385
    %402 = vst [vmem:[#allocation2 + $0x20] sm:$0xff] %v386
    %403 = vst [vmem:[#allocation2 + $0x28] sm:$0xff] %v387
    %404 = vst [vmem:[#allocation2 + $0x30] sm:$0xff] %v388
    %405 = vst [vmem:[#allocation2 + $0x38] sm:$0xff] %v389
    %406 = vst [vmem:[#allocation2 + $0x40] sm:$0xff] %v390
    %407 = vst [vmem:[#allocation2 + $0x48] sm:$0xff] %v391
    %408 = vst [vmem:[#allocation2 + $0x50] sm:$0xff] %v392
    %409 = vst [vmem:[#allocation2 + $0x58] sm:$0xff] %v393
    %410 = vst [vmem:[#allocation2 + $0x60] sm:$0xff] %v394
    %411 = vst [vmem:[#allocation2 + $0x68] sm:$0xff] %v395
    %412 = vst [vmem:[#allocation2 + $0x70] sm:$0xff] %v396
    %413 = vst [vmem:[#allocation2 + $0x78] sm:$0xff] %v397
    %v414 = vld [vmem:[%s1] sm:$0xff]
    %v415 = vld [vmem:[%s1 + $0x8] sm:$0xff]
    %s416 = scalar_lea.vmem %s0, 256
    %v417 = vld [vmem:[%s416] sm:$0xff]
    %v418 = vld [vmem:[%s416 + $0x8] sm:$0xff]
    %v419 = vld [vmem:[%s416 + $0x10] sm:$0xff]
    %v420 = vld [vmem:[%s416 + $0x18] sm:$0xff]
    %v421 = vld [vmem:[%s416 + $0x20] sm:$0xff]
    %v422 = vld [vmem:[%s416 + $0x28] sm:$0xff]
    %v423 = vld [vmem:[%s416 + $0x30] sm:$0xff]
    %v424 = vld [vmem:[%s416 + $0x38] sm:$0xff]
    %v425 = vld [vmem:[%s416 + $0x40] sm:$0xff]
    %v426 = vld [vmem:[%s416 + $0x48] sm:$0xff]
    %v427 = vld [vmem:[%s416 + $0x50] sm:$0xff]
    %v428 = vld [vmem:[%s416 + $0x58] sm:$0xff]
    %v429 = vld [vmem:[%s416 + $0x60] sm:$0xff]
    %v430 = vld [vmem:[%s416 + $0x68] sm:$0xff]
    %v431 = vld [vmem:[%s416 + $0x70] sm:$0xff]
    %v432 = vld [vmem:[%s416 + $0x78] sm:$0xff]
    %v433 = vld [vmem:[%s416 + $0x80] sm:$0xff]
    %v434 = vld [vmem:[%s416 + $0x88] sm:$0xff]
    %v435 = vld [vmem:[%s416 + $0x90] sm:$0xff]
    %v436 = vld [vmem:[%s416 + $0x98] sm:$0xff]
    %v437 = vld [vmem:[%s416 + $0xa0] sm:$0xff]
    %v438 = vld [vmem:[%s416 + $0xa8] sm:$0xff]
    %v439 = vld [vmem:[%s416 + $0xb0] sm:$0xff]
    %v440 = vld [vmem:[%s416 + $0xb8] sm:$0xff]
    %v441 = vld [vmem:[%s416 + $0xc0] sm:$0xff]
    %v442 = vld [vmem:[%s416 + $0xc8] sm:$0xff]
    %v443 = vld [vmem:[%s416 + $0xd0] sm:$0xff]
    %v444 = vld [vmem:[%s416 + $0xd8] sm:$0xff]
    %v445 = vld [vmem:[%s416 + $0xe0] sm:$0xff]
    %v446 = vld [vmem:[%s416 + $0xe8] sm:$0xff]
    %v447 = vld [vmem:[%s416 + $0xf0] sm:$0xff]
    %v448 = vld [vmem:[%s416 + $0xf8] sm:$0xff]
    %v449 = vld [vmem:[%s2] sm:$0xff]
    %v450 = vld [vmem:[%s2 + $0x8] sm:$0xff]
    %452 = vset.pattern.permute.xlu0 0
    %453 = vperm.xlu0 %452, %v449
    %v454 = vpop.permute.xlu0 %453
    %457 = vset.pattern.permute.xlu0 0
    %458 = vperm.xlu0 %457, %v450
    %v459 = vpop.permute.xlu0 %458
    %v462 = vsel %vm67, %v414, 0
    %v465 = vsel %vm67, %v415, 0
    %467 = vmatprep.subr.mxu0 %v418
    %468 = vmatpush1.msra.mxu0 %v417
    %469 = vmatprep.subr.mxu0 %v426
    %470 = vmatpush1.msra.mxu0 %v425
    %471 = vmatprep.subr.mxu0 %v434
    %472 = vmatpush1.msra.mxu0 %v433
    %473 = vmatprep.subr.mxu0 %v442
    %474 = vmatpush1.msra.mxu0 %v441
    %475 = vmatprep.subr.mxu0 0.0
    %476 = vmatpush1.msra.mxu0 0.0
    %477 = vmatprep.subr.mxu0 0.0
    %478 = vmatpush1.msra.mxu0 0.0
    %479 = vmatprep.subr.mxu0 0.0
    %480 = vmatpush1.msra.mxu0 0.0
    %481 = vmatprep.subr.mxu0 0.0
    %482 = vmatpush1.msra.mxu0 0.0
    %483 = vmatprep.subr.mxu0 0.0
    %484 = vmatpush1.msra.mxu0 0.0
    %485 = vmatprep.subr.mxu0 0.0
    %486 = vmatpush1.msra.mxu0 0.0
    %487 = vmatprep.subr.mxu0 0.0
    %488 = vmatpush1.msra.mxu0 0.0
    %489 = vmatprep.subr.mxu0 0.0
    %490 = vmatpush1.msra.mxu0 0.0
    %491 = vmatprep.subr.mxu0 0.0
    %492 = vmatpush1.msra.mxu0 0.0
    %493 = vmatprep.subr.mxu0 0.0
    %494 = vmatpush1.msra.mxu0 0.0
    %495 = vmatprep.subr.mxu0 0.0
    %496 = vmatpush1.msra.mxu0 0.0
    %497 = vmatprep.subr.mxu0 0.0
    %498 = vmatpush1.msra.mxu0 0.0
    %499 = vmatprep.subr.mxu0 0.0
    %500 = vmatpush1.msra.mxu0 0.0
    %501 = vmatprep.subr.mxu0 0.0
    %502 = vmatpush1.msra.mxu0 0.0
    %503 = vmatprep.subr.mxu0 0.0
    %504 = vmatpush1.msra.mxu0 0.0
    %505 = vmatprep.subr.mxu0 0.0
    %506 = vmatpush1.msra.mxu0 0.0
    %507 = vmatprep.subr.mxu0 0.0
    %508 = vmatpush1.msra.mxu0 0.0
    %509 = vmatprep.subr.mxu0 0.0
    %510 = vmatpush1.msra.mxu0 0.0
    %511 = vmatprep.subr.mxu0 0.0
    %512 = vmatpush1.msra.mxu0 0.0
    %513 = vmatprep.subr.mxu0 0.0
    %514 = vmatpush1.msra.mxu0 0.0
    %515 = vmatprep.subr.mxu0 0.0
    %516 = vmatpush1.msra.mxu0 0.0
    %517 = vmatprep.subr.mxu0 0.0
    %518 = vmatpush1.msra.mxu0 0.0
    %519 = vmatprep.subr.mxu0 0.0
    %520 = vmatpush1.msra.mxu0 0.0
    %521 = vmatprep.subr.mxu0 0.0
    %522 = vmatpush1.msra.mxu0 0.0
    %523 = vmatprep.subr.mxu0 0.0
    %524 = vmatpush1.msra.mxu0 0.0
    %525 = vmatprep.subr.mxu0 0.0
    %526 = vmatpush1.msra.mxu0 0.0
    %527 = vmatprep.subr.mxu0 0.0
    %528 = vmatpush1.msra.mxu0 0.0
    %529 = vmatprep.subr.mxu0 0.0
    %530 = vmatpush1.msra.mxu0 0.0
    %531 = vmatprep.mubr.f32.mxu0 0.0
    %532 = vmatmul.mubr.f32.gmra.mrb[0].mxu0 %v462
    %v533 = vpop.f32.mrb[0].mxu0
    %v534 = vadd.f32 %v454, %v533
    %v535 = vpop.f32.mrb[0].mxu0
    %v536 = vadd.f32 %v454, %v535
    %537 = vmatprep.mubr.f32.mxu0 0.0
    %538 = vmatmul.mubr.f32.gmra.mrb[0].mxu0 %v465
    %v539 = vpop.f32.mrb[0].mxu0
    %v540 = vadd.f32 %v459, %v539
    %v541 = vpop.f32.mrb[0].mxu0
    %v542 = vadd.f32 %v459, %v541
    %543 = vdwg.mxu0
    %544 = vmatprep.subr.mxu0 %v420
    %545 = vmatpush1.msra.mxu0 %v419
    %546 = vmatprep.subr.mxu0 %v428
    %547 = vmatpush1.msra.mxu0 %v427
    %548 = vmatprep.subr.mxu0 %v436
    %549 = vmatpush1.msra.mxu0 %v435
    %550 = vmatprep.subr.mxu0 %v444
    %551 = vmatpush1.msra.mxu0 %v443
    %552 = vmatprep.subr.mxu0 0.0
    %553 = vmatpush1.msra.mxu0 0.0
    %554 = vmatprep.subr.mxu0 0.0
    %555 = vmatpush1.msra.mxu0 0.0
    %556 = vmatprep.subr.mxu0 0.0
    %557 = vmatpush1.msra.mxu0 0.0
    %558 = vmatprep.subr.mxu0 0.0
    %559 = vmatpush1.msra.mxu0 0.0
    %560 = vmatprep.subr.mxu0 0.0
    %561 = vmatpush1.msra.mxu0 0.0
    %562 = vmatprep.subr.mxu0 0.0
    %563 = vmatpush1.msra.mxu0 0.0
    %564 = vmatprep.subr.mxu0 0.0
    %565 = vmatpush1.msra.mxu0 0.0
    %566 = vmatprep.subr.mxu0 0.0
    %567 = vmatpush1.msra.mxu0 0.0
    %568 = vmatprep.subr.mxu0 0.0
    %569 = vmatpush1.msra.mxu0 0.0
    %570 = vmatprep.subr.mxu0 0.0
    %571 = vmatpush1.msra.mxu0 0.0
    %572 = vmatprep.subr.mxu0 0.0
    %573 = vmatpush1.msra.mxu0 0.0
    %574 = vmatprep.subr.mxu0 0.0
    %575 = vmatpush1.msra.mxu0 0.0
    %576 = vmatprep.subr.mxu0 0.0
    %577 = vmatpush1.msra.mxu0 0.0
    %578 = vmatprep.subr.mxu0 0.0
    %579 = vmatpush1.msra.mxu0 0.0
    %580 = vmatprep.subr.mxu0 0.0
    %581 = vmatpush1.msra.mxu0 0.0
    %582 = vmatprep.subr.mxu0 0.0
    %583 = vmatpush1.msra.mxu0 0.0
    %584 = vmatprep.subr.mxu0 0.0
    %585 = vmatpush1.msra.mxu0 0.0
    %586 = vmatprep.subr.mxu0 0.0
    %587 = vmatpush1.msra.mxu0 0.0
    %588 = vmatprep.subr.mxu0 0.0
    %589 = vmatpush1.msra.mxu0 0.0
    %590 = vmatprep.subr.mxu0 0.0
    %591 = vmatpush1.msra.mxu0 0.0
    %592 = vmatprep.subr.mxu0 0.0
    %593 = vmatpush1.msra.mxu0 0.0
    %594 = vmatprep.subr.mxu0 0.0
    %595 = vmatpush1.msra.mxu0 0.0
    %596 = vmatprep.subr.mxu0 0.0
    %597 = vmatpush1.msra.mxu0 0.0
    %598 = vmatprep.subr.mxu0 0.0
    %599 = vmatpush1.msra.mxu0 0.0
    %600 = vmatprep.subr.mxu0 0.0
    %601 = vmatpush1.msra.mxu0 0.0
    %602 = vmatprep.subr.mxu0 0.0
    %603 = vmatpush1.msra.mxu0 0.0
    %604 = vmatprep.subr.mxu0 0.0
    %605 = vmatpush1.msra.mxu0 0.0
    %606 = vmatprep.subr.mxu0 0.0
    %607 = vmatpush1.msra.mxu0 0.0
    %608 = vmatprep.mubr.f32.mxu0 0.0
    %609 = vmatmul.mubr.f32.gmra.mrb[0].mxu0 %v462
    %v610 = vpop.f32.mrb[0].mxu0
    %v611 = vadd.f32 %v454, %v610
    %v612 = vpop.f32.mrb[0].mxu0
    %v613 = vadd.f32 %v454, %v612
    %614 = vmatprep.mubr.f32.mxu0 0.0
    %615 = vmatmul.mubr.f32.gmra.mrb[0].mxu0 %v465
    %v616 = vpop.f32.mrb[0].mxu0
    %v617 = vadd.f32 %v459, %v616
    %v618 = vpop.f32.mrb[0].mxu0
    %v619 = vadd.f32 %v459, %v618
    %620 = vdwg.mxu0
    %621 = vmatprep.subr.mxu0 %v422
    %622 = vmatpush1.msra.mxu0 %v421
    %623 = vmatprep.subr.mxu0 %v430
    %624 = vmatpush1.msra.mxu0 %v429
    %625 = vmatprep.subr.mxu0 %v438
    %626 = vmatpush1.msra.mxu0 %v437
    %627 = vmatprep.subr.mxu0 %v446
    %628 = vmatpush1.msra.mxu0 %v445
    %629 = vmatprep.subr.mxu0 0.0
    %630 = vmatpush1.msra.mxu0 0.0
    %631 = vmatprep.subr.mxu0 0.0
    %632 = vmatpush1.msra.mxu0 0.0
    %633 = vmatprep.subr.mxu0 0.0
    %634 = vmatpush1.msra.mxu0 0.0
    %635 = vmatprep.subr.mxu0 0.0
    %636 = vmatpush1.msra.mxu0 0.0
    %637 = vmatprep.subr.mxu0 0.0
    %638 = vmatpush1.msra.mxu0 0.0
    %639 = vmatprep.subr.mxu0 0.0
    %640 = vmatpush1.msra.mxu0 0.0
    %641 = vmatprep.subr.mxu0 0.0
    %642 = vmatpush1.msra.mxu0 0.0
    %643 = vmatprep.subr.mxu0 0.0
    %644 = vmatpush1.msra.mxu0 0.0
    %645 = vmatprep.subr.mxu0 0.0
    %646 = vmatpush1.msra.mxu0 0.0
    %647 = vmatprep.subr.mxu0 0.0
    %648 = vmatpush1.msra.mxu0 0.0
    %649 = vmatprep.subr.mxu0 0.0
    %650 = vmatpush1.msra.mxu0 0.0
    %651 = vmatprep.subr.mxu0 0.0
    %652 = vmatpush1.msra.mxu0 0.0
    %653 = vmatprep.subr.mxu0 0.0
    %654 = vmatpush1.msra.mxu0 0.0
    %655 = vmatprep.subr.mxu0 0.0
    %656 = vmatpush1.msra.mxu0 0.0
    %657 = vmatprep.subr.mxu0 0.0
    %658 = vmatpush1.msra.mxu0 0.0
    %659 = vmatprep.subr.mxu0 0.0
    %660 = vmatpush1.msra.mxu0 0.0
    %661 = vmatprep.subr.mxu0 0.0
    %662 = vmatpush1.msra.mxu0 0.0
    %663 = vmatprep.subr.mxu0 0.0
    %664 = vmatpush1.msra.mxu0 0.0
    %665 = vmatprep.subr.mxu0 0.0
    %666 = vmatpush1.msra.mxu0 0.0
    %667 = vmatprep.subr.mxu0 0.0
    %668 = vmatpush1.msra.mxu0 0.0
    %669 = vmatprep.subr.mxu0 0.0
    %670 = vmatpush1.msra.mxu0 0.0
    %671 = vmatprep.subr.mxu0 0.0
    %672 = vmatpush1.msra.mxu0 0.0
    %673 = vmatprep.subr.mxu0 0.0
    %674 = vmatpush1.msra.mxu0 0.0
    %675 = vmatprep.subr.mxu0 0.0
    %676 = vmatpush1.msra.mxu0 0.0
    %677 = vmatprep.subr.mxu0 0.0
    %678 = vmatpush1.msra.mxu0 0.0
    %679 = vmatprep.subr.mxu0 0.0
    %680 = vmatpush1.msra.mxu0 0.0
    %681 = vmatprep.subr.mxu0 0.0
    %682 = vmatpush1.msra.mxu0 0.0
    %683 = vmatprep.subr.mxu0 0.0
    %684 = vmatpush1.msra.mxu0 0.0
    %685 = vmatprep.mubr.f32.mxu0 0.0
    %686 = vmatmul.mubr.f32.gmra.mrb[0].mxu0 %v462
    %v687 = vpop.f32.mrb[0].mxu0
    %v688 = vadd.f32 %v454, %v687
    %v689 = vpop.f32.mrb[0].mxu0
    %v690 = vadd.f32 %v454, %v689
    %691 = vmatprep.mubr.f32.mxu0 0.0
    %692 = vmatmul.mubr.f32.gmra.mrb[0].mxu0 %v465
    %v693 = vpop.f32.mrb[0].mxu0
    %v694 = vadd.f32 %v459, %v693
    %v695 = vpop.f32.mrb[0].mxu0
    %v696 = vadd.f32 %v459, %v695
    %697 = vdwg.mxu0
    %698 = vmatprep.subr.mxu0 %v424
    %699 = vmatpush1.msra.mxu0 %v423
    %700 = vmatprep.subr.mxu0 %v432
    %701 = vmatpush1.msra.mxu0 %v431
    %702 = vmatprep.subr.mxu0 %v440
    %703 = vmatpush1.msra.mxu0 %v439
    %704 = vmatprep.subr.mxu0 %v448
    %705 = vmatpush1.msra.mxu0 %v447
    %706 = vmatprep.subr.mxu0 0.0
    %707 = vmatpush1.msra.mxu0 0.0
    %708 = vmatprep.subr.mxu0 0.0
    %709 = vmatpush1.msra.mxu0 0.0
    %710 = vmatprep.subr.mxu0 0.0
    %711 = vmatpush1.msra.mxu0 0.0
    %712 = vmatprep.subr.mxu0 0.0
    %713 = vmatpush1.msra.mxu0 0.0
    %714 = vmatprep.subr.mxu0 0.0
    %715 = vmatpush1.msra.mxu0 0.0
    %716 = vmatprep.subr.mxu0 0.0
    %717 = vmatpush1.msra.mxu0 0.0
    %718 = vmatprep.subr.mxu0 0.0
    %719 = vmatpush1.msra.mxu0 0.0
    %720 = vmatprep.subr.mxu0 0.0
    %721 = vmatpush1.msra.mxu0 0.0
    %722 = vmatprep.subr.mxu0 0.0
    %723 = vmatpush1.msra.mxu0 0.0
    %724 = vmatprep.subr.mxu0 0.0
    %725 = vmatpush1.msra.mxu0 0.0
    %726 = vmatprep.subr.mxu0 0.0
    %727 = vmatpush1.msra.mxu0 0.0
    %728 = vmatprep.subr.mxu0 0.0
    %729 = vmatpush1.msra.mxu0 0.0
    %730 = vmatprep.subr.mxu0 0.0
    %731 = vmatpush1.msra.mxu0 0.0
    %732 = vmatprep.subr.mxu0 0.0
    %733 = vmatpush1.msra.mxu0 0.0
    %734 = vmatprep.subr.mxu0 0.0
    %735 = vmatpush1.msra.mxu0 0.0
    %736 = vmatprep.subr.mxu0 0.0
    %737 = vmatpush1.msra.mxu0 0.0
    %738 = vmatprep.subr.mxu0 0.0
    %739 = vmatpush1.msra.mxu0 0.0
    %740 = vmatprep.subr.mxu0 0.0
    %741 = vmatpush1.msra.mxu0 0.0
    %742 = vmatprep.subr.mxu0 0.0
    %743 = vmatpush1.msra.mxu0 0.0
    %744 = vmatprep.subr.mxu0 0.0
    %745 = vmatpush1.msra.mxu0 0.0
    %746 = vmatprep.subr.mxu0 0.0
    %747 = vmatpush1.msra.mxu0 0.0
    %748 = vmatprep.subr.mxu0 0.0
    %749 = vmatpush1.msra.mxu0 0.0
    %750 = vmatprep.subr.mxu0 0.0
    %751 = vmatpush1.msra.mxu0 0.0
    %752 = vmatprep.subr.mxu0 0.0
    %753 = vmatpush1.msra.mxu0 0.0
    %754 = vmatprep.subr.mxu0 0.0
    %755 = vmatpush1.msra.mxu0 0.0
    %756 = vmatprep.subr.mxu0 0.0
    %757 = vmatpush1.msra.mxu0 0.0
    %758 = vmatprep.subr.mxu0 0.0
    %759 = vmatpush1.msra.mxu0 0.0
    %760 = vmatprep.subr.mxu0 0.0
    %761 = vmatpush1.msra.mxu0 0.0
    %762 = vmatprep.mubr.f32.mxu0 0.0
    %763 = vmatmul.mubr.f32.gmra.mrb[0].mxu0 %v462
    %v764 = vpop.f32.mrb[0].mxu0
    %v765 = vadd.f32 %v454, %v764
    %v766 = vpop.f32.mrb[0].mxu0
    %v767 = vadd.f32 %v454, %v766
    %768 = vmatprep.mubr.f32.mxu0 0.0
    %769 = vmatmul.mubr.f32.gmra.mrb[0].mxu0 %v465
    %v770 = vpop.f32.mrb[0].mxu0
    %v771 = vadd.f32 %v459, %v770
    %v772 = vpop.f32.mrb[0].mxu0
    %v773 = vadd.f32 %v459, %v772
    %774 = vdwg.mxu0
    %v775 = vmax.f32 %v534, 0.0
    %v776 = vmax.f32 %v536, 0.0
    %v777 = vmax.f32 %v611, 0.0
    %v778 = vmax.f32 %v613, 0.0
    %v779 = vmax.f32 %v688, 0.0
    %v780 = vmax.f32 %v690, 0.0
    %v781 = vmax.f32 %v765, 0.0
    %v782 = vmax.f32 %v767, 0.0
    %v783 = vmax.f32 %v540, 0.0
    %v784 = vmax.f32 %v542, 0.0
    %v785 = vmax.f32 %v617, 0.0
    %v786 = vmax.f32 %v619, 0.0
    %v787 = vmax.f32 %v694, 0.0
    %v788 = vmax.f32 %v696, 0.0
    %v789 = vmax.f32 %v771, 0.0
    %v790 = vmax.f32 %v773, 0.0
    %s791 = scalar_lea.vmem [#allocation2], 128
    %792 = vst [vmem:[%s791] sm:$0xff] %v775
    %793 = vst [vmem:[%s791 + $0x8] sm:$0xff] %v776
    %794 = vst [vmem:[%s791 + $0x10] sm:$0xff] %v777
    %795 = vst [vmem:[%s791 + $0x18] sm:$0xff] %v778
    %796 = vst [vmem:[%s791 + $0x20] sm:$0xff] %v779
    %797 = vst [vmem:[%s791 + $0x28] sm:$0xff] %v780
    %798 = vst [vmem:[%s791 + $0x30] sm:$0xff] %v781
    %799 = vst [vmem:[%s791 + $0x38] sm:$0xff] %v782
    %800 = vst [vmem:[%s791 + $0x40] sm:$0xff] %v783
    %801 = vst [vmem:[%s791 + $0x48] sm:$0xff] %v784
    %802 = vst [vmem:[%s791 + $0x50] sm:$0xff] %v785
    %803 = vst [vmem:[%s791 + $0x58] sm:$0xff] %v786
    %804 = vst [vmem:[%s791 + $0x60] sm:$0xff] %v787
    %805 = vst [vmem:[%s791 + $0x68] sm:$0xff] %v788
    %806 = vst [vmem:[%s791 + $0x70] sm:$0xff] %v789
    %807 = vst [vmem:[%s791 + $0x78] sm:$0xff] %v790
    %v808 = vld [vmem:[%s4] sm:$0x1]
    %v810 = vlaneseq
    %v811 = vshrl.u32 %v810, 7
    %v812 = vsub.s32 0, %v811
    %v813 = vrot.slane %v808, %v812
    %v815 = vadd.f32 %v813, 0.0
    %v816 = vld [vmem:[#allocation2] ss:$8 sm:$0xf]
    %v817 = vld [vmem:[#allocation2] ss:$8 sm:$0xf0]
    %v818 = vor.u32 %v816, %v817
    %s819 = scalar_lea.vmem [#allocation2], 128
    %v820 = vld [vmem:[%s819] ss:$8 sm:$0xf]
    %v821 = vld [vmem:[%s819] ss:$8 sm:$0xf0]
    %v822 = vor.u32 %v820, %v821
    %v823 = vld [vmem:[%s3] ss:$8 sm:$0xf]
    %v824 = vld [vmem:[%s3] ss:$8 sm:$0xf0]
    %v825 = vor.u32 %v823, %v824
    %s826 = scalar_lea.vmem %s3, 128
    %v827 = vld [vmem:[%s826] ss:$8 sm:$0xf]
    %v828 = vld [vmem:[%s826] ss:$8 sm:$0xf0]
    %v829 = vor.u32 %v827, %v828
    %s830 = scalar_lea.vmem %s3, 256
    %v831 = vld [vmem:[%s830] ss:$8 sm:$0xf]
    %v832 = vld [vmem:[%s830] ss:$8 sm:$0xf0]
    %v833 = vor.u32 %v831, %v832
    %s834 = scalar_lea.vmem %s3, 384
    %v835 = vld [vmem:[%s834] ss:$8 sm:$0xf]
    %v836 = vld [vmem:[%s834] ss:$8 sm:$0xf0]
    %v837 = vor.u32 %v835, %v836
    %s838 = scalar_lea.vmem %s3, 512
    %v839 = vld [vmem:[%s838] ss:$8 sm:$0xf]
    %v840 = vld [vmem:[%s838] ss:$8 sm:$0xf0]
    %v841 = vor.u32 %v839, %v840
    %s842 = scalar_lea.vmem %s3, 640
    %v843 = vld [vmem:[%s842] ss:$8 sm:$0xf]
    %v844 = vld [vmem:[%s842] ss:$8 sm:$0xf0]
    %v845 = vor.u32 %v843, %v844
    %s846 = scalar_lea.vmem %s3, 768
    %v847 = vld [vmem:[%s846] ss:$8 sm:$0xf]
    %v848 = vld [vmem:[%s846] ss:$8 sm:$0xf0]
    %v849 = vor.u32 %v847, %v848
    %s850 = scalar_lea.vmem %s3, 896
    %v851 = vld [vmem:[%s850] ss:$8 sm:$0xf]
    %v852 = vld [vmem:[%s850] ss:$8 sm:$0xf0]
    %v853 = vor.u32 %v851, %v852
    %s854 = scalar_lea.vmem %s3, 1024
    %v855 = vld [vmem:[%s854] ss:$8 sm:$0xf]
    %v856 = vld [vmem:[%s854] ss:$8 sm:$0xf0]
    %v857 = vor.u32 %v855, %v856
    %s858 = scalar_lea.vmem %s3, 1152
    %v859 = vld [vmem:[%s858] ss:$8 sm:$0xf]
    %v860 = vld [vmem:[%s858] ss:$8 sm:$0xf0]
    %v861 = vor.u32 %v859, %v860
    %v864 = vcombine.low %v818, %v822
    %v865 = vcombine.high %v818, %v822
    %v867 = vunpack.c.l.s4 1966171168
    %v868 = vunpack.c.0.s8 %v867
    %v869 = vlaneseq
    %v870 = vshrl.u32 %v869, 7
    %v871 = vsub.s32 %v868, %v870
    %v872 = vrot.slane %v864, %v871
    %v874 = vunpack.c.l.s4 1966171168
    %v875 = vunpack.c.0.s8 %v874
    %v876 = vlaneseq
    %v877 = vshrl.u32 %v876, 7
    %v878 = vsub.s32 %v875, %v877
    %v879 = vrot.slane %v865, %v878
    %v880 = vcombine.high %v872, %v872
    %v881 = vcombine.high %v879, %v879
    %v883 = vunpack.c.l.s4 1966171168
    %v884 = vunpack.c.0.s8 %v883
    %v885 = vlaneseq
    %v886 = vshrl.u32 %v885, 7
    %v887 = vsub.s32 %v884, %v886
    %v888 = vrot.slane %v872, %v887
    %v890 = vunpack.c.l.s4 1966171168
    %v891 = vunpack.c.0.s8 %v890
    %v892 = vlaneseq
    %v893 = vshrl.u32 %v892, 7
    %v894 = vsub.s32 %v891, %v893
    %v895 = vrot.slane %v879, %v894
    %v897 = vunpack.c.l.s4 1966171168
    %v898 = vunpack.c.0.s8 %v897
    %v899 = vlaneseq
    %v900 = vshrl.u32 %v899, 7
    %v901 = vsub.s32 %v898, %v900
    %v902 = vrot.slane %v880, %v901
    %v904 = vunpack.c.l.s4 1966171168
    %v905 = vunpack.c.0.s8 %v904
    %v906 = vlaneseq
    %v907 = vshrl.u32 %v906, 7
    %v908 = vsub.s32 %v905, %v907
    %v909 = vrot.slane %v881, %v908
    %v910 = vcombine.high %v888, %v888
    %v911 = vcombine.high %v895, %v895
    %v912 = vcombine.high %v902, %v902
    %v913 = vcombine.high %v909, %v909
    %v932 = vcombine.low %v825, %v829
    %v933 = vcombine.high %v825, %v829
    %v934 = vcombine.low %v833, %v837
    %v935 = vcombine.high %v833, %v837
    %v936 = vcombine.low %v841, %v845
    %v937 = vcombine.high %v841, %v845
    %v938 = vcombine.low %v849, %v853
    %v939 = vcombine.high %v849, %v853
    %v941 = vunpack.c.l.s4 1966171168
    %v942 = vunpack.c.0.s8 %v941
    %v943 = vlaneseq
    %v944 = vshrl.u32 %v943, 7
    %v945 = vsub.s32 %v942, %v944
    %v946 = vrot.slane %v932, %v945
    %v948 = vunpack.c.l.s4 1966171168
    %v949 = vunpack.c.0.s8 %v948
    %v950 = vlaneseq
    %v951 = vshrl.u32 %v950, 7
    %v952 = vsub.s32 %v949, %v951
    %v953 = vrot.slane %v933, %v952
    %v955 = vunpack.c.l.s4 1966171168
    %v956 = vunpack.c.0.s8 %v955
    %v957 = vlaneseq
    %v958 = vshrl.u32 %v957, 7
    %v959 = vsub.s32 %v956, %v958
    %v960 = vrot.slane %v934, %v959
    %v962 = vunpack.c.l.s4 1966171168
    %v963 = vunpack.c.0.s8 %v962
    %v964 = vlaneseq
    %v965 = vshrl.u32 %v964, 7
    %v966 = vsub.s32 %v963, %v965
    %v967 = vrot.slane %v935, %v966
    %v969 = vunpack.c.l.s4 1966171168
    %v970 = vunpack.c.0.s8 %v969
    %v971 = vlaneseq
    %v972 = vshrl.u32 %v971, 7
    %v973 = vsub.s32 %v970, %v972
    %v974 = vrot.slane %v936, %v973
    %v976 = vunpack.c.l.s4 1966171168
    %v977 = vunpack.c.0.s8 %v976
    %v978 = vlaneseq
    %v979 = vshrl.u32 %v978, 7
    %v980 = vsub.s32 %v977, %v979
    %v981 = vrot.slane %v937, %v980
    %v983 = vunpack.c.l.s4 1966171168
    %v984 = vunpack.c.0.s8 %v983
    %v985 = vlaneseq
    %v986 = vshrl.u32 %v985, 7
    %v987 = vsub.s32 %v984, %v986
    %v988 = vrot.slane %v938, %v987
    %v990 = vunpack.c.l.s4 1966171168
    %v991 = vunpack.c.0.s8 %v990
    %v992 = vlaneseq
    %v993 = vshrl.u32 %v992, 7
    %v994 = vsub.s32 %v991, %v993
    %v995 = vrot.slane %v939, %v994
    %v996 = vcombine.low %v946, %v960
    %v997 = vcombine.high %v946, %v960
    %v998 = vcombine.low %v953, %v967
    %v999 = vcombine.high %v953, %v967
    %v1000 = vcombine.low %v974, %v988
    %v1001 = vcombine.high %v974, %v988
    %v1002 = vcombine.low %v981, %v995
    %v1003 = vcombine.high %v981, %v995
    %v1005 = vunpack.c.l.s4 1966171168
    %v1006 = vunpack.c.0.s8 %v1005
    %v1007 = vlaneseq
    %v1008 = vshrl.u32 %v1007, 7
    %v1009 = vsub.s32 %v1006, %v1008
    %v1010 = vrot.slane %v996, %v1009
    %v1012 = vunpack.c.l.s4 1966171168
    %v1013 = vunpack.c.0.s8 %v1012
    %v1014 = vlaneseq
    %v1015 = vshrl.u32 %v1014, 7
    %v1016 = vsub.s32 %v1013, %v1015
    %v1017 = vrot.slane %v998, %v1016
    %v1019 = vunpack.c.l.s4 1966171168
    %v1020 = vunpack.c.0.s8 %v1019
    %v1021 = vlaneseq
    %v1022 = vshrl.u32 %v1021, 7
    %v1023 = vsub.s32 %v1020, %v1022
    %v1024 = vrot.slane %v997, %v1023
    %v1026 = vunpack.c.l.s4 1966171168
    %v1027 = vunpack.c.0.s8 %v1026
    %v1028 = vlaneseq
    %v1029 = vshrl.u32 %v1028, 7
    %v1030 = vsub.s32 %v1027, %v1029
    %v1031 = vrot.slane %v999, %v1030
    %v1033 = vunpack.c.l.s4 1966171168
    %v1034 = vunpack.c.0.s8 %v1033
    %v1035 = vlaneseq
    %v1036 = vshrl.u32 %v1035, 7
    %v1037 = vsub.s32 %v1034, %v1036
    %v1038 = vrot.slane %v1000, %v1037
    %v1040 = vunpack.c.l.s4 1966171168
    %v1041 = vunpack.c.0.s8 %v1040
    %v1042 = vlaneseq
    %v1043 = vshrl.u32 %v1042, 7
    %v1044 = vsub.s32 %v1041, %v1043
    %v1045 = vrot.slane %v1002, %v1044
    %v1047 = vunpack.c.l.s4 1966171168
    %v1048 = vunpack.c.0.s8 %v1047
    %v1049 = vlaneseq
    %v1050 = vshrl.u32 %v1049, 7
    %v1051 = vsub.s32 %v1048, %v1050
    %v1052 = vrot.slane %v1001, %v1051
    %v1054 = vunpack.c.l.s4 1966171168
    %v1055 = vunpack.c.0.s8 %v1054
    %v1056 = vlaneseq
    %v1057 = vshrl.u32 %v1056, 7
    %v1058 = vsub.s32 %v1055, %v1057
    %v1059 = vrot.slane %v1003, %v1058
    %v1060 = vcombine.low %v1010, %v1038
    %v1061 = vcombine.high %v1010, %v1038
    %v1062 = vcombine.low %v1017, %v1045
    %v1063 = vcombine.high %v1017, %v1045
    %v1064 = vcombine.low %v1024, %v1052
    %v1065 = vcombine.high %v1024, %v1052
    %v1066 = vcombine.low %v1031, %v1059
    %v1067 = vcombine.high %v1031, %v1059
    %v1068 = vcombine.low %v857, %v861
    %v1069 = vcombine.high %v857, %v861
    %v1071 = vunpack.c.l.s4 1966171168
    %v1072 = vunpack.c.0.s8 %v1071
    %v1073 = vlaneseq
    %v1074 = vshrl.u32 %v1073, 7
    %v1075 = vsub.s32 %v1072, %v1074
    %v1076 = vrot.slane %v1068, %v1075
    %v1078 = vunpack.c.l.s4 1966171168
    %v1079 = vunpack.c.0.s8 %v1078
    %v1080 = vlaneseq
    %v1081 = vshrl.u32 %v1080, 7
    %v1082 = vsub.s32 %v1079, %v1081
    %v1083 = vrot.slane %v1069, %v1082
    %v1084 = vcombine.high %v1076, %v1076
    %v1085 = vcombine.high %v1083, %v1083
    %v1087 = vunpack.c.l.s4 1966171168
    %v1088 = vunpack.c.0.s8 %v1087
    %v1089 = vlaneseq
    %v1090 = vshrl.u32 %v1089, 7
    %v1091 = vsub.s32 %v1088, %v1090
    %v1092 = vrot.slane %v1076, %v1091
    %v1094 = vunpack.c.l.s4 1966171168
    %v1095 = vunpack.c.0.s8 %v1094
    %v1096 = vlaneseq
    %v1097 = vshrl.u32 %v1096, 7
    %v1098 = vsub.s32 %v1095, %v1097
    %v1099 = vrot.slane %v1083, %v1098
    %v1101 = vunpack.c.l.s4 1966171168
    %v1102 = vunpack.c.0.s8 %v1101
    %v1103 = vlaneseq
    %v1104 = vshrl.u32 %v1103, 7
    %v1105 = vsub.s32 %v1102, %v1104
    %v1106 = vrot.slane %v1084, %v1105
    %v1108 = vunpack.c.l.s4 1966171168
    %v1109 = vunpack.c.0.s8 %v1108
    %v1110 = vlaneseq
    %v1111 = vshrl.u32 %v1110, 7
    %v1112 = vsub.s32 %v1109, %v1111
    %v1113 = vrot.slane %v1085, %v1112
    %v1114 = vcombine.high %v1092, %v1092
    %v1115 = vcombine.high %v1099, %v1099
    %v1116 = vcombine.high %v1106, %v1106
    %v1117 = vcombine.high %v1113, %v1113
    %1134 = vmatprep.subr.mxu0 %v1064
    %1135 = vmatpush1.xpose.msra.mxu0 %v1060
    %1136 = vmatprep.subr.mxu0 %v1106
    %1137 = vmatpush1.xpose.msra.mxu0 %v1092
    %1138 = vmatprep.subr.mxu0 0.0
    %1139 = vmatpush1.xpose.msra.mxu0 0.0
    %1140 = vmatprep.subr.mxu0 0.0
    %1141 = vmatpush1.xpose.msra.mxu0 0.0
    %1142 = vmatprep.subr.mxu0 0.0
    %1143 = vmatpush1.xpose.msra.mxu0 0.0
    %1144 = vmatprep.subr.mxu0 0.0
    %1145 = vmatpush1.xpose.msra.mxu0 0.0
    %1146 = vmatprep.subr.mxu0 0.0
    %1147 = vmatpush1.xpose.msra.mxu0 0.0
    %1148 = vmatprep.subr.mxu0 0.0
    %1149 = vmatpush1.xpose.msra.mxu0 0.0
    %1150 = vmatprep.subr.mxu0 0.0
    %1151 = vmatpush1.xpose.msra.mxu0 0.0
    %1152 = vmatprep.subr.mxu0 0.0
    %1153 = vmatpush1.xpose.msra.mxu0 0.0
    %1154 = vmatprep.subr.mxu0 0.0
    %1155 = vmatpush1.xpose.msra.mxu0 0.0
    %1156 = vmatprep.subr.mxu0 0.0
    %1157 = vmatpush1.xpose.msra.mxu0 0.0
    %1158 = vmatprep.subr.mxu0 0.0
    %1159 = vmatpush1.xpose.msra.mxu0 0.0
    %1160 = vmatprep.subr.mxu0 0.0
    %1161 = vmatpush1.xpose.msra.mxu0 0.0
    %1162 = vmatprep.subr.mxu0 0.0
    %1163 = vmatpush1.xpose.msra.mxu0 0.0
    %1164 = vmatprep.subr.mxu0 0.0
    %1165 = vmatpush1.xpose.msra.mxu0 0.0
    %1166 = vmatprep.subr.mxu0 0.0
    %1167 = vmatpush1.xpose.msra.mxu0 0.0
    %1168 = vmatprep.subr.mxu0 0.0
    %1169 = vmatpush1.xpose.msra.mxu0 0.0
    %1170 = vmatprep.subr.mxu0 0.0
    %1171 = vmatpush1.xpose.msra.mxu0 0.0
    %1172 = vmatprep.subr.mxu0 0.0
    %1173 = vmatpush1.xpose.msra.mxu0 0.0
    %1174 = vmatprep.subr.mxu0 0.0
    %1175 = vmatpush1.xpose.msra.mxu0 0.0
    %1176 = vmatprep.subr.mxu0 0.0
    %1177 = vmatpush1.xpose.msra.mxu0 0.0
    %1178 = vmatprep.subr.mxu0 0.0
    %1179 = vmatpush1.xpose.msra.mxu0 0.0
    %1180 = vmatprep.subr.mxu0 0.0
    %1181 = vmatpush1.xpose.msra.mxu0 0.0
    %1182 = vmatprep.subr.mxu0 0.0
    %1183 = vmatpush1.xpose.msra.mxu0 0.0
    %1184 = vmatprep.subr.mxu0 0.0
    %1185 = vmatpush1.xpose.msra.mxu0 0.0
    %1186 = vmatprep.subr.mxu0 0.0
    %1187 = vmatpush1.xpose.msra.mxu0 0.0
    %1188 = vmatprep.subr.mxu0 0.0
    %1189 = vmatpush1.xpose.msra.mxu0 0.0
    %1190 = vmatprep.subr.mxu0 0.0
    %1191 = vmatpush1.xpose.msra.mxu0 0.0
    %1192 = vmatprep.subr.mxu0 0.0
    %1193 = vmatpush1.xpose.msra.mxu0 0.0
    %1194 = vmatprep.subr.mxu0 0.0
    %1195 = vmatpush1.xpose.msra.mxu0 0.0
    %1196 = vmatprep.subr.mxu0 0.0
    %1197 = vmatpush1.xpose.msra.mxu0 0.0
    %1198 = vmatprep.mubr.f32.mxu0 %v902
    %1199 = vmatmul.mubr.f32.gmra.mrb[0].mxu0 %v888
    %v1200 = vpop.f32.mrb[0].mxu0
    %v1201 = vadd.f32 0.0, %v1200
    %v1202 = vpop.f32.mrb[0].mxu0
    %1203 = vdwg.mxu0
    %1204 = vmatprep.subr.mxu0 %v1065
    %1205 = vmatpush1.xpose.msra.mxu0 %v1061
    %1206 = vmatprep.subr.mxu0 %v1116
    %1207 = vmatpush1.xpose.msra.mxu0 %v1114
    %1208 = vmatprep.subr.mxu0 0.0
    %1209 = vmatpush1.xpose.msra.mxu0 0.0
    %1210 = vmatprep.subr.mxu0 0.0
    %1211 = vmatpush1.xpose.msra.mxu0 0.0
    %1212 = vmatprep.subr.mxu0 0.0
    %1213 = vmatpush1.xpose.msra.mxu0 0.0
    %1214 = vmatprep.subr.mxu0 0.0
    %1215 = vmatpush1.xpose.msra.mxu0 0.0
    %1216 = vmatprep.subr.mxu0 0.0
    %1217 = vmatpush1.xpose.msra.mxu0 0.0
    %1218 = vmatprep.subr.mxu0 0.0
    %1219 = vmatpush1.xpose.msra.mxu0 0.0
    %1220 = vmatprep.subr.mxu0 0.0
    %1221 = vmatpush1.xpose.msra.mxu0 0.0
    %1222 = vmatprep.subr.mxu0 0.0
    %1223 = vmatpush1.xpose.msra.mxu0 0.0
    %1224 = vmatprep.subr.mxu0 0.0
    %1225 = vmatpush1.xpose.msra.mxu0 0.0
    %1226 = vmatprep.subr.mxu0 0.0
    %1227 = vmatpush1.xpose.msra.mxu0 0.0
    %1228 = vmatprep.subr.mxu0 0.0
    %1229 = vmatpush1.xpose.msra.mxu0 0.0
    %1230 = vmatprep.subr.mxu0 0.0
    %1231 = vmatpush1.xpose.msra.mxu0 0.0
    %1232 = vmatprep.subr.mxu0 0.0
    %1233 = vmatpush1.xpose.msra.mxu0 0.0
    %1234 = vmatprep.subr.mxu0 0.0
    %1235 = vmatpush1.xpose.msra.mxu0 0.0
    %1236 = vmatprep.subr.mxu0 0.0
    %1237 = vmatpush1.xpose.msra.mxu0 0.0
    %1238 = vmatprep.subr.mxu0 0.0
    %1239 = vmatpush1.xpose.msra.mxu0 0.0
    %1240 = vmatprep.subr.mxu0 0.0
    %1241 = vmatpush1.xpose.msra.mxu0 0.0
    %1242 = vmatprep.subr.mxu0 0.0
    %1243 = vmatpush1.xpose.msra.mxu0 0.0
    %1244 = vmatprep.subr.mxu0 0.0
    %1245 = vmatpush1.xpose.msra.mxu0 0.0
    %1246 = vmatprep.subr.mxu0 0.0
    %1247 = vmatpush1.xpose.msra.mxu0 0.0
    %1248 = vmatprep.subr.mxu0 0.0
    %1249 = vmatpush1.xpose.msra.mxu0 0.0
    %1250 = vmatprep.subr.mxu0 0.0
    %1251 = vmatpush1.xpose.msra.mxu0 0.0
    %1252 = vmatprep.subr.mxu0 0.0
    %1253 = vmatpush1.xpose.msra.mxu0 0.0
    %1254 = vmatprep.subr.mxu0 0.0
    %1255 = vmatpush1.xpose.msra.mxu0 0.0
    %1256 = vmatprep.subr.mxu0 0.0
    %1257 = vmatpush1.xpose.msra.mxu0 0.0
    %1258 = vmatprep.subr.mxu0 0.0
    %1259 = vmatpush1.xpose.msra.mxu0 0.0
    %1260 = vmatprep.subr.mxu0 0.0
    %1261 = vmatpush1.xpose.msra.mxu0 0.0
    %1262 = vmatprep.subr.mxu0 0.0
    %1263 = vmatpush1.xpose.msra.mxu0 0.0
    %1264 = vmatprep.subr.mxu0 0.0
    %1265 = vmatpush1.xpose.msra.mxu0 0.0
    %1266 = vmatprep.subr.mxu0 0.0
    %1267 = vmatpush1.xpose.msra.mxu0 0.0
    %1268 = vmatprep.mubr.f32.mxu0 %v912
    %1269 = vmatmul.mubr.f32.gmra.mrb[0].mxu0 %v910
    %v1270 = vpop.f32.mrb[0].mxu0
    %v1271 = vadd.f32 %v1201, %v1270
    %v1272 = vpop.f32.mrb[0].mxu0
    %1273 = vdwg.mxu0
    %1274 = vmatprep.subr.mxu0 %v1066
    %1275 = vmatpush1.xpose.msra.mxu0 %v1062
    %1276 = vmatprep.subr.mxu0 %v1113
    %1277 = vmatpush1.xpose.msra.mxu0 %v1099
    %1278 = vmatprep.subr.mxu0 0.0
    %1279 = vmatpush1.xpose.msra.mxu0 0.0
    %1280 = vmatprep.subr.mxu0 0.0
    %1281 = vmatpush1.xpose.msra.mxu0 0.0
    %1282 = vmatprep.subr.mxu0 0.0
    %1283 = vmatpush1.xpose.msra.mxu0 0.0
    %1284 = vmatprep.subr.mxu0 0.0
    %1285 = vmatpush1.xpose.msra.mxu0 0.0
    %1286 = vmatprep.subr.mxu0 0.0
    %1287 = vmatpush1.xpose.msra.mxu0 0.0
    %1288 = vmatprep.subr.mxu0 0.0
    %1289 = vmatpush1.xpose.msra.mxu0 0.0
    %1290 = vmatprep.subr.mxu0 0.0
    %1291 = vmatpush1.xpose.msra.mxu0 0.0
    %1292 = vmatprep.subr.mxu0 0.0
    %1293 = vmatpush1.xpose.msra.mxu0 0.0
    %1294 = vmatprep.subr.mxu0 0.0
    %1295 = vmatpush1.xpose.msra.mxu0 0.0
    %1296 = vmatprep.subr.mxu0 0.0
    %1297 = vmatpush1.xpose.msra.mxu0 0.0
    %1298 = vmatprep.subr.mxu0 0.0
    %1299 = vmatpush1.xpose.msra.mxu0 0.0
    %1300 = vmatprep.subr.mxu0 0.0
    %1301 = vmatpush1.xpose.msra.mxu0 0.0
    %1302 = vmatprep.subr.mxu0 0.0
    %1303 = vmatpush1.xpose.msra.mxu0 0.0
    %1304 = vmatprep.subr.mxu0 0.0
    %1305 = vmatpush1.xpose.msra.mxu0 0.0
    %1306 = vmatprep.subr.mxu0 0.0
    %1307 = vmatpush1.xpose.msra.mxu0 0.0
    %1308 = vmatprep.subr.mxu0 0.0
    %1309 = vmatpush1.xpose.msra.mxu0 0.0
    %1310 = vmatprep.subr.mxu0 0.0
    %1311 = vmatpush1.xpose.msra.mxu0 0.0
    %1312 = vmatprep.subr.mxu0 0.0
    %1313 = vmatpush1.xpose.msra.mxu0 0.0
    %1314 = vmatprep.subr.mxu0 0.0
    %1315 = vmatpush1.xpose.msra.mxu0 0.0
    %1316 = vmatprep.subr.mxu0 0.0
    %1317 = vmatpush1.xpose.msra.mxu0 0.0
    %1318 = vmatprep.subr.mxu0 0.0
    %1319 = vmatpush1.xpose.msra.mxu0 0.0
    %1320 = vmatprep.subr.mxu0 0.0
    %1321 = vmatpush1.xpose.msra.mxu0 0.0
    %1322 = vmatprep.subr.mxu0 0.0
    %1323 = vmatpush1.xpose.msra.mxu0 0.0
    %1324 = vmatprep.subr.mxu0 0.0
    %1325 = vmatpush1.xpose.msra.mxu0 0.0
    %1326 = vmatprep.subr.mxu0 0.0
    %1327 = vmatpush1.xpose.msra.mxu0 0.0
    %1328 = vmatprep.subr.mxu0 0.0
    %1329 = vmatpush1.xpose.msra.mxu0 0.0
    %1330 = vmatprep.subr.mxu0 0.0
    %1331 = vmatpush1.xpose.msra.mxu0 0.0
    %1332 = vmatprep.subr.mxu0 0.0
    %1333 = vmatpush1.xpose.msra.mxu0 0.0
    %1334 = vmatprep.subr.mxu0 0.0
    %1335 = vmatpush1.xpose.msra.mxu0 0.0
    %1336 = vmatprep.subr.mxu0 0.0
    %1337 = vmatpush1.xpose.msra.mxu0 0.0
    %1338 = vmatprep.mubr.f32.mxu0 %v909
    %1339 = vmatmul.mubr.f32.gmra.mrb[0].mxu0 %v895
    %v1340 = vpop.f32.mrb[0].mxu0
    %v1341 = vadd.f32 %v1271, %v1340
    %v1342 = vpop.f32.mrb[0].mxu0
    %1343 = vdwg.mxu0
    %1344 = vmatprep.subr.mxu0 %v1067
    %1345 = vmatpush1.xpose.msra.mxu0 %v1063
    %1346 = vmatprep.subr.mxu0 %v1117
    %1347 = vmatpush1.xpose.msra.mxu0 %v1115
    %1348 = vmatprep.subr.mxu0 0.0
    %1349 = vmatpush1.xpose.msra.mxu0 0.0
    %1350 = vmatprep.subr.mxu0 0.0
    %1351 = vmatpush1.xpose.msra.mxu0 0.0
    %1352 = vmatprep.subr.mxu0 0.0
    %1353 = vmatpush1.xpose.msra.mxu0 0.0
    %1354 = vmatprep.subr.mxu0 0.0
    %1355 = vmatpush1.xpose.msra.mxu0 0.0
    %1356 = vmatprep.subr.mxu0 0.0
    %1357 = vmatpush1.xpose.msra.mxu0 0.0
    %1358 = vmatprep.subr.mxu0 0.0
    %1359 = vmatpush1.xpose.msra.mxu0 0.0
    %1360 = vmatprep.subr.mxu0 0.0
    %1361 = vmatpush1.xpose.msra.mxu0 0.0
    %1362 = vmatprep.subr.mxu0 0.0
    %1363 = vmatpush1.xpose.msra.mxu0 0.0
    %1364 = vmatprep.subr.mxu0 0.0
    %1365 = vmatpush1.xpose.msra.mxu0 0.0
    %1366 = vmatprep.subr.mxu0 0.0
    %1367 = vmatpush1.xpose.msra.mxu0 0.0
    %1368 = vmatprep.subr.mxu0 0.0
    %1369 = vmatpush1.xpose.msra.mxu0 0.0
    %1370 = vmatprep.subr.mxu0 0.0
    %1371 = vmatpush1.xpose.msra.mxu0 0.0
    %1372 = vmatprep.subr.mxu0 0.0
    %1373 = vmatpush1.xpose.msra.mxu0 0.0
    %1374 = vmatprep.subr.mxu0 0.0
    %1375 = vmatpush1.xpose.msra.mxu0 0.0
    %1376 = vmatprep.subr.mxu0 0.0
    %1377 = vmatpush1.xpose.msra.mxu0 0.0
    %1378 = vmatprep.subr.mxu0 0.0
    %1379 = vmatpush1.xpose.msra.mxu0 0.0
    %1380 = vmatprep.subr.mxu0 0.0
    %1381 = vmatpush1.xpose.msra.mxu0 0.0
    %1382 = vmatprep.subr.mxu0 0.0
    %1383 = vmatpush1.xpose.msra.mxu0 0.0
    %1384 = vmatprep.subr.mxu0 0.0
    %1385 = vmatpush1.xpose.msra.mxu0 0.0
    %1386 = vmatprep.subr.mxu0 0.0
    %1387 = vmatpush1.xpose.msra.mxu0 0.0
    %1388 = vmatprep.subr.mxu0 0.0
    %1389 = vmatpush1.xpose.msra.mxu0 0.0
    %1390 = vmatprep.subr.mxu0 0.0
    %1391 = vmatpush1.xpose.msra.mxu0 0.0
    %1392 = vmatprep.subr.mxu0 0.0
    %1393 = vmatpush1.xpose.msra.mxu0 0.0
    %1394 = vmatprep.subr.mxu0 0.0
    %1395 = vmatpush1.xpose.msra.mxu0 0.0
    %1396 = vmatprep.subr.mxu0 0.0
    %1397 = vmatpush1.xpose.msra.mxu0 0.0
    %1398 = vmatprep.subr.mxu0 0.0
    %1399 = vmatpush1.xpose.msra.mxu0 0.0
    %1400 = vmatprep.subr.mxu0 0.0
    %1401 = vmatpush1.xpose.msra.mxu0 0.0
    %1402 = vmatprep.subr.mxu0 0.0
    %1403 = vmatpush1.xpose.msra.mxu0 0.0
    %1404 = vmatprep.subr.mxu0 0.0
    %1405 = vmatpush1.xpose.msra.mxu0 0.0
    %1406 = vmatprep.subr.mxu0 0.0
    %1407 = vmatpush1.xpose.msra.mxu0 0.0
    %1408 = vmatprep.mubr.f32.mxu0 %v913
    %1409 = vmatmul.mubr.f32.gmra.mrb[0].mxu0 %v911
    %v1410 = vpop.f32.mrb[0].mxu0
    %v1411 = vadd.f32 %v1341, %v1410
    %v1412 = vpop.f32.mrb[0].mxu0
    %1413 = vdwg.mxu0
    %v1414 = vadd.f32 %v815, %v1411
    %s1415 = scalar_lea.vmem [#allocation2], 1
    %v1416 = vld [vmem:[%s1415] ss:$8 sm:$0xf]
    %v1417 = vld [vmem:[%s1415] ss:$8 sm:$0xf0]
    %v1418 = vor.u32 %v1416, %v1417
    %s1419 = scalar_lea.vmem [#allocation2], 129
    %v1420 = vld [vmem:[%s1419] ss:$8 sm:$0xf]
    %v1421 = vld [vmem:[%s1419] ss:$8 sm:$0xf0]
    %v1422 = vor.u32 %v1420, %v1421
    %s1423 = scalar_lea.vmem %s3, 1
    %v1424 = vld [vmem:[%s1423] ss:$8 sm:$0xf]
    %v1425 = vld [vmem:[%s1423] ss:$8 sm:$0xf0]
    %v1426 = vor.u32 %v1424, %v1425
    %s1427 = scalar_lea.vmem %s3, 129
    %v1428 = vld [vmem:[%s1427] ss:$8 sm:$0xf]
    %v1429 = vld [vmem:[%s1427] ss:$8 sm:$0xf0]
    %v1430 = vor.u32 %v1428, %v1429
    %s1431 = scalar_lea.vmem %s3, 257
    %v1432 = vld [vmem:[%s1431] ss:$8 sm:$0xf]
    %v1433 = vld [vmem:[%s1431] ss:$8 sm:$0xf0]
    %v1434 = vor.u32 %v1432, %v1433
    %s1435 = scalar_lea.vmem %s3, 385
    %v1436 = vld [vmem:[%s1435] ss:$8 sm:$0xf]
    %v1437 = vld [vmem:[%s1435] ss:$8 sm:$0xf0]
    %v1438 = vor.u32 %v1436, %v1437
    %s1439 = scalar_lea.vmem %s3, 513
    %v1440 = vld [vmem:[%s1439] ss:$8 sm:$0xf]
    %v1441 = vld [vmem:[%s1439] ss:$8 sm:$0xf0]
    %v1442 = vor.u32 %v1440, %v1441
    %s1443 = scalar_lea.vmem %s3, 641
    %v1444 = vld [vmem:[%s1443] ss:$8 sm:$0xf]
    %v1445 = vld [vmem:[%s1443] ss:$8 sm:$0xf0]
    %v1446 = vor.u32 %v1444, %v1445
    %s1447 = scalar_lea.vmem %s3, 769
    %v1448 = vld [vmem:[%s1447] ss:$8 sm:$0xf]
    %v1449 = vld [vmem:[%s1447] ss:$8 sm:$0xf0]
    %v1450 = vor.u32 %v1448, %v1449
    %s1451 = scalar_lea.vmem %s3, 897
    %v1452 = vld [vmem:[%s1451] ss:$8 sm:$0xf]
    %v1453 = vld [vmem:[%s1451] ss:$8 sm:$0xf0]
    %v1454 = vor.u32 %v1452, %v1453
    %s1455 = scalar_lea.vmem %s3, 1025
    %v1456 = vld [vmem:[%s1455] ss:$8 sm:$0xf]
    %v1457 = vld [vmem:[%s1455] ss:$8 sm:$0xf0]
    %v1458 = vor.u32 %v1456, %v1457
    %s1459 = scalar_lea.vmem %s3, 1153
    %v1460 = vld [vmem:[%s1459] ss:$8 sm:$0xf]
    %v1461 = vld [vmem:[%s1459] ss:$8 sm:$0xf0]
    %v1462 = vor.u32 %v1460, %v1461
    %v1465 = vcombine.low %v1418, %v1422
    %v1466 = vcombine.high %v1418, %v1422
    %v1468 = vunpack.c.l.s4 1966171168
    %v1469 = vunpack.c.0.s8 %v1468
    %v1470 = vlaneseq
    %v1471 = vshrl.u32 %v1470, 7
    %v1472 = vsub.s32 %v1469, %v1471
    %v1473 = vrot.slane %v1465, %v1472
    %v1475 = vunpack.c.l.s4 1966171168
    %v1476 = vunpack.c.0.s8 %v1475
    %v1477 = vlaneseq
    %v1478 = vshrl.u32 %v1477, 7
    %v1479 = vsub.s32 %v1476, %v1478
    %v1480 = vrot.slane %v1466, %v1479
    %v1481 = vcombine.high %v1473, %v1473
    %v1482 = vcombine.high %v1480, %v1480
    %v1484 = vunpack.c.l.s4 1966171168
    %v1485 = vunpack.c.0.s8 %v1484
    %v1486 = vlaneseq
    %v1487 = vshrl.u32 %v1486, 7
    %v1488 = vsub.s32 %v1485, %v1487
    %v1489 = vrot.slane %v1473, %v1488
    %v1491 = vunpack.c.l.s4 1966171168
    %v1492 = vunpack.c.0.s8 %v1491
    %v1493 = vlaneseq
    %v1494 = vshrl.u32 %v1493, 7
    %v1495 = vsub.s32 %v1492, %v1494
    %v1496 = vrot.slane %v1480, %v1495
    %v1498 = vunpack.c.l.s4 1966171168
    %v1499 = vunpack.c.0.s8 %v1498
    %v1500 = vlaneseq
    %v1501 = vshrl.u32 %v1500, 7
    %v1502 = vsub.s32 %v1499, %v1501
    %v1503 = vrot.slane %v1481, %v1502
    %v1505 = vunpack.c.l.s4 1966171168
    %v1506 = vunpack.c.0.s8 %v1505
    %v1507 = vlaneseq
    %v1508 = vshrl.u32 %v1507, 7
    %v1509 = vsub.s32 %v1506, %v1508
    %v1510 = vrot.slane %v1482, %v1509
    %v1511 = vcombine.high %v1489, %v1489
    %v1512 = vcombine.high %v1496, %v1496
    %v1513 = vcombine.high %v1503, %v1503
    %v1514 = vcombine.high %v1510, %v1510
    %v1533 = vcombine.low %v1426, %v1430
    %v1534 = vcombine.high %v1426, %v1430
    %v1535 = vcombine.low %v1434, %v1438
    %v1536 = vcombine.high %v1434, %v1438
    %v1537 = vcombine.low %v1442, %v1446
    %v1538 = vcombine.high %v1442, %v1446
    %v1539 = vcombine.low %v1450, %v1454
    %v1540 = vcombine.high %v1450, %v1454
    %v1542 = vunpack.c.l.s4 1966171168
    %v1543 = vunpack.c.0.s8 %v1542
    %v1544 = vlaneseq
    %v1545 = vshrl.u32 %v1544, 7
    %v1546 = vsub.s32 %v1543, %v1545
    %v1547 = vrot.slane %v1533, %v1546
    %v1549 = vunpack.c.l.s4 1966171168
    %v1550 = vunpack.c.0.s8 %v1549
    %v1551 = vlaneseq
    %v1552 = vshrl.u32 %v1551, 7
    %v1553 = vsub.s32 %v1550, %v1552
    %v1554 = vrot.slane %v1534, %v1553
    %v1556 = vunpack.c.l.s4 1966171168
    %v1557 = vunpack.c.0.s8 %v1556
    %v1558 = vlaneseq
    %v1559 = vshrl.u32 %v1558, 7
    %v1560 = vsub.s32 %v1557, %v1559
    %v1561 = vrot.slane %v1535, %v1560
    %v1563 = vunpack.c.l.s4 1966171168
    %v1564 = vunpack.c.0.s8 %v1563
    %v1565 = vlaneseq
    %v1566 = vshrl.u32 %v1565, 7
    %v1567 = vsub.s32 %v1564, %v1566
    %v1568 = vrot.slane %v1536, %v1567
    %v1570 = vunpack.c.l.s4 1966171168
    %v1571 = vunpack.c.0.s8 %v1570
    %v1572 = vlaneseq
    %v1573 = vshrl.u32 %v1572, 7
    %v1574 = vsub.s32 %v1571, %v1573
    %v1575 = vrot.slane %v1537, %v1574
    %v1577 = vunpack.c.l.s4 1966171168
    %v1578 = vunpack.c.0.s8 %v1577
    %v1579 = vlaneseq
    %v1580 = vshrl.u32 %v1579, 7
    %v1581 = vsub.s32 %v1578, %v1580
    %v1582 = vrot.slane %v1538, %v1581
    %v1584 = vunpack.c.l.s4 1966171168
    %v1585 = vunpack.c.0.s8 %v1584
    %v1586 = vlaneseq
    %v1587 = vshrl.u32 %v1586, 7
    %v1588 = vsub.s32 %v1585, %v1587
    %v1589 = vrot.slane %v1539, %v1588
    %v1591 = vunpack.c.l.s4 1966171168
    %v1592 = vunpack.c.0.s8 %v1591
    %v1593 = vlaneseq
    %v1594 = vshrl.u32 %v1593, 7
    %v1595 = vsub.s32 %v1592, %v1594
    %v1596 = vrot.slane %v1540, %v1595
    %v1597 = vcombine.low %v1547, %v1561
    %v1598 = vcombine.high %v1547, %v1561
    %v1599 = vcombine.low %v1554, %v1568
    %v1600 = vcombine.high %v1554, %v1568
    %v1601 = vcombine.low %v1575, %v1589
    %v1602 = vcombine.high %v1575, %v1589
    %v1603 = vcombine.low %v1582, %v1596
    %v1604 = vcombine.high %v1582, %v1596
    %v1606 = vunpack.c.l.s4 1966171168
    %v1607 = vunpack.c.0.s8 %v1606
    %v1608 = vlaneseq
    %v1609 = vshrl.u32 %v1608, 7
    %v1610 = vsub.s32 %v1607, %v1609
    %v1611 = vrot.slane %v1597, %v1610
    %v1613 = vunpack.c.l.s4 1966171168
    %v1614 = vunpack.c.0.s8 %v1613
    %v1615 = vlaneseq
    %v1616 = vshrl.u32 %v1615, 7
    %v1617 = vsub.s32 %v1614, %v1616
    %v1618 = vrot.slane %v1599, %v1617
    %v1620 = vunpack.c.l.s4 1966171168
    %v1621 = vunpack.c.0.s8 %v1620
    %v1622 = vlaneseq
    %v1623 = vshrl.u32 %v1622, 7
    %v1624 = vsub.s32 %v1621, %v1623
    %v1625 = vrot.slane %v1598, %v1624
    %v1627 = vunpack.c.l.s4 1966171168
    %v1628 = vunpack.c.0.s8 %v1627
    %v1629 = vlaneseq
    %v1630 = vshrl.u32 %v1629, 7
    %v1631 = vsub.s32 %v1628, %v1630
    %v1632 = vrot.slane %v1600, %v1631
    %v1634 = vunpack.c.l.s4 1966171168
    %v1635 = vunpack.c.0.s8 %v1634
    %v1636 = vlaneseq
    %v1637 = vshrl.u32 %v1636, 7
    %v1638 = vsub.s32 %v1635, %v1637
    %v1639 = vrot.slane %v1601, %v1638
    %v1641 = vunpack.c.l.s4 1966171168
    %v1642 = vunpack.c.0.s8 %v1641
    %v1643 = vlaneseq
    %v1644 = vshrl.u32 %v1643, 7
    %v1645 = vsub.s32 %v1642, %v1644
    %v1646 = vrot.slane %v1603, %v1645
    %v1648 = vunpack.c.l.s4 1966171168
    %v1649 = vunpack.c.0.s8 %v1648
    %v1650 = vlaneseq
    %v1651 = vshrl.u32 %v1650, 7
    %v1652 = vsub.s32 %v1649, %v1651
    %v1653 = vrot.slane %v1602, %v1652
    %v1655 = vunpack.c.l.s4 1966171168
    %v1656 = vunpack.c.0.s8 %v1655
    %v1657 = vlaneseq
    %v1658 = vshrl.u32 %v1657, 7
    %v1659 = vsub.s32 %v1656, %v1658
    %v1660 = vrot.slane %v1604, %v1659
    %v1661 = vcombine.low %v1611, %v1639
    %v1662 = vcombine.high %v1611, %v1639
    %v1663 = vcombine.low %v1618, %v1646
    %v1664 = vcombine.high %v1618, %v1646
    %v1665 = vcombine.low %v1625, %v1653
    %v1666 = vcombine.high %v1625, %v1653
    %v1667 = vcombine.low %v1632, %v1660
    %v1668 = vcombine.high %v1632, %v1660
    %v1669 = vcombine.low %v1458, %v1462
    %v1670 = vcombine.high %v1458, %v1462
    %v1672 = vunpack.c.l.s4 1966171168
    %v1673 = vunpack.c.0.s8 %v1672
    %v1674 = vlaneseq
    %v1675 = vshrl.u32 %v1674, 7
    %v1676 = vsub.s32 %v1673, %v1675
    %v1677 = vrot.slane %v1669, %v1676
    %v1679 = vunpack.c.l.s4 1966171168
    %v1680 = vunpack.c.0.s8 %v1679
    %v1681 = vlaneseq
    %v1682 = vshrl.u32 %v1681, 7
    %v1683 = vsub.s32 %v1680, %v1682
    %v1684 = vrot.slane %v1670, %v1683
    %v1685 = vcombine.high %v1677, %v1677
    %v1686 = vcombine.high %v1684, %v1684
    %v1688 = vunpack.c.l.s4 1966171168
    %v1689 = vunpack.c.0.s8 %v1688
    %v1690 = vlaneseq
    %v1691 = vshrl.u32 %v1690, 7
    %v1692 = vsub.s32 %v1689, %v1691
    %v1693 = vrot.slane %v1677, %v1692
    %v1695 = vunpack.c.l.s4 1966171168
    %v1696 = vunpack.c.0.s8 %v1695
    %v1697 = vlaneseq
    %v1698 = vshrl.u32 %v1697, 7
    %v1699 = vsub.s32 %v1696, %v1698
    %v1700 = vrot.slane %v1684, %v1699
    %v1702 = vunpack.c.l.s4 1966171168
    %v1703 = vunpack.c.0.s8 %v1702
    %v1704 = vlaneseq
    %v1705 = vshrl.u32 %v1704, 7
    %v1706 = vsub.s32 %v1703, %v1705
    %v1707 = vrot.slane %v1685, %v1706
    %v1709 = vunpack.c.l.s4 1966171168
    %v1710 = vunpack.c.0.s8 %v1709
    %v1711 = vlaneseq
    %v1712 = vshrl.u32 %v1711, 7
    %v1713 = vsub.s32 %v1710, %v1712
    %v1714 = vrot.slane %v1686, %v1713
    %v1715 = vcombine.high %v1693, %v1693
    %v1716 = vcombine.high %v1700, %v1700
    %v1717 = vcombine.high %v1707, %v1707
    %v1718 = vcombine.high %v1714, %v1714
    %1735 = vmatprep.subr.mxu0 %v1665
    %1736 = vmatpush1.xpose.msra.mxu0 %v1661
    %1737 = vmatprep.subr.mxu0 %v1707
    %1738 = vmatpush1.xpose.msra.mxu0 %v1693
    %1739 = vmatprep.subr.mxu0 0.0
    %1740 = vmatpush1.xpose.msra.mxu0 0.0
    %1741 = vmatprep.subr.mxu0 0.0
    %1742 = vmatpush1.xpose.msra.mxu0 0.0
    %1743 = vmatprep.subr.mxu0 0.0
    %1744 = vmatpush1.xpose.msra.mxu0 0.0
    %1745 = vmatprep.subr.mxu0 0.0
    %1746 = vmatpush1.xpose.msra.mxu0 0.0
    %1747 = vmatprep.subr.mxu0 0.0
    %1748 = vmatpush1.xpose.msra.mxu0 0.0
    %1749 = vmatprep.subr.mxu0 0.0
    %1750 = vmatpush1.xpose.msra.mxu0 0.0
    %1751 = vmatprep.subr.mxu0 0.0
    %1752 = vmatpush1.xpose.msra.mxu0 0.0
    %1753 = vmatprep.subr.mxu0 0.0
    %1754 = vmatpush1.xpose.msra.mxu0 0.0
    %1755 = vmatprep.subr.mxu0 0.0
    %1756 = vmatpush1.xpose.msra.mxu0 0.0
    %1757 = vmatprep.subr.mxu0 0.0
    %1758 = vmatpush1.xpose.msra.mxu0 0.0
    %1759 = vmatprep.subr.mxu0 0.0
    %1760 = vmatpush1.xpose.msra.mxu0 0.0
    %1761 = vmatprep.subr.mxu0 0.0
    %1762 = vmatpush1.xpose.msra.mxu0 0.0
    %1763 = vmatprep.subr.mxu0 0.0
    %1764 = vmatpush1.xpose.msra.mxu0 0.0
    %1765 = vmatprep.subr.mxu0 0.0
    %1766 = vmatpush1.xpose.msra.mxu0 0.0
    %1767 = vmatprep.subr.mxu0 0.0
    %1768 = vmatpush1.xpose.msra.mxu0 0.0
    %1769 = vmatprep.subr.mxu0 0.0
    %1770 = vmatpush1.xpose.msra.mxu0 0.0
    %1771 = vmatprep.subr.mxu0 0.0
    %1772 = vmatpush1.xpose.msra.mxu0 0.0
    %1773 = vmatprep.subr.mxu0 0.0
    %1774 = vmatpush1.xpose.msra.mxu0 0.0
    %1775 = vmatprep.subr.mxu0 0.0
    %1776 = vmatpush1.xpose.msra.mxu0 0.0
    %1777 = vmatprep.subr.mxu0 0.0
    %1778 = vmatpush1.xpose.msra.mxu0 0.0
    %1779 = vmatprep.subr.mxu0 0.0
    %1780 = vmatpush1.xpose.msra.mxu0 0.0
    %1781 = vmatprep.subr.mxu0 0.0
    %1782 = vmatpush1.xpose.msra.mxu0 0.0
    %1783 = vmatprep.subr.mxu0 0.0
    %1784 = vmatpush1.xpose.msra.mxu0 0.0
    %1785 = vmatprep.subr.mxu0 0.0
    %1786 = vmatpush1.xpose.msra.mxu0 0.0
    %1787 = vmatprep.subr.mxu0 0.0
    %1788 = vmatpush1.xpose.msra.mxu0 0.0
    %1789 = vmatprep.subr.mxu0 0.0
    %1790 = vmatpush1.xpose.msra.mxu0 0.0
    %1791 = vmatprep.subr.mxu0 0.0
    %1792 = vmatpush1.xpose.msra.mxu0 0.0
    %1793 = vmatprep.subr.mxu0 0.0
    %1794 = vmatpush1.xpose.msra.mxu0 0.0
    %1795 = vmatprep.subr.mxu0 0.0
    %1796 = vmatpush1.xpose.msra.mxu0 0.0
    %1797 = vmatprep.subr.mxu0 0.0
    %1798 = vmatpush1.xpose.msra.mxu0 0.0
    %1799 = vmatprep.mubr.f32.mxu0 %v1503
    %1800 = vmatmul.mubr.f32.gmra.mrb[0].mxu0 %v1489
    %v1801 = vpop.f32.mrb[0].mxu0
    %v1802 = vadd.f32 0.0, %v1801
    %v1803 = vpop.f32.mrb[0].mxu0
    %1804 = vdwg.mxu0
    %1805 = vmatprep.subr.mxu0 %v1666
    %1806 = vmatpush1.xpose.msra.mxu0 %v1662
    %1807 = vmatprep.subr.mxu0 %v1717
    %1808 = vmatpush1.xpose.msra.mxu0 %v1715
    %1809 = vmatprep.subr.mxu0 0.0
    %1810 = vmatpush1.xpose.msra.mxu0 0.0
    %1811 = vmatprep.subr.mxu0 0.0
    %1812 = vmatpush1.xpose.msra.mxu0 0.0
    %1813 = vmatprep.subr.mxu0 0.0
    %1814 = vmatpush1.xpose.msra.mxu0 0.0
    %1815 = vmatprep.subr.mxu0 0.0
    %1816 = vmatpush1.xpose.msra.mxu0 0.0
    %1817 = vmatprep.subr.mxu0 0.0
    %1818 = vmatpush1.xpose.msra.mxu0 0.0
    %1819 = vmatprep.subr.mxu0 0.0
    %1820 = vmatpush1.xpose.msra.mxu0 0.0
    %1821 = vmatprep.subr.mxu0 0.0
    %1822 = vmatpush1.xpose.msra.mxu0 0.0
    %1823 = vmatprep.subr.mxu0 0.0
    %1824 = vmatpush1.xpose.msra.mxu0 0.0
    %1825 = vmatprep.subr.mxu0 0.0
    %1826 = vmatpush1.xpose.msra.mxu0 0.0
    %1827 = vmatprep.subr.mxu0 0.0
    %1828 = vmatpush1.xpose.msra.mxu0 0.0
    %1829 = vmatprep.subr.mxu0 0.0
    %1830 = vmatpush1.xpose.msra.mxu0 0.0
    %1831 = vmatprep.subr.mxu0 0.0
    %1832 = vmatpush1.xpose.msra.mxu0 0.0
    %1833 = vmatprep.subr.mxu0 0.0
    %1834 = vmatpush1.xpose.msra.mxu0 0.0
    %1835 = vmatprep.subr.mxu0 0.0
    %1836 = vmatpush1.xpose.msra.mxu0 0.0
    %1837 = vmatprep.subr.mxu0 0.0
    %1838 = vmatpush1.xpose.msra.mxu0 0.0
    %1839 = vmatprep.subr.mxu0 0.0
    %1840 = vmatpush1.xpose.msra.mxu0 0.0
    %1841 = vmatprep.subr.mxu0 0.0
    %1842 = vmatpush1.xpose.msra.mxu0 0.0
    %1843 = vmatprep.subr.mxu0 0.0
    %1844 = vmatpush1.xpose.msra.mxu0 0.0
    %1845 = vmatprep.subr.mxu0 0.0
    %1846 = vmatpush1.xpose.msra.mxu0 0.0
    %1847 = vmatprep.subr.mxu0 0.0
    %1848 = vmatpush1.xpose.msra.mxu0 0.0
    %1849 = vmatprep.subr.mxu0 0.0
    %1850 = vmatpush1.xpose.msra.mxu0 0.0
    %1851 = vmatprep.subr.mxu0 0.0
    %1852 = vmatpush1.xpose.msra.mxu0 0.0
    %1853 = vmatprep.subr.mxu0 0.0
    %1854 = vmatpush1.xpose.msra.mxu0 0.0
    %1855 = vmatprep.subr.mxu0 0.0
    %1856 = vmatpush1.xpose.msra.mxu0 0.0
    %1857 = vmatprep.subr.mxu0 0.0
    %1858 = vmatpush1.xpose.msra.mxu0 0.0
    %1859 = vmatprep.subr.mxu0 0.0
    %1860 = vmatpush1.xpose.msra.mxu0 0.0
    %1861 = vmatprep.subr.mxu0 0.0
    %1862 = vmatpush1.xpose.msra.mxu0 0.0
    %1863 = vmatprep.subr.mxu0 0.0
    %1864 = vmatpush1.xpose.msra.mxu0 0.0
    %1865 = vmatprep.subr.mxu0 0.0
    %1866 = vmatpush1.xpose.msra.mxu0 0.0
    %1867 = vmatprep.subr.mxu0 0.0
    %1868 = vmatpush1.xpose.msra.mxu0 0.0
    %1869 = vmatprep.mubr.f32.mxu0 %v1513
    %1870 = vmatmul.mubr.f32.gmra.mrb[0].mxu0 %v1511
    %v1871 = vpop.f32.mrb[0].mxu0
    %v1872 = vadd.f32 %v1802, %v1871
    %v1873 = vpop.f32.mrb[0].mxu0
    %1874 = vdwg.mxu0
    %1875 = vmatprep.subr.mxu0 %v1667
    %1876 = vmatpush1.xpose.msra.mxu0 %v1663
    %1877 = vmatprep.subr.mxu0 %v1714
    %1878 = vmatpush1.xpose.msra.mxu0 %v1700
    %1879 = vmatprep.subr.mxu0 0.0
    %1880 = vmatpush1.xpose.msra.mxu0 0.0
    %1881 = vmatprep.subr.mxu0 0.0
    %1882 = vmatpush1.xpose.msra.mxu0 0.0
    %1883 = vmatprep.subr.mxu0 0.0
    %1884 = vmatpush1.xpose.msra.mxu0 0.0
    %1885 = vmatprep.subr.mxu0 0.0
    %1886 = vmatpush1.xpose.msra.mxu0 0.0
    %1887 = vmatprep.subr.mxu0 0.0
    %1888 = vmatpush1.xpose.msra.mxu0 0.0
    %1889 = vmatprep.subr.mxu0 0.0
    %1890 = vmatpush1.xpose.msra.mxu0 0.0
    %1891 = vmatprep.subr.mxu0 0.0
    %1892 = vmatpush1.xpose.msra.mxu0 0.0
    %1893 = vmatprep.subr.mxu0 0.0
    %1894 = vmatpush1.xpose.msra.mxu0 0.0
    %1895 = vmatprep.subr.mxu0 0.0
    %1896 = vmatpush1.xpose.msra.mxu0 0.0
    %1897 = vmatprep.subr.mxu0 0.0
    %1898 = vmatpush1.xpose.msra.mxu0 0.0
    %1899 = vmatprep.subr.mxu0 0.0
    %1900 = vmatpush1.xpose.msra.mxu0 0.0
    %1901 = vmatprep.subr.mxu0 0.0
    %1902 = vmatpush1.xpose.msra.mxu0 0.0
    %1903 = vmatprep.subr.mxu0 0.0
    %1904 = vmatpush1.xpose.msra.mxu0 0.0
    %1905 = vmatprep.subr.mxu0 0.0
    %1906 = vmatpush1.xpose.msra.mxu0 0.0
    %1907 = vmatprep.subr.mxu0 0.0
    %1908 = vmatpush1.xpose.msra.mxu0 0.0
    %1909 = vmatprep.subr.mxu0 0.0
    %1910 = vmatpush1.xpose.msra.mxu0 0.0
    %1911 = vmatprep.subr.mxu0 0.0
    %1912 = vmatpush1.xpose.msra.mxu0 0.0
    %1913 = vmatprep.subr.mxu0 0.0
    %1914 = vmatpush1.xpose.msra.mxu0 0.0
    %1915 = vmatprep.subr.mxu0 0.0
    %1916 = vmatpush1.xpose.msra.mxu0 0.0
    %1917 = vmatprep.subr.mxu0 0.0
    %1918 = vmatpush1.xpose.msra.mxu0 0.0
    %1919 = vmatprep.subr.mxu0 0.0
    %1920 = vmatpush1.xpose.msra.mxu0 0.0
    %1921 = vmatprep.subr.mxu0 0.0
    %1922 = vmatpush1.xpose.msra.mxu0 0.0
    %1923 = vmatprep.subr.mxu0 0.0
    %1924 = vmatpush1.xpose.msra.mxu0 0.0
    %1925 = vmatprep.subr.mxu0 0.0
    %1926 = vmatpush1.xpose.msra.mxu0 0.0
    %1927 = vmatprep.subr.mxu0 0.0
    %1928 = vmatpush1.xpose.msra.mxu0 0.0
    %1929 = vmatprep.subr.mxu0 0.0
    %1930 = vmatpush1.xpose.msra.mxu0 0.0
    %1931 = vmatprep.subr.mxu0 0.0
    %1932 = vmatpush1.xpose.msra.mxu0 0.0
    %1933 = vmatprep.subr.mxu0 0.0
    %1934 = vmatpush1.xpose.msra.mxu0 0.0
    %1935 = vmatprep.subr.mxu0 0.0
    %1936 = vmatpush1.xpose.msra.mxu0 0.0
    %1937 = vmatprep.subr.mxu0 0.0
    %1938 = vmatpush1.xpose.msra.mxu0 0.0
    %1939 = vmatprep.mubr.f32.mxu0 %v1510
    %1940 = vmatmul.mubr.f32.gmra.mrb[0].mxu0 %v1496
    %v1941 = vpop.f32.mrb[0].mxu0
    %v1942 = vadd.f32 %v1872, %v1941
    %v1943 = vpop.f32.mrb[0].mxu0
    %1944 = vdwg.mxu0
    %1945 = vmatprep.subr.mxu0 %v1668
    %1946 = vmatpush1.xpose.msra.mxu0 %v1664
    %1947 = vmatprep.subr.mxu0 %v1718
    %1948 = vmatpush1.xpose.msra.mxu0 %v1716
    %1949 = vmatprep.subr.mxu0 0.0
    %1950 = vmatpush1.xpose.msra.mxu0 0.0
    %1951 = vmatprep.subr.mxu0 0.0
    %1952 = vmatpush1.xpose.msra.mxu0 0.0
    %1953 = vmatprep.subr.mxu0 0.0
    %1954 = vmatpush1.xpose.msra.mxu0 0.0
    %1955 = vmatprep.subr.mxu0 0.0
    %1956 = vmatpush1.xpose.msra.mxu0 0.0
    %1957 = vmatprep.subr.mxu0 0.0
    %1958 = vmatpush1.xpose.msra.mxu0 0.0
    %1959 = vmatprep.subr.mxu0 0.0
    %1960 = vmatpush1.xpose.msra.mxu0 0.0
    %1961 = vmatprep.subr.mxu0 0.0
    %1962 = vmatpush1.xpose.msra.mxu0 0.0
    %1963 = vmatprep.subr.mxu0 0.0
    %1964 = vmatpush1.xpose.msra.mxu0 0.0
    %1965 = vmatprep.subr.mxu0 0.0
    %1966 = vmatpush1.xpose.msra.mxu0 0.0
    %1967 = vmatprep.subr.mxu0 0.0
    %1968 = vmatpush1.xpose.msra.mxu0 0.0
    %1969 = vmatprep.subr.mxu0 0.0
    %1970 = vmatpush1.xpose.msra.mxu0 0.0
    %1971 = vmatprep.subr.mxu0 0.0
    %1972 = vmatpush1.xpose.msra.mxu0 0.0
    %1973 = vmatprep.subr.mxu0 0.0
    %1974 = vmatpush1.xpose.msra.mxu0 0.0
    %1975 = vmatprep.subr.mxu0 0.0
    %1976 = vmatpush1.xpose.msra.mxu0 0.0
    %1977 = vmatprep.subr.mxu0 0.0
    %1978 = vmatpush1.xpose.msra.mxu0 0.0
    %1979 = vmatprep.subr.mxu0 0.0
    %1980 = vmatpush1.xpose.msra.mxu0 0.0
    %1981 = vmatprep.subr.mxu0 0.0
    %1982 = vmatpush1.xpose.msra.mxu0 0.0
    %1983 = vmatprep.subr.mxu0 0.0
    %1984 = vmatpush1.xpose.msra.mxu0 0.0
    %1985 = vmatprep.subr.mxu0 0.0
    %1986 = vmatpush1.xpose.msra.mxu0 0.0
    %1987 = vmatprep.subr.mxu0 0.0
    %1988 = vmatpush1.xpose.msra.mxu0 0.0
    %1989 = vmatprep.subr.mxu0 0.0
    %1990 = vmatpush1.xpose.msra.mxu0 0.0
    %1991 = vmatprep.subr.mxu0 0.0
    %1992 = vmatpush1.xpose.msra.mxu0 0.0
    %1993 = vmatprep.subr.mxu0 0.0
    %1994 = vmatpush1.xpose.msra.mxu0 0.0
    %1995 = vmatprep.subr.mxu0 0.0
    %1996 = vmatpush1.xpose.msra.mxu0 0.0
    %1997 = vmatprep.subr.mxu0 0.0
    %1998 = vmatpush1.xpose.msra.mxu0 0.0
    %1999 = vmatprep.subr.mxu0 0.0
    %2000 = vmatpush1.xpose.msra.mxu0 0.0
    %2001 = vmatprep.subr.mxu0 0.0
    %2002 = vmatpush1.xpose.msra.mxu0 0.0
    %2003 = vmatprep.subr.mxu0 0.0
    %2004 = vmatpush1.xpose.msra.mxu0 0.0
    %2005 = vmatprep.subr.mxu0 0.0
    %2006 = vmatpush1.xpose.msra.mxu0 0.0
    %2007 = vmatprep.subr.mxu0 0.0
    %2008 = vmatpush1.xpose.msra.mxu0 0.0
    %2009 = vmatprep.mubr.f32.mxu0 %v1514
    %2010 = vmatmul.mubr.f32.gmra.mrb[0].mxu0 %v1512
    %v2011 = vpop.f32.mrb[0].mxu0
    %v2012 = vadd.f32 %v1942, %v2011
    %v2013 = vpop.f32.mrb[0].mxu0
    %2014 = vdwg.mxu0
    %v2015 = vadd.f32 %v1414, %v2012
    %s2016 = scalar_lea.vmem [#allocation2], 2
    %v2017 = vld [vmem:[%s2016] ss:$8 sm:$0xf]
    %v2018 = vld [vmem:[%s2016] ss:$8 sm:$0xf0]
    %v2019 = vor.u32 %v2017, %v2018
    %s2020 = scalar_lea.vmem [#allocation2], 130
    %v2021 = vld [vmem:[%s2020] ss:$8 sm:$0xf]
    %v2022 = vld [vmem:[%s2020] ss:$8 sm:$0xf0]
    %v2023 = vor.u32 %v2021, %v2022
    %s2024 = scalar_lea.vmem %s3, 2
    %v2025 = vld [vmem:[%s2024] ss:$8 sm:$0xf]
    %v2026 = vld [vmem:[%s2024] ss:$8 sm:$0xf0]
    %v2027 = vor.u32 %v2025, %v2026
    %s2028 = scalar_lea.vmem %s3, 130
    %v2029 = vld [vmem:[%s2028] ss:$8 sm:$0xf]
    %v2030 = vld [vmem:[%s2028] ss:$8 sm:$0xf0]
    %v2031 = vor.u32 %v2029, %v2030
    %s2032 = scalar_lea.vmem %s3, 258
    %v2033 = vld [vmem:[%s2032] ss:$8 sm:$0xf]
    %v2034 = vld [vmem:[%s2032] ss:$8 sm:$0xf0]
    %v2035 = vor.u32 %v2033, %v2034
    %s2036 = scalar_lea.vmem %s3, 386
    %v2037 = vld [vmem:[%s2036] ss:$8 sm:$0xf]
    %v2038 = vld [vmem:[%s2036] ss:$8 sm:$0xf0]
    %v2039 = vor.u32 %v2037, %v2038
    %s2040 = scalar_lea.vmem %s3, 514
    %v2041 = vld [vmem:[%s2040] ss:$8 sm:$0xf]
    %v2042 = vld [vmem:[%s2040] ss:$8 sm:$0xf0]
    %v2043 = vor.u32 %v2041, %v2042
    %s2044 = scalar_lea.vmem %s3, 642
    %v2045 = vld [vmem:[%s2044] ss:$8 sm:$0xf]
    %v2046 = vld [vmem:[%s2044] ss:$8 sm:$0xf0]
    %v2047 = vor.u32 %v2045, %v2046
    %s2048 = scalar_lea.vmem %s3, 770
    %v2049 = vld [vmem:[%s2048] ss:$8 sm:$0xf]
    %v2050 = vld [vmem:[%s2048] ss:$8 sm:$0xf0]
    %v2051 = vor.u32 %v2049, %v2050
    %s2052 = scalar_lea.vmem %s3, 898
    %v2053 = vld [vmem:[%s2052] ss:$8 sm:$0xf]
    %v2054 = vld [vmem:[%s2052] ss:$8 sm:$0xf0]
    %v2055 = vor.u32 %v2053, %v2054
    %s2056 = scalar_lea.vmem %s3, 1026
    %v2057 = vld [vmem:[%s2056] ss:$8 sm:$0xf]
    %v2058 = vld [vmem:[%s2056] ss:$8 sm:$0xf0]
    %v2059 = vor.u32 %v2057, %v2058
    %s2060 = scalar_lea.vmem %s3, 1154
    %v2061 = vld [vmem:[%s2060] ss:$8 sm:$0xf]
    %v2062 = vld [vmem:[%s2060] ss:$8 sm:$0xf0]
    %v2063 = vor.u32 %v2061, %v2062
    %v2066 = vcombine.low %v2019, %v2023
    %v2067 = vcombine.high %v2019, %v2023
    %v2069 = vunpack.c.l.s4 1966171168
    %v2070 = vunpack.c.0.s8 %v2069
    %v2071 = vlaneseq
    %v2072 = vshrl.u32 %v2071, 7
    %v2073 = vsub.s32 %v2070, %v2072
    %v2074 = vrot.slane %v2066, %v2073
    %v2076 = vunpack.c.l.s4 1966171168
    %v2077 = vunpack.c.0.s8 %v2076
    %v2078 = vlaneseq
    %v2079 = vshrl.u32 %v2078, 7
    %v2080 = vsub.s32 %v2077, %v2079
    %v2081 = vrot.slane %v2067, %v2080
    %v2082 = vcombine.high %v2074, %v2074
    %v2083 = vcombine.high %v2081, %v2081
    %v2085 = vunpack.c.l.s4 1966171168
    %v2086 = vunpack.c.0.s8 %v2085
    %v2087 = vlaneseq
    %v2088 = vshrl.u32 %v2087, 7
    %v2089 = vsub.s32 %v2086, %v2088
    %v2090 = vrot.slane %v2074, %v2089
    %v2092 = vunpack.c.l.s4 1966171168
    %v2093 = vunpack.c.0.s8 %v2092
    %v2094 = vlaneseq
    %v2095 = vshrl.u32 %v2094, 7
    %v2096 = vsub.s32 %v2093, %v2095
    %v2097 = vrot.slane %v2081, %v2096
    %v2099 = vunpack.c.l.s4 1966171168
    %v2100 = vunpack.c.0.s8 %v2099
    %v2101 = vlaneseq
    %v2102 = vshrl.u32 %v2101, 7
    %v2103 = vsub.s32 %v2100, %v2102
    %v2104 = vrot.slane %v2082, %v2103
    %v2106 = vunpack.c.l.s4 1966171168
    %v2107 = vunpack.c.0.s8 %v2106
    %v2108 = vlaneseq
    %v2109 = vshrl.u32 %v2108, 7
    %v2110 = vsub.s32 %v2107, %v2109
    %v2111 = vrot.slane %v2083, %v2110
    %v2112 = vcombine.high %v2090, %v2090
    %v2113 = vcombine.high %v2097, %v2097
    %v2114 = vcombine.high %v2104, %v2104
    %v2115 = vcombine.high %v2111, %v2111
    %v2134 = vcombine.low %v2027, %v2031
    %v2135 = vcombine.high %v2027, %v2031
    %v2136 = vcombine.low %v2035, %v2039
    %v2137 = vcombine.high %v2035, %v2039
    %v2138 = vcombine.low %v2043, %v2047
    %v2139 = vcombine.high %v2043, %v2047
    %v2140 = vcombine.low %v2051, %v2055
    %v2141 = vcombine.high %v2051, %v2055
    %v2143 = vunpack.c.l.s4 1966171168
    %v2144 = vunpack.c.0.s8 %v2143
    %v2145 = vlaneseq
    %v2146 = vshrl.u32 %v2145, 7
    %v2147 = vsub.s32 %v2144, %v2146
    %v2148 = vrot.slane %v2134, %v2147
    %v2150 = vunpack.c.l.s4 1966171168
    %v2151 = vunpack.c.0.s8 %v2150
    %v2152 = vlaneseq
    %v2153 = vshrl.u32 %v2152, 7
    %v2154 = vsub.s32 %v2151, %v2153
    %v2155 = vrot.slane %v2135, %v2154
    %v2157 = vunpack.c.l.s4 1966171168
    %v2158 = vunpack.c.0.s8 %v2157
    %v2159 = vlaneseq
    %v2160 = vshrl.u32 %v2159, 7
    %v2161 = vsub.s32 %v2158, %v2160
    %v2162 = vrot.slane %v2136, %v2161
    %v2164 = vunpack.c.l.s4 1966171168
    %v2165 = vunpack.c.0.s8 %v2164
    %v2166 = vlaneseq
    %v2167 = vshrl.u32 %v2166, 7
    %v2168 = vsub.s32 %v2165, %v2167
    %v2169 = vrot.slane %v2137, %v2168
    %v2171 = vunpack.c.l.s4 1966171168
    %v2172 = vunpack.c.0.s8 %v2171
    %v2173 = vlaneseq
    %v2174 = vshrl.u32 %v2173, 7
    %v2175 = vsub.s32 %v2172, %v2174
    %v2176 = vrot.slane %v2138, %v2175
    %v2178 = vunpack.c.l.s4 1966171168
    %v2179 = vunpack.c.0.s8 %v2178
    %v2180 = vlaneseq
    %v2181 = vshrl.u32 %v2180, 7
    %v2182 = vsub.s32 %v2179, %v2181
    %v2183 = vrot.slane %v2139, %v2182
    %v2185 = vunpack.c.l.s4 1966171168
    %v2186 = vunpack.c.0.s8 %v2185
    %v2187 = vlaneseq
    %v2188 = vshrl.u32 %v2187, 7
    %v2189 = vsub.s32 %v2186, %v2188
    %v2190 = vrot.slane %v2140, %v2189
    %v2192 = vunpack.c.l.s4 1966171168
    %v2193 = vunpack.c.0.s8 %v2192
    %v2194 = vlaneseq
    %v2195 = vshrl.u32 %v2194, 7
    %v2196 = vsub.s32 %v2193, %v2195
    %v2197 = vrot.slane %v2141, %v2196
    %v2198 = vcombine.low %v2148, %v2162
    %v2199 = vcombine.high %v2148, %v2162
    %v2200 = vcombine.low %v2155, %v2169
    %v2201 = vcombine.high %v2155, %v2169
    %v2202 = vcombine.low %v2176, %v2190
    %v2203 = vcombine.high %v2176, %v2190
    %v2204 = vcombine.low %v2183, %v2197
    %v2205 = vcombine.high %v2183, %v2197
    %v2207 = vunpack.c.l.s4 1966171168
    %v2208 = vunpack.c.0.s8 %v2207
    %v2209 = vlaneseq
    %v2210 = vshrl.u32 %v2209, 7
    %v2211 = vsub.s32 %v2208, %v2210
    %v2212 = vrot.slane %v2198, %v2211
    %v2214 = vunpack.c.l.s4 1966171168
    %v2215 = vunpack.c.0.s8 %v2214
    %v2216 = vlaneseq
    %v2217 = vshrl.u32 %v2216, 7
    %v2218 = vsub.s32 %v2215, %v2217
    %v2219 = vrot.slane %v2200, %v2218
    %v2221 = vunpack.c.l.s4 1966171168
    %v2222 = vunpack.c.0.s8 %v2221
    %v2223 = vlaneseq
    %v2224 = vshrl.u32 %v2223, 7
    %v2225 = vsub.s32 %v2222, %v2224
    %v2226 = vrot.slane %v2199, %v2225
    %v2228 = vunpack.c.l.s4 1966171168
    %v2229 = vunpack.c.0.s8 %v2228
    %v2230 = vlaneseq
    %v2231 = vshrl.u32 %v2230, 7
    %v2232 = vsub.s32 %v2229, %v2231
    %v2233 = vrot.slane %v2201, %v2232
    %v2235 = vunpack.c.l.s4 1966171168
    %v2236 = vunpack.c.0.s8 %v2235
    %v2237 = vlaneseq
    %v2238 = vshrl.u32 %v2237, 7
    %v2239 = vsub.s32 %v2236, %v2238
    %v2240 = vrot.slane %v2202, %v2239
    %v2242 = vunpack.c.l.s4 1966171168
    %v2243 = vunpack.c.0.s8 %v2242
    %v2244 = vlaneseq
    %v2245 = vshrl.u32 %v2244, 7
    %v2246 = vsub.s32 %v2243, %v2245
    %v2247 = vrot.slane %v2204, %v2246
    %v2249 = vunpack.c.l.s4 1966171168
    %v2250 = vunpack.c.0.s8 %v2249
    %v2251 = vlaneseq
    %v2252 = vshrl.u32 %v2251, 7
    %v2253 = vsub.s32 %v2250, %v2252
    %v2254 = vrot.slane %v2203, %v2253
    %v2256 = vunpack.c.l.s4 1966171168
    %v2257 = vunpack.c.0.s8 %v2256
    %v2258 = vlaneseq
    %v2259 = vshrl.u32 %v2258, 7
    %v2260 = vsub.s32 %v2257, %v2259
    %v2261 = vrot.slane %v2205, %v2260
    %v2262 = vcombine.low %v2212, %v2240
    %v2263 = vcombine.high %v2212, %v2240
    %v2264 = vcombine.low %v2219, %v2247
    %v2265 = vcombine.high %v2219, %v2247
    %v2266 = vcombine.low %v2226, %v2254
    %v2267 = vcombine.high %v2226, %v2254
    %v2268 = vcombine.low %v2233, %v2261
    %v2269 = vcombine.high %v2233, %v2261
    %v2270 = vcombine.low %v2059, %v2063
    %v2271 = vcombine.high %v2059, %v2063
    %v2273 = vunpack.c.l.s4 1966171168
    %v2274 = vunpack.c.0.s8 %v2273
    %v2275 = vlaneseq
    %v2276 = vshrl.u32 %v2275, 7
    %v2277 = vsub.s32 %v2274, %v2276
    %v2278 = vrot.slane %v2270, %v2277
    %v2280 = vunpack.c.l.s4 1966171168
    %v2281 = vunpack.c.0.s8 %v2280
    %v2282 = vlaneseq
    %v2283 = vshrl.u32 %v2282, 7
    %v2284 = vsub.s32 %v2281, %v2283
    %v2285 = vrot.slane %v2271, %v2284
    %v2286 = vcombine.high %v2278, %v2278
    %v2287 = vcombine.high %v2285, %v2285
    %v2289 = vunpack.c.l.s4 1966171168
    %v2290 = vunpack.c.0.s8 %v2289
    %v2291 = vlaneseq
    %v2292 = vshrl.u32 %v2291, 7
    %v2293 = vsub.s32 %v2290, %v2292
    %v2294 = vrot.slane %v2278, %v2293
    %v2296 = vunpack.c.l.s4 1966171168
    %v2297 = vunpack.c.0.s8 %v2296
    %v2298 = vlaneseq
    %v2299 = vshrl.u32 %v2298, 7
    %v2300 = vsub.s32 %v2297, %v2299
    %v2301 = vrot.slane %v2285, %v2300
    %v2303 = vunpack.c.l.s4 1966171168
    %v2304 = vunpack.c.0.s8 %v2303
    %v2305 = vlaneseq
    %v2306 = vshrl.u32 %v2305, 7
    %v2307 = vsub.s32 %v2304, %v2306
    %v2308 = vrot.slane %v2286, %v2307
    %v2310 = vunpack.c.l.s4 1966171168
    %v2311 = vunpack.c.0.s8 %v2310
    %v2312 = vlaneseq
    %v2313 = vshrl.u32 %v2312, 7
    %v2314 = vsub.s32 %v2311, %v2313
    %v2315 = vrot.slane %v2287, %v2314
    %v2316 = vcombine.high %v2294, %v2294
    %v2317 = vcombine.high %v2301, %v2301
    %v2318 = vcombine.high %v2308, %v2308
    %v2319 = vcombine.high %v2315, %v2315
    %2336 = vmatprep.subr.mxu0 %v2266
    %2337 = vmatpush1.xpose.msra.mxu0 %v2262
    %2338 = vmatprep.subr.mxu0 %v2308
    %2339 = vmatpush1.xpose.msra.mxu0 %v2294
    %2340 = vmatprep.subr.mxu0 0.0
    %2341 = vmatpush1.xpose.msra.mxu0 0.0
    %2342 = vmatprep.subr.mxu0 0.0
    %2343 = vmatpush1.xpose.msra.mxu0 0.0
    %2344 = vmatprep.subr.mxu0 0.0
    %2345 = vmatpush1.xpose.msra.mxu0 0.0
    %2346 = vmatprep.subr.mxu0 0.0
    %2347 = vmatpush1.xpose.msra.mxu0 0.0
    %2348 = vmatprep.subr.mxu0 0.0
    %2349 = vmatpush1.xpose.msra.mxu0 0.0
    %2350 = vmatprep.subr.mxu0 0.0
    %2351 = vmatpush1.xpose.msra.mxu0 0.0
    %2352 = vmatprep.subr.mxu0 0.0
    %2353 = vmatpush1.xpose.msra.mxu0 0.0
    %2354 = vmatprep.subr.mxu0 0.0
    %2355 = vmatpush1.xpose.msra.mxu0 0.0
    %2356 = vmatprep.subr.mxu0 0.0
    %2357 = vmatpush1.xpose.msra.mxu0 0.0
    %2358 = vmatprep.subr.mxu0 0.0
    %2359 = vmatpush1.xpose.msra.mxu0 0.0
    %2360 = vmatprep.subr.mxu0 0.0
    %2361 = vmatpush1.xpose.msra.mxu0 0.0
    %2362 = vmatprep.subr.mxu0 0.0
    %2363 = vmatpush1.xpose.msra.mxu0 0.0
    %2364 = vmatprep.subr.mxu0 0.0
    %2365 = vmatpush1.xpose.msra.mxu0 0.0
    %2366 = vmatprep.subr.mxu0 0.0
    %2367 = vmatpush1.xpose.msra.mxu0 0.0
    %2368 = vmatprep.subr.mxu0 0.0
    %2369 = vmatpush1.xpose.msra.mxu0 0.0
    %2370 = vmatprep.subr.mxu0 0.0
    %2371 = vmatpush1.xpose.msra.mxu0 0.0
    %2372 = vmatprep.subr.mxu0 0.0
    %2373 = vmatpush1.xpose.msra.mxu0 0.0
    %2374 = vmatprep.subr.mxu0 0.0
    %2375 = vmatpush1.xpose.msra.mxu0 0.0
    %2376 = vmatprep.subr.mxu0 0.0
    %2377 = vmatpush1.xpose.msra.mxu0 0.0
    %2378 = vmatprep.subr.mxu0 0.0
    %2379 = vmatpush1.xpose.msra.mxu0 0.0
    %2380 = vmatprep.subr.mxu0 0.0
    %2381 = vmatpush1.xpose.msra.mxu0 0.0
    %2382 = vmatprep.subr.mxu0 0.0
    %2383 = vmatpush1.xpose.msra.mxu0 0.0
    %2384 = vmatprep.subr.mxu0 0.0
    %2385 = vmatpush1.xpose.msra.mxu0 0.0
    %2386 = vmatprep.subr.mxu0 0.0
    %2387 = vmatpush1.xpose.msra.mxu0 0.0
    %2388 = vmatprep.subr.mxu0 0.0
    %2389 = vmatpush1.xpose.msra.mxu0 0.0
    %2390 = vmatprep.subr.mxu0 0.0
    %2391 = vmatpush1.xpose.msra.mxu0 0.0
    %2392 = vmatprep.subr.mxu0 0.0
    %2393 = vmatpush1.xpose.msra.mxu0 0.0
    %2394 = vmatprep.subr.mxu0 0.0
    %2395 = vmatpush1.xpose.msra.mxu0 0.0
    %2396 = vmatprep.subr.mxu0 0.0
    %2397 = vmatpush1.xpose.msra.mxu0 0.0
    %2398 = vmatprep.subr.mxu0 0.0
    %2399 = vmatpush1.xpose.msra.mxu0 0.0
    %2400 = vmatprep.mubr.f32.mxu0 %v2104
    %2401 = vmatmul.mubr.f32.gmra.mrb[0].mxu0 %v2090
    %v2402 = vpop.f32.mrb[0].mxu0
    %v2403 = vadd.f32 0.0, %v2402
    %v2404 = vpop.f32.mrb[0].mxu0
    %2405 = vdwg.mxu0
    %2406 = vmatprep.subr.mxu0 %v2267
    %2407 = vmatpush1.xpose.msra.mxu0 %v2263
    %2408 = vmatprep.subr.mxu0 %v2318
    %2409 = vmatpush1.xpose.msra.mxu0 %v2316
    %2410 = vmatprep.subr.mxu0 0.0
    %2411 = vmatpush1.xpose.msra.mxu0 0.0
    %2412 = vmatprep.subr.mxu0 0.0
    %2413 = vmatpush1.xpose.msra.mxu0 0.0
    %2414 = vmatprep.subr.mxu0 0.0
    %2415 = vmatpush1.xpose.msra.mxu0 0.0
    %2416 = vmatprep.subr.mxu0 0.0
    %2417 = vmatpush1.xpose.msra.mxu0 0.0
    %2418 = vmatprep.subr.mxu0 0.0
    %2419 = vmatpush1.xpose.msra.mxu0 0.0
    %2420 = vmatprep.subr.mxu0 0.0
    %2421 = vmatpush1.xpose.msra.mxu0 0.0
    %2422 = vmatprep.subr.mxu0 0.0
    %2423 = vmatpush1.xpose.msra.mxu0 0.0
    %2424 = vmatprep.subr.mxu0 0.0
    %2425 = vmatpush1.xpose.msra.mxu0 0.0
    %2426 = vmatprep.subr.mxu0 0.0
    %2427 = vmatpush1.xpose.msra.mxu0 0.0
    %2428 = vmatprep.subr.mxu0 0.0
    %2429 = vmatpush1.xpose.msra.mxu0 0.0
    %2430 = vmatprep.subr.mxu0 0.0
    %2431 = vmatpush1.xpose.msra.mxu0 0.0
    %2432 = vmatprep.subr.mxu0 0.0
    %2433 = vmatpush1.xpose.msra.mxu0 0.0
    %2434 = vmatprep.subr.mxu0 0.0
    %2435 = vmatpush1.xpose.msra.mxu0 0.0
    %2436 = vmatprep.subr.mxu0 0.0
    %2437 = vmatpush1.xpose.msra.mxu0 0.0
    %2438 = vmatprep.subr.mxu0 0.0
    %2439 = vmatpush1.xpose.msra.mxu0 0.0
    %2440 = vmatprep.subr.mxu0 0.0
    %2441 = vmatpush1.xpose.msra.mxu0 0.0
    %2442 = vmatprep.subr.mxu0 0.0
    %2443 = vmatpush1.xpose.msra.mxu0 0.0
    %2444 = vmatprep.subr.mxu0 0.0
    %2445 = vmatpush1.xpose.msra.mxu0 0.0
    %2446 = vmatprep.subr.mxu0 0.0
    %2447 = vmatpush1.xpose.msra.mxu0 0.0
    %2448 = vmatprep.subr.mxu0 0.0
    %2449 = vmatpush1.xpose.msra.mxu0 0.0
    %2450 = vmatprep.subr.mxu0 0.0
    %2451 = vmatpush1.xpose.msra.mxu0 0.0
    %2452 = vmatprep.subr.mxu0 0.0
    %2453 = vmatpush1.xpose.msra.mxu0 0.0
    %2454 = vmatprep.subr.mxu0 0.0
    %2455 = vmatpush1.xpose.msra.mxu0 0.0
    %2456 = vmatprep.subr.mxu0 0.0
    %2457 = vmatpush1.xpose.msra.mxu0 0.0
    %2458 = vmatprep.subr.mxu0 0.0
    %2459 = vmatpush1.xpose.msra.mxu0 0.0
    %2460 = vmatprep.subr.mxu0 0.0
    %2461 = vmatpush1.xpose.msra.mxu0 0.0
    %2462 = vmatprep.subr.mxu0 0.0
    %2463 = vmatpush1.xpose.msra.mxu0 0.0
    %2464 = vmatprep.subr.mxu0 0.0
    %2465 = vmatpush1.xpose.msra.mxu0 0.0
    %2466 = vmatprep.subr.mxu0 0.0
    %2467 = vmatpush1.xpose.msra.mxu0 0.0
    %2468 = vmatprep.subr.mxu0 0.0
    %2469 = vmatpush1.xpose.msra.mxu0 0.0
    %2470 = vmatprep.mubr.f32.mxu0 %v2114
    %2471 = vmatmul.mubr.f32.gmra.mrb[0].mxu0 %v2112
    %v2472 = vpop.f32.mrb[0].mxu0
    %v2473 = vadd.f32 %v2403, %v2472
    %v2474 = vpop.f32.mrb[0].mxu0
    %2475 = vdwg.mxu0
    %2476 = vmatprep.subr.mxu0 %v2268
    %2477 = vmatpush1.xpose.msra.mxu0 %v2264
    %2478 = vmatprep.subr.mxu0 %v2315
    %2479 = vmatpush1.xpose.msra.mxu0 %v2301
    %2480 = vmatprep.subr.mxu0 0.0
    %2481 = vmatpush1.xpose.msra.mxu0 0.0
    %2482 = vmatprep.subr.mxu0 0.0
    %2483 = vmatpush1.xpose.msra.mxu0 0.0
    %2484 = vmatprep.subr.mxu0 0.0
    %2485 = vmatpush1.xpose.msra.mxu0 0.0
    %2486 = vmatprep.subr.mxu0 0.0
    %2487 = vmatpush1.xpose.msra.mxu0 0.0
    %2488 = vmatprep.subr.mxu0 0.0
    %2489 = vmatpush1.xpose.msra.mxu0 0.0
    %2490 = vmatprep.subr.mxu0 0.0
    %2491 = vmatpush1.xpose.msra.mxu0 0.0
    %2492 = vmatprep.subr.mxu0 0.0
    %2493 = vmatpush1.xpose.msra.mxu0 0.0
    %2494 = vmatprep.subr.mxu0 0.0
    %2495 = vmatpush1.xpose.msra.mxu0 0.0
    %2496 = vmatprep.subr.mxu0 0.0
    %2497 = vmatpush1.xpose.msra.mxu0 0.0
    %2498 = vmatprep.subr.mxu0 0.0
    %2499 = vmatpush1.xpose.msra.mxu0 0.0
    %2500 = vmatprep.subr.mxu0 0.0
    %2501 = vmatpush1.xpose.msra.mxu0 0.0
    %2502 = vmatprep.subr.mxu0 0.0
    %2503 = vmatpush1.xpose.msra.mxu0 0.0
    %2504 = vmatprep.subr.mxu0 0.0
    %2505 = vmatpush1.xpose.msra.mxu0 0.0
    %2506 = vmatprep.subr.mxu0 0.0
    %2507 = vmatpush1.xpose.msra.mxu0 0.0
    %2508 = vmatprep.subr.mxu0 0.0
    %2509 = vmatpush1.xpose.msra.mxu0 0.0
    %2510 = vmatprep.subr.mxu0 0.0
    %2511 = vmatpush1.xpose.msra.mxu0 0.0
    %2512 = vmatprep.subr.mxu0 0.0
    %2513 = vmatpush1.xpose.msra.mxu0 0.0
    %2514 = vmatprep.subr.mxu0 0.0
    %2515 = vmatpush1.xpose.msra.mxu0 0.0
    %2516 = vmatprep.subr.mxu0 0.0
    %2517 = vmatpush1.xpose.msra.mxu0 0.0
    %2518 = vmatprep.subr.mxu0 0.0
    %2519 = vmatpush1.xpose.msra.mxu0 0.0
    %2520 = vmatprep.subr.mxu0 0.0
    %2521 = vmatpush1.xpose.msra.mxu0 0.0
    %2522 = vmatprep.subr.mxu0 0.0
    %2523 = vmatpush1.xpose.msra.mxu0 0.0
    %2524 = vmatprep.subr.mxu0 0.0
    %2525 = vmatpush1.xpose.msra.mxu0 0.0
    %2526 = vmatprep.subr.mxu0 0.0
    %2527 = vmatpush1.xpose.msra.mxu0 0.0
    %2528 = vmatprep.subr.mxu0 0.0
    %2529 = vmatpush1.xpose.msra.mxu0 0.0
    %2530 = vmatprep.subr.mxu0 0.0
    %2531 = vmatpush1.xpose.msra.mxu0 0.0
    %2532 = vmatprep.subr.mxu0 0.0
    %2533 = vmatpush1.xpose.msra.mxu0 0.0
    %2534 = vmatprep.subr.mxu0 0.0
    %2535 = vmatpush1.xpose.msra.mxu0 0.0
    %2536 = vmatprep.subr.mxu0 0.0
    %2537 = vmatpush1.xpose.msra.mxu0 0.0
    %2538 = vmatprep.subr.mxu0 0.0
    %2539 = vmatpush1.xpose.msra.mxu0 0.0
    %2540 = vmatprep.mubr.f32.mxu0 %v2111
    %2541 = vmatmul.mubr.f32.gmra.mrb[0].mxu0 %v2097
    %v2542 = vpop.f32.mrb[0].mxu0
    %v2543 = vadd.f32 %v2473, %v2542
    %v2544 = vpop.f32.mrb[0].mxu0
    %2545 = vdwg.mxu0
    %2546 = vmatprep.subr.mxu0 %v2269
    %2547 = vmatpush1.xpose.msra.mxu0 %v2265
    %2548 = vmatprep.subr.mxu0 %v2319
    %2549 = vmatpush1.xpose.msra.mxu0 %v2317
    %2550 = vmatprep.subr.mxu0 0.0
    %2551 = vmatpush1.xpose.msra.mxu0 0.0
    %2552 = vmatprep.subr.mxu0 0.0
    %2553 = vmatpush1.xpose.msra.mxu0 0.0
    %2554 = vmatprep.subr.mxu0 0.0
    %2555 = vmatpush1.xpose.msra.mxu0 0.0
    %2556 = vmatprep.subr.mxu0 0.0
    %2557 = vmatpush1.xpose.msra.mxu0 0.0
    %2558 = vmatprep.subr.mxu0 0.0
    %2559 = vmatpush1.xpose.msra.mxu0 0.0
    %2560 = vmatprep.subr.mxu0 0.0
    %2561 = vmatpush1.xpose.msra.mxu0 0.0
    %2562 = vmatprep.subr.mxu0 0.0
    %2563 = vmatpush1.xpose.msra.mxu0 0.0
    %2564 = vmatprep.subr.mxu0 0.0
    %2565 = vmatpush1.xpose.msra.mxu0 0.0
    %2566 = vmatprep.subr.mxu0 0.0
    %2567 = vmatpush1.xpose.msra.mxu0 0.0
    %2568 = vmatprep.subr.mxu0 0.0
    %2569 = vmatpush1.xpose.msra.mxu0 0.0
    %2570 = vmatprep.subr.mxu0 0.0
    %2571 = vmatpush1.xpose.msra.mxu0 0.0
    %2572 = vmatprep.subr.mxu0 0.0
    %2573 = vmatpush1.xpose.msra.mxu0 0.0
    %2574 = vmatprep.subr.mxu0 0.0
    %2575 = vmatpush1.xpose.msra.mxu0 0.0
    %2576 = vmatprep.subr.mxu0 0.0
    %2577 = vmatpush1.xpose.msra.mxu0 0.0
    %2578 = vmatprep.subr.mxu0 0.0
    %2579 = vmatpush1.xpose.msra.mxu0 0.0
    %2580 = vmatprep.subr.mxu0 0.0
    %2581 = vmatpush1.xpose.msra.mxu0 0.0
    %2582 = vmatprep.subr.mxu0 0.0
    %2583 = vmatpush1.xpose.msra.mxu0 0.0
    %2584 = vmatprep.subr.mxu0 0.0
    %2585 = vmatpush1.xpose.msra.mxu0 0.0
    %2586 = vmatprep.subr.mxu0 0.0
    %2587 = vmatpush1.xpose.msra.mxu0 0.0
    %2588 = vmatprep.subr.mxu0 0.0
    %2589 = vmatpush1.xpose.msra.mxu0 0.0
    %2590 = vmatprep.subr.mxu0 0.0
    %2591 = vmatpush1.xpose.msra.mxu0 0.0
    %2592 = vmatprep.subr.mxu0 0.0
    %2593 = vmatpush1.xpose.msra.mxu0 0.0
    %2594 = vmatprep.subr.mxu0 0.0
    %2595 = vmatpush1.xpose.msra.mxu0 0.0
    %2596 = vmatprep.subr.mxu0 0.0
    %2597 = vmatpush1.xpose.msra.mxu0 0.0
    %2598 = vmatprep.subr.mxu0 0.0
    %2599 = vmatpush1.xpose.msra.mxu0 0.0
    %2600 = vmatprep.subr.mxu0 0.0
    %2601 = vmatpush1.xpose.msra.mxu0 0.0
    %2602 = vmatprep.subr.mxu0 0.0
    %2603 = vmatpush1.xpose.msra.mxu0 0.0
    %2604 = vmatprep.subr.mxu0 0.0
    %2605 = vmatpush1.xpose.msra.mxu0 0.0
    %2606 = vmatprep.subr.mxu0 0.0
    %2607 = vmatpush1.xpose.msra.mxu0 0.0
    %2608 = vmatprep.subr.mxu0 0.0
    %2609 = vmatpush1.xpose.msra.mxu0 0.0
    %2610 = vmatprep.mubr.f32.mxu0 %v2115
    %2611 = vmatmul.mubr.f32.gmra.mrb[0].mxu0 %v2113
    %v2612 = vpop.f32.mrb[0].mxu0
    %v2613 = vadd.f32 %v2543, %v2612
    %v2614 = vpop.f32.mrb[0].mxu0
    %2615 = vdwg.mxu0
    %v2616 = vadd.f32 %v2015, %v2613
    %s2617 = scalar_lea.vmem [#allocation2], 3
    %v2618 = vld [vmem:[%s2617] ss:$8 sm:$0xf]
    %v2619 = vld [vmem:[%s2617] ss:$8 sm:$0xf0]
    %v2620 = vor.u32 %v2618, %v2619
    %s2621 = scalar_lea.vmem [#allocation2], 131
    %v2622 = vld [vmem:[%s2621] ss:$8 sm:$0xf]
    %v2623 = vld [vmem:[%s2621] ss:$8 sm:$0xf0]
    %v2624 = vor.u32 %v2622, %v2623
    %s2625 = scalar_lea.vmem %s3, 3
    %v2626 = vld [vmem:[%s2625] ss:$8 sm:$0xf]
    %v2627 = vld [vmem:[%s2625] ss:$8 sm:$0xf0]
    %v2628 = vor.u32 %v2626, %v2627
    %s2629 = scalar_lea.vmem %s3, 131
    %v2630 = vld [vmem:[%s2629] ss:$8 sm:$0xf]
    %v2631 = vld [vmem:[%s2629] ss:$8 sm:$0xf0]
    %v2632 = vor.u32 %v2630, %v2631
    %s2633 = scalar_lea.vmem %s3, 259
    %v2634 = vld [vmem:[%s2633] ss:$8 sm:$0xf]
    %v2635 = vld [vmem:[%s2633] ss:$8 sm:$0xf0]
    %v2636 = vor.u32 %v2634, %v2635
    %s2637 = scalar_lea.vmem %s3, 387
    %v2638 = vld [vmem:[%s2637] ss:$8 sm:$0xf]
    %v2639 = vld [vmem:[%s2637] ss:$8 sm:$0xf0]
    %v2640 = vor.u32 %v2638, %v2639
    %s2641 = scalar_lea.vmem %s3, 515
    %v2642 = vld [vmem:[%s2641] ss:$8 sm:$0xf]
    %v2643 = vld [vmem:[%s2641] ss:$8 sm:$0xf0]
    %v2644 = vor.u32 %v2642, %v2643
    %s2645 = scalar_lea.vmem %s3, 643
    %v2646 = vld [vmem:[%s2645] ss:$8 sm:$0xf]
    %v2647 = vld [vmem:[%s2645] ss:$8 sm:$0xf0]
    %v2648 = vor.u32 %v2646, %v2647
    %s2649 = scalar_lea.vmem %s3, 771
    %v2650 = vld [vmem:[%s2649] ss:$8 sm:$0xf]
    %v2651 = vld [vmem:[%s2649] ss:$8 sm:$0xf0]
    %v2652 = vor.u32 %v2650, %v2651
    %s2653 = scalar_lea.vmem %s3, 899
    %v2654 = vld [vmem:[%s2653] ss:$8 sm:$0xf]
    %v2655 = vld [vmem:[%s2653] ss:$8 sm:$0xf0]
    %v2656 = vor.u32 %v2654, %v2655
    %s2657 = scalar_lea.vmem %s3, 1027
    %v2658 = vld [vmem:[%s2657] ss:$8 sm:$0xf]
    %v2659 = vld [vmem:[%s2657] ss:$8 sm:$0xf0]
    %v2660 = vor.u32 %v2658, %v2659
    %s2661 = scalar_lea.vmem %s3, 1155
    %v2662 = vld [vmem:[%s2661] ss:$8 sm:$0xf]
    %v2663 = vld [vmem:[%s2661] ss:$8 sm:$0xf0]
    %v2664 = vor.u32 %v2662, %v2663
    %v2667 = vcombine.low %v2620, %v2624
    %v2668 = vcombine.high %v2620, %v2624
    %v2670 = vunpack.c.l.s4 1966171168
    %v2671 = vunpack.c.0.s8 %v2670
    %v2672 = vlaneseq
    %v2673 = vshrl.u32 %v2672, 7
    %v2674 = vsub.s32 %v2671, %v2673
    %v2675 = vrot.slane %v2667, %v2674
    %v2677 = vunpack.c.l.s4 1966171168
    %v2678 = vunpack.c.0.s8 %v2677
    %v2679 = vlaneseq
    %v2680 = vshrl.u32 %v2679, 7
    %v2681 = vsub.s32 %v2678, %v2680
    %v2682 = vrot.slane %v2668, %v2681
    %v2683 = vcombine.high %v2675, %v2675
    %v2684 = vcombine.high %v2682, %v2682
    %v2686 = vunpack.c.l.s4 1966171168
    %v2687 = vunpack.c.0.s8 %v2686
    %v2688 = vlaneseq
    %v2689 = vshrl.u32 %v2688, 7
    %v2690 = vsub.s32 %v2687, %v2689
    %v2691 = vrot.slane %v2675, %v2690
    %v2693 = vunpack.c.l.s4 1966171168
    %v2694 = vunpack.c.0.s8 %v2693
    %v2695 = vlaneseq
    %v2696 = vshrl.u32 %v2695, 7
    %v2697 = vsub.s32 %v2694, %v2696
    %v2698 = vrot.slane %v2682, %v2697
    %v2700 = vunpack.c.l.s4 1966171168
    %v2701 = vunpack.c.0.s8 %v2700
    %v2702 = vlaneseq
    %v2703 = vshrl.u32 %v2702, 7
    %v2704 = vsub.s32 %v2701, %v2703
    %v2705 = vrot.slane %v2683, %v2704
    %v2707 = vunpack.c.l.s4 1966171168
    %v2708 = vunpack.c.0.s8 %v2707
    %v2709 = vlaneseq
    %v2710 = vshrl.u32 %v2709, 7
    %v2711 = vsub.s32 %v2708, %v2710
    %v2712 = vrot.slane %v2684, %v2711
    %v2713 = vcombine.high %v2691, %v2691
    %v2714 = vcombine.high %v2698, %v2698
    %v2715 = vcombine.high %v2705, %v2705
    %v2716 = vcombine.high %v2712, %v2712
    %v2735 = vcombine.low %v2628, %v2632
    %v2736 = vcombine.high %v2628, %v2632
    %v2737 = vcombine.low %v2636, %v2640
    %v2738 = vcombine.high %v2636, %v2640
    %v2739 = vcombine.low %v2644, %v2648
    %v2740 = vcombine.high %v2644, %v2648
    %v2741 = vcombine.low %v2652, %v2656
    %v2742 = vcombine.high %v2652, %v2656
    %v2744 = vunpack.c.l.s4 1966171168
    %v2745 = vunpack.c.0.s8 %v2744
    %v2746 = vlaneseq
    %v2747 = vshrl.u32 %v2746, 7
    %v2748 = vsub.s32 %v2745, %v2747
    %v2749 = vrot.slane %v2735, %v2748
    %v2751 = vunpack.c.l.s4 1966171168
    %v2752 = vunpack.c.0.s8 %v2751
    %v2753 = vlaneseq
    %v2754 = vshrl.u32 %v2753, 7
    %v2755 = vsub.s32 %v2752, %v2754
    %v2756 = vrot.slane %v2736, %v2755
    %v2758 = vunpack.c.l.s4 1966171168
    %v2759 = vunpack.c.0.s8 %v2758
    %v2760 = vlaneseq
    %v2761 = vshrl.u32 %v2760, 7
    %v2762 = vsub.s32 %v2759, %v2761
    %v2763 = vrot.slane %v2737, %v2762
    %v2765 = vunpack.c.l.s4 1966171168
    %v2766 = vunpack.c.0.s8 %v2765
    %v2767 = vlaneseq
    %v2768 = vshrl.u32 %v2767, 7
    %v2769 = vsub.s32 %v2766, %v2768
    %v2770 = vrot.slane %v2738, %v2769
    %v2772 = vunpack.c.l.s4 1966171168
    %v2773 = vunpack.c.0.s8 %v2772
    %v2774 = vlaneseq
    %v2775 = vshrl.u32 %v2774, 7
    %v2776 = vsub.s32 %v2773, %v2775
    %v2777 = vrot.slane %v2739, %v2776
    %v2779 = vunpack.c.l.s4 1966171168
    %v2780 = vunpack.c.0.s8 %v2779
    %v2781 = vlaneseq
    %v2782 = vshrl.u32 %v2781, 7
    %v2783 = vsub.s32 %v2780, %v2782
    %v2784 = vrot.slane %v2740, %v2783
    %v2786 = vunpack.c.l.s4 1966171168
    %v2787 = vunpack.c.0.s8 %v2786
    %v2788 = vlaneseq
    %v2789 = vshrl.u32 %v2788, 7
    %v2790 = vsub.s32 %v2787, %v2789
    %v2791 = vrot.slane %v2741, %v2790
    %v2793 = vunpack.c.l.s4 1966171168
    %v2794 = vunpack.c.0.s8 %v2793
    %v2795 = vlaneseq
    %v2796 = vshrl.u32 %v2795, 7
    %v2797 = vsub.s32 %v2794, %v2796
    %v2798 = vrot.slane %v2742, %v2797
    %v2799 = vcombine.low %v2749, %v2763
    %v2800 = vcombine.high %v2749, %v2763
    %v2801 = vcombine.low %v2756, %v2770
    %v2802 = vcombine.high %v2756, %v2770
    %v2803 = vcombine.low %v2777, %v2791
    %v2804 = vcombine.high %v2777, %v2791
    %v2805 = vcombine.low %v2784, %v2798
    %v2806 = vcombine.high %v2784, %v2798
    %v2808 = vunpack.c.l.s4 1966171168
    %v2809 = vunpack.c.0.s8 %v2808
    %v2810 = vlaneseq
    %v2811 = vshrl.u32 %v2810, 7
    %v2812 = vsub.s32 %v2809, %v2811
    %v2813 = vrot.slane %v2799, %v2812
    %v2815 = vunpack.c.l.s4 1966171168
    %v2816 = vunpack.c.0.s8 %v2815
    %v2817 = vlaneseq
    %v2818 = vshrl.u32 %v2817, 7
    %v2819 = vsub.s32 %v2816, %v2818
    %v2820 = vrot.slane %v2801, %v2819
    %v2822 = vunpack.c.l.s4 1966171168
    %v2823 = vunpack.c.0.s8 %v2822
    %v2824 = vlaneseq
    %v2825 = vshrl.u32 %v2824, 7
    %v2826 = vsub.s32 %v2823, %v2825
    %v2827 = vrot.slane %v2800, %v2826
    %v2829 = vunpack.c.l.s4 1966171168
    %v2830 = vunpack.c.0.s8 %v2829
    %v2831 = vlaneseq
    %v2832 = vshrl.u32 %v2831, 7
    %v2833 = vsub.s32 %v2830, %v2832
    %v2834 = vrot.slane %v2802, %v2833
    %v2836 = vunpack.c.l.s4 1966171168
    %v2837 = vunpack.c.0.s8 %v2836
    %v2838 = vlaneseq
    %v2839 = vshrl.u32 %v2838, 7
    %v2840 = vsub.s32 %v2837, %v2839
    %v2841 = vrot.slane %v2803, %v2840
    %v2843 = vunpack.c.l.s4 1966171168
    %v2844 = vunpack.c.0.s8 %v2843
    %v2845 = vlaneseq
    %v2846 = vshrl.u32 %v2845, 7
    %v2847 = vsub.s32 %v2844, %v2846
    %v2848 = vrot.slane %v2805, %v2847
    %v2850 = vunpack.c.l.s4 1966171168
    %v2851 = vunpack.c.0.s8 %v2850
    %v2852 = vlaneseq
    %v2853 = vshrl.u32 %v2852, 7
    %v2854 = vsub.s32 %v2851, %v2853
    %v2855 = vrot.slane %v2804, %v2854
    %v2857 = vunpack.c.l.s4 1966171168
    %v2858 = vunpack.c.0.s8 %v2857
    %v2859 = vlaneseq
    %v2860 = vshrl.u32 %v2859, 7
    %v2861 = vsub.s32 %v2858, %v2860
    %v2862 = vrot.slane %v2806, %v2861
    %v2863 = vcombine.low %v2813, %v2841
    %v2864 = vcombine.high %v2813, %v2841
    %v2865 = vcombine.low %v2820, %v2848
    %v2866 = vcombine.high %v2820, %v2848
    %v2867 = vcombine.low %v2827, %v2855
    %v2868 = vcombine.high %v2827, %v2855
    %v2869 = vcombine.low %v2834, %v2862
    %v2870 = vcombine.high %v2834, %v2862
    %v2871 = vcombine.low %v2660, %v2664
    %v2872 = vcombine.high %v2660, %v2664
    %v2874 = vunpack.c.l.s4 1966171168
    %v2875 = vunpack.c.0.s8 %v2874
    %v2876 = vlaneseq
    %v2877 = vshrl.u32 %v2876, 7
    %v2878 = vsub.s32 %v2875, %v2877
    %v2879 = vrot.slane %v2871, %v2878
    %v2881 = vunpack.c.l.s4 1966171168
    %v2882 = vunpack.c.0.s8 %v2881
    %v2883 = vlaneseq
    %v2884 = vshrl.u32 %v2883, 7
    %v2885 = vsub.s32 %v2882, %v2884
    %v2886 = vrot.slane %v2872, %v2885
    %v2887 = vcombine.high %v2879, %v2879
    %v2888 = vcombine.high %v2886, %v2886
    %v2890 = vunpack.c.l.s4 1966171168
    %v2891 = vunpack.c.0.s8 %v2890
    %v2892 = vlaneseq
    %v2893 = vshrl.u32 %v2892, 7
    %v2894 = vsub.s32 %v2891, %v2893
    %v2895 = vrot.slane %v2879, %v2894
    %v2897 = vunpack.c.l.s4 1966171168
    %v2898 = vunpack.c.0.s8 %v2897
    %v2899 = vlaneseq
    %v2900 = vshrl.u32 %v2899, 7
    %v2901 = vsub.s32 %v2898, %v2900
    %v2902 = vrot.slane %v2886, %v2901
    %v2904 = vunpack.c.l.s4 1966171168
    %v2905 = vunpack.c.0.s8 %v2904
    %v2906 = vlaneseq
    %v2907 = vshrl.u32 %v2906, 7
    %v2908 = vsub.s32 %v2905, %v2907
    %v2909 = vrot.slane %v2887, %v2908
    %v2911 = vunpack.c.l.s4 1966171168
    %v2912 = vunpack.c.0.s8 %v2911
    %v2913 = vlaneseq
    %v2914 = vshrl.u32 %v2913, 7
    %v2915 = vsub.s32 %v2912, %v2914
    %v2916 = vrot.slane %v2888, %v2915
    %v2917 = vcombine.high %v2895, %v2895
    %v2918 = vcombine.high %v2902, %v2902
    %v2919 = vcombine.high %v2909, %v2909
    %v2920 = vcombine.high %v2916, %v2916
    %2937 = vmatprep.subr.mxu0 %v2867
    %2938 = vmatpush1.xpose.msra.mxu0 %v2863
    %2939 = vmatprep.subr.mxu0 %v2909
    %2940 = vmatpush1.xpose.msra.mxu0 %v2895
    %2941 = vmatprep.subr.mxu0 0.0
    %2942 = vmatpush1.xpose.msra.mxu0 0.0
    %2943 = vmatprep.subr.mxu0 0.0
    %2944 = vmatpush1.xpose.msra.mxu0 0.0
    %2945 = vmatprep.subr.mxu0 0.0
    %2946 = vmatpush1.xpose.msra.mxu0 0.0
    %2947 = vmatprep.subr.mxu0 0.0
    %2948 = vmatpush1.xpose.msra.mxu0 0.0
    %2949 = vmatprep.subr.mxu0 0.0
    %2950 = vmatpush1.xpose.msra.mxu0 0.0
    %2951 = vmatprep.subr.mxu0 0.0
    %2952 = vmatpush1.xpose.msra.mxu0 0.0
    %2953 = vmatprep.subr.mxu0 0.0
    %2954 = vmatpush1.xpose.msra.mxu0 0.0
    %2955 = vmatprep.subr.mxu0 0.0
    %2956 = vmatpush1.xpose.msra.mxu0 0.0
    %2957 = vmatprep.subr.mxu0 0.0
    %2958 = vmatpush1.xpose.msra.mxu0 0.0
    %2959 = vmatprep.subr.mxu0 0.0
    %2960 = vmatpush1.xpose.msra.mxu0 0.0
    %2961 = vmatprep.subr.mxu0 0.0
    %2962 = vmatpush1.xpose.msra.mxu0 0.0
    %2963 = vmatprep.subr.mxu0 0.0
    %2964 = vmatpush1.xpose.msra.mxu0 0.0
    %2965 = vmatprep.subr.mxu0 0.0
    %2966 = vmatpush1.xpose.msra.mxu0 0.0
    %2967 = vmatprep.subr.mxu0 0.0
    %2968 = vmatpush1.xpose.msra.mxu0 0.0
    %2969 = vmatprep.subr.mxu0 0.0
    %2970 = vmatpush1.xpose.msra.mxu0 0.0
    %2971 = vmatprep.subr.mxu0 0.0
    %2972 = vmatpush1.xpose.msra.mxu0 0.0
    %2973 = vmatprep.subr.mxu0 0.0
    %2974 = vmatpush1.xpose.msra.mxu0 0.0
    %2975 = vmatprep.subr.mxu0 0.0
    %2976 = vmatpush1.xpose.msra.mxu0 0.0
    %2977 = vmatprep.subr.mxu0 0.0
    %2978 = vmatpush1.xpose.msra.mxu0 0.0
    %2979 = vmatprep.subr.mxu0 0.0
    %2980 = vmatpush1.xpose.msra.mxu0 0.0
    %2981 = vmatprep.subr.mxu0 0.0
    %2982 = vmatpush1.xpose.msra.mxu0 0.0
    %2983 = vmatprep.subr.mxu0 0.0
    %2984 = vmatpush1.xpose.msra.mxu0 0.0
    %2985 = vmatprep.subr.mxu0 0.0
    %2986 = vmatpush1.xpose.msra.mxu0 0.0
    %2987 = vmatprep.subr.mxu0 0.0
    %2988 = vmatpush1.xpose.msra.mxu0 0.0
    %2989 = vmatprep.subr.mxu0 0.0
    %2990 = vmatpush1.xpose.msra.mxu0 0.0
    %2991 = vmatprep.subr.mxu0 0.0
    %2992 = vmatpush1.xpose.msra.mxu0 0.0
    %2993 = vmatprep.subr.mxu0 0.0
    %2994 = vmatpush1.xpose.msra.mxu0 0.0
    %2995 = vmatprep.subr.mxu0 0.0
    %2996 = vmatpush1.xpose.msra.mxu0 0.0
    %2997 = vmatprep.subr.mxu0 0.0
    %2998 = vmatpush1.xpose.msra.mxu0 0.0
    %2999 = vmatprep.subr.mxu0 0.0
    %3000 = vmatpush1.xpose.msra.mxu0 0.0
    %3001 = vmatprep.mubr.f32.mxu0 %v2705
    %3002 = vmatmul.mubr.f32.gmra.mrb[0].mxu0 %v2691
    %v3003 = vpop.f32.mrb[0].mxu0
    %v3004 = vadd.f32 0.0, %v3003
    %v3005 = vpop.f32.mrb[0].mxu0
    %3006 = vdwg.mxu0
    %3007 = vmatprep.subr.mxu0 %v2868
    %3008 = vmatpush1.xpose.msra.mxu0 %v2864
    %3009 = vmatprep.subr.mxu0 %v2919
    %3010 = vmatpush1.xpose.msra.mxu0 %v2917
    %3011 = vmatprep.subr.mxu0 0.0
    %3012 = vmatpush1.xpose.msra.mxu0 0.0
    %3013 = vmatprep.subr.mxu0 0.0
    %3014 = vmatpush1.xpose.msra.mxu0 0.0
    %3015 = vmatprep.subr.mxu0 0.0
    %3016 = vmatpush1.xpose.msra.mxu0 0.0
    %3017 = vmatprep.subr.mxu0 0.0
    %3018 = vmatpush1.xpose.msra.mxu0 0.0
    %3019 = vmatprep.subr.mxu0 0.0
    %3020 = vmatpush1.xpose.msra.mxu0 0.0
    %3021 = vmatprep.subr.mxu0 0.0
    %3022 = vmatpush1.xpose.msra.mxu0 0.0
    %3023 = vmatprep.subr.mxu0 0.0
    %3024 = vmatpush1.xpose.msra.mxu0 0.0
    %3025 = vmatprep.subr.mxu0 0.0
    %3026 = vmatpush1.xpose.msra.mxu0 0.0
    %3027 = vmatprep.subr.mxu0 0.0
    %3028 = vmatpush1.xpose.msra.mxu0 0.0
    %3029 = vmatprep.subr.mxu0 0.0
    %3030 = vmatpush1.xpose.msra.mxu0 0.0
    %3031 = vmatprep.subr.mxu0 0.0
    %3032 = vmatpush1.xpose.msra.mxu0 0.0
    %3033 = vmatprep.subr.mxu0 0.0
    %3034 = vmatpush1.xpose.msra.mxu0 0.0
    %3035 = vmatprep.subr.mxu0 0.0
    %3036 = vmatpush1.xpose.msra.mxu0 0.0
    %3037 = vmatprep.subr.mxu0 0.0
    %3038 = vmatpush1.xpose.msra.mxu0 0.0
    %3039 = vmatprep.subr.mxu0 0.0
    %3040 = vmatpush1.xpose.msra.mxu0 0.0
    %3041 = vmatprep.subr.mxu0 0.0
    %3042 = vmatpush1.xpose.msra.mxu0 0.0
    %3043 = vmatprep.subr.mxu0 0.0
    %3044 = vmatpush1.xpose.msra.mxu0 0.0
    %3045 = vmatprep.subr.mxu0 0.0
    %3046 = vmatpush1.xpose.msra.mxu0 0.0
    %3047 = vmatprep.subr.mxu0 0.0
    %3048 = vmatpush1.xpose.msra.mxu0 0.0
    %3049 = vmatprep.subr.mxu0 0.0
    %3050 = vmatpush1.xpose.msra.mxu0 0.0
    %3051 = vmatprep.subr.mxu0 0.0
    %3052 = vmatpush1.xpose.msra.mxu0 0.0
    %3053 = vmatprep.subr.mxu0 0.0
    %3054 = vmatpush1.xpose.msra.mxu0 0.0
    %3055 = vmatprep.subr.mxu0 0.0
    %3056 = vmatpush1.xpose.msra.mxu0 0.0
    %3057 = vmatprep.subr.mxu0 0.0
    %3058 = vmatpush1.xpose.msra.mxu0 0.0
    %3059 = vmatprep.subr.mxu0 0.0
    %3060 = vmatpush1.xpose.msra.mxu0 0.0
    %3061 = vmatprep.subr.mxu0 0.0
    %3062 = vmatpush1.xpose.msra.mxu0 0.0
    %3063 = vmatprep.subr.mxu0 0.0
    %3064 = vmatpush1.xpose.msra.mxu0 0.0
    %3065 = vmatprep.subr.mxu0 0.0
    %3066 = vmatpush1.xpose.msra.mxu0 0.0
    %3067 = vmatprep.subr.mxu0 0.0
    %3068 = vmatpush1.xpose.msra.mxu0 0.0
    %3069 = vmatprep.subr.mxu0 0.0
    %3070 = vmatpush1.xpose.msra.mxu0 0.0
    %3071 = vmatprep.mubr.f32.mxu0 %v2715
    %3072 = vmatmul.mubr.f32.gmra.mrb[0].mxu0 %v2713
    %v3073 = vpop.f32.mrb[0].mxu0
    %v3074 = vadd.f32 %v3004, %v3073
    %v3075 = vpop.f32.mrb[0].mxu0
    %3076 = vdwg.mxu0
    %3077 = vmatprep.subr.mxu0 %v2869
    %3078 = vmatpush1.xpose.msra.mxu0 %v2865
    %3079 = vmatprep.subr.mxu0 %v2916
    %3080 = vmatpush1.xpose.msra.mxu0 %v2902
    %3081 = vmatprep.subr.mxu0 0.0
    %3082 = vmatpush1.xpose.msra.mxu0 0.0
    %3083 = vmatprep.subr.mxu0 0.0
    %3084 = vmatpush1.xpose.msra.mxu0 0.0
    %3085 = vmatprep.subr.mxu0 0.0
    %3086 = vmatpush1.xpose.msra.mxu0 0.0
    %3087 = vmatprep.subr.mxu0 0.0
    %3088 = vmatpush1.xpose.msra.mxu0 0.0
    %3089 = vmatprep.subr.mxu0 0.0
    %3090 = vmatpush1.xpose.msra.mxu0 0.0
    %3091 = vmatprep.subr.mxu0 0.0
    %3092 = vmatpush1.xpose.msra.mxu0 0.0
    %3093 = vmatprep.subr.mxu0 0.0
    %3094 = vmatpush1.xpose.msra.mxu0 0.0
    %3095 = vmatprep.subr.mxu0 0.0
    %3096 = vmatpush1.xpose.msra.mxu0 0.0
    %3097 = vmatprep.subr.mxu0 0.0
    %3098 = vmatpush1.xpose.msra.mxu0 0.0
    %3099 = vmatprep.subr.mxu0 0.0
    %3100 = vmatpush1.xpose.msra.mxu0 0.0
    %3101 = vmatprep.subr.mxu0 0.0
    %3102 = vmatpush1.xpose.msra.mxu0 0.0
    %3103 = vmatprep.subr.mxu0 0.0
    %3104 = vmatpush1.xpose.msra.mxu0 0.0
    %3105 = vmatprep.subr.mxu0 0.0
    %3106 = vmatpush1.xpose.msra.mxu0 0.0
    %3107 = vmatprep.subr.mxu0 0.0
    %3108 = vmatpush1.xpose.msra.mxu0 0.0
    %3109 = vmatprep.subr.mxu0 0.0
    %3110 = vmatpush1.xpose.msra.mxu0 0.0
    %3111 = vmatprep.subr.mxu0 0.0
    %3112 = vmatpush1.xpose.msra.mxu0 0.0
    %3113 = vmatprep.subr.mxu0 0.0
    %3114 = vmatpush1.xpose.msra.mxu0 0.0
    %3115 = vmatprep.subr.mxu0 0.0
    %3116 = vmatpush1.xpose.msra.mxu0 0.0
    %3117 = vmatprep.subr.mxu0 0.0
    %3118 = vmatpush1.xpose.msra.mxu0 0.0
    %3119 = vmatprep.subr.mxu0 0.0
    %3120 = vmatpush1.xpose.msra.mxu0 0.0
    %3121 = vmatprep.subr.mxu0 0.0
    %3122 = vmatpush1.xpose.msra.mxu0 0.0
    %3123 = vmatprep.subr.mxu0 0.0
    %3124 = vmatpush1.xpose.msra.mxu0 0.0
    %3125 = vmatprep.subr.mxu0 0.0
    %3126 = vmatpush1.xpose.msra.mxu0 0.0
    %3127 = vmatprep.subr.mxu0 0.0
    %3128 = vmatpush1.xpose.msra.mxu0 0.0
    %3129 = vmatprep.subr.mxu0 0.0
    %3130 = vmatpush1.xpose.msra.mxu0 0.0
    %3131 = vmatprep.subr.mxu0 0.0
    %3132 = vmatpush1.xpose.msra.mxu0 0.0
    %3133 = vmatprep.subr.mxu0 0.0
    %3134 = vmatpush1.xpose.msra.mxu0 0.0
    %3135 = vmatprep.subr.mxu0 0.0
    %3136 = vmatpush1.xpose.msra.mxu0 0.0
    %3137 = vmatprep.subr.mxu0 0.0
    %3138 = vmatpush1.xpose.msra.mxu0 0.0
    %3139 = vmatprep.subr.mxu0 0.0
    %3140 = vmatpush1.xpose.msra.mxu0 0.0
    %3141 = vmatprep.mubr.f32.mxu0 %v2712
    %3142 = vmatmul.mubr.f32.gmra.mrb[0].mxu0 %v2698
    %v3143 = vpop.f32.mrb[0].mxu0
    %v3144 = vadd.f32 %v3074, %v3143
    %v3145 = vpop.f32.mrb[0].mxu0
    %3146 = vdwg.mxu0
    %3147 = vmatprep.subr.mxu0 %v2870
    %3148 = vmatpush1.xpose.msra.mxu0 %v2866
    %3149 = vmatprep.subr.mxu0 %v2920
    %3150 = vmatpush1.xpose.msra.mxu0 %v2918
    %3151 = vmatprep.subr.mxu0 0.0
    %3152 = vmatpush1.xpose.msra.mxu0 0.0
    %3153 = vmatprep.subr.mxu0 0.0
    %3154 = vmatpush1.xpose.msra.mxu0 0.0
    %3155 = vmatprep.subr.mxu0 0.0
    %3156 = vmatpush1.xpose.msra.mxu0 0.0
    %3157 = vmatprep.subr.mxu0 0.0
    %3158 = vmatpush1.xpose.msra.mxu0 0.0
    %3159 = vmatprep.subr.mxu0 0.0
    %3160 = vmatpush1.xpose.msra.mxu0 0.0
    %3161 = vmatprep.subr.mxu0 0.0
    %3162 = vmatpush1.xpose.msra.mxu0 0.0
    %3163 = vmatprep.subr.mxu0 0.0
    %3164 = vmatpush1.xpose.msra.mxu0 0.0
    %3165 = vmatprep.subr.mxu0 0.0
    %3166 = vmatpush1.xpose.msra.mxu0 0.0
    %3167 = vmatprep.subr.mxu0 0.0
    %3168 = vmatpush1.xpose.msra.mxu0 0.0
    %3169 = vmatprep.subr.mxu0 0.0
    %3170 = vmatpush1.xpose.msra.mxu0 0.0
    %3171 = vmatprep.subr.mxu0 0.0
    %3172 = vmatpush1.xpose.msra.mxu0 0.0
    %3173 = vmatprep.subr.mxu0 0.0
    %3174 = vmatpush1.xpose.msra.mxu0 0.0
    %3175 = vmatprep.subr.mxu0 0.0
    %3176 = vmatpush1.xpose.msra.mxu0 0.0
    %3177 = vmatprep.subr.mxu0 0.0
    %3178 = vmatpush1.xpose.msra.mxu0 0.0
    %3179 = vmatprep.subr.mxu0 0.0
    %3180 = vmatpush1.xpose.msra.mxu0 0.0
    %3181 = vmatprep.subr.mxu0 0.0
    %3182 = vmatpush1.xpose.msra.mxu0 0.0
    %3183 = vmatprep.subr.mxu0 0.0
    %3184 = vmatpush1.xpose.msra.mxu0 0.0
    %3185 = vmatprep.subr.mxu0 0.0
    %3186 = vmatpush1.xpose.msra.mxu0 0.0
    %3187 = vmatprep.subr.mxu0 0.0
    %3188 = vmatpush1.xpose.msra.mxu0 0.0
    %3189 = vmatprep.subr.mxu0 0.0
    %3190 = vmatpush1.xpose.msra.mxu0 0.0
    %3191 = vmatprep.subr.mxu0 0.0
    %3192 = vmatpush1.xpose.msra.mxu0 0.0
    %3193 = vmatprep.subr.mxu0 0.0
    %3194 = vmatpush1.xpose.msra.mxu0 0.0
    %3195 = vmatprep.subr.mxu0 0.0
    %3196 = vmatpush1.xpose.msra.mxu0 0.0
    %3197 = vmatprep.subr.mxu0 0.0
    %3198 = vmatpush1.xpose.msra.mxu0 0.0
    %3199 = vmatprep.subr.mxu0 0.0
    %3200 = vmatpush1.xpose.msra.mxu0 0.0
    %3201 = vmatprep.subr.mxu0 0.0
    %3202 = vmatpush1.xpose.msra.mxu0 0.0
    %3203 = vmatprep.subr.mxu0 0.0
    %3204 = vmatpush1.xpose.msra.mxu0 0.0
    %3205 = vmatprep.subr.mxu0 0.0
    %3206 = vmatpush1.xpose.msra.mxu0 0.0
    %3207 = vmatprep.subr.mxu0 0.0
    %3208 = vmatpush1.xpose.msra.mxu0 0.0
    %3209 = vmatprep.subr.mxu0 0.0
    %3210 = vmatpush1.xpose.msra.mxu0 0.0
    %3211 = vmatprep.mubr.f32.mxu0 %v2716
    %3212 = vmatmul.mubr.f32.gmra.mrb[0].mxu0 %v2714
    %v3213 = vpop.f32.mrb[0].mxu0
    %v3214 = vadd.f32 %v3144, %v3213
    %v3215 = vpop.f32.mrb[0].mxu0
    %3216 = vdwg.mxu0
    %v3217 = vadd.f32 %v2616, %v3214
    %s3218 = scalar_lea.vmem [#allocation2], 4
    %v3219 = vld [vmem:[%s3218] ss:$8 sm:$0xf]
    %v3220 = vld [vmem:[%s3218] ss:$8 sm:$0xf0]
    %v3221 = vor.u32 %v3219, %v3220
    %s3222 = scalar_lea.vmem [#allocation2], 132
    %v3223 = vld [vmem:[%s3222] ss:$8 sm:$0xf]
    %v3224 = vld [vmem:[%s3222] ss:$8 sm:$0xf0]
    %v3225 = vor.u32 %v3223, %v3224
    %s3226 = scalar_lea.vmem %s3, 4
    %v3227 = vld [vmem:[%s3226] ss:$8 sm:$0xf]
    %v3228 = vld [vmem:[%s3226] ss:$8 sm:$0xf0]
    %v3229 = vor.u32 %v3227, %v3228
    %s3230 = scalar_lea.vmem %s3, 132
    %v3231 = vld [vmem:[%s3230] ss:$8 sm:$0xf]
    %v3232 = vld [vmem:[%s3230] ss:$8 sm:$0xf0]
    %v3233 = vor.u32 %v3231, %v3232
    %s3234 = scalar_lea.vmem %s3, 260
    %v3235 = vld [vmem:[%s3234] ss:$8 sm:$0xf]
    %v3236 = vld [vmem:[%s3234] ss:$8 sm:$0xf0]
    %v3237 = vor.u32 %v3235, %v3236
    %s3238 = scalar_lea.vmem %s3, 388
    %v3239 = vld [vmem:[%s3238] ss:$8 sm:$0xf]
    %v3240 = vld [vmem:[%s3238] ss:$8 sm:$0xf0]
    %v3241 = vor.u32 %v3239, %v3240
    %s3242 = scalar_lea.vmem %s3, 516
    %v3243 = vld [vmem:[%s3242] ss:$8 sm:$0xf]
    %v3244 = vld [vmem:[%s3242] ss:$8 sm:$0xf0]
    %v3245 = vor.u32 %v3243, %v3244
    %s3246 = scalar_lea.vmem %s3, 644
    %v3247 = vld [vmem:[%s3246] ss:$8 sm:$0xf]
    %v3248 = vld [vmem:[%s3246] ss:$8 sm:$0xf0]
    %v3249 = vor.u32 %v3247, %v3248
    %s3250 = scalar_lea.vmem %s3, 772
    %v3251 = vld [vmem:[%s3250] ss:$8 sm:$0xf]
    %v3252 = vld [vmem:[%s3250] ss:$8 sm:$0xf0]
    %v3253 = vor.u32 %v3251, %v3252
    %s3254 = scalar_lea.vmem %s3, 900
    %v3255 = vld [vmem:[%s3254] ss:$8 sm:$0xf]
    %v3256 = vld [vmem:[%s3254] ss:$8 sm:$0xf0]
    %v3257 = vor.u32 %v3255, %v3256
    %s3258 = scalar_lea.vmem %s3, 1028
    %v3259 = vld [vmem:[%s3258] ss:$8 sm:$0xf]
    %v3260 = vld [vmem:[%s3258] ss:$8 sm:$0xf0]
    %v3261 = vor.u32 %v3259, %v3260
    %s3262 = scalar_lea.vmem %s3, 1156
    %v3263 = vld [vmem:[%s3262] ss:$8 sm:$0xf]
    %v3264 = vld [vmem:[%s3262] ss:$8 sm:$0xf0]
    %v3265 = vor.u32 %v3263, %v3264
    %v3268 = vcombine.low %v3221, %v3225
    %v3269 = vcombine.high %v3221, %v3225
    %v3271 = vunpack.c.l.s4 1966171168
    %v3272 = vunpack.c.0.s8 %v3271
    %v3273 = vlaneseq
    %v3274 = vshrl.u32 %v3273, 7
    %v3275 = vsub.s32 %v3272, %v3274
    %v3276 = vrot.slane %v3268, %v3275
    %v3278 = vunpack.c.l.s4 1966171168
    %v3279 = vunpack.c.0.s8 %v3278
    %v3280 = vlaneseq
    %v3281 = vshrl.u32 %v3280, 7
    %v3282 = vsub.s32 %v3279, %v3281
    %v3283 = vrot.slane %v3269, %v3282
    %v3284 = vcombine.high %v3276, %v3276
    %v3285 = vcombine.high %v3283, %v3283
    %v3287 = vunpack.c.l.s4 1966171168
    %v3288 = vunpack.c.0.s8 %v3287
    %v3289 = vlaneseq
    %v3290 = vshrl.u32 %v3289, 7
    %v3291 = vsub.s32 %v3288, %v3290
    %v3292 = vrot.slane %v3276, %v3291
    %v3294 = vunpack.c.l.s4 1966171168
    %v3295 = vunpack.c.0.s8 %v3294
    %v3296 = vlaneseq
    %v3297 = vshrl.u32 %v3296, 7
    %v3298 = vsub.s32 %v3295, %v3297
    %v3299 = vrot.slane %v3283, %v3298
    %v3301 = vunpack.c.l.s4 1966171168
    %v3302 = vunpack.c.0.s8 %v3301
    %v3303 = vlaneseq
    %v3304 = vshrl.u32 %v3303, 7
    %v3305 = vsub.s32 %v3302, %v3304
    %v3306 = vrot.slane %v3284, %v3305
    %v3308 = vunpack.c.l.s4 1966171168
    %v3309 = vunpack.c.0.s8 %v3308
    %v3310 = vlaneseq
    %v3311 = vshrl.u32 %v3310, 7
    %v3312 = vsub.s32 %v3309, %v3311
    %v3313 = vrot.slane %v3285, %v3312
    %v3314 = vcombine.high %v3292, %v3292
    %v3315 = vcombine.high %v3299, %v3299
    %v3316 = vcombine.high %v3306, %v3306
    %v3317 = vcombine.high %v3313, %v3313
    %v3336 = vcombine.low %v3229, %v3233
    %v3337 = vcombine.high %v3229, %v3233
    %v3338 = vcombine.low %v3237, %v3241
    %v3339 = vcombine.high %v3237, %v3241
    %v3340 = vcombine.low %v3245, %v3249
    %v3341 = vcombine.high %v3245, %v3249
    %v3342 = vcombine.low %v3253, %v3257
    %v3343 = vcombine.high %v3253, %v3257
    %v3345 = vunpack.c.l.s4 1966171168
    %v3346 = vunpack.c.0.s8 %v3345
    %v3347 = vlaneseq
    %v3348 = vshrl.u32 %v3347, 7
    %v3349 = vsub.s32 %v3346, %v3348
    %v3350 = vrot.slane %v3336, %v3349
    %v3352 = vunpack.c.l.s4 1966171168
    %v3353 = vunpack.c.0.s8 %v3352
    %v3354 = vlaneseq
    %v3355 = vshrl.u32 %v3354, 7
    %v3356 = vsub.s32 %v3353, %v3355
    %v3357 = vrot.slane %v3337, %v3356
    %v3359 = vunpack.c.l.s4 1966171168
    %v3360 = vunpack.c.0.s8 %v3359
    %v3361 = vlaneseq
    %v3362 = vshrl.u32 %v3361, 7
    %v3363 = vsub.s32 %v3360, %v3362
    %v3364 = vrot.slane %v3338, %v3363
    %v3366 = vunpack.c.l.s4 1966171168
    %v3367 = vunpack.c.0.s8 %v3366
    %v3368 = vlaneseq
    %v3369 = vshrl.u32 %v3368, 7
    %v3370 = vsub.s32 %v3367, %v3369
    %v3371 = vrot.slane %v3339, %v3370
    %v3373 = vunpack.c.l.s4 1966171168
    %v3374 = vunpack.c.0.s8 %v3373
    %v3375 = vlaneseq
    %v3376 = vshrl.u32 %v3375, 7
    %v3377 = vsub.s32 %v3374, %v3376
    %v3378 = vrot.slane %v3340, %v3377
    %v3380 = vunpack.c.l.s4 1966171168
    %v3381 = vunpack.c.0.s8 %v3380
    %v3382 = vlaneseq
    %v3383 = vshrl.u32 %v3382, 7
    %v3384 = vsub.s32 %v3381, %v3383
    %v3385 = vrot.slane %v3341, %v3384
    %v3387 = vunpack.c.l.s4 1966171168
    %v3388 = vunpack.c.0.s8 %v3387
    %v3389 = vlaneseq
    %v3390 = vshrl.u32 %v3389, 7
    %v3391 = vsub.s32 %v3388, %v3390
    %v3392 = vrot.slane %v3342, %v3391
    %v3394 = vunpack.c.l.s4 1966171168
    %v3395 = vunpack.c.0.s8 %v3394
    %v3396 = vlaneseq
    %v3397 = vshrl.u32 %v3396, 7
    %v3398 = vsub.s32 %v3395, %v3397
    %v3399 = vrot.slane %v3343, %v3398
    %v3400 = vcombine.low %v3350, %v3364
    %v3401 = vcombine.high %v3350, %v3364
    %v3402 = vcombine.low %v3357, %v3371
    %v3403 = vcombine.high %v3357, %v3371
    %v3404 = vcombine.low %v3378, %v3392
    %v3405 = vcombine.high %v3378, %v3392
    %v3406 = vcombine.low %v3385, %v3399
    %v3407 = vcombine.high %v3385, %v3399
    %v3409 = vunpack.c.l.s4 1966171168
    %v3410 = vunpack.c.0.s8 %v3409
    %v3411 = vlaneseq
    %v3412 = vshrl.u32 %v3411, 7
    %v3413 = vsub.s32 %v3410, %v3412
    %v3414 = vrot.slane %v3400, %v3413
    %v3416 = vunpack.c.l.s4 1966171168
    %v3417 = vunpack.c.0.s8 %v3416
    %v3418 = vlaneseq
    %v3419 = vshrl.u32 %v3418, 7
    %v3420 = vsub.s32 %v3417, %v3419
    %v3421 = vrot.slane %v3402, %v3420
    %v3423 = vunpack.c.l.s4 1966171168
    %v3424 = vunpack.c.0.s8 %v3423
    %v3425 = vlaneseq
    %v3426 = vshrl.u32 %v3425, 7
    %v3427 = vsub.s32 %v3424, %v3426
    %v3428 = vrot.slane %v3401, %v3427
    %v3430 = vunpack.c.l.s4 1966171168
    %v3431 = vunpack.c.0.s8 %v3430
    %v3432 = vlaneseq
    %v3433 = vshrl.u32 %v3432, 7
    %v3434 = vsub.s32 %v3431, %v3433
    %v3435 = vrot.slane %v3403, %v3434
    %v3437 = vunpack.c.l.s4 1966171168
    %v3438 = vunpack.c.0.s8 %v3437
    %v3439 = vlaneseq
    %v3440 = vshrl.u32 %v3439, 7
    %v3441 = vsub.s32 %v3438, %v3440
    %v3442 = vrot.slane %v3404, %v3441
    %v3444 = vunpack.c.l.s4 1966171168
    %v3445 = vunpack.c.0.s8 %v3444
    %v3446 = vlaneseq
    %v3447 = vshrl.u32 %v3446, 7
    %v3448 = vsub.s32 %v3445, %v3447
    %v3449 = vrot.slane %v3406, %v3448
    %v3451 = vunpack.c.l.s4 1966171168
    %v3452 = vunpack.c.0.s8 %v3451
    %v3453 = vlaneseq
    %v3454 = vshrl.u32 %v3453, 7
    %v3455 = vsub.s32 %v3452, %v3454
    %v3456 = vrot.slane %v3405, %v3455
    %v3458 = vunpack.c.l.s4 1966171168
    %v3459 = vunpack.c.0.s8 %v3458
    %v3460 = vlaneseq
    %v3461 = vshrl.u32 %v3460, 7
    %v3462 = vsub.s32 %v3459, %v3461
    %v3463 = vrot.slane %v3407, %v3462
    %v3464 = vcombine.low %v3414, %v3442
    %v3465 = vcombine.high %v3414, %v3442
    %v3466 = vcombine.low %v3421, %v3449
    %v3467 = vcombine.high %v3421, %v3449
    %v3468 = vcombine.low %v3428, %v3456
    %v3469 = vcombine.high %v3428, %v3456
    %v3470 = vcombine.low %v3435, %v3463
    %v3471 = vcombine.high %v3435, %v3463
    %v3472 = vcombine.low %v3261, %v3265
    %v3473 = vcombine.high %v3261, %v3265
    %v3475 = vunpack.c.l.s4 1966171168
    %v3476 = vunpack.c.0.s8 %v3475
    %v3477 = vlaneseq
    %v3478 = vshrl.u32 %v3477, 7
    %v3479 = vsub.s32 %v3476, %v3478
    %v3480 = vrot.slane %v3472, %v3479
    %v3482 = vunpack.c.l.s4 1966171168
    %v3483 = vunpack.c.0.s8 %v3482
    %v3484 = vlaneseq
    %v3485 = vshrl.u32 %v3484, 7
    %v3486 = vsub.s32 %v3483, %v3485
    %v3487 = vrot.slane %v3473, %v3486
    %v3488 = vcombine.high %v3480, %v3480
    %v3489 = vcombine.high %v3487, %v3487
    %v3491 = vunpack.c.l.s4 1966171168
    %v3492 = vunpack.c.0.s8 %v3491
    %v3493 = vlaneseq
    %v3494 = vshrl.u32 %v3493, 7
    %v3495 = vsub.s32 %v3492, %v3494
    %v3496 = vrot.slane %v3480, %v3495
    %v3498 = vunpack.c.l.s4 1966171168
    %v3499 = vunpack.c.0.s8 %v3498
    %v3500 = vlaneseq
    %v3501 = vshrl.u32 %v3500, 7
    %v3502 = vsub.s32 %v3499, %v3501
    %v3503 = vrot.slane %v3487, %v3502
    %v3505 = vunpack.c.l.s4 1966171168
    %v3506 = vunpack.c.0.s8 %v3505
    %v3507 = vlaneseq
    %v3508 = vshrl.u32 %v3507, 7
    %v3509 = vsub.s32 %v3506, %v3508
    %v3510 = vrot.slane %v3488, %v3509
    %v3512 = vunpack.c.l.s4 1966171168
    %v3513 = vunpack.c.0.s8 %v3512
    %v3514 = vlaneseq
    %v3515 = vshrl.u32 %v3514, 7
    %v3516 = vsub.s32 %v3513, %v3515
    %v3517 = vrot.slane %v3489, %v3516
    %v3518 = vcombine.high %v3496, %v3496
    %v3519 = vcombine.high %v3503, %v3503
    %v3520 = vcombine.high %v3510, %v3510
    %v3521 = vcombine.high %v3517, %v3517
    %3538 = vmatprep.subr.mxu0 %v3468
    %3539 = vmatpush1.xpose.msra.mxu0 %v3464
    %3540 = vmatprep.subr.mxu0 %v3510
    %3541 = vmatpush1.xpose.msra.mxu0 %v3496
    %3542 = vmatprep.subr.mxu0 0.0
    %3543 = vmatpush1.xpose.msra.mxu0 0.0
    %3544 = vmatprep.subr.mxu0 0.0
    %3545 = vmatpush1.xpose.msra.mxu0 0.0
    %3546 = vmatprep.subr.mxu0 0.0
    %3547 = vmatpush1.xpose.msra.mxu0 0.0
    %3548 = vmatprep.subr.mxu0 0.0
    %3549 = vmatpush1.xpose.msra.mxu0 0.0
    %3550 = vmatprep.subr.mxu0 0.0
    %3551 = vmatpush1.xpose.msra.mxu0 0.0
    %3552 = vmatprep.subr.mxu0 0.0
    %3553 = vmatpush1.xpose.msra.mxu0 0.0
    %3554 = vmatprep.subr.mxu0 0.0
    %3555 = vmatpush1.xpose.msra.mxu0 0.0
    %3556 = vmatprep.subr.mxu0 0.0
    %3557 = vmatpush1.xpose.msra.mxu0 0.0
    %3558 = vmatprep.subr.mxu0 0.0
    %3559 = vmatpush1.xpose.msra.mxu0 0.0
    %3560 = vmatprep.subr.mxu0 0.0
    %3561 = vmatpush1.xpose.msra.mxu0 0.0
    %3562 = vmatprep.subr.mxu0 0.0
    %3563 = vmatpush1.xpose.msra.mxu0 0.0
    %3564 = vmatprep.subr.mxu0 0.0
    %3565 = vmatpush1.xpose.msra.mxu0 0.0
    %3566 = vmatprep.subr.mxu0 0.0
    %3567 = vmatpush1.xpose.msra.mxu0 0.0
    %3568 = vmatprep.subr.mxu0 0.0
    %3569 = vmatpush1.xpose.msra.mxu0 0.0
    %3570 = vmatprep.subr.mxu0 0.0
    %3571 = vmatpush1.xpose.msra.mxu0 0.0
    %3572 = vmatprep.subr.mxu0 0.0
    %3573 = vmatpush1.xpose.msra.mxu0 0.0
    %3574 = vmatprep.subr.mxu0 0.0
    %3575 = vmatpush1.xpose.msra.mxu0 0.0
    %3576 = vmatprep.subr.mxu0 0.0
    %3577 = vmatpush1.xpose.msra.mxu0 0.0
    %3578 = vmatprep.subr.mxu0 0.0
    %3579 = vmatpush1.xpose.msra.mxu0 0.0
    %3580 = vmatprep.subr.mxu0 0.0
    %3581 = vmatpush1.xpose.msra.mxu0 0.0
    %3582 = vmatprep.subr.mxu0 0.0
    %3583 = vmatpush1.xpose.msra.mxu0 0.0
    %3584 = vmatprep.subr.mxu0 0.0
    %3585 = vmatpush1.xpose.msra.mxu0 0.0
    %3586 = vmatprep.subr.mxu0 0.0
    %3587 = vmatpush1.xpose.msra.mxu0 0.0
    %3588 = vmatprep.subr.mxu0 0.0
    %3589 = vmatpush1.xpose.msra.mxu0 0.0
    %3590 = vmatprep.subr.mxu0 0.0
    %3591 = vmatpush1.xpose.msra.mxu0 0.0
    %3592 = vmatprep.subr.mxu0 0.0
    %3593 = vmatpush1.xpose.msra.mxu0 0.0
    %3594 = vmatprep.subr.mxu0 0.0
    %3595 = vmatpush1.xpose.msra.mxu0 0.0
    %3596 = vmatprep.subr.mxu0 0.0
    %3597 = vmatpush1.xpose.msra.mxu0 0.0
    %3598 = vmatprep.subr.mxu0 0.0
    %3599 = vmatpush1.xpose.msra.mxu0 0.0
    %3600 = vmatprep.subr.mxu0 0.0
    %3601 = vmatpush1.xpose.msra.mxu0 0.0
    %3602 = vmatprep.mubr.f32.mxu0 %v3306
    %3603 = vmatmul.mubr.f32.gmra.mrb[0].mxu0 %v3292
    %v3604 = vpop.f32.mrb[0].mxu0
    %v3605 = vadd.f32 0.0, %v3604
    %v3606 = vpop.f32.mrb[0].mxu0
    %3607 = vdwg.mxu0
    %3608 = vmatprep.subr.mxu0 %v3469
    %3609 = vmatpush1.xpose.msra.mxu0 %v3465
    %3610 = vmatprep.subr.mxu0 %v3520
    %3611 = vmatpush1.xpose.msra.mxu0 %v3518
    %3612 = vmatprep.subr.mxu0 0.0
    %3613 = vmatpush1.xpose.msra.mxu0 0.0
    %3614 = vmatprep.subr.mxu0 0.0
    %3615 = vmatpush1.xpose.msra.mxu0 0.0
    %3616 = vmatprep.subr.mxu0 0.0
    %3617 = vmatpush1.xpose.msra.mxu0 0.0
    %3618 = vmatprep.subr.mxu0 0.0
    %3619 = vmatpush1.xpose.msra.mxu0 0.0
    %3620 = vmatprep.subr.mxu0 0.0
    %3621 = vmatpush1.xpose.msra.mxu0 0.0
    %3622 = vmatprep.subr.mxu0 0.0
    %3623 = vmatpush1.xpose.msra.mxu0 0.0
    %3624 = vmatprep.subr.mxu0 0.0
    %3625 = vmatpush1.xpose.msra.mxu0 0.0
    %3626 = vmatprep.subr.mxu0 0.0
    %3627 = vmatpush1.xpose.msra.mxu0 0.0
    %3628 = vmatprep.subr.mxu0 0.0
    %3629 = vmatpush1.xpose.msra.mxu0 0.0
    %3630 = vmatprep.subr.mxu0 0.0
    %3631 = vmatpush1.xpose.msra.mxu0 0.0
    %3632 = vmatprep.subr.mxu0 0.0
    %3633 = vmatpush1.xpose.msra.mxu0 0.0
    %3634 = vmatprep.subr.mxu0 0.0
    %3635 = vmatpush1.xpose.msra.mxu0 0.0
    %3636 = vmatprep.subr.mxu0 0.0
    %3637 = vmatpush1.xpose.msra.mxu0 0.0
    %3638 = vmatprep.subr.mxu0 0.0
    %3639 = vmatpush1.xpose.msra.mxu0 0.0
    %3640 = vmatprep.subr.mxu0 0.0
    %3641 = vmatpush1.xpose.msra.mxu0 0.0
    %3642 = vmatprep.subr.mxu0 0.0
    %3643 = vmatpush1.xpose.msra.mxu0 0.0
    %3644 = vmatprep.subr.mxu0 0.0
    %3645 = vmatpush1.xpose.msra.mxu0 0.0
    %3646 = vmatprep.subr.mxu0 0.0
    %3647 = vmatpush1.xpose.msra.mxu0 0.0
    %3648 = vmatprep.subr.mxu0 0.0
    %3649 = vmatpush1.xpose.msra.mxu0 0.0
    %3650 = vmatprep.subr.mxu0 0.0
    %3651 = vmatpush1.xpose.msra.mxu0 0.0
    %3652 = vmatprep.subr.mxu0 0.0
    %3653 = vmatpush1.xpose.msra.mxu0 0.0
    %3654 = vmatprep.subr.mxu0 0.0
    %3655 = vmatpush1.xpose.msra.mxu0 0.0
    %3656 = vmatprep.subr.mxu0 0.0
    %3657 = vmatpush1.xpose.msra.mxu0 0.0
    %3658 = vmatprep.subr.mxu0 0.0
    %3659 = vmatpush1.xpose.msra.mxu0 0.0
    %3660 = vmatprep.subr.mxu0 0.0
    %3661 = vmatpush1.xpose.msra.mxu0 0.0
    %3662 = vmatprep.subr.mxu0 0.0
    %3663 = vmatpush1.xpose.msra.mxu0 0.0
    %3664 = vmatprep.subr.mxu0 0.0
    %3665 = vmatpush1.xpose.msra.mxu0 0.0
    %3666 = vmatprep.subr.mxu0 0.0
    %3667 = vmatpush1.xpose.msra.mxu0 0.0
    %3668 = vmatprep.subr.mxu0 0.0
    %3669 = vmatpush1.xpose.msra.mxu0 0.0
    %3670 = vmatprep.subr.mxu0 0.0
    %3671 = vmatpush1.xpose.msra.mxu0 0.0
    %3672 = vmatprep.mubr.f32.mxu0 %v3316
    %3673 = vmatmul.mubr.f32.gmra.mrb[0].mxu0 %v3314
    %v3674 = vpop.f32.mrb[0].mxu0
    %v3675 = vadd.f32 %v3605, %v3674
    %v3676 = vpop.f32.mrb[0].mxu0
    %3677 = vdwg.mxu0
    %3678 = vmatprep.subr.mxu0 %v3470
    %3679 = vmatpush1.xpose.msra.mxu0 %v3466
    %3680 = vmatprep.subr.mxu0 %v3517
    %3681 = vmatpush1.xpose.msra.mxu0 %v3503
    %3682 = vmatprep.subr.mxu0 0.0
    %3683 = vmatpush1.xpose.msra.mxu0 0.0
    %3684 = vmatprep.subr.mxu0 0.0
    %3685 = vmatpush1.xpose.msra.mxu0 0.0
    %3686 = vmatprep.subr.mxu0 0.0
    %3687 = vmatpush1.xpose.msra.mxu0 0.0
    %3688 = vmatprep.subr.mxu0 0.0
    %3689 = vmatpush1.xpose.msra.mxu0 0.0
    %3690 = vmatprep.subr.mxu0 0.0
    %3691 = vmatpush1.xpose.msra.mxu0 0.0
    %3692 = vmatprep.subr.mxu0 0.0
    %3693 = vmatpush1.xpose.msra.mxu0 0.0
    %3694 = vmatprep.subr.mxu0 0.0
    %3695 = vmatpush1.xpose.msra.mxu0 0.0
    %3696 = vmatprep.subr.mxu0 0.0
    %3697 = vmatpush1.xpose.msra.mxu0 0.0
    %3698 = vmatprep.subr.mxu0 0.0
    %3699 = vmatpush1.xpose.msra.mxu0 0.0
    %3700 = vmatprep.subr.mxu0 0.0
    %3701 = vmatpush1.xpose.msra.mxu0 0.0
    %3702 = vmatprep.subr.mxu0 0.0
    %3703 = vmatpush1.xpose.msra.mxu0 0.0
    %3704 = vmatprep.subr.mxu0 0.0
    %3705 = vmatpush1.xpose.msra.mxu0 0.0
    %3706 = vmatprep.subr.mxu0 0.0
    %3707 = vmatpush1.xpose.msra.mxu0 0.0
    %3708 = vmatprep.subr.mxu0 0.0
    %3709 = vmatpush1.xpose.msra.mxu0 0.0
    %3710 = vmatprep.subr.mxu0 0.0
    %3711 = vmatpush1.xpose.msra.mxu0 0.0
    %3712 = vmatprep.subr.mxu0 0.0
    %3713 = vmatpush1.xpose.msra.mxu0 0.0
    %3714 = vmatprep.subr.mxu0 0.0
    %3715 = vmatpush1.xpose.msra.mxu0 0.0
    %3716 = vmatprep.subr.mxu0 0.0
    %3717 = vmatpush1.xpose.msra.mxu0 0.0
    %3718 = vmatprep.subr.mxu0 0.0
    %3719 = vmatpush1.xpose.msra.mxu0 0.0
    %3720 = vmatprep.subr.mxu0 0.0
    %3721 = vmatpush1.xpose.msra.mxu0 0.0
    %3722 = vmatprep.subr.mxu0 0.0
    %3723 = vmatpush1.xpose.msra.mxu0 0.0
    %3724 = vmatprep.subr.mxu0 0.0
    %3725 = vmatpush1.xpose.msra.mxu0 0.0
    %3726 = vmatprep.subr.mxu0 0.0
    %3727 = vmatpush1.xpose.msra.mxu0 0.0
    %3728 = vmatprep.subr.mxu0 0.0
    %3729 = vmatpush1.xpose.msra.mxu0 0.0
    %3730 = vmatprep.subr.mxu0 0.0
    %3731 = vmatpush1.xpose.msra.mxu0 0.0
    %3732 = vmatprep.subr.mxu0 0.0
    %3733 = vmatpush1.xpose.msra.mxu0 0.0
    %3734 = vmatprep.subr.mxu0 0.0
    %3735 = vmatpush1.xpose.msra.mxu0 0.0
    %3736 = vmatprep.subr.mxu0 0.0
    %3737 = vmatpush1.xpose.msra.mxu0 0.0
    %3738 = vmatprep.subr.mxu0 0.0
    %3739 = vmatpush1.xpose.msra.mxu0 0.0
    %3740 = vmatprep.subr.mxu0 0.0
    %3741 = vmatpush1.xpose.msra.mxu0 0.0
    %3742 = vmatprep.mubr.f32.mxu0 %v3313
    %3743 = vmatmul.mubr.f32.gmra.mrb[0].mxu0 %v3299
    %v3744 = vpop.f32.mrb[0].mxu0
    %v3745 = vadd.f32 %v3675, %v3744
    %v3746 = vpop.f32.mrb[0].mxu0
    %3747 = vdwg.mxu0
    %3748 = vmatprep.subr.mxu0 %v3471
    %3749 = vmatpush1.xpose.msra.mxu0 %v3467
    %3750 = vmatprep.subr.mxu0 %v3521
    %3751 = vmatpush1.xpose.msra.mxu0 %v3519
    %3752 = vmatprep.subr.mxu0 0.0
    %3753 = vmatpush1.xpose.msra.mxu0 0.0
    %3754 = vmatprep.subr.mxu0 0.0
    %3755 = vmatpush1.xpose.msra.mxu0 0.0
    %3756 = vmatprep.subr.mxu0 0.0
    %3757 = vmatpush1.xpose.msra.mxu0 0.0
    %3758 = vmatprep.subr.mxu0 0.0
    %3759 = vmatpush1.xpose.msra.mxu0 0.0
    %3760 = vmatprep.subr.mxu0 0.0
    %3761 = vmatpush1.xpose.msra.mxu0 0.0
    %3762 = vmatprep.subr.mxu0 0.0
    %3763 = vmatpush1.xpose.msra.mxu0 0.0
    %3764 = vmatprep.subr.mxu0 0.0
    %3765 = vmatpush1.xpose.msra.mxu0 0.0
    %3766 = vmatprep.subr.mxu0 0.0
    %3767 = vmatpush1.xpose.msra.mxu0 0.0
    %3768 = vmatprep.subr.mxu0 0.0
    %3769 = vmatpush1.xpose.msra.mxu0 0.0
    %3770 = vmatprep.subr.mxu0 0.0
    %3771 = vmatpush1.xpose.msra.mxu0 0.0
    %3772 = vmatprep.subr.mxu0 0.0
    %3773 = vmatpush1.xpose.msra.mxu0 0.0
    %3774 = vmatprep.subr.mxu0 0.0
    %3775 = vmatpush1.xpose.msra.mxu0 0.0
    %3776 = vmatprep.subr.mxu0 0.0
    %3777 = vmatpush1.xpose.msra.mxu0 0.0
    %3778 = vmatprep.subr.mxu0 0.0
    %3779 = vmatpush1.xpose.msra.mxu0 0.0
    %3780 = vmatprep.subr.mxu0 0.0
    %3781 = vmatpush1.xpose.msra.mxu0 0.0
    %3782 = vmatprep.subr.mxu0 0.0
    %3783 = vmatpush1.xpose.msra.mxu0 0.0
    %3784 = vmatprep.subr.mxu0 0.0
    %3785 = vmatpush1.xpose.msra.mxu0 0.0
    %3786 = vmatprep.subr.mxu0 0.0
    %3787 = vmatpush1.xpose.msra.mxu0 0.0
    %3788 = vmatprep.subr.mxu0 0.0
    %3789 = vmatpush1.xpose.msra.mxu0 0.0
    %3790 = vmatprep.subr.mxu0 0.0
    %3791 = vmatpush1.xpose.msra.mxu0 0.0
    %3792 = vmatprep.subr.mxu0 0.0
    %3793 = vmatpush1.xpose.msra.mxu0 0.0
    %3794 = vmatprep.subr.mxu0 0.0
    %3795 = vmatpush1.xpose.msra.mxu0 0.0
    %3796 = vmatprep.subr.mxu0 0.0
    %3797 = vmatpush1.xpose.msra.mxu0 0.0
    %3798 = vmatprep.subr.mxu0 0.0
    %3799 = vmatpush1.xpose.msra.mxu0 0.0
    %3800 = vmatprep.subr.mxu0 0.0
    %3801 = vmatpush1.xpose.msra.mxu0 0.0
    %3802 = vmatprep.subr.mxu0 0.0
    %3803 = vmatpush1.xpose.msra.mxu0 0.0
    %3804 = vmatprep.subr.mxu0 0.0
    %3805 = vmatpush1.xpose.msra.mxu0 0.0
    %3806 = vmatprep.subr.mxu0 0.0
    %3807 = vmatpush1.xpose.msra.mxu0 0.0
    %3808 = vmatprep.subr.mxu0 0.0
    %3809 = vmatpush1.xpose.msra.mxu0 0.0
    %3810 = vmatprep.subr.mxu0 0.0
    %3811 = vmatpush1.xpose.msra.mxu0 0.0
    %3812 = vmatprep.mubr.f32.mxu0 %v3317
    %3813 = vmatmul.mubr.f32.gmra.mrb[0].mxu0 %v3315
    %v3814 = vpop.f32.mrb[0].mxu0
    %v3815 = vadd.f32 %v3745, %v3814
    %v3816 = vpop.f32.mrb[0].mxu0
    %3817 = vdwg.mxu0
    %v3818 = vadd.f32 %v3217, %v3815
    %s3819 = scalar_lea.vmem [#allocation2], 5
    %v3820 = vld [vmem:[%s3819] ss:$8 sm:$0xf]
    %v3821 = vld [vmem:[%s3819] ss:$8 sm:$0xf0]
    %v3822 = vor.u32 %v3820, %v3821
    %s3823 = scalar_lea.vmem [#allocation2], 133
    %v3824 = vld [vmem:[%s3823] ss:$8 sm:$0xf]
    %v3825 = vld [vmem:[%s3823] ss:$8 sm:$0xf0]
    %v3826 = vor.u32 %v3824, %v3825
    %s3827 = scalar_lea.vmem %s3, 5
    %v3828 = vld [vmem:[%s3827] ss:$8 sm:$0xf]
    %v3829 = vld [vmem:[%s3827] ss:$8 sm:$0xf0]
    %v3830 = vor.u32 %v3828, %v3829
    %s3831 = scalar_lea.vmem %s3, 133
    %v3832 = vld [vmem:[%s3831] ss:$8 sm:$0xf]
    %v3833 = vld [vmem:[%s3831] ss:$8 sm:$0xf0]
    %v3834 = vor.u32 %v3832, %v3833
    %s3835 = scalar_lea.vmem %s3, 261
    %v3836 = vld [vmem:[%s3835] ss:$8 sm:$0xf]
    %v3837 = vld [vmem:[%s3835] ss:$8 sm:$0xf0]
    %v3838 = vor.u32 %v3836, %v3837
    %s3839 = scalar_lea.vmem %s3, 389
    %v3840 = vld [vmem:[%s3839] ss:$8 sm:$0xf]
    %v3841 = vld [vmem:[%s3839] ss:$8 sm:$0xf0]
    %v3842 = vor.u32 %v3840, %v3841
    %s3843 = scalar_lea.vmem %s3, 517
    %v3844 = vld [vmem:[%s3843] ss:$8 sm:$0xf]
    %v3845 = vld [vmem:[%s3843] ss:$8 sm:$0xf0]
    %v3846 = vor.u32 %v3844, %v3845
    %s3847 = scalar_lea.vmem %s3, 645
    %v3848 = vld [vmem:[%s3847] ss:$8 sm:$0xf]
    %v3849 = vld [vmem:[%s3847] ss:$8 sm:$0xf0]
    %v3850 = vor.u32 %v3848, %v3849
    %s3851 = scalar_lea.vmem %s3, 773
    %v3852 = vld [vmem:[%s3851] ss:$8 sm:$0xf]
    %v3853 = vld [vmem:[%s3851] ss:$8 sm:$0xf0]
    %v3854 = vor.u32 %v3852, %v3853
    %s3855 = scalar_lea.vmem %s3, 901
    %v3856 = vld [vmem:[%s3855] ss:$8 sm:$0xf]
    %v3857 = vld [vmem:[%s3855] ss:$8 sm:$0xf0]
    %v3858 = vor.u32 %v3856, %v3857
    %s3859 = scalar_lea.vmem %s3, 1029
    %v3860 = vld [vmem:[%s3859] ss:$8 sm:$0xf]
    %v3861 = vld [vmem:[%s3859] ss:$8 sm:$0xf0]
    %v3862 = vor.u32 %v3860, %v3861
    %s3863 = scalar_lea.vmem %s3, 1157
    %v3864 = vld [vmem:[%s3863] ss:$8 sm:$0xf]
    %v3865 = vld [vmem:[%s3863] ss:$8 sm:$0xf0]
    %v3866 = vor.u32 %v3864, %v3865
    %v3869 = vcombine.low %v3822, %v3826
    %v3870 = vcombine.high %v3822, %v3826
    %v3872 = vunpack.c.l.s4 1966171168
    %v3873 = vunpack.c.0.s8 %v3872
    %v3874 = vlaneseq
    %v3875 = vshrl.u32 %v3874, 7
    %v3876 = vsub.s32 %v3873, %v3875
    %v3877 = vrot.slane %v3869, %v3876
    %v3879 = vunpack.c.l.s4 1966171168
    %v3880 = vunpack.c.0.s8 %v3879
    %v3881 = vlaneseq
    %v3882 = vshrl.u32 %v3881, 7
    %v3883 = vsub.s32 %v3880, %v3882
    %v3884 = vrot.slane %v3870, %v3883
    %v3885 = vcombine.high %v3877, %v3877
    %v3886 = vcombine.high %v3884, %v3884
    %v3888 = vunpack.c.l.s4 1966171168
    %v3889 = vunpack.c.0.s8 %v3888
    %v3890 = vlaneseq
    %v3891 = vshrl.u32 %v3890, 7
    %v3892 = vsub.s32 %v3889, %v3891
    %v3893 = vrot.slane %v3877, %v3892
    %v3895 = vunpack.c.l.s4 1966171168
    %v3896 = vunpack.c.0.s8 %v3895
    %v3897 = vlaneseq
    %v3898 = vshrl.u32 %v3897, 7
    %v3899 = vsub.s32 %v3896, %v3898
    %v3900 = vrot.slane %v3884, %v3899
    %v3902 = vunpack.c.l.s4 1966171168
    %v3903 = vunpack.c.0.s8 %v3902
    %v3904 = vlaneseq
    %v3905 = vshrl.u32 %v3904, 7
    %v3906 = vsub.s32 %v3903, %v3905
    %v3907 = vrot.slane %v3885, %v3906
    %v3909 = vunpack.c.l.s4 1966171168
    %v3910 = vunpack.c.0.s8 %v3909
    %v3911 = vlaneseq
    %v3912 = vshrl.u32 %v3911, 7
    %v3913 = vsub.s32 %v3910, %v3912
    %v3914 = vrot.slane %v3886, %v3913
    %v3915 = vcombine.high %v3893, %v3893
    %v3916 = vcombine.high %v3900, %v3900
    %v3917 = vcombine.high %v3907, %v3907
    %v3918 = vcombine.high %v3914, %v3914
    %v3937 = vcombine.low %v3830, %v3834
    %v3938 = vcombine.high %v3830, %v3834
    %v3939 = vcombine.low %v3838, %v3842
    %v3940 = vcombine.high %v3838, %v3842
    %v3941 = vcombine.low %v3846, %v3850
    %v3942 = vcombine.high %v3846, %v3850
    %v3943 = vcombine.low %v3854, %v3858
    %v3944 = vcombine.high %v3854, %v3858
    %v3946 = vunpack.c.l.s4 1966171168
    %v3947 = vunpack.c.0.s8 %v3946
    %v3948 = vlaneseq
    %v3949 = vshrl.u32 %v3948, 7
    %v3950 = vsub.s32 %v3947, %v3949
    %v3951 = vrot.slane %v3937, %v3950
    %v3953 = vunpack.c.l.s4 1966171168
    %v3954 = vunpack.c.0.s8 %v3953
    %v3955 = vlaneseq
    %v3956 = vshrl.u32 %v3955, 7
    %v3957 = vsub.s32 %v3954, %v3956
    %v3958 = vrot.slane %v3938, %v3957
    %v3960 = vunpack.c.l.s4 1966171168
    %v3961 = vunpack.c.0.s8 %v3960
    %v3962 = vlaneseq
    %v3963 = vshrl.u32 %v3962, 7
    %v3964 = vsub.s32 %v3961, %v3963
    %v3965 = vrot.slane %v3939, %v3964
    %v3967 = vunpack.c.l.s4 1966171168
    %v3968 = vunpack.c.0.s8 %v3967
    %v3969 = vlaneseq
    %v3970 = vshrl.u32 %v3969, 7
    %v3971 = vsub.s32 %v3968, %v3970
    %v3972 = vrot.slane %v3940, %v3971
    %v3974 = vunpack.c.l.s4 1966171168
    %v3975 = vunpack.c.0.s8 %v3974
    %v3976 = vlaneseq
    %v3977 = vshrl.u32 %v3976, 7
    %v3978 = vsub.s32 %v3975, %v3977
    %v3979 = vrot.slane %v3941, %v3978
    %v3981 = vunpack.c.l.s4 1966171168
    %v3982 = vunpack.c.0.s8 %v3981
    %v3983 = vlaneseq
    %v3984 = vshrl.u32 %v3983, 7
    %v3985 = vsub.s32 %v3982, %v3984
    %v3986 = vrot.slane %v3942, %v3985
    %v3988 = vunpack.c.l.s4 1966171168
    %v3989 = vunpack.c.0.s8 %v3988
    %v3990 = vlaneseq
    %v3991 = vshrl.u32 %v3990, 7
    %v3992 = vsub.s32 %v3989, %v3991
    %v3993 = vrot.slane %v3943, %v3992
    %v3995 = vunpack.c.l.s4 1966171168
    %v3996 = vunpack.c.0.s8 %v3995
    %v3997 = vlaneseq
    %v3998 = vshrl.u32 %v3997, 7
    %v3999 = vsub.s32 %v3996, %v3998
    %v4000 = vrot.slane %v3944, %v3999
    %v4001 = vcombine.low %v3951, %v3965
    %v4002 = vcombine.high %v3951, %v3965
    %v4003 = vcombine.low %v3958, %v3972
    %v4004 = vcombine.high %v3958, %v3972
    %v4005 = vcombine.low %v3979, %v3993
    %v4006 = vcombine.high %v3979, %v3993
    %v4007 = vcombine.low %v3986, %v4000
    %v4008 = vcombine.high %v3986, %v4000
    %v4010 = vunpack.c.l.s4 1966171168
    %v4011 = vunpack.c.0.s8 %v4010
    %v4012 = vlaneseq
    %v4013 = vshrl.u32 %v4012, 7
    %v4014 = vsub.s32 %v4011, %v4013
    %v4015 = vrot.slane %v4001, %v4014
    %v4017 = vunpack.c.l.s4 1966171168
    %v4018 = vunpack.c.0.s8 %v4017
    %v4019 = vlaneseq
    %v4020 = vshrl.u32 %v4019, 7
    %v4021 = vsub.s32 %v4018, %v4020
    %v4022 = vrot.slane %v4003, %v4021
    %v4024 = vunpack.c.l.s4 1966171168
    %v4025 = vunpack.c.0.s8 %v4024
    %v4026 = vlaneseq
    %v4027 = vshrl.u32 %v4026, 7
    %v4028 = vsub.s32 %v4025, %v4027
    %v4029 = vrot.slane %v4002, %v4028
    %v4031 = vunpack.c.l.s4 1966171168
    %v4032 = vunpack.c.0.s8 %v4031
    %v4033 = vlaneseq
    %v4034 = vshrl.u32 %v4033, 7
    %v4035 = vsub.s32 %v4032, %v4034
    %v4036 = vrot.slane %v4004, %v4035
    %v4038 = vunpack.c.l.s4 1966171168
    %v4039 = vunpack.c.0.s8 %v4038
    %v4040 = vlaneseq
    %v4041 = vshrl.u32 %v4040, 7
    %v4042 = vsub.s32 %v4039, %v4041
    %v4043 = vrot.slane %v4005, %v4042
    %v4045 = vunpack.c.l.s4 1966171168
    %v4046 = vunpack.c.0.s8 %v4045
    %v4047 = vlaneseq
    %v4048 = vshrl.u32 %v4047, 7
    %v4049 = vsub.s32 %v4046, %v4048
    %v4050 = vrot.slane %v4007, %v4049
    %v4052 = vunpack.c.l.s4 1966171168
    %v4053 = vunpack.c.0.s8 %v4052
    %v4054 = vlaneseq
    %v4055 = vshrl.u32 %v4054, 7
    %v4056 = vsub.s32 %v4053, %v4055
    %v4057 = vrot.slane %v4006, %v4056
    %v4059 = vunpack.c.l.s4 1966171168
    %v4060 = vunpack.c.0.s8 %v4059
    %v4061 = vlaneseq
    %v4062 = vshrl.u32 %v4061, 7
    %v4063 = vsub.s32 %v4060, %v4062
    %v4064 = vrot.slane %v4008, %v4063
    %v4065 = vcombine.low %v4015, %v4043
    %v4066 = vcombine.high %v4015, %v4043
    %v4067 = vcombine.low %v4022, %v4050
    %v4068 = vcombine.high %v4022, %v4050
    %v4069 = vcombine.low %v4029, %v4057
    %v4070 = vcombine.high %v4029, %v4057
    %v4071 = vcombine.low %v4036, %v4064
    %v4072 = vcombine.high %v4036, %v4064
    %v4073 = vcombine.low %v3862, %v3866
    %v4074 = vcombine.high %v3862, %v3866
    %v4076 = vunpack.c.l.s4 1966171168
    %v4077 = vunpack.c.0.s8 %v4076
    %v4078 = vlaneseq
    %v4079 = vshrl.u32 %v4078, 7
    %v4080 = vsub.s32 %v4077, %v4079
    %v4081 = vrot.slane %v4073, %v4080
    %v4083 = vunpack.c.l.s4 1966171168
    %v4084 = vunpack.c.0.s8 %v4083
    %v4085 = vlaneseq
    %v4086 = vshrl.u32 %v4085, 7
    %v4087 = vsub.s32 %v4084, %v4086
    %v4088 = vrot.slane %v4074, %v4087
    %v4089 = vcombine.high %v4081, %v4081
    %v4090 = vcombine.high %v4088, %v4088
    %v4092 = vunpack.c.l.s4 1966171168
    %v4093 = vunpack.c.0.s8 %v4092
    %v4094 = vlaneseq
    %v4095 = vshrl.u32 %v4094, 7
    %v4096 = vsub.s32 %v4093, %v4095
    %v4097 = vrot.slane %v4081, %v4096
    %v4099 = vunpack.c.l.s4 1966171168
    %v4100 = vunpack.c.0.s8 %v4099
    %v4101 = vlaneseq
    %v4102 = vshrl.u32 %v4101, 7
    %v4103 = vsub.s32 %v4100, %v4102
    %v4104 = vrot.slane %v4088, %v4103
    %v4106 = vunpack.c.l.s4 1966171168
    %v4107 = vunpack.c.0.s8 %v4106
    %v4108 = vlaneseq
    %v4109 = vshrl.u32 %v4108, 7
    %v4110 = vsub.s32 %v4107, %v4109
    %v4111 = vrot.slane %v4089, %v4110
    %v4113 = vunpack.c.l.s4 1966171168
    %v4114 = vunpack.c.0.s8 %v4113
    %v4115 = vlaneseq
    %v4116 = vshrl.u32 %v4115, 7
    %v4117 = vsub.s32 %v4114, %v4116
    %v4118 = vrot.slane %v4090, %v4117
    %v4119 = vcombine.high %v4097, %v4097
    %v4120 = vcombine.high %v4104, %v4104
    %v4121 = vcombine.high %v4111, %v4111
    %v4122 = vcombine.high %v4118, %v4118
    %4139 = vmatprep.subr.mxu0 %v4069
    %4140 = vmatpush1.xpose.msra.mxu0 %v4065
    %4141 = vmatprep.subr.mxu0 %v4111
    %4142 = vmatpush1.xpose.msra.mxu0 %v4097
    %4143 = vmatprep.subr.mxu0 0.0
    %4144 = vmatpush1.xpose.msra.mxu0 0.0
    %4145 = vmatprep.subr.mxu0 0.0
    %4146 = vmatpush1.xpose.msra.mxu0 0.0
    %4147 = vmatprep.subr.mxu0 0.0
    %4148 = vmatpush1.xpose.msra.mxu0 0.0
    %4149 = vmatprep.subr.mxu0 0.0
    %4150 = vmatpush1.xpose.msra.mxu0 0.0
    %4151 = vmatprep.subr.mxu0 0.0
    %4152 = vmatpush1.xpose.msra.mxu0 0.0
    %4153 = vmatprep.subr.mxu0 0.0
    %4154 = vmatpush1.xpose.msra.mxu0 0.0
    %4155 = vmatprep.subr.mxu0 0.0
    %4156 = vmatpush1.xpose.msra.mxu0 0.0
    %4157 = vmatprep.subr.mxu0 0.0
    %4158 = vmatpush1.xpose.msra.mxu0 0.0
    %4159 = vmatprep.subr.mxu0 0.0
    %4160 = vmatpush1.xpose.msra.mxu0 0.0
    %4161 = vmatprep.subr.mxu0 0.0
    %4162 = vmatpush1.xpose.msra.mxu0 0.0
    %4163 = vmatprep.subr.mxu0 0.0
    %4164 = vmatpush1.xpose.msra.mxu0 0.0
    %4165 = vmatprep.subr.mxu0 0.0
    %4166 = vmatpush1.xpose.msra.mxu0 0.0
    %4167 = vmatprep.subr.mxu0 0.0
    %4168 = vmatpush1.xpose.msra.mxu0 0.0
    %4169 = vmatprep.subr.mxu0 0.0
    %4170 = vmatpush1.xpose.msra.mxu0 0.0
    %4171 = vmatprep.subr.mxu0 0.0
    %4172 = vmatpush1.xpose.msra.mxu0 0.0
    %4173 = vmatprep.subr.mxu0 0.0
    %4174 = vmatpush1.xpose.msra.mxu0 0.0
    %4175 = vmatprep.subr.mxu0 0.0
    %4176 = vmatpush1.xpose.msra.mxu0 0.0
    %4177 = vmatprep.subr.mxu0 0.0
    %4178 = vmatpush1.xpose.msra.mxu0 0.0
    %4179 = vmatprep.subr.mxu0 0.0
    %4180 = vmatpush1.xpose.msra.mxu0 0.0
    %4181 = vmatprep.subr.mxu0 0.0
    %4182 = vmatpush1.xpose.msra.mxu0 0.0
    %4183 = vmatprep.subr.mxu0 0.0
    %4184 = vmatpush1.xpose.msra.mxu0 0.0
    %4185 = vmatprep.subr.mxu0 0.0
    %4186 = vmatpush1.xpose.msra.mxu0 0.0
    %4187 = vmatprep.subr.mxu0 0.0
    %4188 = vmatpush1.xpose.msra.mxu0 0.0
    %4189 = vmatprep.subr.mxu0 0.0
    %4190 = vmatpush1.xpose.msra.mxu0 0.0
    %4191 = vmatprep.subr.mxu0 0.0
    %4192 = vmatpush1.xpose.msra.mxu0 0.0
    %4193 = vmatprep.subr.mxu0 0.0
    %4194 = vmatpush1.xpose.msra.mxu0 0.0
    %4195 = vmatprep.subr.mxu0 0.0
    %4196 = vmatpush1.xpose.msra.mxu0 0.0
    %4197 = vmatprep.subr.mxu0 0.0
    %4198 = vmatpush1.xpose.msra.mxu0 0.0
    %4199 = vmatprep.subr.mxu0 0.0
    %4200 = vmatpush1.xpose.msra.mxu0 0.0
    %4201 = vmatprep.subr.mxu0 0.0
    %4202 = vmatpush1.xpose.msra.mxu0 0.0
    %4203 = vmatprep.mubr.f32.mxu0 %v3907
    %4204 = vmatmul.mubr.f32.gmra.mrb[0].mxu0 %v3893
    %v4205 = vpop.f32.mrb[0].mxu0
    %v4206 = vadd.f32 0.0, %v4205
    %v4207 = vpop.f32.mrb[0].mxu0
    %4208 = vdwg.mxu0
    %4209 = vmatprep.subr.mxu0 %v4070
    %4210 = vmatpush1.xpose.msra.mxu0 %v4066
    %4211 = vmatprep.subr.mxu0 %v4121
    %4212 = vmatpush1.xpose.msra.mxu0 %v4119
    %4213 = vmatprep.subr.mxu0 0.0
    %4214 = vmatpush1.xpose.msra.mxu0 0.0
    %4215 = vmatprep.subr.mxu0 0.0
    %4216 = vmatpush1.xpose.msra.mxu0 0.0
    %4217 = vmatprep.subr.mxu0 0.0
    %4218 = vmatpush1.xpose.msra.mxu0 0.0
    %4219 = vmatprep.subr.mxu0 0.0
    %4220 = vmatpush1.xpose.msra.mxu0 0.0
    %4221 = vmatprep.subr.mxu0 0.0
    %4222 = vmatpush1.xpose.msra.mxu0 0.0
    %4223 = vmatprep.subr.mxu0 0.0
    %4224 = vmatpush1.xpose.msra.mxu0 0.0
    %4225 = vmatprep.subr.mxu0 0.0
    %4226 = vmatpush1.xpose.msra.mxu0 0.0
    %4227 = vmatprep.subr.mxu0 0.0
    %4228 = vmatpush1.xpose.msra.mxu0 0.0
    %4229 = vmatprep.subr.mxu0 0.0
    %4230 = vmatpush1.xpose.msra.mxu0 0.0
    %4231 = vmatprep.subr.mxu0 0.0
    %4232 = vmatpush1.xpose.msra.mxu0 0.0
    %4233 = vmatprep.subr.mxu0 0.0
    %4234 = vmatpush1.xpose.msra.mxu0 0.0
    %4235 = vmatprep.subr.mxu0 0.0
    %4236 = vmatpush1.xpose.msra.mxu0 0.0
    %4237 = vmatprep.subr.mxu0 0.0
    %4238 = vmatpush1.xpose.msra.mxu0 0.0
    %4239 = vmatprep.subr.mxu0 0.0
    %4240 = vmatpush1.xpose.msra.mxu0 0.0
    %4241 = vmatprep.subr.mxu0 0.0
    %4242 = vmatpush1.xpose.msra.mxu0 0.0
    %4243 = vmatprep.subr.mxu0 0.0
    %4244 = vmatpush1.xpose.msra.mxu0 0.0
    %4245 = vmatprep.subr.mxu0 0.0
    %4246 = vmatpush1.xpose.msra.mxu0 0.0
    %4247 = vmatprep.subr.mxu0 0.0
    %4248 = vmatpush1.xpose.msra.mxu0 0.0
    %4249 = vmatprep.subr.mxu0 0.0
    %4250 = vmatpush1.xpose.msra.mxu0 0.0
    %4251 = vmatprep.subr.mxu0 0.0
    %4252 = vmatpush1.xpose.msra.mxu0 0.0
    %4253 = vmatprep.subr.mxu0 0.0
    %4254 = vmatpush1.xpose.msra.mxu0 0.0
    %4255 = vmatprep.subr.mxu0 0.0
    %4256 = vmatpush1.xpose.msra.mxu0 0.0
    %4257 = vmatprep.subr.mxu0 0.0
    %4258 = vmatpush1.xpose.msra.mxu0 0.0
    %4259 = vmatprep.subr.mxu0 0.0
    %4260 = vmatpush1.xpose.msra.mxu0 0.0
    %4261 = vmatprep.subr.mxu0 0.0
    %4262 = vmatpush1.xpose.msra.mxu0 0.0
    %4263 = vmatprep.subr.mxu0 0.0
    %4264 = vmatpush1.xpose.msra.mxu0 0.0
    %4265 = vmatprep.subr.mxu0 0.0
    %4266 = vmatpush1.xpose.msra.mxu0 0.0
    %4267 = vmatprep.subr.mxu0 0.0
    %4268 = vmatpush1.xpose.msra.mxu0 0.0
    %4269 = vmatprep.subr.mxu0 0.0
    %4270 = vmatpush1.xpose.msra.mxu0 0.0
    %4271 = vmatprep.subr.mxu0 0.0
    %4272 = vmatpush1.xpose.msra.mxu0 0.0
    %4273 = vmatprep.mubr.f32.mxu0 %v3917
    %4274 = vmatmul.mubr.f32.gmra.mrb[0].mxu0 %v3915
    %v4275 = vpop.f32.mrb[0].mxu0
    %v4276 = vadd.f32 %v4206, %v4275
    %v4277 = vpop.f32.mrb[0].mxu0
    %4278 = vdwg.mxu0
    %4279 = vmatprep.subr.mxu0 %v4071
    %4280 = vmatpush1.xpose.msra.mxu0 %v4067
    %4281 = vmatprep.subr.mxu0 %v4118
    %4282 = vmatpush1.xpose.msra.mxu0 %v4104
    %4283 = vmatprep.subr.mxu0 0.0
    %4284 = vmatpush1.xpose.msra.mxu0 0.0
    %4285 = vmatprep.subr.mxu0 0.0
    %4286 = vmatpush1.xpose.msra.mxu0 0.0
    %4287 = vmatprep.subr.mxu0 0.0
    %4288 = vmatpush1.xpose.msra.mxu0 0.0
    %4289 = vmatprep.subr.mxu0 0.0
    %4290 = vmatpush1.xpose.msra.mxu0 0.0
    %4291 = vmatprep.subr.mxu0 0.0
    %4292 = vmatpush1.xpose.msra.mxu0 0.0
    %4293 = vmatprep.subr.mxu0 0.0
    %4294 = vmatpush1.xpose.msra.mxu0 0.0
    %4295 = vmatprep.subr.mxu0 0.0
    %4296 = vmatpush1.xpose.msra.mxu0 0.0
    %4297 = vmatprep.subr.mxu0 0.0
    %4298 = vmatpush1.xpose.msra.mxu0 0.0
    %4299 = vmatprep.subr.mxu0 0.0
    %4300 = vmatpush1.xpose.msra.mxu0 0.0
    %4301 = vmatprep.subr.mxu0 0.0
    %4302 = vmatpush1.xpose.msra.mxu0 0.0
    %4303 = vmatprep.subr.mxu0 0.0
    %4304 = vmatpush1.xpose.msra.mxu0 0.0
    %4305 = vmatprep.subr.mxu0 0.0
    %4306 = vmatpush1.xpose.msra.mxu0 0.0
    %4307 = vmatprep.subr.mxu0 0.0
    %4308 = vmatpush1.xpose.msra.mxu0 0.0
    %4309 = vmatprep.subr.mxu0 0.0
    %4310 = vmatpush1.xpose.msra.mxu0 0.0
    %4311 = vmatprep.subr.mxu0 0.0
    %4312 = vmatpush1.xpose.msra.mxu0 0.0
    %4313 = vmatprep.subr.mxu0 0.0
    %4314 = vmatpush1.xpose.msra.mxu0 0.0
    %4315 = vmatprep.subr.mxu0 0.0
    %4316 = vmatpush1.xpose.msra.mxu0 0.0
    %4317 = vmatprep.subr.mxu0 0.0
    %4318 = vmatpush1.xpose.msra.mxu0 0.0
    %4319 = vmatprep.subr.mxu0 0.0
    %4320 = vmatpush1.xpose.msra.mxu0 0.0
    %4321 = vmatprep.subr.mxu0 0.0
    %4322 = vmatpush1.xpose.msra.mxu0 0.0
    %4323 = vmatprep.subr.mxu0 0.0
    %4324 = vmatpush1.xpose.msra.mxu0 0.0
    %4325 = vmatprep.subr.mxu0 0.0
    %4326 = vmatpush1.xpose.msra.mxu0 0.0
    %4327 = vmatprep.subr.mxu0 0.0
    %4328 = vmatpush1.xpose.msra.mxu0 0.0
    %4329 = vmatprep.subr.mxu0 0.0
    %4330 = vmatpush1.xpose.msra.mxu0 0.0
    %4331 = vmatprep.subr.mxu0 0.0
    %4332 = vmatpush1.xpose.msra.mxu0 0.0
    %4333 = vmatprep.subr.mxu0 0.0
    %4334 = vmatpush1.xpose.msra.mxu0 0.0
    %4335 = vmatprep.subr.mxu0 0.0
    %4336 = vmatpush1.xpose.msra.mxu0 0.0
    %4337 = vmatprep.subr.mxu0 0.0
    %4338 = vmatpush1.xpose.msra.mxu0 0.0
    %4339 = vmatprep.subr.mxu0 0.0
    %4340 = vmatpush1.xpose.msra.mxu0 0.0
    %4341 = vmatprep.subr.mxu0 0.0
    %4342 = vmatpush1.xpose.msra.mxu0 0.0
    %4343 = vmatprep.mubr.f32.mxu0 %v3914
    %4344 = vmatmul.mubr.f32.gmra.mrb[0].mxu0 %v3900
    %v4345 = vpop.f32.mrb[0].mxu0
    %v4346 = vadd.f32 %v4276, %v4345
    %v4347 = vpop.f32.mrb[0].mxu0
    %4348 = vdwg.mxu0
    %4349 = vmatprep.subr.mxu0 %v4072
    %4350 = vmatpush1.xpose.msra.mxu0 %v4068
    %4351 = vmatprep.subr.mxu0 %v4122
    %4352 = vmatpush1.xpose.msra.mxu0 %v4120
    %4353 = vmatprep.subr.mxu0 0.0
    %4354 = vmatpush1.xpose.msra.mxu0 0.0
    %4355 = vmatprep.subr.mxu0 0.0
    %4356 = vmatpush1.xpose.msra.mxu0 0.0
    %4357 = vmatprep.subr.mxu0 0.0
    %4358 = vmatpush1.xpose.msra.mxu0 0.0
    %4359 = vmatprep.subr.mxu0 0.0
    %4360 = vmatpush1.xpose.msra.mxu0 0.0
    %4361 = vmatprep.subr.mxu0 0.0
    %4362 = vmatpush1.xpose.msra.mxu0 0.0
    %4363 = vmatprep.subr.mxu0 0.0
    %4364 = vmatpush1.xpose.msra.mxu0 0.0
    %4365 = vmatprep.subr.mxu0 0.0
    %4366 = vmatpush1.xpose.msra.mxu0 0.0
    %4367 = vmatprep.subr.mxu0 0.0
    %4368 = vmatpush1.xpose.msra.mxu0 0.0
    %4369 = vmatprep.subr.mxu0 0.0
    %4370 = vmatpush1.xpose.msra.mxu0 0.0
    %4371 = vmatprep.subr.mxu0 0.0
    %4372 = vmatpush1.xpose.msra.mxu0 0.0
    %4373 = vmatprep.subr.mxu0 0.0
    %4374 = vmatpush1.xpose.msra.mxu0 0.0
    %4375 = vmatprep.subr.mxu0 0.0
    %4376 = vmatpush1.xpose.msra.mxu0 0.0
    %4377 = vmatprep.subr.mxu0 0.0
    %4378 = vmatpush1.xpose.msra.mxu0 0.0
    %4379 = vmatprep.subr.mxu0 0.0
    %4380 = vmatpush1.xpose.msra.mxu0 0.0
    %4381 = vmatprep.subr.mxu0 0.0
    %4382 = vmatpush1.xpose.msra.mxu0 0.0
    %4383 = vmatprep.subr.mxu0 0.0
    %4384 = vmatpush1.xpose.msra.mxu0 0.0
    %4385 = vmatprep.subr.mxu0 0.0
    %4386 = vmatpush1.xpose.msra.mxu0 0.0
    %4387 = vmatprep.subr.mxu0 0.0
    %4388 = vmatpush1.xpose.msra.mxu0 0.0
    %4389 = vmatprep.subr.mxu0 0.0
    %4390 = vmatpush1.xpose.msra.mxu0 0.0
    %4391 = vmatprep.subr.mxu0 0.0
    %4392 = vmatpush1.xpose.msra.mxu0 0.0
    %4393 = vmatprep.subr.mxu0 0.0
    %4394 = vmatpush1.xpose.msra.mxu0 0.0
    %4395 = vmatprep.subr.mxu0 0.0
    %4396 = vmatpush1.xpose.msra.mxu0 0.0
    %4397 = vmatprep.subr.mxu0 0.0
    %4398 = vmatpush1.xpose.msra.mxu0 0.0
    %4399 = vmatprep.subr.mxu0 0.0
    %4400 = vmatpush1.xpose.msra.mxu0 0.0
    %4401 = vmatprep.subr.mxu0 0.0
    %4402 = vmatpush1.xpose.msra.mxu0 0.0
    %4403 = vmatprep.subr.mxu0 0.0
    %4404 = vmatpush1.xpose.msra.mxu0 0.0
    %4405 = vmatprep.subr.mxu0 0.0
    %4406 = vmatpush1.xpose.msra.mxu0 0.0
    %4407 = vmatprep.subr.mxu0 0.0
    %4408 = vmatpush1.xpose.msra.mxu0 0.0
    %4409 = vmatprep.subr.mxu0 0.0
    %4410 = vmatpush1.xpose.msra.mxu0 0.0
    %4411 = vmatprep.subr.mxu0 0.0
    %4412 = vmatpush1.xpose.msra.mxu0 0.0
    %4413 = vmatprep.mubr.f32.mxu0 %v3918
    %4414 = vmatmul.mubr.f32.gmra.mrb[0].mxu0 %v3916
    %v4415 = vpop.f32.mrb[0].mxu0
    %v4416 = vadd.f32 %v4346, %v4415
    %v4417 = vpop.f32.mrb[0].mxu0
    %4418 = vdwg.mxu0
    %v4419 = vadd.f32 %v3818, %v4416
    %s4420 = scalar_lea.vmem [#allocation2], 6
    %v4421 = vld [vmem:[%s4420] ss:$8 sm:$0xf]
    %v4422 = vld [vmem:[%s4420] ss:$8 sm:$0xf0]
    %v4423 = vor.u32 %v4421, %v4422
    %s4424 = scalar_lea.vmem [#allocation2], 134
    %v4425 = vld [vmem:[%s4424] ss:$8 sm:$0xf]
    %v4426 = vld [vmem:[%s4424] ss:$8 sm:$0xf0]
    %v4427 = vor.u32 %v4425, %v4426
    %s4428 = scalar_lea.vmem %s3, 6
    %v4429 = vld [vmem:[%s4428] ss:$8 sm:$0xf]
    %v4430 = vld [vmem:[%s4428] ss:$8 sm:$0xf0]
    %v4431 = vor.u32 %v4429, %v4430
    %s4432 = scalar_lea.vmem %s3, 134
    %v4433 = vld [vmem:[%s4432] ss:$8 sm:$0xf]
    %v4434 = vld [vmem:[%s4432] ss:$8 sm:$0xf0]
    %v4435 = vor.u32 %v4433, %v4434
    %s4436 = scalar_lea.vmem %s3, 262
    %v4437 = vld [vmem:[%s4436] ss:$8 sm:$0xf]
    %v4438 = vld [vmem:[%s4436] ss:$8 sm:$0xf0]
    %v4439 = vor.u32 %v4437, %v4438
    %s4440 = scalar_lea.vmem %s3, 390
    %v4441 = vld [vmem:[%s4440] ss:$8 sm:$0xf]
    %v4442 = vld [vmem:[%s4440] ss:$8 sm:$0xf0]
    %v4443 = vor.u32 %v4441, %v4442
    %s4444 = scalar_lea.vmem %s3, 518
    %v4445 = vld [vmem:[%s4444] ss:$8 sm:$0xf]
    %v4446 = vld [vmem:[%s4444] ss:$8 sm:$0xf0]
    %v4447 = vor.u32 %v4445, %v4446
    %s4448 = scalar_lea.vmem %s3, 646
    %v4449 = vld [vmem:[%s4448] ss:$8 sm:$0xf]
    %v4450 = vld [vmem:[%s4448] ss:$8 sm:$0xf0]
    %v4451 = vor.u32 %v4449, %v4450
    %s4452 = scalar_lea.vmem %s3, 774
    %v4453 = vld [vmem:[%s4452] ss:$8 sm:$0xf]
    %v4454 = vld [vmem:[%s4452] ss:$8 sm:$0xf0]
    %v4455 = vor.u32 %v4453, %v4454
    %s4456 = scalar_lea.vmem %s3, 902
    %v4457 = vld [vmem:[%s4456] ss:$8 sm:$0xf]
    %v4458 = vld [vmem:[%s4456] ss:$8 sm:$0xf0]
    %v4459 = vor.u32 %v4457, %v4458
    %s4460 = scalar_lea.vmem %s3, 1030
    %v4461 = vld [vmem:[%s4460] ss:$8 sm:$0xf]
    %v4462 = vld [vmem:[%s4460] ss:$8 sm:$0xf0]
    %v4463 = vor.u32 %v4461, %v4462
    %s4464 = scalar_lea.vmem %s3, 1158
    %v4465 = vld [vmem:[%s4464] ss:$8 sm:$0xf]
    %v4466 = vld [vmem:[%s4464] ss:$8 sm:$0xf0]
    %v4467 = vor.u32 %v4465, %v4466
    %v4470 = vcombine.low %v4423, %v4427
    %v4471 = vcombine.high %v4423, %v4427
    %v4473 = vunpack.c.l.s4 1966171168
    %v4474 = vunpack.c.0.s8 %v4473
    %v4475 = vlaneseq
    %v4476 = vshrl.u32 %v4475, 7
    %v4477 = vsub.s32 %v4474, %v4476
    %v4478 = vrot.slane %v4470, %v4477
    %v4480 = vunpack.c.l.s4 1966171168
    %v4481 = vunpack.c.0.s8 %v4480
    %v4482 = vlaneseq
    %v4483 = vshrl.u32 %v4482, 7
    %v4484 = vsub.s32 %v4481, %v4483
    %v4485 = vrot.slane %v4471, %v4484
    %v4486 = vcombine.high %v4478, %v4478
    %v4487 = vcombine.high %v4485, %v4485
    %v4489 = vunpack.c.l.s4 1966171168
    %v4490 = vunpack.c.0.s8 %v4489
    %v4491 = vlaneseq
    %v4492 = vshrl.u32 %v4491, 7
    %v4493 = vsub.s32 %v4490, %v4492
    %v4494 = vrot.slane %v4478, %v4493
    %v4496 = vunpack.c.l.s4 1966171168
    %v4497 = vunpack.c.0.s8 %v4496
    %v4498 = vlaneseq
    %v4499 = vshrl.u32 %v4498, 7
    %v4500 = vsub.s32 %v4497, %v4499
    %v4501 = vrot.slane %v4485, %v4500
    %v4503 = vunpack.c.l.s4 1966171168
    %v4504 = vunpack.c.0.s8 %v4503
    %v4505 = vlaneseq
    %v4506 = vshrl.u32 %v4505, 7
    %v4507 = vsub.s32 %v4504, %v4506
    %v4508 = vrot.slane %v4486, %v4507
    %v4510 = vunpack.c.l.s4 1966171168
    %v4511 = vunpack.c.0.s8 %v4510
    %v4512 = vlaneseq
    %v4513 = vshrl.u32 %v4512, 7
    %v4514 = vsub.s32 %v4511, %v4513
    %v4515 = vrot.slane %v4487, %v4514
    %v4516 = vcombine.high %v4494, %v4494
    %v4517 = vcombine.high %v4501, %v4501
    %v4518 = vcombine.high %v4508, %v4508
    %v4519 = vcombine.high %v4515, %v4515
    %v4538 = vcombine.low %v4431, %v4435
    %v4539 = vcombine.high %v4431, %v4435
    %v4540 = vcombine.low %v4439, %v4443
    %v4541 = vcombine.high %v4439, %v4443
    %v4542 = vcombine.low %v4447, %v4451
    %v4543 = vcombine.high %v4447, %v4451
    %v4544 = vcombine.low %v4455, %v4459
    %v4545 = vcombine.high %v4455, %v4459
    %v4547 = vunpack.c.l.s4 1966171168
    %v4548 = vunpack.c.0.s8 %v4547
    %v4549 = vlaneseq
    %v4550 = vshrl.u32 %v4549, 7
    %v4551 = vsub.s32 %v4548, %v4550
    %v4552 = vrot.slane %v4538, %v4551
    %v4554 = vunpack.c.l.s4 1966171168
    %v4555 = vunpack.c.0.s8 %v4554
    %v4556 = vlaneseq
    %v4557 = vshrl.u32 %v4556, 7
    %v4558 = vsub.s32 %v4555, %v4557
    %v4559 = vrot.slane %v4539, %v4558
    %v4561 = vunpack.c.l.s4 1966171168
    %v4562 = vunpack.c.0.s8 %v4561
    %v4563 = vlaneseq
    %v4564 = vshrl.u32 %v4563, 7
    %v4565 = vsub.s32 %v4562, %v4564
    %v4566 = vrot.slane %v4540, %v4565
    %v4568 = vunpack.c.l.s4 1966171168
    %v4569 = vunpack.c.0.s8 %v4568
    %v4570 = vlaneseq
    %v4571 = vshrl.u32 %v4570, 7
    %v4572 = vsub.s32 %v4569, %v4571
    %v4573 = vrot.slane %v4541, %v4572
    %v4575 = vunpack.c.l.s4 1966171168
    %v4576 = vunpack.c.0.s8 %v4575
    %v4577 = vlaneseq
    %v4578 = vshrl.u32 %v4577, 7
    %v4579 = vsub.s32 %v4576, %v4578
    %v4580 = vrot.slane %v4542, %v4579
    %v4582 = vunpack.c.l.s4 1966171168
    %v4583 = vunpack.c.0.s8 %v4582
    %v4584 = vlaneseq
    %v4585 = vshrl.u32 %v4584, 7
    %v4586 = vsub.s32 %v4583, %v4585
    %v4587 = vrot.slane %v4543, %v4586
    %v4589 = vunpack.c.l.s4 1966171168
    %v4590 = vunpack.c.0.s8 %v4589
    %v4591 = vlaneseq
    %v4592 = vshrl.u32 %v4591, 7
    %v4593 = vsub.s32 %v4590, %v4592
    %v4594 = vrot.slane %v4544, %v4593
    %v4596 = vunpack.c.l.s4 1966171168
    %v4597 = vunpack.c.0.s8 %v4596
    %v4598 = vlaneseq
    %v4599 = vshrl.u32 %v4598, 7
    %v4600 = vsub.s32 %v4597, %v4599
    %v4601 = vrot.slane %v4545, %v4600
    %v4602 = vcombine.low %v4552, %v4566
    %v4603 = vcombine.high %v4552, %v4566
    %v4604 = vcombine.low %v4559, %v4573
    %v4605 = vcombine.high %v4559, %v4573
    %v4606 = vcombine.low %v4580, %v4594
    %v4607 = vcombine.high %v4580, %v4594
    %v4608 = vcombine.low %v4587, %v4601
    %v4609 = vcombine.high %v4587, %v4601
    %v4611 = vunpack.c.l.s4 1966171168
    %v4612 = vunpack.c.0.s8 %v4611
    %v4613 = vlaneseq
    %v4614 = vshrl.u32 %v4613, 7
    %v4615 = vsub.s32 %v4612, %v4614
    %v4616 = vrot.slane %v4602, %v4615
    %v4618 = vunpack.c.l.s4 1966171168
    %v4619 = vunpack.c.0.s8 %v4618
    %v4620 = vlaneseq
    %v4621 = vshrl.u32 %v4620, 7
    %v4622 = vsub.s32 %v4619, %v4621
    %v4623 = vrot.slane %v4604, %v4622
    %v4625 = vunpack.c.l.s4 1966171168
    %v4626 = vunpack.c.0.s8 %v4625
    %v4627 = vlaneseq
    %v4628 = vshrl.u32 %v4627, 7
    %v4629 = vsub.s32 %v4626, %v4628
    %v4630 = vrot.slane %v4603, %v4629
    %v4632 = vunpack.c.l.s4 1966171168
    %v4633 = vunpack.c.0.s8 %v4632
    %v4634 = vlaneseq
    %v4635 = vshrl.u32 %v4634, 7
    %v4636 = vsub.s32 %v4633, %v4635
    %v4637 = vrot.slane %v4605, %v4636
    %v4639 = vunpack.c.l.s4 1966171168
    %v4640 = vunpack.c.0.s8 %v4639
    %v4641 = vlaneseq
    %v4642 = vshrl.u32 %v4641, 7
    %v4643 = vsub.s32 %v4640, %v4642
    %v4644 = vrot.slane %v4606, %v4643
    %v4646 = vunpack.c.l.s4 1966171168
    %v4647 = vunpack.c.0.s8 %v4646
    %v4648 = vlaneseq
    %v4649 = vshrl.u32 %v4648, 7
    %v4650 = vsub.s32 %v4647, %v4649
    %v4651 = vrot.slane %v4608, %v4650
    %v4653 = vunpack.c.l.s4 1966171168
    %v4654 = vunpack.c.0.s8 %v4653
    %v4655 = vlaneseq
    %v4656 = vshrl.u32 %v4655, 7
    %v4657 = vsub.s32 %v4654, %v4656
    %v4658 = vrot.slane %v4607, %v4657
    %v4660 = vunpack.c.l.s4 1966171168
    %v4661 = vunpack.c.0.s8 %v4660
    %v4662 = vlaneseq
    %v4663 = vshrl.u32 %v4662, 7
    %v4664 = vsub.s32 %v4661, %v4663
    %v4665 = vrot.slane %v4609, %v4664
    %v4666 = vcombine.low %v4616, %v4644
    %v4667 = vcombine.high %v4616, %v4644
    %v4668 = vcombine.low %v4623, %v4651
    %v4669 = vcombine.high %v4623, %v4651
    %v4670 = vcombine.low %v4630, %v4658
    %v4671 = vcombine.high %v4630, %v4658
    %v4672 = vcombine.low %v4637, %v4665
    %v4673 = vcombine.high %v4637, %v4665
    %v4674 = vcombine.low %v4463, %v4467
    %v4675 = vcombine.high %v4463, %v4467
    %v4677 = vunpack.c.l.s4 1966171168
    %v4678 = vunpack.c.0.s8 %v4677
    %v4679 = vlaneseq
    %v4680 = vshrl.u32 %v4679, 7
    %v4681 = vsub.s32 %v4678, %v4680
    %v4682 = vrot.slane %v4674, %v4681
    %v4684 = vunpack.c.l.s4 1966171168
    %v4685 = vunpack.c.0.s8 %v4684
    %v4686 = vlaneseq
    %v4687 = vshrl.u32 %v4686, 7
    %v4688 = vsub.s32 %v4685, %v4687
    %v4689 = vrot.slane %v4675, %v4688
    %v4690 = vcombine.high %v4682, %v4682
    %v4691 = vcombine.high %v4689, %v4689
    %v4693 = vunpack.c.l.s4 1966171168
    %v4694 = vunpack.c.0.s8 %v4693
    %v4695 = vlaneseq
    %v4696 = vshrl.u32 %v4695, 7
    %v4697 = vsub.s32 %v4694, %v4696
    %v4698 = vrot.slane %v4682, %v4697
    %v4700 = vunpack.c.l.s4 1966171168
    %v4701 = vunpack.c.0.s8 %v4700
    %v4702 = vlaneseq
    %v4703 = vshrl.u32 %v4702, 7
    %v4704 = vsub.s32 %v4701, %v4703
    %v4705 = vrot.slane %v4689, %v4704
    %v4707 = vunpack.c.l.s4 1966171168
    %v4708 = vunpack.c.0.s8 %v4707
    %v4709 = vlaneseq
    %v4710 = vshrl.u32 %v4709, 7
    %v4711 = vsub.s32 %v4708, %v4710
    %v4712 = vrot.slane %v4690, %v4711
    %v4714 = vunpack.c.l.s4 1966171168
    %v4715 = vunpack.c.0.s8 %v4714
    %v4716 = vlaneseq
    %v4717 = vshrl.u32 %v4716, 7
    %v4718 = vsub.s32 %v4715, %v4717
    %v4719 = vrot.slane %v4691, %v4718
    %v4720 = vcombine.high %v4698, %v4698
    %v4721 = vcombine.high %v4705, %v4705
    %v4722 = vcombine.high %v4712, %v4712
    %v4723 = vcombine.high %v4719, %v4719
    %4740 = vmatprep.subr.mxu0 %v4670
    %4741 = vmatpush1.xpose.msra.mxu0 %v4666
    %4742 = vmatprep.subr.mxu0 %v4712
    %4743 = vmatpush1.xpose.msra.mxu0 %v4698
    %4744 = vmatprep.subr.mxu0 0.0
    %4745 = vmatpush1.xpose.msra.mxu0 0.0
    %4746 = vmatprep.subr.mxu0 0.0
    %4747 = vmatpush1.xpose.msra.mxu0 0.0
    %4748 = vmatprep.subr.mxu0 0.0
    %4749 = vmatpush1.xpose.msra.mxu0 0.0
    %4750 = vmatprep.subr.mxu0 0.0
    %4751 = vmatpush1.xpose.msra.mxu0 0.0
    %4752 = vmatprep.subr.mxu0 0.0
    %4753 = vmatpush1.xpose.msra.mxu0 0.0
    %4754 = vmatprep.subr.mxu0 0.0
    %4755 = vmatpush1.xpose.msra.mxu0 0.0
    %4756 = vmatprep.subr.mxu0 0.0
    %4757 = vmatpush1.xpose.msra.mxu0 0.0
    %4758 = vmatprep.subr.mxu0 0.0
    %4759 = vmatpush1.xpose.msra.mxu0 0.0
    %4760 = vmatprep.subr.mxu0 0.0
    %4761 = vmatpush1.xpose.msra.mxu0 0.0
    %4762 = vmatprep.subr.mxu0 0.0
    %4763 = vmatpush1.xpose.msra.mxu0 0.0
    %4764 = vmatprep.subr.mxu0 0.0
    %4765 = vmatpush1.xpose.msra.mxu0 0.0
    %4766 = vmatprep.subr.mxu0 0.0
    %4767 = vmatpush1.xpose.msra.mxu0 0.0
    %4768 = vmatprep.subr.mxu0 0.0
    %4769 = vmatpush1.xpose.msra.mxu0 0.0
    %4770 = vmatprep.subr.mxu0 0.0
    %4771 = vmatpush1.xpose.msra.mxu0 0.0
    %4772 = vmatprep.subr.mxu0 0.0
    %4773 = vmatpush1.xpose.msra.mxu0 0.0
    %4774 = vmatprep.subr.mxu0 0.0
    %4775 = vmatpush1.xpose.msra.mxu0 0.0
    %4776 = vmatprep.subr.mxu0 0.0
    %4777 = vmatpush1.xpose.msra.mxu0 0.0
    %4778 = vmatprep.subr.mxu0 0.0
    %4779 = vmatpush1.xpose.msra.mxu0 0.0
    %4780 = vmatprep.subr.mxu0 0.0
    %4781 = vmatpush1.xpose.msra.mxu0 0.0
    %4782 = vmatprep.subr.mxu0 0.0
    %4783 = vmatpush1.xpose.msra.mxu0 0.0
    %4784 = vmatprep.subr.mxu0 0.0
    %4785 = vmatpush1.xpose.msra.mxu0 0.0
    %4786 = vmatprep.subr.mxu0 0.0
    %4787 = vmatpush1.xpose.msra.mxu0 0.0
    %4788 = vmatprep.subr.mxu0 0.0
    %4789 = vmatpush1.xpose.msra.mxu0 0.0
    %4790 = vmatprep.subr.mxu0 0.0
    %4791 = vmatpush1.xpose.msra.mxu0 0.0
    %4792 = vmatprep.subr.mxu0 0.0
    %4793 = vmatpush1.xpose.msra.mxu0 0.0
    %4794 = vmatprep.subr.mxu0 0.0
    %4795 = vmatpush1.xpose.msra.mxu0 0.0
    %4796 = vmatprep.subr.mxu0 0.0
    %4797 = vmatpush1.xpose.msra.mxu0 0.0
    %4798 = vmatprep.subr.mxu0 0.0
    %4799 = vmatpush1.xpose.msra.mxu0 0.0
    %4800 = vmatprep.subr.mxu0 0.0
    %4801 = vmatpush1.xpose.msra.mxu0 0.0
    %4802 = vmatprep.subr.mxu0 0.0
    %4803 = vmatpush1.xpose.msra.mxu0 0.0
    %4804 = vmatprep.mubr.f32.mxu0 %v4508
    %4805 = vmatmul.mubr.f32.gmra.mrb[0].mxu0 %v4494
    %v4806 = vpop.f32.mrb[0].mxu0
    %v4807 = vadd.f32 0.0, %v4806
    %v4808 = vpop.f32.mrb[0].mxu0
    %4809 = vdwg.mxu0
    %4810 = vmatprep.subr.mxu0 %v4671
    %4811 = vmatpush1.xpose.msra.mxu0 %v4667
    %4812 = vmatprep.subr.mxu0 %v4722
    %4813 = vmatpush1.xpose.msra.mxu0 %v4720
    %4814 = vmatprep.subr.mxu0 0.0
    %4815 = vmatpush1.xpose.msra.mxu0 0.0
    %4816 = vmatprep.subr.mxu0 0.0
    %4817 = vmatpush1.xpose.msra.mxu0 0.0
    %4818 = vmatprep.subr.mxu0 0.0
    %4819 = vmatpush1.xpose.msra.mxu0 0.0
    %4820 = vmatprep.subr.mxu0 0.0
    %4821 = vmatpush1.xpose.msra.mxu0 0.0
    %4822 = vmatprep.subr.mxu0 0.0
    %4823 = vmatpush1.xpose.msra.mxu0 0.0
    %4824 = vmatprep.subr.mxu0 0.0
    %4825 = vmatpush1.xpose.msra.mxu0 0.0
    %4826 = vmatprep.subr.mxu0 0.0
    %4827 = vmatpush1.xpose.msra.mxu0 0.0
    %4828 = vmatprep.subr.mxu0 0.0
    %4829 = vmatpush1.xpose.msra.mxu0 0.0
    %4830 = vmatprep.subr.mxu0 0.0
    %4831 = vmatpush1.xpose.msra.mxu0 0.0
    %4832 = vmatprep.subr.mxu0 0.0
    %4833 = vmatpush1.xpose.msra.mxu0 0.0
    %4834 = vmatprep.subr.mxu0 0.0
    %4835 = vmatpush1.xpose.msra.mxu0 0.0
    %4836 = vmatprep.subr.mxu0 0.0
    %4837 = vmatpush1.xpose.msra.mxu0 0.0
    %4838 = vmatprep.subr.mxu0 0.0
    %4839 = vmatpush1.xpose.msra.mxu0 0.0
    %4840 = vmatprep.subr.mxu0 0.0
    %4841 = vmatpush1.xpose.msra.mxu0 0.0
    %4842 = vmatprep.subr.mxu0 0.0
    %4843 = vmatpush1.xpose.msra.mxu0 0.0
    %4844 = vmatprep.subr.mxu0 0.0
    %4845 = vmatpush1.xpose.msra.mxu0 0.0
    %4846 = vmatprep.subr.mxu0 0.0
    %4847 = vmatpush1.xpose.msra.mxu0 0.0
    %4848 = vmatprep.subr.mxu0 0.0
    %4849 = vmatpush1.xpose.msra.mxu0 0.0
    %4850 = vmatprep.subr.mxu0 0.0
    %4851 = vmatpush1.xpose.msra.mxu0 0.0
    %4852 = vmatprep.subr.mxu0 0.0
    %4853 = vmatpush1.xpose.msra.mxu0 0.0
    %4854 = vmatprep.subr.mxu0 0.0
    %4855 = vmatpush1.xpose.msra.mxu0 0.0
    %4856 = vmatprep.subr.mxu0 0.0
    %4857 = vmatpush1.xpose.msra.mxu0 0.0
    %4858 = vmatprep.subr.mxu0 0.0
    %4859 = vmatpush1.xpose.msra.mxu0 0.0
    %4860 = vmatprep.subr.mxu0 0.0
    %4861 = vmatpush1.xpose.msra.mxu0 0.0
    %4862 = vmatprep.subr.mxu0 0.0
    %4863 = vmatpush1.xpose.msra.mxu0 0.0
    %4864 = vmatprep.subr.mxu0 0.0
    %4865 = vmatpush1.xpose.msra.mxu0 0.0
    %4866 = vmatprep.subr.mxu0 0.0
    %4867 = vmatpush1.xpose.msra.mxu0 0.0
    %4868 = vmatprep.subr.mxu0 0.0
    %4869 = vmatpush1.xpose.msra.mxu0 0.0
    %4870 = vmatprep.subr.mxu0 0.0
    %4871 = vmatpush1.xpose.msra.mxu0 0.0
    %4872 = vmatprep.subr.mxu0 0.0
    %4873 = vmatpush1.xpose.msra.mxu0 0.0
    %4874 = vmatprep.mubr.f32.mxu0 %v4518
    %4875 = vmatmul.mubr.f32.gmra.mrb[0].mxu0 %v4516
    %v4876 = vpop.f32.mrb[0].mxu0
    %v4877 = vadd.f32 %v4807, %v4876
    %v4878 = vpop.f32.mrb[0].mxu0
    %4879 = vdwg.mxu0
    %4880 = vmatprep.subr.mxu0 %v4672
    %4881 = vmatpush1.xpose.msra.mxu0 %v4668
    %4882 = vmatprep.subr.mxu0 %v4719
    %4883 = vmatpush1.xpose.msra.mxu0 %v4705
    %4884 = vmatprep.subr.mxu0 0.0
    %4885 = vmatpush1.xpose.msra.mxu0 0.0
    %4886 = vmatprep.subr.mxu0 0.0
    %4887 = vmatpush1.xpose.msra.mxu0 0.0
    %4888 = vmatprep.subr.mxu0 0.0
    %4889 = vmatpush1.xpose.msra.mxu0 0.0
    %4890 = vmatprep.subr.mxu0 0.0
    %4891 = vmatpush1.xpose.msra.mxu0 0.0
    %4892 = vmatprep.subr.mxu0 0.0
    %4893 = vmatpush1.xpose.msra.mxu0 0.0
    %4894 = vmatprep.subr.mxu0 0.0
    %4895 = vmatpush1.xpose.msra.mxu0 0.0
    %4896 = vmatprep.subr.mxu0 0.0
    %4897 = vmatpush1.xpose.msra.mxu0 0.0
    %4898 = vmatprep.subr.mxu0 0.0
    %4899 = vmatpush1.xpose.msra.mxu0 0.0
    %4900 = vmatprep.subr.mxu0 0.0
    %4901 = vmatpush1.xpose.msra.mxu0 0.0
    %4902 = vmatprep.subr.mxu0 0.0
    %4903 = vmatpush1.xpose.msra.mxu0 0.0
    %4904 = vmatprep.subr.mxu0 0.0
    %4905 = vmatpush1.xpose.msra.mxu0 0.0
    %4906 = vmatprep.subr.mxu0 0.0
    %4907 = vmatpush1.xpose.msra.mxu0 0.0
    %4908 = vmatprep.subr.mxu0 0.0
    %4909 = vmatpush1.xpose.msra.mxu0 0.0
    %4910 = vmatprep.subr.mxu0 0.0
    %4911 = vmatpush1.xpose.msra.mxu0 0.0
    %4912 = vmatprep.subr.mxu0 0.0
    %4913 = vmatpush1.xpose.msra.mxu0 0.0
    %4914 = vmatprep.subr.mxu0 0.0
    %4915 = vmatpush1.xpose.msra.mxu0 0.0
    %4916 = vmatprep.subr.mxu0 0.0
    %4917 = vmatpush1.xpose.msra.mxu0 0.0
    %4918 = vmatprep.subr.mxu0 0.0
    %4919 = vmatpush1.xpose.msra.mxu0 0.0
    %4920 = vmatprep.subr.mxu0 0.0
    %4921 = vmatpush1.xpose.msra.mxu0 0.0
    %4922 = vmatprep.subr.mxu0 0.0
    %4923 = vmatpush1.xpose.msra.mxu0 0.0
    %4924 = vmatprep.subr.mxu0 0.0
    %4925 = vmatpush1.xpose.msra.mxu0 0.0
    %4926 = vmatprep.subr.mxu0 0.0
    %4927 = vmatpush1.xpose.msra.mxu0 0.0
    %4928 = vmatprep.subr.mxu0 0.0
    %4929 = vmatpush1.xpose.msra.mxu0 0.0
    %4930 = vmatprep.subr.mxu0 0.0
    %4931 = vmatpush1.xpose.msra.mxu0 0.0
    %4932 = vmatprep.subr.mxu0 0.0
    %4933 = vmatpush1.xpose.msra.mxu0 0.0
    %4934 = vmatprep.subr.mxu0 0.0
    %4935 = vmatpush1.xpose.msra.mxu0 0.0
    %4936 = vmatprep.subr.mxu0 0.0
    %4937 = vmatpush1.xpose.msra.mxu0 0.0
    %4938 = vmatprep.subr.mxu0 0.0
    %4939 = vmatpush1.xpose.msra.mxu0 0.0
    %4940 = vmatprep.subr.mxu0 0.0
    %4941 = vmatpush1.xpose.msra.mxu0 0.0
    %4942 = vmatprep.subr.mxu0 0.0
    %4943 = vmatpush1.xpose.msra.mxu0 0.0
    %4944 = vmatprep.mubr.f32.mxu0 %v4515
    %4945 = vmatmul.mubr.f32.gmra.mrb[0].mxu0 %v4501
    %v4946 = vpop.f32.mrb[0].mxu0
    %v4947 = vadd.f32 %v4877, %v4946
    %v4948 = vpop.f32.mrb[0].mxu0
    %4949 = vdwg.mxu0
    %4950 = vmatprep.subr.mxu0 %v4673
    %4951 = vmatpush1.xpose.msra.mxu0 %v4669
    %4952 = vmatprep.subr.mxu0 %v4723
    %4953 = vmatpush1.xpose.msra.mxu0 %v4721
    %4954 = vmatprep.subr.mxu0 0.0
    %4955 = vmatpush1.xpose.msra.mxu0 0.0
    %4956 = vmatprep.subr.mxu0 0.0
    %4957 = vmatpush1.xpose.msra.mxu0 0.0
    %4958 = vmatprep.subr.mxu0 0.0
    %4959 = vmatpush1.xpose.msra.mxu0 0.0
    %4960 = vmatprep.subr.mxu0 0.0
    %4961 = vmatpush1.xpose.msra.mxu0 0.0
    %4962 = vmatprep.subr.mxu0 0.0
    %4963 = vmatpush1.xpose.msra.mxu0 0.0
    %4964 = vmatprep.subr.mxu0 0.0
    %4965 = vmatpush1.xpose.msra.mxu0 0.0
    %4966 = vmatprep.subr.mxu0 0.0
    %4967 = vmatpush1.xpose.msra.mxu0 0.0
    %4968 = vmatprep.subr.mxu0 0.0
    %4969 = vmatpush1.xpose.msra.mxu0 0.0
    %4970 = vmatprep.subr.mxu0 0.0
    %4971 = vmatpush1.xpose.msra.mxu0 0.0
    %4972 = vmatprep.subr.mxu0 0.0
    %4973 = vmatpush1.xpose.msra.mxu0 0.0
    %4974 = vmatprep.subr.mxu0 0.0
    %4975 = vmatpush1.xpose.msra.mxu0 0.0
    %4976 = vmatprep.subr.mxu0 0.0
    %4977 = vmatpush1.xpose.msra.mxu0 0.0
    %4978 = vmatprep.subr.mxu0 0.0
    %4979 = vmatpush1.xpose.msra.mxu0 0.0
    %4980 = vmatprep.subr.mxu0 0.0
    %4981 = vmatpush1.xpose.msra.mxu0 0.0
    %4982 = vmatprep.subr.mxu0 0.0
    %4983 = vmatpush1.xpose.msra.mxu0 0.0
    %4984 = vmatprep.subr.mxu0 0.0
    %4985 = vmatpush1.xpose.msra.mxu0 0.0
    %4986 = vmatprep.subr.mxu0 0.0
    %4987 = vmatpush1.xpose.msra.mxu0 0.0
    %4988 = vmatprep.subr.mxu0 0.0
    %4989 = vmatpush1.xpose.msra.mxu0 0.0
    %4990 = vmatprep.subr.mxu0 0.0
    %4991 = vmatpush1.xpose.msra.mxu0 0.0
    %4992 = vmatprep.subr.mxu0 0.0
    %4993 = vmatpush1.xpose.msra.mxu0 0.0
    %4994 = vmatprep.subr.mxu0 0.0
    %4995 = vmatpush1.xpose.msra.mxu0 0.0
    %4996 = vmatprep.subr.mxu0 0.0
    %4997 = vmatpush1.xpose.msra.mxu0 0.0
    %4998 = vmatprep.subr.mxu0 0.0
    %4999 = vmatpush1.xpose.msra.mxu0 0.0
    %5000 = vmatprep.subr.mxu0 0.0
    %5001 = vmatpush1.xpose.msra.mxu0 0.0
    %5002 = vmatprep.subr.mxu0 0.0
    %5003 = vmatpush1.xpose.msra.mxu0 0.0
    %5004 = vmatprep.subr.mxu0 0.0
    %5005 = vmatpush1.xpose.msra.mxu0 0.0
    %5006 = vmatprep.subr.mxu0 0.0
    %5007 = vmatpush1.xpose.msra.mxu0 0.0
    %5008 = vmatprep.subr.mxu0 0.0
    %5009 = vmatpush1.xpose.msra.mxu0 0.0
    %5010 = vmatprep.subr.mxu0 0.0
    %5011 = vmatpush1.xpose.msra.mxu0 0.0
    %5012 = vmatprep.subr.mxu0 0.0
    %5013 = vmatpush1.xpose.msra.mxu0 0.0
    %5014 = vmatprep.mubr.f32.mxu0 %v4519
    %5015 = vmatmul.mubr.f32.gmra.mrb[0].mxu0 %v4517
    %v5016 = vpop.f32.mrb[0].mxu0
    %v5017 = vadd.f32 %v4947, %v5016
    %v5018 = vpop.f32.mrb[0].mxu0
    %5019 = vdwg.mxu0
    %v5020 = vadd.f32 %v4419, %v5017
    %s5021 = scalar_lea.vmem [#allocation2], 7
    %v5022 = vld [vmem:[%s5021] ss:$8 sm:$0xf]
    %v5023 = vld [vmem:[%s5021] ss:$8 sm:$0xf0]
    %v5024 = vor.u32 %v5022, %v5023
    %s5025 = scalar_lea.vmem [#allocation2], 135
    %v5026 = vld [vmem:[%s5025] ss:$8 sm:$0xf]
    %v5027 = vld [vmem:[%s5025] ss:$8 sm:$0xf0]
    %v5028 = vor.u32 %v5026, %v5027
    %s5029 = scalar_lea.vmem %s3, 7
    %v5030 = vld [vmem:[%s5029] ss:$8 sm:$0xf]
    %v5031 = vld [vmem:[%s5029] ss:$8 sm:$0xf0]
    %v5032 = vor.u32 %v5030, %v5031
    %s5033 = scalar_lea.vmem %s3, 135
    %v5034 = vld [vmem:[%s5033] ss:$8 sm:$0xf]
    %v5035 = vld [vmem:[%s5033] ss:$8 sm:$0xf0]
    %v5036 = vor.u32 %v5034, %v5035
    %s5037 = scalar_lea.vmem %s3, 263
    %v5038 = vld [vmem:[%s5037] ss:$8 sm:$0xf]
    %v5039 = vld [vmem:[%s5037] ss:$8 sm:$0xf0]
    %v5040 = vor.u32 %v5038, %v5039
    %s5041 = scalar_lea.vmem %s3, 391
    %v5042 = vld [vmem:[%s5041] ss:$8 sm:$0xf]
    %v5043 = vld [vmem:[%s5041] ss:$8 sm:$0xf0]
    %v5044 = vor.u32 %v5042, %v5043
    %s5045 = scalar_lea.vmem %s3, 519
    %v5046 = vld [vmem:[%s5045] ss:$8 sm:$0xf]
    %v5047 = vld [vmem:[%s5045] ss:$8 sm:$0xf0]
    %v5048 = vor.u32 %v5046, %v5047
    %s5049 = scalar_lea.vmem %s3, 647
    %v5050 = vld [vmem:[%s5049] ss:$8 sm:$0xf]
    %v5051 = vld [vmem:[%s5049] ss:$8 sm:$0xf0]
    %v5052 = vor.u32 %v5050, %v5051
    %s5053 = scalar_lea.vmem %s3, 775
    %v5054 = vld [vmem:[%s5053] ss:$8 sm:$0xf]
    %v5055 = vld [vmem:[%s5053] ss:$8 sm:$0xf0]
    %v5056 = vor.u32 %v5054, %v5055
    %s5057 = scalar_lea.vmem %s3, 903
    %v5058 = vld [vmem:[%s5057] ss:$8 sm:$0xf]
    %v5059 = vld [vmem:[%s5057] ss:$8 sm:$0xf0]
    %v5060 = vor.u32 %v5058, %v5059
    %s5061 = scalar_lea.vmem %s3, 1031
    %v5062 = vld [vmem:[%s5061] ss:$8 sm:$0xf]
    %v5063 = vld [vmem:[%s5061] ss:$8 sm:$0xf0]
    %v5064 = vor.u32 %v5062, %v5063
    %s5065 = scalar_lea.vmem %s3, 1159
    %v5066 = vld [vmem:[%s5065] ss:$8 sm:$0xf]
    %v5067 = vld [vmem:[%s5065] ss:$8 sm:$0xf0]
    %v5068 = vor.u32 %v5066, %v5067
    %v5071 = vcombine.low %v5024, %v5028
    %v5072 = vcombine.high %v5024, %v5028
    %v5074 = vunpack.c.l.s4 1966171168
    %v5075 = vunpack.c.0.s8 %v5074
    %v5076 = vlaneseq
    %v5077 = vshrl.u32 %v5076, 7
    %v5078 = vsub.s32 %v5075, %v5077
    %v5079 = vrot.slane %v5071, %v5078
    %v5081 = vunpack.c.l.s4 1966171168
    %v5082 = vunpack.c.0.s8 %v5081
    %v5083 = vlaneseq
    %v5084 = vshrl.u32 %v5083, 7
    %v5085 = vsub.s32 %v5082, %v5084
    %v5086 = vrot.slane %v5072, %v5085
    %v5087 = vcombine.high %v5079, %v5079
    %v5088 = vcombine.high %v5086, %v5086
    %v5090 = vunpack.c.l.s4 1966171168
    %v5091 = vunpack.c.0.s8 %v5090
    %v5092 = vlaneseq
    %v5093 = vshrl.u32 %v5092, 7
    %v5094 = vsub.s32 %v5091, %v5093
    %v5095 = vrot.slane %v5079, %v5094
    %v5097 = vunpack.c.l.s4 1966171168
    %v5098 = vunpack.c.0.s8 %v5097
    %v5099 = vlaneseq
    %v5100 = vshrl.u32 %v5099, 7
    %v5101 = vsub.s32 %v5098, %v5100
    %v5102 = vrot.slane %v5086, %v5101
    %v5104 = vunpack.c.l.s4 1966171168
    %v5105 = vunpack.c.0.s8 %v5104
    %v5106 = vlaneseq
    %v5107 = vshrl.u32 %v5106, 7
    %v5108 = vsub.s32 %v5105, %v5107
    %v5109 = vrot.slane %v5087, %v5108
    %v5111 = vunpack.c.l.s4 1966171168
    %v5112 = vunpack.c.0.s8 %v5111
    %v5113 = vlaneseq
    %v5114 = vshrl.u32 %v5113, 7
    %v5115 = vsub.s32 %v5112, %v5114
    %v5116 = vrot.slane %v5088, %v5115
    %v5117 = vcombine.high %v5095, %v5095
    %v5118 = vcombine.high %v5102, %v5102
    %v5119 = vcombine.high %v5109, %v5109
    %v5120 = vcombine.high %v5116, %v5116
    %v5139 = vcombine.low %v5032, %v5036
    %v5140 = vcombine.high %v5032, %v5036
    %v5141 = vcombine.low %v5040, %v5044
    %v5142 = vcombine.high %v5040, %v5044
    %v5143 = vcombine.low %v5048, %v5052
    %v5144 = vcombine.high %v5048, %v5052
    %v5145 = vcombine.low %v5056, %v5060
    %v5146 = vcombine.high %v5056, %v5060
    %v5148 = vunpack.c.l.s4 1966171168
    %v5149 = vunpack.c.0.s8 %v5148
    %v5150 = vlaneseq
    %v5151 = vshrl.u32 %v5150, 7
    %v5152 = vsub.s32 %v5149, %v5151
    %v5153 = vrot.slane %v5139, %v5152
    %v5155 = vunpack.c.l.s4 1966171168
    %v5156 = vunpack.c.0.s8 %v5155
    %v5157 = vlaneseq
    %v5158 = vshrl.u32 %v5157, 7
    %v5159 = vsub.s32 %v5156, %v5158
    %v5160 = vrot.slane %v5140, %v5159
    %v5162 = vunpack.c.l.s4 1966171168
    %v5163 = vunpack.c.0.s8 %v5162
    %v5164 = vlaneseq
    %v5165 = vshrl.u32 %v5164, 7
    %v5166 = vsub.s32 %v5163, %v5165
    %v5167 = vrot.slane %v5141, %v5166
    %v5169 = vunpack.c.l.s4 1966171168
    %v5170 = vunpack.c.0.s8 %v5169
    %v5171 = vlaneseq
    %v5172 = vshrl.u32 %v5171, 7
    %v5173 = vsub.s32 %v5170, %v5172
    %v5174 = vrot.slane %v5142, %v5173
    %v5176 = vunpack.c.l.s4 1966171168
    %v5177 = vunpack.c.0.s8 %v5176
    %v5178 = vlaneseq
    %v5179 = vshrl.u32 %v5178, 7
    %v5180 = vsub.s32 %v5177, %v5179
    %v5181 = vrot.slane %v5143, %v5180
    %v5183 = vunpack.c.l.s4 1966171168
    %v5184 = vunpack.c.0.s8 %v5183
    %v5185 = vlaneseq
    %v5186 = vshrl.u32 %v5185, 7
    %v5187 = vsub.s32 %v5184, %v5186
    %v5188 = vrot.slane %v5144, %v5187
    %v5190 = vunpack.c.l.s4 1966171168
    %v5191 = vunpack.c.0.s8 %v5190
    %v5192 = vlaneseq
    %v5193 = vshrl.u32 %v5192, 7
    %v5194 = vsub.s32 %v5191, %v5193
    %v5195 = vrot.slane %v5145, %v5194
    %v5197 = vunpack.c.l.s4 1966171168
    %v5198 = vunpack.c.0.s8 %v5197
    %v5199 = vlaneseq
    %v5200 = vshrl.u32 %v5199, 7
    %v5201 = vsub.s32 %v5198, %v5200
    %v5202 = vrot.slane %v5146, %v5201
    %v5203 = vcombine.low %v5153, %v5167
    %v5204 = vcombine.high %v5153, %v5167
    %v5205 = vcombine.low %v5160, %v5174
    %v5206 = vcombine.high %v5160, %v5174
    %v5207 = vcombine.low %v5181, %v5195
    %v5208 = vcombine.high %v5181, %v5195
    %v5209 = vcombine.low %v5188, %v5202
    %v5210 = vcombine.high %v5188, %v5202
    %v5212 = vunpack.c.l.s4 1966171168
    %v5213 = vunpack.c.0.s8 %v5212
    %v5214 = vlaneseq
    %v5215 = vshrl.u32 %v5214, 7
    %v5216 = vsub.s32 %v5213, %v5215
    %v5217 = vrot.slane %v5203, %v5216
    %v5219 = vunpack.c.l.s4 1966171168
    %v5220 = vunpack.c.0.s8 %v5219
    %v5221 = vlaneseq
    %v5222 = vshrl.u32 %v5221, 7
    %v5223 = vsub.s32 %v5220, %v5222
    %v5224 = vrot.slane %v5205, %v5223
    %v5226 = vunpack.c.l.s4 1966171168
    %v5227 = vunpack.c.0.s8 %v5226
    %v5228 = vlaneseq
    %v5229 = vshrl.u32 %v5228, 7
    %v5230 = vsub.s32 %v5227, %v5229
    %v5231 = vrot.slane %v5204, %v5230
    %v5233 = vunpack.c.l.s4 1966171168
    %v5234 = vunpack.c.0.s8 %v5233
    %v5235 = vlaneseq
    %v5236 = vshrl.u32 %v5235, 7
    %v5237 = vsub.s32 %v5234, %v5236
    %v5238 = vrot.slane %v5206, %v5237
    %v5240 = vunpack.c.l.s4 1966171168
    %v5241 = vunpack.c.0.s8 %v5240
    %v5242 = vlaneseq
    %v5243 = vshrl.u32 %v5242, 7
    %v5244 = vsub.s32 %v5241, %v5243
    %v5245 = vrot.slane %v5207, %v5244
    %v5247 = vunpack.c.l.s4 1966171168
    %v5248 = vunpack.c.0.s8 %v5247
    %v5249 = vlaneseq
    %v5250 = vshrl.u32 %v5249, 7
    %v5251 = vsub.s32 %v5248, %v5250
    %v5252 = vrot.slane %v5209, %v5251
    %v5254 = vunpack.c.l.s4 1966171168
    %v5255 = vunpack.c.0.s8 %v5254
    %v5256 = vlaneseq
    %v5257 = vshrl.u32 %v5256, 7
    %v5258 = vsub.s32 %v5255, %v5257
    %v5259 = vrot.slane %v5208, %v5258
    %v5261 = vunpack.c.l.s4 1966171168
    %v5262 = vunpack.c.0.s8 %v5261
    %v5263 = vlaneseq
    %v5264 = vshrl.u32 %v5263, 7
    %v5265 = vsub.s32 %v5262, %v5264
    %v5266 = vrot.slane %v5210, %v5265
    %v5267 = vcombine.low %v5217, %v5245
    %v5268 = vcombine.high %v5217, %v5245
    %v5269 = vcombine.low %v5224, %v5252
    %v5270 = vcombine.high %v5224, %v5252
    %v5271 = vcombine.low %v5231, %v5259
    %v5272 = vcombine.high %v5231, %v5259
    %v5273 = vcombine.low %v5238, %v5266
    %v5274 = vcombine.high %v5238, %v5266
    %v5275 = vcombine.low %v5064, %v5068
    %v5276 = vcombine.high %v5064, %v5068
    %v5278 = vunpack.c.l.s4 1966171168
    %v5279 = vunpack.c.0.s8 %v5278
    %v5280 = vlaneseq
    %v5281 = vshrl.u32 %v5280, 7
    %v5282 = vsub.s32 %v5279, %v5281
    %v5283 = vrot.slane %v5275, %v5282
    %v5285 = vunpack.c.l.s4 1966171168
    %v5286 = vunpack.c.0.s8 %v5285
    %v5287 = vlaneseq
    %v5288 = vshrl.u32 %v5287, 7
    %v5289 = vsub.s32 %v5286, %v5288
    %v5290 = vrot.slane %v5276, %v5289
    %v5291 = vcombine.high %v5283, %v5283
    %v5292 = vcombine.high %v5290, %v5290
    %v5294 = vunpack.c.l.s4 1966171168
    %v5295 = vunpack.c.0.s8 %v5294
    %v5296 = vlaneseq
    %v5297 = vshrl.u32 %v5296, 7
    %v5298 = vsub.s32 %v5295, %v5297
    %v5299 = vrot.slane %v5283, %v5298
    %v5301 = vunpack.c.l.s4 1966171168
    %v5302 = vunpack.c.0.s8 %v5301
    %v5303 = vlaneseq
    %v5304 = vshrl.u32 %v5303, 7
    %v5305 = vsub.s32 %v5302, %v5304
    %v5306 = vrot.slane %v5290, %v5305
    %v5308 = vunpack.c.l.s4 1966171168
    %v5309 = vunpack.c.0.s8 %v5308
    %v5310 = vlaneseq
    %v5311 = vshrl.u32 %v5310, 7
    %v5312 = vsub.s32 %v5309, %v5311
    %v5313 = vrot.slane %v5291, %v5312
    %v5315 = vunpack.c.l.s4 1966171168
    %v5316 = vunpack.c.0.s8 %v5315
    %v5317 = vlaneseq
    %v5318 = vshrl.u32 %v5317, 7
    %v5319 = vsub.s32 %v5316, %v5318
    %v5320 = vrot.slane %v5292, %v5319
    %v5321 = vcombine.high %v5299, %v5299
    %v5322 = vcombine.high %v5306, %v5306
    %v5323 = vcombine.high %v5313, %v5313
    %v5324 = vcombine.high %v5320, %v5320
    %5341 = vmatprep.subr.mxu0 %v5271
    %5342 = vmatpush1.xpose.msra.mxu0 %v5267
    %5343 = vmatprep.subr.mxu0 %v5313
    %5344 = vmatpush1.xpose.msra.mxu0 %v5299
    %5345 = vmatprep.subr.mxu0 0.0
    %5346 = vmatpush1.xpose.msra.mxu0 0.0
    %5347 = vmatprep.subr.mxu0 0.0
    %5348 = vmatpush1.xpose.msra.mxu0 0.0
    %5349 = vmatprep.subr.mxu0 0.0
    %5350 = vmatpush1.xpose.msra.mxu0 0.0
    %5351 = vmatprep.subr.mxu0 0.0
    %5352 = vmatpush1.xpose.msra.mxu0 0.0
    %5353 = vmatprep.subr.mxu0 0.0
    %5354 = vmatpush1.xpose.msra.mxu0 0.0
    %5355 = vmatprep.subr.mxu0 0.0
    %5356 = vmatpush1.xpose.msra.mxu0 0.0
    %5357 = vmatprep.subr.mxu0 0.0
    %5358 = vmatpush1.xpose.msra.mxu0 0.0
    %5359 = vmatprep.subr.mxu0 0.0
    %5360 = vmatpush1.xpose.msra.mxu0 0.0
    %5361 = vmatprep.subr.mxu0 0.0
    %5362 = vmatpush1.xpose.msra.mxu0 0.0
    %5363 = vmatprep.subr.mxu0 0.0
    %5364 = vmatpush1.xpose.msra.mxu0 0.0
    %5365 = vmatprep.subr.mxu0 0.0
    %5366 = vmatpush1.xpose.msra.mxu0 0.0
    %5367 = vmatprep.subr.mxu0 0.0
    %5368 = vmatpush1.xpose.msra.mxu0 0.0
    %5369 = vmatprep.subr.mxu0 0.0
    %5370 = vmatpush1.xpose.msra.mxu0 0.0
    %5371 = vmatprep.subr.mxu0 0.0
    %5372 = vmatpush1.xpose.msra.mxu0 0.0
    %5373 = vmatprep.subr.mxu0 0.0
    %5374 = vmatpush1.xpose.msra.mxu0 0.0
    %5375 = vmatprep.subr.mxu0 0.0
    %5376 = vmatpush1.xpose.msra.mxu0 0.0
    %5377 = vmatprep.subr.mxu0 0.0
    %5378 = vmatpush1.xpose.msra.mxu0 0.0
    %5379 = vmatprep.subr.mxu0 0.0
    %5380 = vmatpush1.xpose.msra.mxu0 0.0
    %5381 = vmatprep.subr.mxu0 0.0
    %5382 = vmatpush1.xpose.msra.mxu0 0.0
    %5383 = vmatprep.subr.mxu0 0.0
    %5384 = vmatpush1.xpose.msra.mxu0 0.0
    %5385 = vmatprep.subr.mxu0 0.0
    %5386 = vmatpush1.xpose.msra.mxu0 0.0
    %5387 = vmatprep.subr.mxu0 0.0
    %5388 = vmatpush1.xpose.msra.mxu0 0.0
    %5389 = vmatprep.subr.mxu0 0.0
    %5390 = vmatpush1.xpose.msra.mxu0 0.0
    %5391 = vmatprep.subr.mxu0 0.0
    %5392 = vmatpush1.xpose.msra.mxu0 0.0
    %5393 = vmatprep.subr.mxu0 0.0
    %5394 = vmatpush1.xpose.msra.mxu0 0.0
    %5395 = vmatprep.subr.mxu0 0.0
    %5396 = vmatpush1.xpose.msra.mxu0 0.0
    %5397 = vmatprep.subr.mxu0 0.0
    %5398 = vmatpush1.xpose.msra.mxu0 0.0
    %5399 = vmatprep.subr.mxu0 0.0
    %5400 = vmatpush1.xpose.msra.mxu0 0.0
    %5401 = vmatprep.subr.mxu0 0.0
    %5402 = vmatpush1.xpose.msra.mxu0 0.0
    %5403 = vmatprep.subr.mxu0 0.0
    %5404 = vmatpush1.xpose.msra.mxu0 0.0
    %5405 = vmatprep.mubr.f32.mxu0 %v5109
    %5406 = vmatmul.mubr.f32.gmra.mrb[0].mxu0 %v5095
    %v5407 = vpop.f32.mrb[0].mxu0
    %v5408 = vadd.f32 0.0, %v5407
    %v5409 = vpop.f32.mrb[0].mxu0
    %5410 = vdwg.mxu0
    %5411 = vmatprep.subr.mxu0 %v5272
    %5412 = vmatpush1.xpose.msra.mxu0 %v5268
    %5413 = vmatprep.subr.mxu0 %v5323
    %5414 = vmatpush1.xpose.msra.mxu0 %v5321
    %5415 = vmatprep.subr.mxu0 0.0
    %5416 = vmatpush1.xpose.msra.mxu0 0.0
    %5417 = vmatprep.subr.mxu0 0.0
    %5418 = vmatpush1.xpose.msra.mxu0 0.0
    %5419 = vmatprep.subr.mxu0 0.0
    %5420 = vmatpush1.xpose.msra.mxu0 0.0
    %5421 = vmatprep.subr.mxu0 0.0
    %5422 = vmatpush1.xpose.msra.mxu0 0.0
    %5423 = vmatprep.subr.mxu0 0.0
    %5424 = vmatpush1.xpose.msra.mxu0 0.0
    %5425 = vmatprep.subr.mxu0 0.0
    %5426 = vmatpush1.xpose.msra.mxu0 0.0
    %5427 = vmatprep.subr.mxu0 0.0
    %5428 = vmatpush1.xpose.msra.mxu0 0.0
    %5429 = vmatprep.subr.mxu0 0.0
    %5430 = vmatpush1.xpose.msra.mxu0 0.0
    %5431 = vmatprep.subr.mxu0 0.0
    %5432 = vmatpush1.xpose.msra.mxu0 0.0
    %5433 = vmatprep.subr.mxu0 0.0
    %5434 = vmatpush1.xpose.msra.mxu0 0.0
    %5435 = vmatprep.subr.mxu0 0.0
    %5436 = vmatpush1.xpose.msra.mxu0 0.0
    %5437 = vmatprep.subr.mxu0 0.0
    %5438 = vmatpush1.xpose.msra.mxu0 0.0
    %5439 = vmatprep.subr.mxu0 0.0
    %5440 = vmatpush1.xpose.msra.mxu0 0.0
    %5441 = vmatprep.subr.mxu0 0.0
    %5442 = vmatpush1.xpose.msra.mxu0 0.0
    %5443 = vmatprep.subr.mxu0 0.0
    %5444 = vmatpush1.xpose.msra.mxu0 0.0
    %5445 = vmatprep.subr.mxu0 0.0
    %5446 = vmatpush1.xpose.msra.mxu0 0.0
    %5447 = vmatprep.subr.mxu0 0.0
    %5448 = vmatpush1.xpose.msra.mxu0 0.0
    %5449 = vmatprep.subr.mxu0 0.0
    %5450 = vmatpush1.xpose.msra.mxu0 0.0
    %5451 = vmatprep.subr.mxu0 0.0
    %5452 = vmatpush1.xpose.msra.mxu0 0.0
    %5453 = vmatprep.subr.mxu0 0.0
    %5454 = vmatpush1.xpose.msra.mxu0 0.0
    %5455 = vmatprep.subr.mxu0 0.0
    %5456 = vmatpush1.xpose.msra.mxu0 0.0
    %5457 = vmatprep.subr.mxu0 0.0
    %5458 = vmatpush1.xpose.msra.mxu0 0.0
    %5459 = vmatprep.subr.mxu0 0.0
    %5460 = vmatpush1.xpose.msra.mxu0 0.0
    %5461 = vmatprep.subr.mxu0 0.0
    %5462 = vmatpush1.xpose.msra.mxu0 0.0
    %5463 = vmatprep.subr.mxu0 0.0
    %5464 = vmatpush1.xpose.msra.mxu0 0.0
    %5465 = vmatprep.subr.mxu0 0.0
    %5466 = vmatpush1.xpose.msra.mxu0 0.0
    %5467 = vmatprep.subr.mxu0 0.0
    %5468 = vmatpush1.xpose.msra.mxu0 0.0
    %5469 = vmatprep.subr.mxu0 0.0
    %5470 = vmatpush1.xpose.msra.mxu0 0.0
    %5471 = vmatprep.subr.mxu0 0.0
    %5472 = vmatpush1.xpose.msra.mxu0 0.0
    %5473 = vmatprep.subr.mxu0 0.0
    %5474 = vmatpush1.xpose.msra.mxu0 0.0
    %5475 = vmatprep.mubr.f32.mxu0 %v5119
    %5476 = vmatmul.mubr.f32.gmra.mrb[0].mxu0 %v5117
    %v5477 = vpop.f32.mrb[0].mxu0
    %v5478 = vadd.f32 %v5408, %v5477
    %v5479 = vpop.f32.mrb[0].mxu0
    %5480 = vdwg.mxu0
    %5481 = vmatprep.subr.mxu0 %v5273
    %5482 = vmatpush1.xpose.msra.mxu0 %v5269
    %5483 = vmatprep.subr.mxu0 %v5320
    %5484 = vmatpush1.xpose.msra.mxu0 %v5306
    %5485 = vmatprep.subr.mxu0 0.0
    %5486 = vmatpush1.xpose.msra.mxu0 0.0
    %5487 = vmatprep.subr.mxu0 0.0
    %5488 = vmatpush1.xpose.msra.mxu0 0.0
    %5489 = vmatprep.subr.mxu0 0.0
    %5490 = vmatpush1.xpose.msra.mxu0 0.0
    %5491 = vmatprep.subr.mxu0 0.0
    %5492 = vmatpush1.xpose.msra.mxu0 0.0
    %5493 = vmatprep.subr.mxu0 0.0
    %5494 = vmatpush1.xpose.msra.mxu0 0.0
    %5495 = vmatprep.subr.mxu0 0.0
    %5496 = vmatpush1.xpose.msra.mxu0 0.0
    %5497 = vmatprep.subr.mxu0 0.0
    %5498 = vmatpush1.xpose.msra.mxu0 0.0
    %5499 = vmatprep.subr.mxu0 0.0
    %5500 = vmatpush1.xpose.msra.mxu0 0.0
    %5501 = vmatprep.subr.mxu0 0.0
    %5502 = vmatpush1.xpose.msra.mxu0 0.0
    %5503 = vmatprep.subr.mxu0 0.0
    %5504 = vmatpush1.xpose.msra.mxu0 0.0
    %5505 = vmatprep.subr.mxu0 0.0
    %5506 = vmatpush1.xpose.msra.mxu0 0.0
    %5507 = vmatprep.subr.mxu0 0.0
    %5508 = vmatpush1.xpose.msra.mxu0 0.0
    %5509 = vmatprep.subr.mxu0 0.0
    %5510 = vmatpush1.xpose.msra.mxu0 0.0
    %5511 = vmatprep.subr.mxu0 0.0
    %5512 = vmatpush1.xpose.msra.mxu0 0.0
    %5513 = vmatprep.subr.mxu0 0.0
    %5514 = vmatpush1.xpose.msra.mxu0 0.0
    %5515 = vmatprep.subr.mxu0 0.0
    %5516 = vmatpush1.xpose.msra.mxu0 0.0
    %5517 = vmatprep.subr.mxu0 0.0
    %5518 = vmatpush1.xpose.msra.mxu0 0.0
    %5519 = vmatprep.subr.mxu0 0.0
    %5520 = vmatpush1.xpose.msra.mxu0 0.0
    %5521 = vmatprep.subr.mxu0 0.0
    %5522 = vmatpush1.xpose.msra.mxu0 0.0
    %5523 = vmatprep.subr.mxu0 0.0
    %5524 = vmatpush1.xpose.msra.mxu0 0.0
    %5525 = vmatprep.subr.mxu0 0.0
    %5526 = vmatpush1.xpose.msra.mxu0 0.0
    %5527 = vmatprep.subr.mxu0 0.0
    %5528 = vmatpush1.xpose.msra.mxu0 0.0
    %5529 = vmatprep.subr.mxu0 0.0
    %5530 = vmatpush1.xpose.msra.mxu0 0.0
    %5531 = vmatprep.subr.mxu0 0.0
    %5532 = vmatpush1.xpose.msra.mxu0 0.0
    %5533 = vmatprep.subr.mxu0 0.0
    %5534 = vmatpush1.xpose.msra.mxu0 0.0
    %5535 = vmatprep.subr.mxu0 0.0
    %5536 = vmatpush1.xpose.msra.mxu0 0.0
    %5537 = vmatprep.subr.mxu0 0.0
    %5538 = vmatpush1.xpose.msra.mxu0 0.0
    %5539 = vmatprep.subr.mxu0 0.0
    %5540 = vmatpush1.xpose.msra.mxu0 0.0
    %5541 = vmatprep.subr.mxu0 0.0
    %5542 = vmatpush1.xpose.msra.mxu0 0.0
    %5543 = vmatprep.subr.mxu0 0.0
    %5544 = vmatpush1.xpose.msra.mxu0 0.0
    %5545 = vmatprep.mubr.f32.mxu0 %v5116
    %5546 = vmatmul.mubr.f32.gmra.mrb[0].mxu0 %v5102
    %v5547 = vpop.f32.mrb[0].mxu0
    %v5548 = vadd.f32 %v5478, %v5547
    %v5549 = vpop.f32.mrb[0].mxu0
    %5550 = vdwg.mxu0
    %5551 = vmatprep.subr.mxu0 %v5274
    %5552 = vmatpush1.xpose.msra.mxu0 %v5270
    %5553 = vmatprep.subr.mxu0 %v5324
    %5554 = vmatpush1.xpose.msra.mxu0 %v5322
    %5555 = vmatprep.subr.mxu0 0.0
    %5556 = vmatpush1.xpose.msra.mxu0 0.0
    %5557 = vmatprep.subr.mxu0 0.0
    %5558 = vmatpush1.xpose.msra.mxu0 0.0
    %5559 = vmatprep.subr.mxu0 0.0
    %5560 = vmatpush1.xpose.msra.mxu0 0.0
    %5561 = vmatprep.subr.mxu0 0.0
    %5562 = vmatpush1.xpose.msra.mxu0 0.0
    %5563 = vmatprep.subr.mxu0 0.0
    %5564 = vmatpush1.xpose.msra.mxu0 0.0
    %5565 = vmatprep.subr.mxu0 0.0
    %5566 = vmatpush1.xpose.msra.mxu0 0.0
    %5567 = vmatprep.subr.mxu0 0.0
    %5568 = vmatpush1.xpose.msra.mxu0 0.0
    %5569 = vmatprep.subr.mxu0 0.0
    %5570 = vmatpush1.xpose.msra.mxu0 0.0
    %5571 = vmatprep.subr.mxu0 0.0
    %5572 = vmatpush1.xpose.msra.mxu0 0.0
    %5573 = vmatprep.subr.mxu0 0.0
    %5574 = vmatpush1.xpose.msra.mxu0 0.0
    %5575 = vmatprep.subr.mxu0 0.0
    %5576 = vmatpush1.xpose.msra.mxu0 0.0
    %5577 = vmatprep.subr.mxu0 0.0
    %5578 = vmatpush1.xpose.msra.mxu0 0.0
    %5579 = vmatprep.subr.mxu0 0.0
    %5580 = vmatpush1.xpose.msra.mxu0 0.0
    %5581 = vmatprep.subr.mxu0 0.0
    %5582 = vmatpush1.xpose.msra.mxu0 0.0
    %5583 = vmatprep.subr.mxu0 0.0
    %5584 = vmatpush1.xpose.msra.mxu0 0.0
    %5585 = vmatprep.subr.mxu0 0.0
    %5586 = vmatpush1.xpose.msra.mxu0 0.0
    %5587 = vmatprep.subr.mxu0 0.0
    %5588 = vmatpush1.xpose.msra.mxu0 0.0
    %5589 = vmatprep.subr.mxu0 0.0
    %5590 = vmatpush1.xpose.msra.mxu0 0.0
    %5591 = vmatprep.subr.mxu0 0.0
    %5592 = vmatpush1.xpose.msra.mxu0 0.0
    %5593 = vmatprep.subr.mxu0 0.0
    %5594 = vmatpush1.xpose.msra.mxu0 0.0
    %5595 = vmatprep.subr.mxu0 0.0
    %5596 = vmatpush1.xpose.msra.mxu0 0.0
    %5597 = vmatprep.subr.mxu0 0.0
    %5598 = vmatpush1.xpose.msra.mxu0 0.0
    %5599 = vmatprep.subr.mxu0 0.0
    %5600 = vmatpush1.xpose.msra.mxu0 0.0
    %5601 = vmatprep.subr.mxu0 0.0
    %5602 = vmatpush1.xpose.msra.mxu0 0.0
    %5603 = vmatprep.subr.mxu0 0.0
    %5604 = vmatpush1.xpose.msra.mxu0 0.0
    %5605 = vmatprep.subr.mxu0 0.0
    %5606 = vmatpush1.xpose.msra.mxu0 0.0
    %5607 = vmatprep.subr.mxu0 0.0
    %5608 = vmatpush1.xpose.msra.mxu0 0.0
    %5609 = vmatprep.subr.mxu0 0.0
    %5610 = vmatpush1.xpose.msra.mxu0 0.0
    %5611 = vmatprep.subr.mxu0 0.0
    %5612 = vmatpush1.xpose.msra.mxu0 0.0
    %5613 = vmatprep.subr.mxu0 0.0
    %5614 = vmatpush1.xpose.msra.mxu0 0.0
    %5615 = vmatprep.mubr.f32.mxu0 %v5120
    %5616 = vmatmul.mubr.f32.gmra.mrb[0].mxu0 %v5118
    %v5617 = vpop.f32.mrb[0].mxu0
    %v5618 = vadd.f32 %v5548, %v5617
    %v5619 = vpop.f32.mrb[0].mxu0
    %5620 = vdwg.mxu0
    %v5621 = vadd.f32 %v5020, %v5618
    %s5622 = scalar_lea.vmem [#allocation2], 64
    %v5623 = vld [vmem:[%s5622] ss:$8 sm:$0xf]
    %v5624 = vld [vmem:[%s5622] ss:$8 sm:$0xf0]
    %v5625 = vor.u32 %v5623, %v5624
    %s5626 = scalar_lea.vmem [#allocation2], 192
    %v5627 = vld [vmem:[%s5626] ss:$8 sm:$0xf]
    %v5628 = vld [vmem:[%s5626] ss:$8 sm:$0xf0]
    %v5629 = vor.u32 %v5627, %v5628
    %s5630 = scalar_lea.vmem %s3, 64
    %v5631 = vld [vmem:[%s5630] ss:$8 sm:$0xf]
    %v5632 = vld [vmem:[%s5630] ss:$8 sm:$0xf0]
    %v5633 = vor.u32 %v5631, %v5632
    %s5634 = scalar_lea.vmem %s3, 192
    %v5635 = vld [vmem:[%s5634] ss:$8 sm:$0xf]
    %v5636 = vld [vmem:[%s5634] ss:$8 sm:$0xf0]
    %v5637 = vor.u32 %v5635, %v5636
    %s5638 = scalar_lea.vmem %s3, 320
    %v5639 = vld [vmem:[%s5638] ss:$8 sm:$0xf]
    %v5640 = vld [vmem:[%s5638] ss:$8 sm:$0xf0]
    %v5641 = vor.u32 %v5639, %v5640
    %s5642 = scalar_lea.vmem %s3, 448
    %v5643 = vld [vmem:[%s5642] ss:$8 sm:$0xf]
    %v5644 = vld [vmem:[%s5642] ss:$8 sm:$0xf0]
    %v5645 = vor.u32 %v5643, %v5644
    %s5646 = scalar_lea.vmem %s3, 576
    %v5647 = vld [vmem:[%s5646] ss:$8 sm:$0xf]
    %v5648 = vld [vmem:[%s5646] ss:$8 sm:$0xf0]
    %v5649 = vor.u32 %v5647, %v5648
    %s5650 = scalar_lea.vmem %s3, 704
    %v5651 = vld [vmem:[%s5650] ss:$8 sm:$0xf]
    %v5652 = vld [vmem:[%s5650] ss:$8 sm:$0xf0]
    %v5653 = vor.u32 %v5651, %v5652
    %s5654 = scalar_lea.vmem %s3, 832
    %v5655 = vld [vmem:[%s5654] ss:$8 sm:$0xf]
    %v5656 = vld [vmem:[%s5654] ss:$8 sm:$0xf0]
    %v5657 = vor.u32 %v5655, %v5656
    %s5658 = scalar_lea.vmem %s3, 960
    %v5659 = vld [vmem:[%s5658] ss:$8 sm:$0xf]
    %v5660 = vld [vmem:[%s5658] ss:$8 sm:$0xf0]
    %v5661 = vor.u32 %v5659, %v5660
    %s5662 = scalar_lea.vmem %s3, 1088
    %v5663 = vld [vmem:[%s5662] ss:$8 sm:$0xf]
    %v5664 = vld [vmem:[%s5662] ss:$8 sm:$0xf0]
    %v5665 = vor.u32 %v5663, %v5664
    %s5666 = scalar_lea.vmem %s3, 1216
    %v5667 = vld [vmem:[%s5666] ss:$8 sm:$0xf]
    %v5668 = vld [vmem:[%s5666] ss:$8 sm:$0xf0]
    %v5669 = vor.u32 %v5667, %v5668
    %v5672 = vcombine.low %v5625, %v5629
    %v5673 = vcombine.high %v5625, %v5629
    %v5675 = vunpack.c.l.s4 1966171168
    %v5676 = vunpack.c.0.s8 %v5675
    %v5677 = vlaneseq
    %v5678 = vshrl.u32 %v5677, 7
    %v5679 = vsub.s32 %v5676, %v5678
    %v5680 = vrot.slane %v5672, %v5679
    %v5682 = vunpack.c.l.s4 1966171168
    %v5683 = vunpack.c.0.s8 %v5682
    %v5684 = vlaneseq
    %v5685 = vshrl.u32 %v5684, 7
    %v5686 = vsub.s32 %v5683, %v5685
    %v5687 = vrot.slane %v5673, %v5686
    %v5688 = vcombine.high %v5680, %v5680
    %v5689 = vcombine.high %v5687, %v5687
    %v5691 = vunpack.c.l.s4 1966171168
    %v5692 = vunpack.c.0.s8 %v5691
    %v5693 = vlaneseq
    %v5694 = vshrl.u32 %v5693, 7
    %v5695 = vsub.s32 %v5692, %v5694
    %v5696 = vrot.slane %v5680, %v5695
    %v5698 = vunpack.c.l.s4 1966171168
    %v5699 = vunpack.c.0.s8 %v5698
    %v5700 = vlaneseq
    %v5701 = vshrl.u32 %v5700, 7
    %v5702 = vsub.s32 %v5699, %v5701
    %v5703 = vrot.slane %v5687, %v5702
    %v5705 = vunpack.c.l.s4 1966171168
    %v5706 = vunpack.c.0.s8 %v5705
    %v5707 = vlaneseq
    %v5708 = vshrl.u32 %v5707, 7
    %v5709 = vsub.s32 %v5706, %v5708
    %v5710 = vrot.slane %v5688, %v5709
    %v5712 = vunpack.c.l.s4 1966171168
    %v5713 = vunpack.c.0.s8 %v5712
    %v5714 = vlaneseq
    %v5715 = vshrl.u32 %v5714, 7
    %v5716 = vsub.s32 %v5713, %v5715
    %v5717 = vrot.slane %v5689, %v5716
    %v5718 = vcombine.high %v5696, %v5696
    %v5719 = vcombine.high %v5703, %v5703
    %v5720 = vcombine.high %v5710, %v5710
    %v5721 = vcombine.high %v5717, %v5717
    %v5740 = vcombine.low %v5633, %v5637
    %v5741 = vcombine.high %v5633, %v5637
    %v5742 = vcombine.low %v5641, %v5645
    %v5743 = vcombine.high %v5641, %v5645
    %v5744 = vcombine.low %v5649, %v5653
    %v5745 = vcombine.high %v5649, %v5653
    %v5746 = vcombine.low %v5657, %v5661
    %v5747 = vcombine.high %v5657, %v5661
    %v5749 = vunpack.c.l.s4 1966171168
    %v5750 = vunpack.c.0.s8 %v5749
    %v5751 = vlaneseq
    %v5752 = vshrl.u32 %v5751, 7
    %v5753 = vsub.s32 %v5750, %v5752
    %v5754 = vrot.slane %v5740, %v5753
    %v5756 = vunpack.c.l.s4 1966171168
    %v5757 = vunpack.c.0.s8 %v5756
    %v5758 = vlaneseq
    %v5759 = vshrl.u32 %v5758, 7
    %v5760 = vsub.s32 %v5757, %v5759
    %v5761 = vrot.slane %v5741, %v5760
    %v5763 = vunpack.c.l.s4 1966171168
    %v5764 = vunpack.c.0.s8 %v5763
    %v5765 = vlaneseq
    %v5766 = vshrl.u32 %v5765, 7
    %v5767 = vsub.s32 %v5764, %v5766
    %v5768 = vrot.slane %v5742, %v5767
    %v5770 = vunpack.c.l.s4 1966171168
    %v5771 = vunpack.c.0.s8 %v5770
    %v5772 = vlaneseq
    %v5773 = vshrl.u32 %v5772, 7
    %v5774 = vsub.s32 %v5771, %v5773
    %v5775 = vrot.slane %v5743, %v5774
    %v5777 = vunpack.c.l.s4 1966171168
    %v5778 = vunpack.c.0.s8 %v5777
    %v5779 = vlaneseq
    %v5780 = vshrl.u32 %v5779, 7
    %v5781 = vsub.s32 %v5778, %v5780
    %v5782 = vrot.slane %v5744, %v5781
    %v5784 = vunpack.c.l.s4 1966171168
    %v5785 = vunpack.c.0.s8 %v5784
    %v5786 = vlaneseq
    %v5787 = vshrl.u32 %v5786, 7
    %v5788 = vsub.s32 %v5785, %v5787
    %v5789 = vrot.slane %v5745, %v5788
    %v5791 = vunpack.c.l.s4 1966171168
    %v5792 = vunpack.c.0.s8 %v5791
    %v5793 = vlaneseq
    %v5794 = vshrl.u32 %v5793, 7
    %v5795 = vsub.s32 %v5792, %v5794
    %v5796 = vrot.slane %v5746, %v5795
    %v5798 = vunpack.c.l.s4 1966171168
    %v5799 = vunpack.c.0.s8 %v5798
    %v5800 = vlaneseq
    %v5801 = vshrl.u32 %v5800, 7
    %v5802 = vsub.s32 %v5799, %v5801
    %v5803 = vrot.slane %v5747, %v5802
    %v5804 = vcombine.low %v5754, %v5768
    %v5805 = vcombine.high %v5754, %v5768
    %v5806 = vcombine.low %v5761, %v5775
    %v5807 = vcombine.high %v5761, %v5775
    %v5808 = vcombine.low %v5782, %v5796
    %v5809 = vcombine.high %v5782, %v5796
    %v5810 = vcombine.low %v5789, %v5803
    %v5811 = vcombine.high %v5789, %v5803
    %v5813 = vunpack.c.l.s4 1966171168
    %v5814 = vunpack.c.0.s8 %v5813
    %v5815 = vlaneseq
    %v5816 = vshrl.u32 %v5815, 7
    %v5817 = vsub.s32 %v5814, %v5816
    %v5818 = vrot.slane %v5804, %v5817
    %v5820 = vunpack.c.l.s4 1966171168
    %v5821 = vunpack.c.0.s8 %v5820
    %v5822 = vlaneseq
    %v5823 = vshrl.u32 %v5822, 7
    %v5824 = vsub.s32 %v5821, %v5823
    %v5825 = vrot.slane %v5806, %v5824
    %v5827 = vunpack.c.l.s4 1966171168
    %v5828 = vunpack.c.0.s8 %v5827
    %v5829 = vlaneseq
    %v5830 = vshrl.u32 %v5829, 7
    %v5831 = vsub.s32 %v5828, %v5830
    %v5832 = vrot.slane %v5805, %v5831
    %v5834 = vunpack.c.l.s4 1966171168
    %v5835 = vunpack.c.0.s8 %v5834
    %v5836 = vlaneseq
    %v5837 = vshrl.u32 %v5836, 7
    %v5838 = vsub.s32 %v5835, %v5837
    %v5839 = vrot.slane %v5807, %v5838
    %v5841 = vunpack.c.l.s4 1966171168
    %v5842 = vunpack.c.0.s8 %v5841
    %v5843 = vlaneseq
    %v5844 = vshrl.u32 %v5843, 7
    %v5845 = vsub.s32 %v5842, %v5844
    %v5846 = vrot.slane %v5808, %v5845
    %v5848 = vunpack.c.l.s4 1966171168
    %v5849 = vunpack.c.0.s8 %v5848
    %v5850 = vlaneseq
    %v5851 = vshrl.u32 %v5850, 7
    %v5852 = vsub.s32 %v5849, %v5851
    %v5853 = vrot.slane %v5810, %v5852
    %v5855 = vunpack.c.l.s4 1966171168
    %v5856 = vunpack.c.0.s8 %v5855
    %v5857 = vlaneseq
    %v5858 = vshrl.u32 %v5857, 7
    %v5859 = vsub.s32 %v5856, %v5858
    %v5860 = vrot.slane %v5809, %v5859
    %v5862 = vunpack.c.l.s4 1966171168
    %v5863 = vunpack.c.0.s8 %v5862
    %v5864 = vlaneseq
    %v5865 = vshrl.u32 %v5864, 7
    %v5866 = vsub.s32 %v5863, %v5865
    %v5867 = vrot.slane %v5811, %v5866
    %v5868 = vcombine.low %v5818, %v5846
    %v5869 = vcombine.high %v5818, %v5846
    %v5870 = vcombine.low %v5825, %v5853
    %v5871 = vcombine.high %v5825, %v5853
    %v5872 = vcombine.low %v5832, %v5860
    %v5873 = vcombine.high %v5832, %v5860
    %v5874 = vcombine.low %v5839, %v5867
    %v5875 = vcombine.high %v5839, %v5867
    %v5876 = vcombine.low %v5665, %v5669
    %v5877 = vcombine.high %v5665, %v5669
    %v5879 = vunpack.c.l.s4 1966171168
    %v5880 = vunpack.c.0.s8 %v5879
    %v5881 = vlaneseq
    %v5882 = vshrl.u32 %v5881, 7
    %v5883 = vsub.s32 %v5880, %v5882
    %v5884 = vrot.slane %v5876, %v5883
    %v5886 = vunpack.c.l.s4 1966171168
    %v5887 = vunpack.c.0.s8 %v5886
    %v5888 = vlaneseq
    %v5889 = vshrl.u32 %v5888, 7
    %v5890 = vsub.s32 %v5887, %v5889
    %v5891 = vrot.slane %v5877, %v5890
    %v5892 = vcombine.high %v5884, %v5884
    %v5893 = vcombine.high %v5891, %v5891
    %v5895 = vunpack.c.l.s4 1966171168
    %v5896 = vunpack.c.0.s8 %v5895
    %v5897 = vlaneseq
    %v5898 = vshrl.u32 %v5897, 7
    %v5899 = vsub.s32 %v5896, %v5898
    %v5900 = vrot.slane %v5884, %v5899
    %v5902 = vunpack.c.l.s4 1966171168
    %v5903 = vunpack.c.0.s8 %v5902
    %v5904 = vlaneseq
    %v5905 = vshrl.u32 %v5904, 7
    %v5906 = vsub.s32 %v5903, %v5905
    %v5907 = vrot.slane %v5891, %v5906
    %v5909 = vunpack.c.l.s4 1966171168
    %v5910 = vunpack.c.0.s8 %v5909
    %v5911 = vlaneseq
    %v5912 = vshrl.u32 %v5911, 7
    %v5913 = vsub.s32 %v5910, %v5912
    %v5914 = vrot.slane %v5892, %v5913
    %v5916 = vunpack.c.l.s4 1966171168
    %v5917 = vunpack.c.0.s8 %v5916
    %v5918 = vlaneseq
    %v5919 = vshrl.u32 %v5918, 7
    %v5920 = vsub.s32 %v5917, %v5919
    %v5921 = vrot.slane %v5893, %v5920
    %v5922 = vcombine.high %v5900, %v5900
    %v5923 = vcombine.high %v5907, %v5907
    %v5924 = vcombine.high %v5914, %v5914
    %v5925 = vcombine.high %v5921, %v5921
    %5942 = vmatprep.subr.mxu0 %v5872
    %5943 = vmatpush1.xpose.msra.mxu0 %v5868
    %5944 = vmatprep.subr.mxu0 %v5914
    %5945 = vmatpush1.xpose.msra.mxu0 %v5900
    %5946 = vmatprep.subr.mxu0 0.0
    %5947 = vmatpush1.xpose.msra.mxu0 0.0
    %5948 = vmatprep.subr.mxu0 0.0
    %5949 = vmatpush1.xpose.msra.mxu0 0.0
    %5950 = vmatprep.subr.mxu0 0.0
    %5951 = vmatpush1.xpose.msra.mxu0 0.0
    %5952 = vmatprep.subr.mxu0 0.0
    %5953 = vmatpush1.xpose.msra.mxu0 0.0
    %5954 = vmatprep.subr.mxu0 0.0
    %5955 = vmatpush1.xpose.msra.mxu0 0.0
    %5956 = vmatprep.subr.mxu0 0.0
    %5957 = vmatpush1.xpose.msra.mxu0 0.0
    %5958 = vmatprep.subr.mxu0 0.0
    %5959 = vmatpush1.xpose.msra.mxu0 0.0
    %5960 = vmatprep.subr.mxu0 0.0
    %5961 = vmatpush1.xpose.msra.mxu0 0.0
    %5962 = vmatprep.subr.mxu0 0.0
    %5963 = vmatpush1.xpose.msra.mxu0 0.0
    %5964 = vmatprep.subr.mxu0 0.0
    %5965 = vmatpush1.xpose.msra.mxu0 0.0
    %5966 = vmatprep.subr.mxu0 0.0
    %5967 = vmatpush1.xpose.msra.mxu0 0.0
    %5968 = vmatprep.subr.mxu0 0.0
    %5969 = vmatpush1.xpose.msra.mxu0 0.0
    %5970 = vmatprep.subr.mxu0 0.0
    %5971 = vmatpush1.xpose.msra.mxu0 0.0
    %5972 = vmatprep.subr.mxu0 0.0
    %5973 = vmatpush1.xpose.msra.mxu0 0.0
    %5974 = vmatprep.subr.mxu0 0.0
    %5975 = vmatpush1.xpose.msra.mxu0 0.0
    %5976 = vmatprep.subr.mxu0 0.0
    %5977 = vmatpush1.xpose.msra.mxu0 0.0
    %5978 = vmatprep.subr.mxu0 0.0
    %5979 = vmatpush1.xpose.msra.mxu0 0.0
    %5980 = vmatprep.subr.mxu0 0.0
    %5981 = vmatpush1.xpose.msra.mxu0 0.0
    %5982 = vmatprep.subr.mxu0 0.0
    %5983 = vmatpush1.xpose.msra.mxu0 0.0
    %5984 = vmatprep.subr.mxu0 0.0
    %5985 = vmatpush1.xpose.msra.mxu0 0.0
    %5986 = vmatprep.subr.mxu0 0.0
    %5987 = vmatpush1.xpose.msra.mxu0 0.0
    %5988 = vmatprep.subr.mxu0 0.0
    %5989 = vmatpush1.xpose.msra.mxu0 0.0
    %5990 = vmatprep.subr.mxu0 0.0
    %5991 = vmatpush1.xpose.msra.mxu0 0.0
    %5992 = vmatprep.subr.mxu0 0.0
    %5993 = vmatpush1.xpose.msra.mxu0 0.0
    %5994 = vmatprep.subr.mxu0 0.0
    %5995 = vmatpush1.xpose.msra.mxu0 0.0
    %5996 = vmatprep.subr.mxu0 0.0
    %5997 = vmatpush1.xpose.msra.mxu0 0.0
    %5998 = vmatprep.subr.mxu0 0.0
    %5999 = vmatpush1.xpose.msra.mxu0 0.0
    %6000 = vmatprep.subr.mxu0 0.0
    %6001 = vmatpush1.xpose.msra.mxu0 0.0
    %6002 = vmatprep.subr.mxu0 0.0
    %6003 = vmatpush1.xpose.msra.mxu0 0.0
    %6004 = vmatprep.subr.mxu0 0.0
    %6005 = vmatpush1.xpose.msra.mxu0 0.0
    %6006 = vmatprep.mubr.f32.mxu0 %v5710
    %6007 = vmatmul.mubr.f32.gmra.mrb[0].mxu0 %v5696
    %v6008 = vpop.f32.mrb[0].mxu0
    %v6009 = vadd.f32 0.0, %v6008
    %v6010 = vpop.f32.mrb[0].mxu0
    %6011 = vdwg.mxu0
    %6012 = vmatprep.subr.mxu0 %v5873
    %6013 = vmatpush1.xpose.msra.mxu0 %v5869
    %6014 = vmatprep.subr.mxu0 %v5924
    %6015 = vmatpush1.xpose.msra.mxu0 %v5922
    %6016 = vmatprep.subr.mxu0 0.0
    %6017 = vmatpush1.xpose.msra.mxu0 0.0
    %6018 = vmatprep.subr.mxu0 0.0
    %6019 = vmatpush1.xpose.msra.mxu0 0.0
    %6020 = vmatprep.subr.mxu0 0.0
    %6021 = vmatpush1.xpose.msra.mxu0 0.0
    %6022 = vmatprep.subr.mxu0 0.0
    %6023 = vmatpush1.xpose.msra.mxu0 0.0
    %6024 = vmatprep.subr.mxu0 0.0
    %6025 = vmatpush1.xpose.msra.mxu0 0.0
    %6026 = vmatprep.subr.mxu0 0.0
    %6027 = vmatpush1.xpose.msra.mxu0 0.0
    %6028 = vmatprep.subr.mxu0 0.0
    %6029 = vmatpush1.xpose.msra.mxu0 0.0
    %6030 = vmatprep.subr.mxu0 0.0
    %6031 = vmatpush1.xpose.msra.mxu0 0.0
    %6032 = vmatprep.subr.mxu0 0.0
    %6033 = vmatpush1.xpose.msra.mxu0 0.0
    %6034 = vmatprep.subr.mxu0 0.0
    %6035 = vmatpush1.xpose.msra.mxu0 0.0
    %6036 = vmatprep.subr.mxu0 0.0
    %6037 = vmatpush1.xpose.msra.mxu0 0.0
    %6038 = vmatprep.subr.mxu0 0.0
    %6039 = vmatpush1.xpose.msra.mxu0 0.0
    %6040 = vmatprep.subr.mxu0 0.0
    %6041 = vmatpush1.xpose.msra.mxu0 0.0
    %6042 = vmatprep.subr.mxu0 0.0
    %6043 = vmatpush1.xpose.msra.mxu0 0.0
    %6044 = vmatprep.subr.mxu0 0.0
    %6045 = vmatpush1.xpose.msra.mxu0 0.0
    %6046 = vmatprep.subr.mxu0 0.0
    %6047 = vmatpush1.xpose.msra.mxu0 0.0
    %6048 = vmatprep.subr.mxu0 0.0
    %6049 = vmatpush1.xpose.msra.mxu0 0.0
    %6050 = vmatprep.subr.mxu0 0.0
    %6051 = vmatpush1.xpose.msra.mxu0 0.0
    %6052 = vmatprep.subr.mxu0 0.0
    %6053 = vmatpush1.xpose.msra.mxu0 0.0
    %6054 = vmatprep.subr.mxu0 0.0
    %6055 = vmatpush1.xpose.msra.mxu0 0.0
    %6056 = vmatprep.subr.mxu0 0.0
    %6057 = vmatpush1.xpose.msra.mxu0 0.0
    %6058 = vmatprep.subr.mxu0 0.0
    %6059 = vmatpush1.xpose.msra.mxu0 0.0
    %6060 = vmatprep.subr.mxu0 0.0
    %6061 = vmatpush1.xpose.msra.mxu0 0.0
    %6062 = vmatprep.subr.mxu0 0.0
    %6063 = vmatpush1.xpose.msra.mxu0 0.0
    %6064 = vmatprep.subr.mxu0 0.0
    %6065 = vmatpush1.xpose.msra.mxu0 0.0
    %6066 = vmatprep.subr.mxu0 0.0
    %6067 = vmatpush1.xpose.msra.mxu0 0.0
    %6068 = vmatprep.subr.mxu0 0.0
    %6069 = vmatpush1.xpose.msra.mxu0 0.0
    %6070 = vmatprep.subr.mxu0 0.0
    %6071 = vmatpush1.xpose.msra.mxu0 0.0
    %6072 = vmatprep.subr.mxu0 0.0
    %6073 = vmatpush1.xpose.msra.mxu0 0.0
    %6074 = vmatprep.subr.mxu0 0.0
    %6075 = vmatpush1.xpose.msra.mxu0 0.0
    %6076 = vmatprep.mubr.f32.mxu0 %v5720
    %6077 = vmatmul.mubr.f32.gmra.mrb[0].mxu0 %v5718
    %v6078 = vpop.f32.mrb[0].mxu0
    %v6079 = vadd.f32 %v6009, %v6078
    %v6080 = vpop.f32.mrb[0].mxu0
    %6081 = vdwg.mxu0
    %6082 = vmatprep.subr.mxu0 %v5874
    %6083 = vmatpush1.xpose.msra.mxu0 %v5870
    %6084 = vmatprep.subr.mxu0 %v5921
    %6085 = vmatpush1.xpose.msra.mxu0 %v5907
    %6086 = vmatprep.subr.mxu0 0.0
    %6087 = vmatpush1.xpose.msra.mxu0 0.0
    %6088 = vmatprep.subr.mxu0 0.0
    %6089 = vmatpush1.xpose.msra.mxu0 0.0
    %6090 = vmatprep.subr.mxu0 0.0
    %6091 = vmatpush1.xpose.msra.mxu0 0.0
    %6092 = vmatprep.subr.mxu0 0.0
    %6093 = vmatpush1.xpose.msra.mxu0 0.0
    %6094 = vmatprep.subr.mxu0 0.0
    %6095 = vmatpush1.xpose.msra.mxu0 0.0
    %6096 = vmatprep.subr.mxu0 0.0
    %6097 = vmatpush1.xpose.msra.mxu0 0.0
    %6098 = vmatprep.subr.mxu0 0.0
    %6099 = vmatpush1.xpose.msra.mxu0 0.0
    %6100 = vmatprep.subr.mxu0 0.0
    %6101 = vmatpush1.xpose.msra.mxu0 0.0
    %6102 = vmatprep.subr.mxu0 0.0
    %6103 = vmatpush1.xpose.msra.mxu0 0.0
    %6104 = vmatprep.subr.mxu0 0.0
    %6105 = vmatpush1.xpose.msra.mxu0 0.0
    %6106 = vmatprep.subr.mxu0 0.0
    %6107 = vmatpush1.xpose.msra.mxu0 0.0
    %6108 = vmatprep.subr.mxu0 0.0
    %6109 = vmatpush1.xpose.msra.mxu0 0.0
    %6110 = vmatprep.subr.mxu0 0.0
    %6111 = vmatpush1.xpose.msra.mxu0 0.0
    %6112 = vmatprep.subr.mxu0 0.0
    %6113 = vmatpush1.xpose.msra.mxu0 0.0
    %6114 = vmatprep.subr.mxu0 0.0
    %6115 = vmatpush1.xpose.msra.mxu0 0.0
    %6116 = vmatprep.subr.mxu0 0.0
    %6117 = vmatpush1.xpose.msra.mxu0 0.0
    %6118 = vmatprep.subr.mxu0 0.0
    %6119 = vmatpush1.xpose.msra.mxu0 0.0
    %6120 = vmatprep.subr.mxu0 0.0
    %6121 = vmatpush1.xpose.msra.mxu0 0.0
    %6122 = vmatprep.subr.mxu0 0.0
    %6123 = vmatpush1.xpose.msra.mxu0 0.0
    %6124 = vmatprep.subr.mxu0 0.0
    %6125 = vmatpush1.xpose.msra.mxu0 0.0
    %6126 = vmatprep.subr.mxu0 0.0
    %6127 = vmatpush1.xpose.msra.mxu0 0.0
    %6128 = vmatprep.subr.mxu0 0.0
    %6129 = vmatpush1.xpose.msra.mxu0 0.0
    %6130 = vmatprep.subr.mxu0 0.0
    %6131 = vmatpush1.xpose.msra.mxu0 0.0
    %6132 = vmatprep.subr.mxu0 0.0
    %6133 = vmatpush1.xpose.msra.mxu0 0.0
    %6134 = vmatprep.subr.mxu0 0.0
    %6135 = vmatpush1.xpose.msra.mxu0 0.0
    %6136 = vmatprep.subr.mxu0 0.0
    %6137 = vmatpush1.xpose.msra.mxu0 0.0
    %6138 = vmatprep.subr.mxu0 0.0
    %6139 = vmatpush1.xpose.msra.mxu0 0.0
    %6140 = vmatprep.subr.mxu0 0.0
    %6141 = vmatpush1.xpose.msra.mxu0 0.0
    %6142 = vmatprep.subr.mxu0 0.0
    %6143 = vmatpush1.xpose.msra.mxu0 0.0
    %6144 = vmatprep.subr.mxu0 0.0
    %6145 = vmatpush1.xpose.msra.mxu0 0.0
    %6146 = vmatprep.mubr.f32.mxu0 %v5717
    %6147 = vmatmul.mubr.f32.gmra.mrb[0].mxu0 %v5703
    %v6148 = vpop.f32.mrb[0].mxu0
    %v6149 = vadd.f32 %v6079, %v6148
    %v6150 = vpop.f32.mrb[0].mxu0
    %6151 = vdwg.mxu0
    %6152 = vmatprep.subr.mxu0 %v5875
    %6153 = vmatpush1.xpose.msra.mxu0 %v5871
    %6154 = vmatprep.subr.mxu0 %v5925
    %6155 = vmatpush1.xpose.msra.mxu0 %v5923
    %6156 = vmatprep.subr.mxu0 0.0
    %6157 = vmatpush1.xpose.msra.mxu0 0.0
    %6158 = vmatprep.subr.mxu0 0.0
    %6159 = vmatpush1.xpose.msra.mxu0 0.0
    %6160 = vmatprep.subr.mxu0 0.0
    %6161 = vmatpush1.xpose.msra.mxu0 0.0
    %6162 = vmatprep.subr.mxu0 0.0
    %6163 = vmatpush1.xpose.msra.mxu0 0.0
    %6164 = vmatprep.subr.mxu0 0.0
    %6165 = vmatpush1.xpose.msra.mxu0 0.0
    %6166 = vmatprep.subr.mxu0 0.0
    %6167 = vmatpush1.xpose.msra.mxu0 0.0
    %6168 = vmatprep.subr.mxu0 0.0
    %6169 = vmatpush1.xpose.msra.mxu0 0.0
    %6170 = vmatprep.subr.mxu0 0.0
    %6171 = vmatpush1.xpose.msra.mxu0 0.0
    %6172 = vmatprep.subr.mxu0 0.0
    %6173 = vmatpush1.xpose.msra.mxu0 0.0
    %6174 = vmatprep.subr.mxu0 0.0
    %6175 = vmatpush1.xpose.msra.mxu0 0.0
    %6176 = vmatprep.subr.mxu0 0.0
    %6177 = vmatpush1.xpose.msra.mxu0 0.0
    %6178 = vmatprep.subr.mxu0 0.0
    %6179 = vmatpush1.xpose.msra.mxu0 0.0
    %6180 = vmatprep.subr.mxu0 0.0
    %6181 = vmatpush1.xpose.msra.mxu0 0.0
    %6182 = vmatprep.subr.mxu0 0.0
    %6183 = vmatpush1.xpose.msra.mxu0 0.0
    %6184 = vmatprep.subr.mxu0 0.0
    %6185 = vmatpush1.xpose.msra.mxu0 0.0
    %6186 = vmatprep.subr.mxu0 0.0
    %6187 = vmatpush1.xpose.msra.mxu0 0.0
    %6188 = vmatprep.subr.mxu0 0.0
    %6189 = vmatpush1.xpose.msra.mxu0 0.0
    %6190 = vmatprep.subr.mxu0 0.0
    %6191 = vmatpush1.xpose.msra.mxu0 0.0
    %6192 = vmatprep.subr.mxu0 0.0
    %6193 = vmatpush1.xpose.msra.mxu0 0.0
    %6194 = vmatprep.subr.mxu0 0.0
    %6195 = vmatpush1.xpose.msra.mxu0 0.0
    %6196 = vmatprep.subr.mxu0 0.0
    %6197 = vmatpush1.xpose.msra.mxu0 0.0
    %6198 = vmatprep.subr.mxu0 0.0
    %6199 = vmatpush1.xpose.msra.mxu0 0.0
    %6200 = vmatprep.subr.mxu0 0.0
    %6201 = vmatpush1.xpose.msra.mxu0 0.0
    %6202 = vmatprep.subr.mxu0 0.0
    %6203 = vmatpush1.xpose.msra.mxu0 0.0
    %6204 = vmatprep.subr.mxu0 0.0
    %6205 = vmatpush1.xpose.msra.mxu0 0.0
    %6206 = vmatprep.subr.mxu0 0.0
    %6207 = vmatpush1.xpose.msra.mxu0 0.0
    %6208 = vmatprep.subr.mxu0 0.0
    %6209 = vmatpush1.xpose.msra.mxu0 0.0
    %6210 = vmatprep.subr.mxu0 0.0
    %6211 = vmatpush1.xpose.msra.mxu0 0.0
    %6212 = vmatprep.subr.mxu0 0.0
    %6213 = vmatpush1.xpose.msra.mxu0 0.0
    %6214 = vmatprep.subr.mxu0 0.0
    %6215 = vmatpush1.xpose.msra.mxu0 0.0
    %6216 = vmatprep.mubr.f32.mxu0 %v5721
    %6217 = vmatmul.mubr.f32.gmra.mrb[0].mxu0 %v5719
    %v6218 = vpop.f32.mrb[0].mxu0
    %v6219 = vadd.f32 %v6149, %v6218
    %v6220 = vpop.f32.mrb[0].mxu0
    %6221 = vdwg.mxu0
    %v6222 = vadd.f32 %v5621, %v6219
    %s6223 = scalar_lea.vmem [#allocation2], 65
    %v6224 = vld [vmem:[%s6223] ss:$8 sm:$0xf]
    %v6225 = vld [vmem:[%s6223] ss:$8 sm:$0xf0]
    %v6226 = vor.u32 %v6224, %v6225
    %s6227 = scalar_lea.vmem [#allocation2], 193
    %v6228 = vld [vmem:[%s6227] ss:$8 sm:$0xf]
    %v6229 = vld [vmem:[%s6227] ss:$8 sm:$0xf0]
    %v6230 = vor.u32 %v6228, %v6229
    %s6231 = scalar_lea.vmem %s3, 65
    %v6232 = vld [vmem:[%s6231] ss:$8 sm:$0xf]
    %v6233 = vld [vmem:[%s6231] ss:$8 sm:$0xf0]
    %v6234 = vor.u32 %v6232, %v6233
    %s6235 = scalar_lea.vmem %s3, 193
    %v6236 = vld [vmem:[%s6235] ss:$8 sm:$0xf]
    %v6237 = vld [vmem:[%s6235] ss:$8 sm:$0xf0]
    %v6238 = vor.u32 %v6236, %v6237
    %s6239 = scalar_lea.vmem %s3, 321
    %v6240 = vld [vmem:[%s6239] ss:$8 sm:$0xf]
    %v6241 = vld [vmem:[%s6239] ss:$8 sm:$0xf0]
    %v6242 = vor.u32 %v6240, %v6241
    %s6243 = scalar_lea.vmem %s3, 449
    %v6244 = vld [vmem:[%s6243] ss:$8 sm:$0xf]
    %v6245 = vld [vmem:[%s6243] ss:$8 sm:$0xf0]
    %v6246 = vor.u32 %v6244, %v6245
    %s6247 = scalar_lea.vmem %s3, 577
    %v6248 = vld [vmem:[%s6247] ss:$8 sm:$0xf]
    %v6249 = vld [vmem:[%s6247] ss:$8 sm:$0xf0]
    %v6250 = vor.u32 %v6248, %v6249
    %s6251 = scalar_lea.vmem %s3, 705
    %v6252 = vld [vmem:[%s6251] ss:$8 sm:$0xf]
    %v6253 = vld [vmem:[%s6251] ss:$8 sm:$0xf0]
    %v6254 = vor.u32 %v6252, %v6253
    %s6255 = scalar_lea.vmem %s3, 833
    %v6256 = vld [vmem:[%s6255] ss:$8 sm:$0xf]
    %v6257 = vld [vmem:[%s6255] ss:$8 sm:$0xf0]
    %v6258 = vor.u32 %v6256, %v6257
    %s6259 = scalar_lea.vmem %s3, 961
    %v6260 = vld [vmem:[%s6259] ss:$8 sm:$0xf]
    %v6261 = vld [vmem:[%s6259] ss:$8 sm:$0xf0]
    %v6262 = vor.u32 %v6260, %v6261
    %s6263 = scalar_lea.vmem %s3, 1089
    %v6264 = vld [vmem:[%s6263] ss:$8 sm:$0xf]
    %v6265 = vld [vmem:[%s6263] ss:$8 sm:$0xf0]
    %v6266 = vor.u32 %v6264, %v6265
    %s6267 = scalar_lea.vmem %s3, 1217
    %v6268 = vld [vmem:[%s6267] ss:$8 sm:$0xf]
    %v6269 = vld [vmem:[%s6267] ss:$8 sm:$0xf0]
    %v6270 = vor.u32 %v6268, %v6269
    %v6273 = vcombine.low %v6226, %v6230
    %v6274 = vcombine.high %v6226, %v6230
    %v6276 = vunpack.c.l.s4 1966171168
    %v6277 = vunpack.c.0.s8 %v6276
    %v6278 = vlaneseq
    %v6279 = vshrl.u32 %v6278, 7
    %v6280 = vsub.s32 %v6277, %v6279
    %v6281 = vrot.slane %v6273, %v6280
    %v6283 = vunpack.c.l.s4 1966171168
    %v6284 = vunpack.c.0.s8 %v6283
    %v6285 = vlaneseq
    %v6286 = vshrl.u32 %v6285, 7
    %v6287 = vsub.s32 %v6284, %v6286
    %v6288 = vrot.slane %v6274, %v6287
    %v6289 = vcombine.high %v6281, %v6281
    %v6290 = vcombine.high %v6288, %v6288
    %v6292 = vunpack.c.l.s4 1966171168
    %v6293 = vunpack.c.0.s8 %v6292
    %v6294 = vlaneseq
    %v6295 = vshrl.u32 %v6294, 7
    %v6296 = vsub.s32 %v6293, %v6295
    %v6297 = vrot.slane %v6281, %v6296
    %v6299 = vunpack.c.l.s4 1966171168
    %v6300 = vunpack.c.0.s8 %v6299
    %v6301 = vlaneseq
    %v6302 = vshrl.u32 %v6301, 7
    %v6303 = vsub.s32 %v6300, %v6302
    %v6304 = vrot.slane %v6288, %v6303
    %v6306 = vunpack.c.l.s4 1966171168
    %v6307 = vunpack.c.0.s8 %v6306
    %v6308 = vlaneseq
    %v6309 = vshrl.u32 %v6308, 7
    %v6310 = vsub.s32 %v6307, %v6309
    %v6311 = vrot.slane %v6289, %v6310
    %v6313 = vunpack.c.l.s4 1966171168
    %v6314 = vunpack.c.0.s8 %v6313
    %v6315 = vlaneseq
    %v6316 = vshrl.u32 %v6315, 7
    %v6317 = vsub.s32 %v6314, %v6316
    %v6318 = vrot.slane %v6290, %v6317
    %v6319 = vcombine.high %v6297, %v6297
    %v6320 = vcombine.high %v6304, %v6304
    %v6321 = vcombine.high %v6311, %v6311
    %v6322 = vcombine.high %v6318, %v6318
    %v6341 = vcombine.low %v6234, %v6238
    %v6342 = vcombine.high %v6234, %v6238
    %v6343 = vcombine.low %v6242, %v6246
    %v6344 = vcombine.high %v6242, %v6246
    %v6345 = vcombine.low %v6250, %v6254
    %v6346 = vcombine.high %v6250, %v6254
    %v6347 = vcombine.low %v6258, %v6262
    %v6348 = vcombine.high %v6258, %v6262
    %v6350 = vunpack.c.l.s4 1966171168
    %v6351 = vunpack.c.0.s8 %v6350
    %v6352 = vlaneseq
    %v6353 = vshrl.u32 %v6352, 7
    %v6354 = vsub.s32 %v6351, %v6353
    %v6355 = vrot.slane %v6341, %v6354
    %v6357 = vunpack.c.l.s4 1966171168
    %v6358 = vunpack.c.0.s8 %v6357
    %v6359 = vlaneseq
    %v6360 = vshrl.u32 %v6359, 7
    %v6361 = vsub.s32 %v6358, %v6360
    %v6362 = vrot.slane %v6342, %v6361
    %v6364 = vunpack.c.l.s4 1966171168
    %v6365 = vunpack.c.0.s8 %v6364
    %v6366 = vlaneseq
    %v6367 = vshrl.u32 %v6366, 7
    %v6368 = vsub.s32 %v6365, %v6367
    %v6369 = vrot.slane %v6343, %v6368
    %v6371 = vunpack.c.l.s4 1966171168
    %v6372 = vunpack.c.0.s8 %v6371
    %v6373 = vlaneseq
    %v6374 = vshrl.u32 %v6373, 7
    %v6375 = vsub.s32 %v6372, %v6374
    %v6376 = vrot.slane %v6344, %v6375
    %v6378 = vunpack.c.l.s4 1966171168
    %v6379 = vunpack.c.0.s8 %v6378
    %v6380 = vlaneseq
    %v6381 = vshrl.u32 %v6380, 7
    %v6382 = vsub.s32 %v6379, %v6381
    %v6383 = vrot.slane %v6345, %v6382
    %v6385 = vunpack.c.l.s4 1966171168
    %v6386 = vunpack.c.0.s8 %v6385
    %v6387 = vlaneseq
    %v6388 = vshrl.u32 %v6387, 7
    %v6389 = vsub.s32 %v6386, %v6388
    %v6390 = vrot.slane %v6346, %v6389
    %v6392 = vunpack.c.l.s4 1966171168
    %v6393 = vunpack.c.0.s8 %v6392
    %v6394 = vlaneseq
    %v6395 = vshrl.u32 %v6394, 7
    %v6396 = vsub.s32 %v6393, %v6395
    %v6397 = vrot.slane %v6347, %v6396
    %v6399 = vunpack.c.l.s4 1966171168
    %v6400 = vunpack.c.0.s8 %v6399
    %v6401 = vlaneseq
    %v6402 = vshrl.u32 %v6401, 7
    %v6403 = vsub.s32 %v6400, %v6402
    %v6404 = vrot.slane %v6348, %v6403
    %v6405 = vcombine.low %v6355, %v6369
    %v6406 = vcombine.high %v6355, %v6369
    %v6407 = vcombine.low %v6362, %v6376
    %v6408 = vcombine.high %v6362, %v6376
    %v6409 = vcombine.low %v6383, %v6397
    %v6410 = vcombine.high %v6383, %v6397
    %v6411 = vcombine.low %v6390, %v6404
    %v6412 = vcombine.high %v6390, %v6404
    %v6414 = vunpack.c.l.s4 1966171168
    %v6415 = vunpack.c.0.s8 %v6414
    %v6416 = vlaneseq
    %v6417 = vshrl.u32 %v6416, 7
    %v6418 = vsub.s32 %v6415, %v6417
    %v6419 = vrot.slane %v6405, %v6418
    %v6421 = vunpack.c.l.s4 1966171168
    %v6422 = vunpack.c.0.s8 %v6421
    %v6423 = vlaneseq
    %v6424 = vshrl.u32 %v6423, 7
    %v6425 = vsub.s32 %v6422, %v6424
    %v6426 = vrot.slane %v6407, %v6425
    %v6428 = vunpack.c.l.s4 1966171168
    %v6429 = vunpack.c.0.s8 %v6428
    %v6430 = vlaneseq
    %v6431 = vshrl.u32 %v6430, 7
    %v6432 = vsub.s32 %v6429, %v6431
    %v6433 = vrot.slane %v6406, %v6432
    %v6435 = vunpack.c.l.s4 1966171168
    %v6436 = vunpack.c.0.s8 %v6435
    %v6437 = vlaneseq
    %v6438 = vshrl.u32 %v6437, 7
    %v6439 = vsub.s32 %v6436, %v6438
    %v6440 = vrot.slane %v6408, %v6439
    %v6442 = vunpack.c.l.s4 1966171168
    %v6443 = vunpack.c.0.s8 %v6442
    %v6444 = vlaneseq
    %v6445 = vshrl.u32 %v6444, 7
    %v6446 = vsub.s32 %v6443, %v6445
    %v6447 = vrot.slane %v6409, %v6446
    %v6449 = vunpack.c.l.s4 1966171168
    %v6450 = vunpack.c.0.s8 %v6449
    %v6451 = vlaneseq
    %v6452 = vshrl.u32 %v6451, 7
    %v6453 = vsub.s32 %v6450, %v6452
    %v6454 = vrot.slane %v6411, %v6453
    %v6456 = vunpack.c.l.s4 1966171168
    %v6457 = vunpack.c.0.s8 %v6456
    %v6458 = vlaneseq
    %v6459 = vshrl.u32 %v6458, 7
    %v6460 = vsub.s32 %v6457, %v6459
    %v6461 = vrot.slane %v6410, %v6460
    %v6463 = vunpack.c.l.s4 1966171168
    %v6464 = vunpack.c.0.s8 %v6463
    %v6465 = vlaneseq
    %v6466 = vshrl.u32 %v6465, 7
    %v6467 = vsub.s32 %v6464, %v6466
    %v6468 = vrot.slane %v6412, %v6467
    %v6469 = vcombine.low %v6419, %v6447
    %v6470 = vcombine.high %v6419, %v6447
    %v6471 = vcombine.low %v6426, %v6454
    %v6472 = vcombine.high %v6426, %v6454
    %v6473 = vcombine.low %v6433, %v6461
    %v6474 = vcombine.high %v6433, %v6461
    %v6475 = vcombine.low %v6440, %v6468
    %v6476 = vcombine.high %v6440, %v6468
    %v6477 = vcombine.low %v6266, %v6270
    %v6478 = vcombine.high %v6266, %v6270
    %v6480 = vunpack.c.l.s4 1966171168
    %v6481 = vunpack.c.0.s8 %v6480
    %v6482 = vlaneseq
    %v6483 = vshrl.u32 %v6482, 7
    %v6484 = vsub.s32 %v6481, %v6483
    %v6485 = vrot.slane %v6477, %v6484
    %v6487 = vunpack.c.l.s4 1966171168
    %v6488 = vunpack.c.0.s8 %v6487
    %v6489 = vlaneseq
    %v6490 = vshrl.u32 %v6489, 7
    %v6491 = vsub.s32 %v6488, %v6490
    %v6492 = vrot.slane %v6478, %v6491
    %v6493 = vcombine.high %v6485, %v6485
    %v6494 = vcombine.high %v6492, %v6492
    %v6496 = vunpack.c.l.s4 1966171168
    %v6497 = vunpack.c.0.s8 %v6496
    %v6498 = vlaneseq
    %v6499 = vshrl.u32 %v6498, 7
    %v6500 = vsub.s32 %v6497, %v6499
    %v6501 = vrot.slane %v6485, %v6500
    %v6503 = vunpack.c.l.s4 1966171168
    %v6504 = vunpack.c.0.s8 %v6503
    %v6505 = vlaneseq
    %v6506 = vshrl.u32 %v6505, 7
    %v6507 = vsub.s32 %v6504, %v6506
    %v6508 = vrot.slane %v6492, %v6507
    %v6510 = vunpack.c.l.s4 1966171168
    %v6511 = vunpack.c.0.s8 %v6510
    %v6512 = vlaneseq
    %v6513 = vshrl.u32 %v6512, 7
    %v6514 = vsub.s32 %v6511, %v6513
    %v6515 = vrot.slane %v6493, %v6514
    %v6517 = vunpack.c.l.s4 1966171168
    %v6518 = vunpack.c.0.s8 %v6517
    %v6519 = vlaneseq
    %v6520 = vshrl.u32 %v6519, 7
    %v6521 = vsub.s32 %v6518, %v6520
    %v6522 = vrot.slane %v6494, %v6521
    %v6523 = vcombine.high %v6501, %v6501
    %v6524 = vcombine.high %v6508, %v6508
    %v6525 = vcombine.high %v6515, %v6515
    %v6526 = vcombine.high %v6522, %v6522
    %6543 = vmatprep.subr.mxu0 %v6473
    %6544 = vmatpush1.xpose.msra.mxu0 %v6469
    %6545 = vmatprep.subr.mxu0 %v6515
    %6546 = vmatpush1.xpose.msra.mxu0 %v6501
    %6547 = vmatprep.subr.mxu0 0.0
    %6548 = vmatpush1.xpose.msra.mxu0 0.0
    %6549 = vmatprep.subr.mxu0 0.0
    %6550 = vmatpush1.xpose.msra.mxu0 0.0
    %6551 = vmatprep.subr.mxu0 0.0
    %6552 = vmatpush1.xpose.msra.mxu0 0.0
    %6553 = vmatprep.subr.mxu0 0.0
    %6554 = vmatpush1.xpose.msra.mxu0 0.0
    %6555 = vmatprep.subr.mxu0 0.0
    %6556 = vmatpush1.xpose.msra.mxu0 0.0
    %6557 = vmatprep.subr.mxu0 0.0
    %6558 = vmatpush1.xpose.msra.mxu0 0.0
    %6559 = vmatprep.subr.mxu0 0.0
    %6560 = vmatpush1.xpose.msra.mxu0 0.0
    %6561 = vmatprep.subr.mxu0 0.0
    %6562 = vmatpush1.xpose.msra.mxu0 0.0
    %6563 = vmatprep.subr.mxu0 0.0
    %6564 = vmatpush1.xpose.msra.mxu0 0.0
    %6565 = vmatprep.subr.mxu0 0.0
    %6566 = vmatpush1.xpose.msra.mxu0 0.0
    %6567 = vmatprep.subr.mxu0 0.0
    %6568 = vmatpush1.xpose.msra.mxu0 0.0
    %6569 = vmatprep.subr.mxu0 0.0
    %6570 = vmatpush1.xpose.msra.mxu0 0.0
    %6571 = vmatprep.subr.mxu0 0.0
    %6572 = vmatpush1.xpose.msra.mxu0 0.0
    %6573 = vmatprep.subr.mxu0 0.0
    %6574 = vmatpush1.xpose.msra.mxu0 0.0
    %6575 = vmatprep.subr.mxu0 0.0
    %6576 = vmatpush1.xpose.msra.mxu0 0.0
    %6577 = vmatprep.subr.mxu0 0.0
    %6578 = vmatpush1.xpose.msra.mxu0 0.0
    %6579 = vmatprep.subr.mxu0 0.0
    %6580 = vmatpush1.xpose.msra.mxu0 0.0
    %6581 = vmatprep.subr.mxu0 0.0
    %6582 = vmatpush1.xpose.msra.mxu0 0.0
    %6583 = vmatprep.subr.mxu0 0.0
    %6584 = vmatpush1.xpose.msra.mxu0 0.0
    %6585 = vmatprep.subr.mxu0 0.0
    %6586 = vmatpush1.xpose.msra.mxu0 0.0
    %6587 = vmatprep.subr.mxu0 0.0
    %6588 = vmatpush1.xpose.msra.mxu0 0.0
    %6589 = vmatprep.subr.mxu0 0.0
    %6590 = vmatpush1.xpose.msra.mxu0 0.0
    %6591 = vmatprep.subr.mxu0 0.0
    %6592 = vmatpush1.xpose.msra.mxu0 0.0
    %6593 = vmatprep.subr.mxu0 0.0
    %6594 = vmatpush1.xpose.msra.mxu0 0.0
    %6595 = vmatprep.subr.mxu0 0.0
    %6596 = vmatpush1.xpose.msra.mxu0 0.0
    %6597 = vmatprep.subr.mxu0 0.0
    %6598 = vmatpush1.xpose.msra.mxu0 0.0
    %6599 = vmatprep.subr.mxu0 0.0
    %6600 = vmatpush1.xpose.msra.mxu0 0.0
    %6601 = vmatprep.subr.mxu0 0.0
    %6602 = vmatpush1.xpose.msra.mxu0 0.0
    %6603 = vmatprep.subr.mxu0 0.0
    %6604 = vmatpush1.xpose.msra.mxu0 0.0
    %6605 = vmatprep.subr.mxu0 0.0
    %6606 = vmatpush1.xpose.msra.mxu0 0.0
    %6607 = vmatprep.mubr.f32.mxu0 %v6311
    %6608 = vmatmul.mubr.f32.gmra.mrb[0].mxu0 %v6297
    %v6609 = vpop.f32.mrb[0].mxu0
    %v6610 = vadd.f32 0.0, %v6609
    %v6611 = vpop.f32.mrb[0].mxu0
    %6612 = vdwg.mxu0
    %6613 = vmatprep.subr.mxu0 %v6474
    %6614 = vmatpush1.xpose.msra.mxu0 %v6470
    %6615 = vmatprep.subr.mxu0 %v6525
    %6616 = vmatpush1.xpose.msra.mxu0 %v6523
    %6617 = vmatprep.subr.mxu0 0.0
    %6618 = vmatpush1.xpose.msra.mxu0 0.0
    %6619 = vmatprep.subr.mxu0 0.0
    %6620 = vmatpush1.xpose.msra.mxu0 0.0
    %6621 = vmatprep.subr.mxu0 0.0
    %6622 = vmatpush1.xpose.msra.mxu0 0.0
    %6623 = vmatprep.subr.mxu0 0.0
    %6624 = vmatpush1.xpose.msra.mxu0 0.0
    %6625 = vmatprep.subr.mxu0 0.0
    %6626 = vmatpush1.xpose.msra.mxu0 0.0
    %6627 = vmatprep.subr.mxu0 0.0
    %6628 = vmatpush1.xpose.msra.mxu0 0.0
    %6629 = vmatprep.subr.mxu0 0.0
    %6630 = vmatpush1.xpose.msra.mxu0 0.0
    %6631 = vmatprep.subr.mxu0 0.0
    %6632 = vmatpush1.xpose.msra.mxu0 0.0
    %6633 = vmatprep.subr.mxu0 0.0
    %6634 = vmatpush1.xpose.msra.mxu0 0.0
    %6635 = vmatprep.subr.mxu0 0.0
    %6636 = vmatpush1.xpose.msra.mxu0 0.0
    %6637 = vmatprep.subr.mxu0 0.0
    %6638 = vmatpush1.xpose.msra.mxu0 0.0
    %6639 = vmatprep.subr.mxu0 0.0
    %6640 = vmatpush1.xpose.msra.mxu0 0.0
    %6641 = vmatprep.subr.mxu0 0.0
    %6642 = vmatpush1.xpose.msra.mxu0 0.0
    %6643 = vmatprep.subr.mxu0 0.0
    %6644 = vmatpush1.xpose.msra.mxu0 0.0
    %6645 = vmatprep.subr.mxu0 0.0
    %6646 = vmatpush1.xpose.msra.mxu0 0.0
    %6647 = vmatprep.subr.mxu0 0.0
    %6648 = vmatpush1.xpose.msra.mxu0 0.0
    %6649 = vmatprep.subr.mxu0 0.0
    %6650 = vmatpush1.xpose.msra.mxu0 0.0
    %6651 = vmatprep.subr.mxu0 0.0
    %6652 = vmatpush1.xpose.msra.mxu0 0.0
    %6653 = vmatprep.subr.mxu0 0.0
    %6654 = vmatpush1.xpose.msra.mxu0 0.0
    %6655 = vmatprep.subr.mxu0 0.0
    %6656 = vmatpush1.xpose.msra.mxu0 0.0
    %6657 = vmatprep.subr.mxu0 0.0
    %6658 = vmatpush1.xpose.msra.mxu0 0.0
    %6659 = vmatprep.subr.mxu0 0.0
    %6660 = vmatpush1.xpose.msra.mxu0 0.0
    %6661 = vmatprep.subr.mxu0 0.0
    %6662 = vmatpush1.xpose.msra.mxu0 0.0
    %6663 = vmatprep.subr.mxu0 0.0
    %6664 = vmatpush1.xpose.msra.mxu0 0.0
    %6665 = vmatprep.subr.mxu0 0.0
    %6666 = vmatpush1.xpose.msra.mxu0 0.0
    %6667 = vmatprep.subr.mxu0 0.0
    %6668 = vmatpush1.xpose.msra.mxu0 0.0
    %6669 = vmatprep.subr.mxu0 0.0
    %6670 = vmatpush1.xpose.msra.mxu0 0.0
    %6671 = vmatprep.subr.mxu0 0.0
    %6672 = vmatpush1.xpose.msra.mxu0 0.0
    %6673 = vmatprep.subr.mxu0 0.0
    %6674 = vmatpush1.xpose.msra.mxu0 0.0
    %6675 = vmatprep.subr.mxu0 0.0
    %6676 = vmatpush1.xpose.msra.mxu0 0.0
    %6677 = vmatprep.mubr.f32.mxu0 %v6321
    %6678 = vmatmul.mubr.f32.gmra.mrb[0].mxu0 %v6319
    %v6679 = vpop.f32.mrb[0].mxu0
    %v6680 = vadd.f32 %v6610, %v6679
    %v6681 = vpop.f32.mrb[0].mxu0
    %6682 = vdwg.mxu0
    %6683 = vmatprep.subr.mxu0 %v6475
    %6684 = vmatpush1.xpose.msra.mxu0 %v6471
    %6685 = vmatprep.subr.mxu0 %v6522
    %6686 = vmatpush1.xpose.msra.mxu0 %v6508
    %6687 = vmatprep.subr.mxu0 0.0
    %6688 = vmatpush1.xpose.msra.mxu0 0.0
    %6689 = vmatprep.subr.mxu0 0.0
    %6690 = vmatpush1.xpose.msra.mxu0 0.0
    %6691 = vmatprep.subr.mxu0 0.0
    %6692 = vmatpush1.xpose.msra.mxu0 0.0
    %6693 = vmatprep.subr.mxu0 0.0
    %6694 = vmatpush1.xpose.msra.mxu0 0.0
    %6695 = vmatprep.subr.mxu0 0.0
    %6696 = vmatpush1.xpose.msra.mxu0 0.0
    %6697 = vmatprep.subr.mxu0 0.0
    %6698 = vmatpush1.xpose.msra.mxu0 0.0
    %6699 = vmatprep.subr.mxu0 0.0
    %6700 = vmatpush1.xpose.msra.mxu0 0.0
    %6701 = vmatprep.subr.mxu0 0.0
    %6702 = vmatpush1.xpose.msra.mxu0 0.0
    %6703 = vmatprep.subr.mxu0 0.0
    %6704 = vmatpush1.xpose.msra.mxu0 0.0
    %6705 = vmatprep.subr.mxu0 0.0
    %6706 = vmatpush1.xpose.msra.mxu0 0.0
    %6707 = vmatprep.subr.mxu0 0.0
    %6708 = vmatpush1.xpose.msra.mxu0 0.0
    %6709 = vmatprep.subr.mxu0 0.0
    %6710 = vmatpush1.xpose.msra.mxu0 0.0
    %6711 = vmatprep.subr.mxu0 0.0
    %6712 = vmatpush1.xpose.msra.mxu0 0.0
    %6713 = vmatprep.subr.mxu0 0.0
    %6714 = vmatpush1.xpose.msra.mxu0 0.0
    %6715 = vmatprep.subr.mxu0 0.0
    %6716 = vmatpush1.xpose.msra.mxu0 0.0
    %6717 = vmatprep.subr.mxu0 0.0
    %6718 = vmatpush1.xpose.msra.mxu0 0.0
    %6719 = vmatprep.subr.mxu0 0.0
    %6720 = vmatpush1.xpose.msra.mxu0 0.0
    %6721 = vmatprep.subr.mxu0 0.0
    %6722 = vmatpush1.xpose.msra.mxu0 0.0
    %6723 = vmatprep.subr.mxu0 0.0
    %6724 = vmatpush1.xpose.msra.mxu0 0.0
    %6725 = vmatprep.subr.mxu0 0.0
    %6726 = vmatpush1.xpose.msra.mxu0 0.0
    %6727 = vmatprep.subr.mxu0 0.0
    %6728 = vmatpush1.xpose.msra.mxu0 0.0
    %6729 = vmatprep.subr.mxu0 0.0
    %6730 = vmatpush1.xpose.msra.mxu0 0.0
    %6731 = vmatprep.subr.mxu0 0.0
    %6732 = vmatpush1.xpose.msra.mxu0 0.0
    %6733 = vmatprep.subr.mxu0 0.0
    %6734 = vmatpush1.xpose.msra.mxu0 0.0
    %6735 = vmatprep.subr.mxu0 0.0
    %6736 = vmatpush1.xpose.msra.mxu0 0.0
    %6737 = vmatprep.subr.mxu0 0.0
    %6738 = vmatpush1.xpose.msra.mxu0 0.0
    %6739 = vmatprep.subr.mxu0 0.0
    %6740 = vmatpush1.xpose.msra.mxu0 0.0
    %6741 = vmatprep.subr.mxu0 0.0
    %6742 = vmatpush1.xpose.msra.mxu0 0.0
    %6743 = vmatprep.subr.mxu0 0.0
    %6744 = vmatpush1.xpose.msra.mxu0 0.0
    %6745 = vmatprep.subr.mxu0 0.0
    %6746 = vmatpush1.xpose.msra.mxu0 0.0
    %6747 = vmatprep.mubr.f32.mxu0 %v6318
    %6748 = vmatmul.mubr.f32.gmra.mrb[0].mxu0 %v6304
    %v6749 = vpop.f32.mrb[0].mxu0
    %v6750 = vadd.f32 %v6680, %v6749
    %v6751 = vpop.f32.mrb[0].mxu0
    %6752 = vdwg.mxu0
    %6753 = vmatprep.subr.mxu0 %v6476
    %6754 = vmatpush1.xpose.msra.mxu0 %v6472
    %6755 = vmatprep.subr.mxu0 %v6526
    %6756 = vmatpush1.xpose.msra.mxu0 %v6524
    %6757 = vmatprep.subr.mxu0 0.0
    %6758 = vmatpush1.xpose.msra.mxu0 0.0
    %6759 = vmatprep.subr.mxu0 0.0
    %6760 = vmatpush1.xpose.msra.mxu0 0.0
    %6761 = vmatprep.subr.mxu0 0.0
    %6762 = vmatpush1.xpose.msra.mxu0 0.0
    %6763 = vmatprep.subr.mxu0 0.0
    %6764 = vmatpush1.xpose.msra.mxu0 0.0
    %6765 = vmatprep.subr.mxu0 0.0
    %6766 = vmatpush1.xpose.msra.mxu0 0.0
    %6767 = vmatprep.subr.mxu0 0.0
    %6768 = vmatpush1.xpose.msra.mxu0 0.0
    %6769 = vmatprep.subr.mxu0 0.0
    %6770 = vmatpush1.xpose.msra.mxu0 0.0
    %6771 = vmatprep.subr.mxu0 0.0
    %6772 = vmatpush1.xpose.msra.mxu0 0.0
    %6773 = vmatprep.subr.mxu0 0.0
    %6774 = vmatpush1.xpose.msra.mxu0 0.0
    %6775 = vmatprep.subr.mxu0 0.0
    %6776 = vmatpush1.xpose.msra.mxu0 0.0
    %6777 = vmatprep.subr.mxu0 0.0
    %6778 = vmatpush1.xpose.msra.mxu0 0.0
    %6779 = vmatprep.subr.mxu0 0.0
    %6780 = vmatpush1.xpose.msra.mxu0 0.0
    %6781 = vmatprep.subr.mxu0 0.0
    %6782 = vmatpush1.xpose.msra.mxu0 0.0
    %6783 = vmatprep.subr.mxu0 0.0
    %6784 = vmatpush1.xpose.msra.mxu0 0.0
    %6785 = vmatprep.subr.mxu0 0.0
    %6786 = vmatpush1.xpose.msra.mxu0 0.0
    %6787 = vmatprep.subr.mxu0 0.0
    %6788 = vmatpush1.xpose.msra.mxu0 0.0
    %6789 = vmatprep.subr.mxu0 0.0
    %6790 = vmatpush1.xpose.msra.mxu0 0.0
    %6791 = vmatprep.subr.mxu0 0.0
    %6792 = vmatpush1.xpose.msra.mxu0 0.0
    %6793 = vmatprep.subr.mxu0 0.0
    %6794 = vmatpush1.xpose.msra.mxu0 0.0
    %6795 = vmatprep.subr.mxu0 0.0
    %6796 = vmatpush1.xpose.msra.mxu0 0.0
    %6797 = vmatprep.subr.mxu0 0.0
    %6798 = vmatpush1.xpose.msra.mxu0 0.0
    %6799 = vmatprep.subr.mxu0 0.0
    %6800 = vmatpush1.xpose.msra.mxu0 0.0
    %6801 = vmatprep.subr.mxu0 0.0
    %6802 = vmatpush1.xpose.msra.mxu0 0.0
    %6803 = vmatprep.subr.mxu0 0.0
    %6804 = vmatpush1.xpose.msra.mxu0 0.0
    %6805 = vmatprep.subr.mxu0 0.0
    %6806 = vmatpush1.xpose.msra.mxu0 0.0
    %6807 = vmatprep.subr.mxu0 0.0
    %6808 = vmatpush1.xpose.msra.mxu0 0.0
    %6809 = vmatprep.subr.mxu0 0.0
    %6810 = vmatpush1.xpose.msra.mxu0 0.0
    %6811 = vmatprep.subr.mxu0 0.0
    %6812 = vmatpush1.xpose.msra.mxu0 0.0
    %6813 = vmatprep.subr.mxu0 0.0
    %6814 = vmatpush1.xpose.msra.mxu0 0.0
    %6815 = vmatprep.subr.mxu0 0.0
    %6816 = vmatpush1.xpose.msra.mxu0 0.0
    %6817 = vmatprep.mubr.f32.mxu0 %v6322
    %6818 = vmatmul.mubr.f32.gmra.mrb[0].mxu0 %v6320
    %v6819 = vpop.f32.mrb[0].mxu0
    %v6820 = vadd.f32 %v6750, %v6819
    %v6821 = vpop.f32.mrb[0].mxu0
    %6822 = vdwg.mxu0
    %v6823 = vadd.f32 %v6222, %v6820
    %s6824 = scalar_lea.vmem [#allocation2], 66
    %v6825 = vld [vmem:[%s6824] ss:$8 sm:$0xf]
    %v6826 = vld [vmem:[%s6824] ss:$8 sm:$0xf0]
    %v6827 = vor.u32 %v6825, %v6826
    %s6828 = scalar_lea.vmem [#allocation2], 194
    %v6829 = vld [vmem:[%s6828] ss:$8 sm:$0xf]
    %v6830 = vld [vmem:[%s6828] ss:$8 sm:$0xf0]
    %v6831 = vor.u32 %v6829, %v6830
    %s6832 = scalar_lea.vmem %s3, 66
    %v6833 = vld [vmem:[%s6832] ss:$8 sm:$0xf]
    %v6834 = vld [vmem:[%s6832] ss:$8 sm:$0xf0]
    %v6835 = vor.u32 %v6833, %v6834
    %s6836 = scalar_lea.vmem %s3, 194
    %v6837 = vld [vmem:[%s6836] ss:$8 sm:$0xf]
    %v6838 = vld [vmem:[%s6836] ss:$8 sm:$0xf0]
    %v6839 = vor.u32 %v6837, %v6838
    %s6840 = scalar_lea.vmem %s3, 322
    %v6841 = vld [vmem:[%s6840] ss:$8 sm:$0xf]
    %v6842 = vld [vmem:[%s6840] ss:$8 sm:$0xf0]
    %v6843 = vor.u32 %v6841, %v6842
    %s6844 = scalar_lea.vmem %s3, 450
    %v6845 = vld [vmem:[%s6844] ss:$8 sm:$0xf]
    %v6846 = vld [vmem:[%s6844] ss:$8 sm:$0xf0]
    %v6847 = vor.u32 %v6845, %v6846
    %s6848 = scalar_lea.vmem %s3, 578
    %v6849 = vld [vmem:[%s6848] ss:$8 sm:$0xf]
    %v6850 = vld [vmem:[%s6848] ss:$8 sm:$0xf0]
    %v6851 = vor.u32 %v6849, %v6850
    %s6852 = scalar_lea.vmem %s3, 706
    %v6853 = vld [vmem:[%s6852] ss:$8 sm:$0xf]
    %v6854 = vld [vmem:[%s6852] ss:$8 sm:$0xf0]
    %v6855 = vor.u32 %v6853, %v6854
    %s6856 = scalar_lea.vmem %s3, 834
    %v6857 = vld [vmem:[%s6856] ss:$8 sm:$0xf]
    %v6858 = vld [vmem:[%s6856] ss:$8 sm:$0xf0]
    %v6859 = vor.u32 %v6857, %v6858
    %s6860 = scalar_lea.vmem %s3, 962
    %v6861 = vld [vmem:[%s6860] ss:$8 sm:$0xf]
    %v6862 = vld [vmem:[%s6860] ss:$8 sm:$0xf0]
    %v6863 = vor.u32 %v6861, %v6862
    %s6864 = scalar_lea.vmem %s3, 1090
    %v6865 = vld [vmem:[%s6864] ss:$8 sm:$0xf]
    %v6866 = vld [vmem:[%s6864] ss:$8 sm:$0xf0]
    %v6867 = vor.u32 %v6865, %v6866
    %s6868 = scalar_lea.vmem %s3, 1218
    %v6869 = vld [vmem:[%s6868] ss:$8 sm:$0xf]
    %v6870 = vld [vmem:[%s6868] ss:$8 sm:$0xf0]
    %v6871 = vor.u32 %v6869, %v6870
    %v6874 = vcombine.low %v6827, %v6831
    %v6875 = vcombine.high %v6827, %v6831
    %v6877 = vunpack.c.l.s4 1966171168
    %v6878 = vunpack.c.0.s8 %v6877
    %v6879 = vlaneseq
    %v6880 = vshrl.u32 %v6879, 7
    %v6881 = vsub.s32 %v6878, %v6880
    %v6882 = vrot.slane %v6874, %v6881
    %v6884 = vunpack.c.l.s4 1966171168
    %v6885 = vunpack.c.0.s8 %v6884
    %v6886 = vlaneseq
    %v6887 = vshrl.u32 %v6886, 7
    %v6888 = vsub.s32 %v6885, %v6887
    %v6889 = vrot.slane %v6875, %v6888
    %v6890 = vcombine.high %v6882, %v6882
    %v6891 = vcombine.high %v6889, %v6889
    %v6893 = vunpack.c.l.s4 1966171168
    %v6894 = vunpack.c.0.s8 %v6893
    %v6895 = vlaneseq
    %v6896 = vshrl.u32 %v6895, 7
    %v6897 = vsub.s32 %v6894, %v6896
    %v6898 = vrot.slane %v6882, %v6897
    %v6900 = vunpack.c.l.s4 1966171168
    %v6901 = vunpack.c.0.s8 %v6900
    %v6902 = vlaneseq
    %v6903 = vshrl.u32 %v6902, 7
    %v6904 = vsub.s32 %v6901, %v6903
    %v6905 = vrot.slane %v6889, %v6904
    %v6907 = vunpack.c.l.s4 1966171168
    %v6908 = vunpack.c.0.s8 %v6907
    %v6909 = vlaneseq
    %v6910 = vshrl.u32 %v6909, 7
    %v6911 = vsub.s32 %v6908, %v6910
    %v6912 = vrot.slane %v6890, %v6911
    %v6914 = vunpack.c.l.s4 1966171168
    %v6915 = vunpack.c.0.s8 %v6914
    %v6916 = vlaneseq
    %v6917 = vshrl.u32 %v6916, 7
    %v6918 = vsub.s32 %v6915, %v6917
    %v6919 = vrot.slane %v6891, %v6918
    %v6920 = vcombine.high %v6898, %v6898
    %v6921 = vcombine.high %v6905, %v6905
    %v6922 = vcombine.high %v6912, %v6912
    %v6923 = vcombine.high %v6919, %v6919
    %v6942 = vcombine.low %v6835, %v6839
    %v6943 = vcombine.high %v6835, %v6839
    %v6944 = vcombine.low %v6843, %v6847
    %v6945 = vcombine.high %v6843, %v6847
    %v6946 = vcombine.low %v6851, %v6855
    %v6947 = vcombine.high %v6851, %v6855
    %v6948 = vcombine.low %v6859, %v6863
    %v6949 = vcombine.high %v6859, %v6863
    %v6951 = vunpack.c.l.s4 1966171168
    %v6952 = vunpack.c.0.s8 %v6951
    %v6953 = vlaneseq
    %v6954 = vshrl.u32 %v6953, 7
    %v6955 = vsub.s32 %v6952, %v6954
    %v6956 = vrot.slane %v6942, %v6955
    %v6958 = vunpack.c.l.s4 1966171168
    %v6959 = vunpack.c.0.s8 %v6958
    %v6960 = vlaneseq
    %v6961 = vshrl.u32 %v6960, 7
    %v6962 = vsub.s32 %v6959, %v6961
    %v6963 = vrot.slane %v6943, %v6962
    %v6965 = vunpack.c.l.s4 1966171168
    %v6966 = vunpack.c.0.s8 %v6965
    %v6967 = vlaneseq
    %v6968 = vshrl.u32 %v6967, 7
    %v6969 = vsub.s32 %v6966, %v6968
    %v6970 = vrot.slane %v6944, %v6969
    %v6972 = vunpack.c.l.s4 1966171168
    %v6973 = vunpack.c.0.s8 %v6972
    %v6974 = vlaneseq
    %v6975 = vshrl.u32 %v6974, 7
    %v6976 = vsub.s32 %v6973, %v6975
    %v6977 = vrot.slane %v6945, %v6976
    %v6979 = vunpack.c.l.s4 1966171168
    %v6980 = vunpack.c.0.s8 %v6979
    %v6981 = vlaneseq
    %v6982 = vshrl.u32 %v6981, 7
    %v6983 = vsub.s32 %v6980, %v6982
    %v6984 = vrot.slane %v6946, %v6983
    %v6986 = vunpack.c.l.s4 1966171168
    %v6987 = vunpack.c.0.s8 %v6986
    %v6988 = vlaneseq
    %v6989 = vshrl.u32 %v6988, 7
    %v6990 = vsub.s32 %v6987, %v6989
    %v6991 = vrot.slane %v6947, %v6990
    %v6993 = vunpack.c.l.s4 1966171168
    %v6994 = vunpack.c.0.s8 %v6993
    %v6995 = vlaneseq
    %v6996 = vshrl.u32 %v6995, 7
    %v6997 = vsub.s32 %v6994, %v6996
    %v6998 = vrot.slane %v6948, %v6997
    %v7000 = vunpack.c.l.s4 1966171168
    %v7001 = vunpack.c.0.s8 %v7000
    %v7002 = vlaneseq
    %v7003 = vshrl.u32 %v7002, 7
    %v7004 = vsub.s32 %v7001, %v7003
    %v7005 = vrot.slane %v6949, %v7004
    %v7006 = vcombine.low %v6956, %v6970
    %v7007 = vcombine.high %v6956, %v6970
    %v7008 = vcombine.low %v6963, %v6977
    %v7009 = vcombine.high %v6963, %v6977
    %v7010 = vcombine.low %v6984, %v6998
    %v7011 = vcombine.high %v6984, %v6998
    %v7012 = vcombine.low %v6991, %v7005
    %v7013 = vcombine.high %v6991, %v7005
    %v7015 = vunpack.c.l.s4 1966171168
    %v7016 = vunpack.c.0.s8 %v7015
    %v7017 = vlaneseq
    %v7018 = vshrl.u32 %v7017, 7
    %v7019 = vsub.s32 %v7016, %v7018
    %v7020 = vrot.slane %v7006, %v7019
    %v7022 = vunpack.c.l.s4 1966171168
    %v7023 = vunpack.c.0.s8 %v7022
    %v7024 = vlaneseq
    %v7025 = vshrl.u32 %v7024, 7
    %v7026 = vsub.s32 %v7023, %v7025
    %v7027 = vrot.slane %v7008, %v7026
    %v7029 = vunpack.c.l.s4 1966171168
    %v7030 = vunpack.c.0.s8 %v7029
    %v7031 = vlaneseq
    %v7032 = vshrl.u32 %v7031, 7
    %v7033 = vsub.s32 %v7030, %v7032
    %v7034 = vrot.slane %v7007, %v7033
    %v7036 = vunpack.c.l.s4 1966171168
    %v7037 = vunpack.c.0.s8 %v7036
    %v7038 = vlaneseq
    %v7039 = vshrl.u32 %v7038, 7
    %v7040 = vsub.s32 %v7037, %v7039
    %v7041 = vrot.slane %v7009, %v7040
    %v7043 = vunpack.c.l.s4 1966171168
    %v7044 = vunpack.c.0.s8 %v7043
    %v7045 = vlaneseq
    %v7046 = vshrl.u32 %v7045, 7
    %v7047 = vsub.s32 %v7044, %v7046
    %v7048 = vrot.slane %v7010, %v7047
    %v7050 = vunpack.c.l.s4 1966171168
    %v7051 = vunpack.c.0.s8 %v7050
    %v7052 = vlaneseq
    %v7053 = vshrl.u32 %v7052, 7
    %v7054 = vsub.s32 %v7051, %v7053
    %v7055 = vrot.slane %v7012, %v7054
    %v7057 = vunpack.c.l.s4 1966171168
    %v7058 = vunpack.c.0.s8 %v7057
    %v7059 = vlaneseq
    %v7060 = vshrl.u32 %v7059, 7
    %v7061 = vsub.s32 %v7058, %v7060
    %v7062 = vrot.slane %v7011, %v7061
    %v7064 = vunpack.c.l.s4 1966171168
    %v7065 = vunpack.c.0.s8 %v7064
    %v7066 = vlaneseq
    %v7067 = vshrl.u32 %v7066, 7
    %v7068 = vsub.s32 %v7065, %v7067
    %v7069 = vrot.slane %v7013, %v7068
    %v7070 = vcombine.low %v7020, %v7048
    %v7071 = vcombine.high %v7020, %v7048
    %v7072 = vcombine.low %v7027, %v7055
    %v7073 = vcombine.high %v7027, %v7055
    %v7074 = vcombine.low %v7034, %v7062
    %v7075 = vcombine.high %v7034, %v7062
    %v7076 = vcombine.low %v7041, %v7069
    %v7077 = vcombine.high %v7041, %v7069
    %v7078 = vcombine.low %v6867, %v6871
    %v7079 = vcombine.high %v6867, %v6871
    %v7081 = vunpack.c.l.s4 1966171168
    %v7082 = vunpack.c.0.s8 %v7081
    %v7083 = vlaneseq
    %v7084 = vshrl.u32 %v7083, 7
    %v7085 = vsub.s32 %v7082, %v7084
    %v7086 = vrot.slane %v7078, %v7085
    %v7088 = vunpack.c.l.s4 1966171168
    %v7089 = vunpack.c.0.s8 %v7088
    %v7090 = vlaneseq
    %v7091 = vshrl.u32 %v7090, 7
    %v7092 = vsub.s32 %v7089, %v7091
    %v7093 = vrot.slane %v7079, %v7092
    %v7094 = vcombine.high %v7086, %v7086
    %v7095 = vcombine.high %v7093, %v7093
    %v7097 = vunpack.c.l.s4 1966171168
    %v7098 = vunpack.c.0.s8 %v7097
    %v7099 = vlaneseq
    %v7100 = vshrl.u32 %v7099, 7
    %v7101 = vsub.s32 %v7098, %v7100
    %v7102 = vrot.slane %v7086, %v7101
    %v7104 = vunpack.c.l.s4 1966171168
    %v7105 = vunpack.c.0.s8 %v7104
    %v7106 = vlaneseq
    %v7107 = vshrl.u32 %v7106, 7
    %v7108 = vsub.s32 %v7105, %v7107
    %v7109 = vrot.slane %v7093, %v7108
    %v7111 = vunpack.c.l.s4 1966171168
    %v7112 = vunpack.c.0.s8 %v7111
    %v7113 = vlaneseq
    %v7114 = vshrl.u32 %v7113, 7
    %v7115 = vsub.s32 %v7112, %v7114
    %v7116 = vrot.slane %v7094, %v7115
    %v7118 = vunpack.c.l.s4 1966171168
    %v7119 = vunpack.c.0.s8 %v7118
    %v7120 = vlaneseq
    %v7121 = vshrl.u32 %v7120, 7
    %v7122 = vsub.s32 %v7119, %v7121
    %v7123 = vrot.slane %v7095, %v7122
    %v7124 = vcombine.high %v7102, %v7102
    %v7125 = vcombine.high %v7109, %v7109
    %v7126 = vcombine.high %v7116, %v7116
    %v7127 = vcombine.high %v7123, %v7123
    %7144 = vmatprep.subr.mxu0 %v7074
    %7145 = vmatpush1.xpose.msra.mxu0 %v7070
    %7146 = vmatprep.subr.mxu0 %v7116
    %7147 = vmatpush1.xpose.msra.mxu0 %v7102
    %7148 = vmatprep.subr.mxu0 0.0
    %7149 = vmatpush1.xpose.msra.mxu0 0.0
    %7150 = vmatprep.subr.mxu0 0.0
    %7151 = vmatpush1.xpose.msra.mxu0 0.0
    %7152 = vmatprep.subr.mxu0 0.0
    %7153 = vmatpush1.xpose.msra.mxu0 0.0
    %7154 = vmatprep.subr.mxu0 0.0
    %7155 = vmatpush1.xpose.msra.mxu0 0.0
    %7156 = vmatprep.subr.mxu0 0.0
    %7157 = vmatpush1.xpose.msra.mxu0 0.0
    %7158 = vmatprep.subr.mxu0 0.0
    %7159 = vmatpush1.xpose.msra.mxu0 0.0
    %7160 = vmatprep.subr.mxu0 0.0
    %7161 = vmatpush1.xpose.msra.mxu0 0.0
    %7162 = vmatprep.subr.mxu0 0.0
    %7163 = vmatpush1.xpose.msra.mxu0 0.0
    %7164 = vmatprep.subr.mxu0 0.0
    %7165 = vmatpush1.xpose.msra.mxu0 0.0
    %7166 = vmatprep.subr.mxu0 0.0
    %7167 = vmatpush1.xpose.msra.mxu0 0.0
    %7168 = vmatprep.subr.mxu0 0.0
    %7169 = vmatpush1.xpose.msra.mxu0 0.0
    %7170 = vmatprep.subr.mxu0 0.0
    %7171 = vmatpush1.xpose.msra.mxu0 0.0
    %7172 = vmatprep.subr.mxu0 0.0
    %7173 = vmatpush1.xpose.msra.mxu0 0.0
    %7174 = vmatprep.subr.mxu0 0.0
    %7175 = vmatpush1.xpose.msra.mxu0 0.0
    %7176 = vmatprep.subr.mxu0 0.0
    %7177 = vmatpush1.xpose.msra.mxu0 0.0
    %7178 = vmatprep.subr.mxu0 0.0
    %7179 = vmatpush1.xpose.msra.mxu0 0.0
    %7180 = vmatprep.subr.mxu0 0.0
    %7181 = vmatpush1.xpose.msra.mxu0 0.0
    %7182 = vmatprep.subr.mxu0 0.0
    %7183 = vmatpush1.xpose.msra.mxu0 0.0
    %7184 = vmatprep.subr.mxu0 0.0
    %7185 = vmatpush1.xpose.msra.mxu0 0.0
    %7186 = vmatprep.subr.mxu0 0.0
    %7187 = vmatpush1.xpose.msra.mxu0 0.0
    %7188 = vmatprep.subr.mxu0 0.0
    %7189 = vmatpush1.xpose.msra.mxu0 0.0
    %7190 = vmatprep.subr.mxu0 0.0
    %7191 = vmatpush1.xpose.msra.mxu0 0.0
    %7192 = vmatprep.subr.mxu0 0.0
    %7193 = vmatpush1.xpose.msra.mxu0 0.0
    %7194 = vmatprep.subr.mxu0 0.0
    %7195 = vmatpush1.xpose.msra.mxu0 0.0
    %7196 = vmatprep.subr.mxu0 0.0
    %7197 = vmatpush1.xpose.msra.mxu0 0.0
    %7198 = vmatprep.subr.mxu0 0.0
    %7199 = vmatpush1.xpose.msra.mxu0 0.0
    %7200 = vmatprep.subr.mxu0 0.0
    %7201 = vmatpush1.xpose.msra.mxu0 0.0
    %7202 = vmatprep.subr.mxu0 0.0
    %7203 = vmatpush1.xpose.msra.mxu0 0.0
    %7204 = vmatprep.subr.mxu0 0.0
    %7205 = vmatpush1.xpose.msra.mxu0 0.0
    %7206 = vmatprep.subr.mxu0 0.0
    %7207 = vmatpush1.xpose.msra.mxu0 0.0
    %7208 = vmatprep.mubr.f32.mxu0 %v6912
    %7209 = vmatmul.mubr.f32.gmra.mrb[0].mxu0 %v6898
    %v7210 = vpop.f32.mrb[0].mxu0
    %v7211 = vadd.f32 0.0, %v7210
    %v7212 = vpop.f32.mrb[0].mxu0
    %7213 = vdwg.mxu0
    %7214 = vmatprep.subr.mxu0 %v7075
    %7215 = vmatpush1.xpose.msra.mxu0 %v7071
    %7216 = vmatprep.subr.mxu0 %v7126
    %7217 = vmatpush1.xpose.msra.mxu0 %v7124
    %7218 = vmatprep.subr.mxu0 0.0
    %7219 = vmatpush1.xpose.msra.mxu0 0.0
    %7220 = vmatprep.subr.mxu0 0.0
    %7221 = vmatpush1.xpose.msra.mxu0 0.0
    %7222 = vmatprep.subr.mxu0 0.0
    %7223 = vmatpush1.xpose.msra.mxu0 0.0
    %7224 = vmatprep.subr.mxu0 0.0
    %7225 = vmatpush1.xpose.msra.mxu0 0.0
    %7226 = vmatprep.subr.mxu0 0.0
    %7227 = vmatpush1.xpose.msra.mxu0 0.0
    %7228 = vmatprep.subr.mxu0 0.0
    %7229 = vmatpush1.xpose.msra.mxu0 0.0
    %7230 = vmatprep.subr.mxu0 0.0
    %7231 = vmatpush1.xpose.msra.mxu0 0.0
    %7232 = vmatprep.subr.mxu0 0.0
    %7233 = vmatpush1.xpose.msra.mxu0 0.0
    %7234 = vmatprep.subr.mxu0 0.0
    %7235 = vmatpush1.xpose.msra.mxu0 0.0
    %7236 = vmatprep.subr.mxu0 0.0
    %7237 = vmatpush1.xpose.msra.mxu0 0.0
    %7238 = vmatprep.subr.mxu0 0.0
    %7239 = vmatpush1.xpose.msra.mxu0 0.0
    %7240 = vmatprep.subr.mxu0 0.0
    %7241 = vmatpush1.xpose.msra.mxu0 0.0
    %7242 = vmatprep.subr.mxu0 0.0
    %7243 = vmatpush1.xpose.msra.mxu0 0.0
    %7244 = vmatprep.subr.mxu0 0.0
    %7245 = vmatpush1.xpose.msra.mxu0 0.0
    %7246 = vmatprep.subr.mxu0 0.0
    %7247 = vmatpush1.xpose.msra.mxu0 0.0
    %7248 = vmatprep.subr.mxu0 0.0
    %7249 = vmatpush1.xpose.msra.mxu0 0.0
    %7250 = vmatprep.subr.mxu0 0.0
    %7251 = vmatpush1.xpose.msra.mxu0 0.0
    %7252 = vmatprep.subr.mxu0 0.0
    %7253 = vmatpush1.xpose.msra.mxu0 0.0
    %7254 = vmatprep.subr.mxu0 0.0
    %7255 = vmatpush1.xpose.msra.mxu0 0.0
    %7256 = vmatprep.subr.mxu0 0.0
    %7257 = vmatpush1.xpose.msra.mxu0 0.0
    %7258 = vmatprep.subr.mxu0 0.0
    %7259 = vmatpush1.xpose.msra.mxu0 0.0
    %7260 = vmatprep.subr.mxu0 0.0
    %7261 = vmatpush1.xpose.msra.mxu0 0.0
    %7262 = vmatprep.subr.mxu0 0.0
    %7263 = vmatpush1.xpose.msra.mxu0 0.0
    %7264 = vmatprep.subr.mxu0 0.0
    %7265 = vmatpush1.xpose.msra.mxu0 0.0
    %7266 = vmatprep.subr.mxu0 0.0
    %7267 = vmatpush1.xpose.msra.mxu0 0.0
    %7268 = vmatprep.subr.mxu0 0.0
    %7269 = vmatpush1.xpose.msra.mxu0 0.0
    %7270 = vmatprep.subr.mxu0 0.0
    %7271 = vmatpush1.xpose.msra.mxu0 0.0
    %7272 = vmatprep.subr.mxu0 0.0
    %7273 = vmatpush1.xpose.msra.mxu0 0.0
    %7274 = vmatprep.subr.mxu0 0.0
    %7275 = vmatpush1.xpose.msra.mxu0 0.0
    %7276 = vmatprep.subr.mxu0 0.0
    %7277 = vmatpush1.xpose.msra.mxu0 0.0
    %7278 = vmatprep.mubr.f32.mxu0 %v6922
    %7279 = vmatmul.mubr.f32.gmra.mrb[0].mxu0 %v6920
    %v7280 = vpop.f32.mrb[0].mxu0
    %v7281 = vadd.f32 %v7211, %v7280
    %v7282 = vpop.f32.mrb[0].mxu0
    %7283 = vdwg.mxu0
    %7284 = vmatprep.subr.mxu0 %v7076
    %7285 = vmatpush1.xpose.msra.mxu0 %v7072
    %7286 = vmatprep.subr.mxu0 %v7123
    %7287 = vmatpush1.xpose.msra.mxu0 %v7109
    %7288 = vmatprep.subr.mxu0 0.0
    %7289 = vmatpush1.xpose.msra.mxu0 0.0
    %7290 = vmatprep.subr.mxu0 0.0
    %7291 = vmatpush1.xpose.msra.mxu0 0.0
    %7292 = vmatprep.subr.mxu0 0.0
    %7293 = vmatpush1.xpose.msra.mxu0 0.0
    %7294 = vmatprep.subr.mxu0 0.0
    %7295 = vmatpush1.xpose.msra.mxu0 0.0
    %7296 = vmatprep.subr.mxu0 0.0
    %7297 = vmatpush1.xpose.msra.mxu0 0.0
    %7298 = vmatprep.subr.mxu0 0.0
    %7299 = vmatpush1.xpose.msra.mxu0 0.0
    %7300 = vmatprep.subr.mxu0 0.0
    %7301 = vmatpush1.xpose.msra.mxu0 0.0
    %7302 = vmatprep.subr.mxu0 0.0
    %7303 = vmatpush1.xpose.msra.mxu0 0.0
    %7304 = vmatprep.subr.mxu0 0.0
    %7305 = vmatpush1.xpose.msra.mxu0 0.0
    %7306 = vmatprep.subr.mxu0 0.0
    %7307 = vmatpush1.xpose.msra.mxu0 0.0
    %7308 = vmatprep.subr.mxu0 0.0
    %7309 = vmatpush1.xpose.msra.mxu0 0.0
    %7310 = vmatprep.subr.mxu0 0.0
    %7311 = vmatpush1.xpose.msra.mxu0 0.0
    %7312 = vmatprep.subr.mxu0 0.0
    %7313 = vmatpush1.xpose.msra.mxu0 0.0
    %7314 = vmatprep.subr.mxu0 0.0
    %7315 = vmatpush1.xpose.msra.mxu0 0.0
    %7316 = vmatprep.subr.mxu0 0.0
    %7317 = vmatpush1.xpose.msra.mxu0 0.0
    %7318 = vmatprep.subr.mxu0 0.0
    %7319 = vmatpush1.xpose.msra.mxu0 0.0
    %7320 = vmatprep.subr.mxu0 0.0
    %7321 = vmatpush1.xpose.msra.mxu0 0.0
    %7322 = vmatprep.subr.mxu0 0.0
    %7323 = vmatpush1.xpose.msra.mxu0 0.0
    %7324 = vmatprep.subr.mxu0 0.0
    %7325 = vmatpush1.xpose.msra.mxu0 0.0
    %7326 = vmatprep.subr.mxu0 0.0
    %7327 = vmatpush1.xpose.msra.mxu0 0.0
    %7328 = vmatprep.subr.mxu0 0.0
    %7329 = vmatpush1.xpose.msra.mxu0 0.0
    %7330 = vmatprep.subr.mxu0 0.0
    %7331 = vmatpush1.xpose.msra.mxu0 0.0
    %7332 = vmatprep.subr.mxu0 0.0
    %7333 = vmatpush1.xpose.msra.mxu0 0.0
    %7334 = vmatprep.subr.mxu0 0.0
    %7335 = vmatpush1.xpose.msra.mxu0 0.0
    %7336 = vmatprep.subr.mxu0 0.0
    %7337 = vmatpush1.xpose.msra.mxu0 0.0
    %7338 = vmatprep.subr.mxu0 0.0
    %7339 = vmatpush1.xpose.msra.mxu0 0.0
    %7340 = vmatprep.subr.mxu0 0.0
    %7341 = vmatpush1.xpose.msra.mxu0 0.0
    %7342 = vmatprep.subr.mxu0 0.0
    %7343 = vmatpush1.xpose.msra.mxu0 0.0
    %7344 = vmatprep.subr.mxu0 0.0
    %7345 = vmatpush1.xpose.msra.mxu0 0.0
    %7346 = vmatprep.subr.mxu0 0.0
    %7347 = vmatpush1.xpose.msra.mxu0 0.0
    %7348 = vmatprep.mubr.f32.mxu0 %v6919
    %7349 = vmatmul.mubr.f32.gmra.mrb[0].mxu0 %v6905
    %v7350 = vpop.f32.mrb[0].mxu0
    %v7351 = vadd.f32 %v7281, %v7350
    %v7352 = vpop.f32.mrb[0].mxu0
    %7353 = vdwg.mxu0
    %7354 = vmatprep.subr.mxu0 %v7077
    %7355 = vmatpush1.xpose.msra.mxu0 %v7073
    %7356 = vmatprep.subr.mxu0 %v7127
    %7357 = vmatpush1.xpose.msra.mxu0 %v7125
    %7358 = vmatprep.subr.mxu0 0.0
    %7359 = vmatpush1.xpose.msra.mxu0 0.0
    %7360 = vmatprep.subr.mxu0 0.0
    %7361 = vmatpush1.xpose.msra.mxu0 0.0
    %7362 = vmatprep.subr.mxu0 0.0
    %7363 = vmatpush1.xpose.msra.mxu0 0.0
    %7364 = vmatprep.subr.mxu0 0.0
    %7365 = vmatpush1.xpose.msra.mxu0 0.0
    %7366 = vmatprep.subr.mxu0 0.0
    %7367 = vmatpush1.xpose.msra.mxu0 0.0
    %7368 = vmatprep.subr.mxu0 0.0
    %7369 = vmatpush1.xpose.msra.mxu0 0.0
    %7370 = vmatprep.subr.mxu0 0.0
    %7371 = vmatpush1.xpose.msra.mxu0 0.0
    %7372 = vmatprep.subr.mxu0 0.0
    %7373 = vmatpush1.xpose.msra.mxu0 0.0
    %7374 = vmatprep.subr.mxu0 0.0
    %7375 = vmatpush1.xpose.msra.mxu0 0.0
    %7376 = vmatprep.subr.mxu0 0.0
    %7377 = vmatpush1.xpose.msra.mxu0 0.0
    %7378 = vmatprep.subr.mxu0 0.0
    %7379 = vmatpush1.xpose.msra.mxu0 0.0
    %7380 = vmatprep.subr.mxu0 0.0
    %7381 = vmatpush1.xpose.msra.mxu0 0.0
    %7382 = vmatprep.subr.mxu0 0.0
    %7383 = vmatpush1.xpose.msra.mxu0 0.0
    %7384 = vmatprep.subr.mxu0 0.0
    %7385 = vmatpush1.xpose.msra.mxu0 0.0
    %7386 = vmatprep.subr.mxu0 0.0
    %7387 = vmatpush1.xpose.msra.mxu0 0.0
    %7388 = vmatprep.subr.mxu0 0.0
    %7389 = vmatpush1.xpose.msra.mxu0 0.0
    %7390 = vmatprep.subr.mxu0 0.0
    %7391 = vmatpush1.xpose.msra.mxu0 0.0
    %7392 = vmatprep.subr.mxu0 0.0
    %7393 = vmatpush1.xpose.msra.mxu0 0.0
    %7394 = vmatprep.subr.mxu0 0.0
    %7395 = vmatpush1.xpose.msra.mxu0 0.0
    %7396 = vmatprep.subr.mxu0 0.0
    %7397 = vmatpush1.xpose.msra.mxu0 0.0
    %7398 = vmatprep.subr.mxu0 0.0
    %7399 = vmatpush1.xpose.msra.mxu0 0.0
    %7400 = vmatprep.subr.mxu0 0.0
    %7401 = vmatpush1.xpose.msra.mxu0 0.0
    %7402 = vmatprep.subr.mxu0 0.0
    %7403 = vmatpush1.xpose.msra.mxu0 0.0
    %7404 = vmatprep.subr.mxu0 0.0
    %7405 = vmatpush1.xpose.msra.mxu0 0.0
    %7406 = vmatprep.subr.mxu0 0.0
    %7407 = vmatpush1.xpose.msra.mxu0 0.0
    %7408 = vmatprep.subr.mxu0 0.0
    %7409 = vmatpush1.xpose.msra.mxu0 0.0
    %7410 = vmatprep.subr.mxu0 0.0
    %7411 = vmatpush1.xpose.msra.mxu0 0.0
    %7412 = vmatprep.subr.mxu0 0.0
    %7413 = vmatpush1.xpose.msra.mxu0 0.0
    %7414 = vmatprep.subr.mxu0 0.0
    %7415 = vmatpush1.xpose.msra.mxu0 0.0
    %7416 = vmatprep.subr.mxu0 0.0
    %7417 = vmatpush1.xpose.msra.mxu0 0.0
    %7418 = vmatprep.mubr.f32.mxu0 %v6923
    %7419 = vmatmul.mubr.f32.gmra.mrb[0].mxu0 %v6921
    %v7420 = vpop.f32.mrb[0].mxu0
    %v7421 = vadd.f32 %v7351, %v7420
    %v7422 = vpop.f32.mrb[0].mxu0
    %7423 = vdwg.mxu0
    %v7424 = vadd.f32 %v6823, %v7421
    %s7425 = scalar_lea.vmem [#allocation2], 67
    %v7426 = vld [vmem:[%s7425] ss:$8 sm:$0xf]
    %v7427 = vld [vmem:[%s7425] ss:$8 sm:$0xf0]
    %v7428 = vor.u32 %v7426, %v7427
    %s7429 = scalar_lea.vmem [#allocation2], 195
    %v7430 = vld [vmem:[%s7429] ss:$8 sm:$0xf]
    %v7431 = vld [vmem:[%s7429] ss:$8 sm:$0xf0]
    %v7432 = vor.u32 %v7430, %v7431
    %s7433 = scalar_lea.vmem %s3, 67
    %v7434 = vld [vmem:[%s7433] ss:$8 sm:$0xf]
    %v7435 = vld [vmem:[%s7433] ss:$8 sm:$0xf0]
    %v7436 = vor.u32 %v7434, %v7435
    %s7437 = scalar_lea.vmem %s3, 195
    %v7438 = vld [vmem:[%s7437] ss:$8 sm:$0xf]
    %v7439 = vld [vmem:[%s7437] ss:$8 sm:$0xf0]
    %v7440 = vor.u32 %v7438, %v7439
    %s7441 = scalar_lea.vmem %s3, 323
    %v7442 = vld [vmem:[%s7441] ss:$8 sm:$0xf]
    %v7443 = vld [vmem:[%s7441] ss:$8 sm:$0xf0]
    %v7444 = vor.u32 %v7442, %v7443
    %s7445 = scalar_lea.vmem %s3, 451
    %v7446 = vld [vmem:[%s7445] ss:$8 sm:$0xf]
    %v7447 = vld [vmem:[%s7445] ss:$8 sm:$0xf0]
    %v7448 = vor.u32 %v7446, %v7447
    %s7449 = scalar_lea.vmem %s3, 579
    %v7450 = vld [vmem:[%s7449] ss:$8 sm:$0xf]
    %v7451 = vld [vmem:[%s7449] ss:$8 sm:$0xf0]
    %v7452 = vor.u32 %v7450, %v7451
    %s7453 = scalar_lea.vmem %s3, 707
    %v7454 = vld [vmem:[%s7453] ss:$8 sm:$0xf]
    %v7455 = vld [vmem:[%s7453] ss:$8 sm:$0xf0]
    %v7456 = vor.u32 %v7454, %v7455
    %s7457 = scalar_lea.vmem %s3, 835
    %v7458 = vld [vmem:[%s7457] ss:$8 sm:$0xf]
    %v7459 = vld [vmem:[%s7457] ss:$8 sm:$0xf0]
    %v7460 = vor.u32 %v7458, %v7459
    %s7461 = scalar_lea.vmem %s3, 963
    %v7462 = vld [vmem:[%s7461] ss:$8 sm:$0xf]
    %v7463 = vld [vmem:[%s7461] ss:$8 sm:$0xf0]
    %v7464 = vor.u32 %v7462, %v7463
    %s7465 = scalar_lea.vmem %s3, 1091
    %v7466 = vld [vmem:[%s7465] ss:$8 sm:$0xf]
    %v7467 = vld [vmem:[%s7465] ss:$8 sm:$0xf0]
    %v7468 = vor.u32 %v7466, %v7467
    %s7469 = scalar_lea.vmem %s3, 1219
    %v7470 = vld [vmem:[%s7469] ss:$8 sm:$0xf]
    %v7471 = vld [vmem:[%s7469] ss:$8 sm:$0xf0]
    %v7472 = vor.u32 %v7470, %v7471
    %v7475 = vcombine.low %v7428, %v7432
    %v7476 = vcombine.high %v7428, %v7432
    %v7478 = vunpack.c.l.s4 1966171168
    %v7479 = vunpack.c.0.s8 %v7478
    %v7480 = vlaneseq
    %v7481 = vshrl.u32 %v7480, 7
    %v7482 = vsub.s32 %v7479, %v7481
    %v7483 = vrot.slane %v7475, %v7482
    %v7485 = vunpack.c.l.s4 1966171168
    %v7486 = vunpack.c.0.s8 %v7485
    %v7487 = vlaneseq
    %v7488 = vshrl.u32 %v7487, 7
    %v7489 = vsub.s32 %v7486, %v7488
    %v7490 = vrot.slane %v7476, %v7489
    %v7491 = vcombine.high %v7483, %v7483
    %v7492 = vcombine.high %v7490, %v7490
    %v7494 = vunpack.c.l.s4 1966171168
    %v7495 = vunpack.c.0.s8 %v7494
    %v7496 = vlaneseq
    %v7497 = vshrl.u32 %v7496, 7
    %v7498 = vsub.s32 %v7495, %v7497
    %v7499 = vrot.slane %v7483, %v7498
    %v7501 = vunpack.c.l.s4 1966171168
    %v7502 = vunpack.c.0.s8 %v7501
    %v7503 = vlaneseq
    %v7504 = vshrl.u32 %v7503, 7
    %v7505 = vsub.s32 %v7502, %v7504
    %v7506 = vrot.slane %v7490, %v7505
    %v7508 = vunpack.c.l.s4 1966171168
    %v7509 = vunpack.c.0.s8 %v7508
    %v7510 = vlaneseq
    %v7511 = vshrl.u32 %v7510, 7
    %v7512 = vsub.s32 %v7509, %v7511
    %v7513 = vrot.slane %v7491, %v7512
    %v7515 = vunpack.c.l.s4 1966171168
    %v7516 = vunpack.c.0.s8 %v7515
    %v7517 = vlaneseq
    %v7518 = vshrl.u32 %v7517, 7
    %v7519 = vsub.s32 %v7516, %v7518
    %v7520 = vrot.slane %v7492, %v7519
    %v7521 = vcombine.high %v7499, %v7499
    %v7522 = vcombine.high %v7506, %v7506
    %v7523 = vcombine.high %v7513, %v7513
    %v7524 = vcombine.high %v7520, %v7520
    %v7543 = vcombine.low %v7436, %v7440
    %v7544 = vcombine.high %v7436, %v7440
    %v7545 = vcombine.low %v7444, %v7448
    %v7546 = vcombine.high %v7444, %v7448
    %v7547 = vcombine.low %v7452, %v7456
    %v7548 = vcombine.high %v7452, %v7456
    %v7549 = vcombine.low %v7460, %v7464
    %v7550 = vcombine.high %v7460, %v7464
    %v7552 = vunpack.c.l.s4 1966171168
    %v7553 = vunpack.c.0.s8 %v7552
    %v7554 = vlaneseq
    %v7555 = vshrl.u32 %v7554, 7
    %v7556 = vsub.s32 %v7553, %v7555
    %v7557 = vrot.slane %v7543, %v7556
    %v7559 = vunpack.c.l.s4 1966171168
    %v7560 = vunpack.c.0.s8 %v7559
    %v7561 = vlaneseq
    %v7562 = vshrl.u32 %v7561, 7
    %v7563 = vsub.s32 %v7560, %v7562
    %v7564 = vrot.slane %v7544, %v7563
    %v7566 = vunpack.c.l.s4 1966171168
    %v7567 = vunpack.c.0.s8 %v7566
    %v7568 = vlaneseq
    %v7569 = vshrl.u32 %v7568, 7
    %v7570 = vsub.s32 %v7567, %v7569
    %v7571 = vrot.slane %v7545, %v7570
    %v7573 = vunpack.c.l.s4 1966171168
    %v7574 = vunpack.c.0.s8 %v7573
    %v7575 = vlaneseq
    %v7576 = vshrl.u32 %v7575, 7
    %v7577 = vsub.s32 %v7574, %v7576
    %v7578 = vrot.slane %v7546, %v7577
    %v7580 = vunpack.c.l.s4 1966171168
    %v7581 = vunpack.c.0.s8 %v7580
    %v7582 = vlaneseq
    %v7583 = vshrl.u32 %v7582, 7
    %v7584 = vsub.s32 %v7581, %v7583
    %v7585 = vrot.slane %v7547, %v7584
    %v7587 = vunpack.c.l.s4 1966171168
    %v7588 = vunpack.c.0.s8 %v7587
    %v7589 = vlaneseq
    %v7590 = vshrl.u32 %v7589, 7
    %v7591 = vsub.s32 %v7588, %v7590
    %v7592 = vrot.slane %v7548, %v7591
    %v7594 = vunpack.c.l.s4 1966171168
    %v7595 = vunpack.c.0.s8 %v7594
    %v7596 = vlaneseq
    %v7597 = vshrl.u32 %v7596, 7
    %v7598 = vsub.s32 %v7595, %v7597
    %v7599 = vrot.slane %v7549, %v7598
    %v7601 = vunpack.c.l.s4 1966171168
    %v7602 = vunpack.c.0.s8 %v7601
    %v7603 = vlaneseq
    %v7604 = vshrl.u32 %v7603, 7
    %v7605 = vsub.s32 %v7602, %v7604
    %v7606 = vrot.slane %v7550, %v7605
    %v7607 = vcombine.low %v7557, %v7571
    %v7608 = vcombine.high %v7557, %v7571
    %v7609 = vcombine.low %v7564, %v7578
    %v7610 = vcombine.high %v7564, %v7578
    %v7611 = vcombine.low %v7585, %v7599
    %v7612 = vcombine.high %v7585, %v7599
    %v7613 = vcombine.low %v7592, %v7606
    %v7614 = vcombine.high %v7592, %v7606
    %v7616 = vunpack.c.l.s4 1966171168
    %v7617 = vunpack.c.0.s8 %v7616
    %v7618 = vlaneseq
    %v7619 = vshrl.u32 %v7618, 7
    %v7620 = vsub.s32 %v7617, %v7619
    %v7621 = vrot.slane %v7607, %v7620
    %v7623 = vunpack.c.l.s4 1966171168
    %v7624 = vunpack.c.0.s8 %v7623
    %v7625 = vlaneseq
    %v7626 = vshrl.u32 %v7625, 7
    %v7627 = vsub.s32 %v7624, %v7626
    %v7628 = vrot.slane %v7609, %v7627
    %v7630 = vunpack.c.l.s4 1966171168
    %v7631 = vunpack.c.0.s8 %v7630
    %v7632 = vlaneseq
    %v7633 = vshrl.u32 %v7632, 7
    %v7634 = vsub.s32 %v7631, %v7633
    %v7635 = vrot.slane %v7608, %v7634
    %v7637 = vunpack.c.l.s4 1966171168
    %v7638 = vunpack.c.0.s8 %v7637
    %v7639 = vlaneseq
    %v7640 = vshrl.u32 %v7639, 7
    %v7641 = vsub.s32 %v7638, %v7640
    %v7642 = vrot.slane %v7610, %v7641
    %v7644 = vunpack.c.l.s4 1966171168
    %v7645 = vunpack.c.0.s8 %v7644
    %v7646 = vlaneseq
    %v7647 = vshrl.u32 %v7646, 7
    %v7648 = vsub.s32 %v7645, %v7647
    %v7649 = vrot.slane %v7611, %v7648
    %v7651 = vunpack.c.l.s4 1966171168
    %v7652 = vunpack.c.0.s8 %v7651
    %v7653 = vlaneseq
    %v7654 = vshrl.u32 %v7653, 7
    %v7655 = vsub.s32 %v7652, %v7654
    %v7656 = vrot.slane %v7613, %v7655
    %v7658 = vunpack.c.l.s4 1966171168
    %v7659 = vunpack.c.0.s8 %v7658
    %v7660 = vlaneseq
    %v7661 = vshrl.u32 %v7660, 7
    %v7662 = vsub.s32 %v7659, %v7661
    %v7663 = vrot.slane %v7612, %v7662
    %v7665 = vunpack.c.l.s4 1966171168
    %v7666 = vunpack.c.0.s8 %v7665
    %v7667 = vlaneseq
    %v7668 = vshrl.u32 %v7667, 7
    %v7669 = vsub.s32 %v7666, %v7668
    %v7670 = vrot.slane %v7614, %v7669
    %v7671 = vcombine.low %v7621, %v7649
    %v7672 = vcombine.high %v7621, %v7649
    %v7673 = vcombine.low %v7628, %v7656
    %v7674 = vcombine.high %v7628, %v7656
    %v7675 = vcombine.low %v7635, %v7663
    %v7676 = vcombine.high %v7635, %v7663
    %v7677 = vcombine.low %v7642, %v7670
    %v7678 = vcombine.high %v7642, %v7670
    %v7679 = vcombine.low %v7468, %v7472
    %v7680 = vcombine.high %v7468, %v7472
    %v7682 = vunpack.c.l.s4 1966171168
    %v7683 = vunpack.c.0.s8 %v7682
    %v7684 = vlaneseq
    %v7685 = vshrl.u32 %v7684, 7
    %v7686 = vsub.s32 %v7683, %v7685
    %v7687 = vrot.slane %v7679, %v7686
    %v7689 = vunpack.c.l.s4 1966171168
    %v7690 = vunpack.c.0.s8 %v7689
    %v7691 = vlaneseq
    %v7692 = vshrl.u32 %v7691, 7
    %v7693 = vsub.s32 %v7690, %v7692
    %v7694 = vrot.slane %v7680, %v7693
    %v7695 = vcombine.high %v7687, %v7687
    %v7696 = vcombine.high %v7694, %v7694
    %v7698 = vunpack.c.l.s4 1966171168
    %v7699 = vunpack.c.0.s8 %v7698
    %v7700 = vlaneseq
    %v7701 = vshrl.u32 %v7700, 7
    %v7702 = vsub.s32 %v7699, %v7701
    %v7703 = vrot.slane %v7687, %v7702
    %v7705 = vunpack.c.l.s4 1966171168
    %v7706 = vunpack.c.0.s8 %v7705
    %v7707 = vlaneseq
    %v7708 = vshrl.u32 %v7707, 7
    %v7709 = vsub.s32 %v7706, %v7708
    %v7710 = vrot.slane %v7694, %v7709
    %v7712 = vunpack.c.l.s4 1966171168
    %v7713 = vunpack.c.0.s8 %v7712
    %v7714 = vlaneseq
    %v7715 = vshrl.u32 %v7714, 7
    %v7716 = vsub.s32 %v7713, %v7715
    %v7717 = vrot.slane %v7695, %v7716
    %v7719 = vunpack.c.l.s4 1966171168
    %v7720 = vunpack.c.0.s8 %v7719
    %v7721 = vlaneseq
    %v7722 = vshrl.u32 %v7721, 7
    %v7723 = vsub.s32 %v7720, %v7722
    %v7724 = vrot.slane %v7696, %v7723
    %v7725 = vcombine.high %v7703, %v7703
    %v7726 = vcombine.high %v7710, %v7710
    %v7727 = vcombine.high %v7717, %v7717
    %v7728 = vcombine.high %v7724, %v7724
    %7745 = vmatprep.subr.mxu0 %v7675
    %7746 = vmatpush1.xpose.msra.mxu0 %v7671
    %7747 = vmatprep.subr.mxu0 %v7717
    %7748 = vmatpush1.xpose.msra.mxu0 %v7703
    %7749 = vmatprep.subr.mxu0 0.0
    %7750 = vmatpush1.xpose.msra.mxu0 0.0
    %7751 = vmatprep.subr.mxu0 0.0
    %7752 = vmatpush1.xpose.msra.mxu0 0.0
    %7753 = vmatprep.subr.mxu0 0.0
    %7754 = vmatpush1.xpose.msra.mxu0 0.0
    %7755 = vmatprep.subr.mxu0 0.0
    %7756 = vmatpush1.xpose.msra.mxu0 0.0
    %7757 = vmatprep.subr.mxu0 0.0
    %7758 = vmatpush1.xpose.msra.mxu0 0.0
    %7759 = vmatprep.subr.mxu0 0.0
    %7760 = vmatpush1.xpose.msra.mxu0 0.0
    %7761 = vmatprep.subr.mxu0 0.0
    %7762 = vmatpush1.xpose.msra.mxu0 0.0
    %7763 = vmatprep.subr.mxu0 0.0
    %7764 = vmatpush1.xpose.msra.mxu0 0.0
    %7765 = vmatprep.subr.mxu0 0.0
    %7766 = vmatpush1.xpose.msra.mxu0 0.0
    %7767 = vmatprep.subr.mxu0 0.0
    %7768 = vmatpush1.xpose.msra.mxu0 0.0
    %7769 = vmatprep.subr.mxu0 0.0
    %7770 = vmatpush1.xpose.msra.mxu0 0.0
    %7771 = vmatprep.subr.mxu0 0.0
    %7772 = vmatpush1.xpose.msra.mxu0 0.0
    %7773 = vmatprep.subr.mxu0 0.0
    %7774 = vmatpush1.xpose.msra.mxu0 0.0
    %7775 = vmatprep.subr.mxu0 0.0
    %7776 = vmatpush1.xpose.msra.mxu0 0.0
    %7777 = vmatprep.subr.mxu0 0.0
    %7778 = vmatpush1.xpose.msra.mxu0 0.0
    %7779 = vmatprep.subr.mxu0 0.0
    %7780 = vmatpush1.xpose.msra.mxu0 0.0
    %7781 = vmatprep.subr.mxu0 0.0
    %7782 = vmatpush1.xpose.msra.mxu0 0.0
    %7783 = vmatprep.subr.mxu0 0.0
    %7784 = vmatpush1.xpose.msra.mxu0 0.0
    %7785 = vmatprep.subr.mxu0 0.0
    %7786 = vmatpush1.xpose.msra.mxu0 0.0
    %7787 = vmatprep.subr.mxu0 0.0
    %7788 = vmatpush1.xpose.msra.mxu0 0.0
    %7789 = vmatprep.subr.mxu0 0.0
    %7790 = vmatpush1.xpose.msra.mxu0 0.0
    %7791 = vmatprep.subr.mxu0 0.0
    %7792 = vmatpush1.xpose.msra.mxu0 0.0
    %7793 = vmatprep.subr.mxu0 0.0
    %7794 = vmatpush1.xpose.msra.mxu0 0.0
    %7795 = vmatprep.subr.mxu0 0.0
    %7796 = vmatpush1.xpose.msra.mxu0 0.0
    %7797 = vmatprep.subr.mxu0 0.0
    %7798 = vmatpush1.xpose.msra.mxu0 0.0
    %7799 = vmatprep.subr.mxu0 0.0
    %7800 = vmatpush1.xpose.msra.mxu0 0.0
    %7801 = vmatprep.subr.mxu0 0.0
    %7802 = vmatpush1.xpose.msra.mxu0 0.0
    %7803 = vmatprep.subr.mxu0 0.0
    %7804 = vmatpush1.xpose.msra.mxu0 0.0
    %7805 = vmatprep.subr.mxu0 0.0
    %7806 = vmatpush1.xpose.msra.mxu0 0.0
    %7807 = vmatprep.subr.mxu0 0.0
    %7808 = vmatpush1.xpose.msra.mxu0 0.0
    %7809 = vmatprep.mubr.f32.mxu0 %v7513
    %7810 = vmatmul.mubr.f32.gmra.mrb[0].mxu0 %v7499
    %v7811 = vpop.f32.mrb[0].mxu0
    %v7812 = vadd.f32 0.0, %v7811
    %v7813 = vpop.f32.mrb[0].mxu0
    %7814 = vdwg.mxu0
    %7815 = vmatprep.subr.mxu0 %v7676
    %7816 = vmatpush1.xpose.msra.mxu0 %v7672
    %7817 = vmatprep.subr.mxu0 %v7727
    %7818 = vmatpush1.xpose.msra.mxu0 %v7725
    %7819 = vmatprep.subr.mxu0 0.0
    %7820 = vmatpush1.xpose.msra.mxu0 0.0
    %7821 = vmatprep.subr.mxu0 0.0
    %7822 = vmatpush1.xpose.msra.mxu0 0.0
    %7823 = vmatprep.subr.mxu0 0.0
    %7824 = vmatpush1.xpose.msra.mxu0 0.0
    %7825 = vmatprep.subr.mxu0 0.0
    %7826 = vmatpush1.xpose.msra.mxu0 0.0
    %7827 = vmatprep.subr.mxu0 0.0
    %7828 = vmatpush1.xpose.msra.mxu0 0.0
    %7829 = vmatprep.subr.mxu0 0.0
    %7830 = vmatpush1.xpose.msra.mxu0 0.0
    %7831 = vmatprep.subr.mxu0 0.0
    %7832 = vmatpush1.xpose.msra.mxu0 0.0
    %7833 = vmatprep.subr.mxu0 0.0
    %7834 = vmatpush1.xpose.msra.mxu0 0.0
    %7835 = vmatprep.subr.mxu0 0.0
    %7836 = vmatpush1.xpose.msra.mxu0 0.0
    %7837 = vmatprep.subr.mxu0 0.0
    %7838 = vmatpush1.xpose.msra.mxu0 0.0
    %7839 = vmatprep.subr.mxu0 0.0
    %7840 = vmatpush1.xpose.msra.mxu0 0.0
    %7841 = vmatprep.subr.mxu0 0.0
    %7842 = vmatpush1.xpose.msra.mxu0 0.0
    %7843 = vmatprep.subr.mxu0 0.0
    %7844 = vmatpush1.xpose.msra.mxu0 0.0
    %7845 = vmatprep.subr.mxu0 0.0
    %7846 = vmatpush1.xpose.msra.mxu0 0.0
    %7847 = vmatprep.subr.mxu0 0.0
    %7848 = vmatpush1.xpose.msra.mxu0 0.0
    %7849 = vmatprep.subr.mxu0 0.0
    %7850 = vmatpush1.xpose.msra.mxu0 0.0
    %7851 = vmatprep.subr.mxu0 0.0
    %7852 = vmatpush1.xpose.msra.mxu0 0.0
    %7853 = vmatprep.subr.mxu0 0.0
    %7854 = vmatpush1.xpose.msra.mxu0 0.0
    %7855 = vmatprep.subr.mxu0 0.0
    %7856 = vmatpush1.xpose.msra.mxu0 0.0
    %7857 = vmatprep.subr.mxu0 0.0
    %7858 = vmatpush1.xpose.msra.mxu0 0.0
    %7859 = vmatprep.subr.mxu0 0.0
    %7860 = vmatpush1.xpose.msra.mxu0 0.0
    %7861 = vmatprep.subr.mxu0 0.0
    %7862 = vmatpush1.xpose.msra.mxu0 0.0
    %7863 = vmatprep.subr.mxu0 0.0
    %7864 = vmatpush1.xpose.msra.mxu0 0.0
    %7865 = vmatprep.subr.mxu0 0.0
    %7866 = vmatpush1.xpose.msra.mxu0 0.0
    %7867 = vmatprep.subr.mxu0 0.0
    %7868 = vmatpush1.xpose.msra.mxu0 0.0
    %7869 = vmatprep.subr.mxu0 0.0
    %7870 = vmatpush1.xpose.msra.mxu0 0.0
    %7871 = vmatprep.subr.mxu0 0.0
    %7872 = vmatpush1.xpose.msra.mxu0 0.0
    %7873 = vmatprep.subr.mxu0 0.0
    %7874 = vmatpush1.xpose.msra.mxu0 0.0
    %7875 = vmatprep.subr.mxu0 0.0
    %7876 = vmatpush1.xpose.msra.mxu0 0.0
    %7877 = vmatprep.subr.mxu0 0.0
    %7878 = vmatpush1.xpose.msra.mxu0 0.0
    %7879 = vmatprep.mubr.f32.mxu0 %v7523
    %7880 = vmatmul.mubr.f32.gmra.mrb[0].mxu0 %v7521
    %v7881 = vpop.f32.mrb[0].mxu0
    %v7882 = vadd.f32 %v7812, %v7881
    %v7883 = vpop.f32.mrb[0].mxu0
    %7884 = vdwg.mxu0
    %7885 = vmatprep.subr.mxu0 %v7677
    %7886 = vmatpush1.xpose.msra.mxu0 %v7673
    %7887 = vmatprep.subr.mxu0 %v7724
    %7888 = vmatpush1.xpose.msra.mxu0 %v7710
    %7889 = vmatprep.subr.mxu0 0.0
    %7890 = vmatpush1.xpose.msra.mxu0 0.0
    %7891 = vmatprep.subr.mxu0 0.0
    %7892 = vmatpush1.xpose.msra.mxu0 0.0
    %7893 = vmatprep.subr.mxu0 0.0
    %7894 = vmatpush1.xpose.msra.mxu0 0.0
    %7895 = vmatprep.subr.mxu0 0.0
    %7896 = vmatpush1.xpose.msra.mxu0 0.0
    %7897 = vmatprep.subr.mxu0 0.0
    %7898 = vmatpush1.xpose.msra.mxu0 0.0
    %7899 = vmatprep.subr.mxu0 0.0
    %7900 = vmatpush1.xpose.msra.mxu0 0.0
    %7901 = vmatprep.subr.mxu0 0.0
    %7902 = vmatpush1.xpose.msra.mxu0 0.0
    %7903 = vmatprep.subr.mxu0 0.0
    %7904 = vmatpush1.xpose.msra.mxu0 0.0
    %7905 = vmatprep.subr.mxu0 0.0
    %7906 = vmatpush1.xpose.msra.mxu0 0.0
    %7907 = vmatprep.subr.mxu0 0.0
    %7908 = vmatpush1.xpose.msra.mxu0 0.0
    %7909 = vmatprep.subr.mxu0 0.0
    %7910 = vmatpush1.xpose.msra.mxu0 0.0
    %7911 = vmatprep.subr.mxu0 0.0
    %7912 = vmatpush1.xpose.msra.mxu0 0.0
    %7913 = vmatprep.subr.mxu0 0.0
    %7914 = vmatpush1.xpose.msra.mxu0 0.0
    %7915 = vmatprep.subr.mxu0 0.0
    %7916 = vmatpush1.xpose.msra.mxu0 0.0
    %7917 = vmatprep.subr.mxu0 0.0
    %7918 = vmatpush1.xpose.msra.mxu0 0.0
    %7919 = vmatprep.subr.mxu0 0.0
    %7920 = vmatpush1.xpose.msra.mxu0 0.0
    %7921 = vmatprep.subr.mxu0 0.0
    %7922 = vmatpush1.xpose.msra.mxu0 0.0
    %7923 = vmatprep.subr.mxu0 0.0
    %7924 = vmatpush1.xpose.msra.mxu0 0.0
    %7925 = vmatprep.subr.mxu0 0.0
    %7926 = vmatpush1.xpose.msra.mxu0 0.0
    %7927 = vmatprep.subr.mxu0 0.0
    %7928 = vmatpush1.xpose.msra.mxu0 0.0
    %7929 = vmatprep.subr.mxu0 0.0
    %7930 = vmatpush1.xpose.msra.mxu0 0.0
    %7931 = vmatprep.subr.mxu0 0.0
    %7932 = vmatpush1.xpose.msra.mxu0 0.0
    %7933 = vmatprep.subr.mxu0 0.0
    %7934 = vmatpush1.xpose.msra.mxu0 0.0
    %7935 = vmatprep.subr.mxu0 0.0
    %7936 = vmatpush1.xpose.msra.mxu0 0.0
    %7937 = vmatprep.subr.mxu0 0.0
    %7938 = vmatpush1.xpose.msra.mxu0 0.0
    %7939 = vmatprep.subr.mxu0 0.0
    %7940 = vmatpush1.xpose.msra.mxu0 0.0
    %7941 = vmatprep.subr.mxu0 0.0
    %7942 = vmatpush1.xpose.msra.mxu0 0.0
    %7943 = vmatprep.subr.mxu0 0.0
    %7944 = vmatpush1.xpose.msra.mxu0 0.0
    %7945 = vmatprep.subr.mxu0 0.0
    %7946 = vmatpush1.xpose.msra.mxu0 0.0
    %7947 = vmatprep.subr.mxu0 0.0
    %7948 = vmatpush1.xpose.msra.mxu0 0.0
    %7949 = vmatprep.mubr.f32.mxu0 %v7520
    %7950 = vmatmul.mubr.f32.gmra.mrb[0].mxu0 %v7506
    %v7951 = vpop.f32.mrb[0].mxu0
    %v7952 = vadd.f32 %v7882, %v7951
    %v7953 = vpop.f32.mrb[0].mxu0
    %7954 = vdwg.mxu0
    %7955 = vmatprep.subr.mxu0 %v7678
    %7956 = vmatpush1.xpose.msra.mxu0 %v7674
    %7957 = vmatprep.subr.mxu0 %v7728
    %7958 = vmatpush1.xpose.msra.mxu0 %v7726
    %7959 = vmatprep.subr.mxu0 0.0
    %7960 = vmatpush1.xpose.msra.mxu0 0.0
    %7961 = vmatprep.subr.mxu0 0.0
    %7962 = vmatpush1.xpose.msra.mxu0 0.0
    %7963 = vmatprep.subr.mxu0 0.0
    %7964 = vmatpush1.xpose.msra.mxu0 0.0
    %7965 = vmatprep.subr.mxu0 0.0
    %7966 = vmatpush1.xpose.msra.mxu0 0.0
    %7967 = vmatprep.subr.mxu0 0.0
    %7968 = vmatpush1.xpose.msra.mxu0 0.0
    %7969 = vmatprep.subr.mxu0 0.0
    %7970 = vmatpush1.xpose.msra.mxu0 0.0
    %7971 = vmatprep.subr.mxu0 0.0
    %7972 = vmatpush1.xpose.msra.mxu0 0.0
    %7973 = vmatprep.subr.mxu0 0.0
    %7974 = vmatpush1.xpose.msra.mxu0 0.0
    %7975 = vmatprep.subr.mxu0 0.0
    %7976 = vmatpush1.xpose.msra.mxu0 0.0
    %7977 = vmatprep.subr.mxu0 0.0
    %7978 = vmatpush1.xpose.msra.mxu0 0.0
    %7979 = vmatprep.subr.mxu0 0.0
    %7980 = vmatpush1.xpose.msra.mxu0 0.0
    %7981 = vmatprep.subr.mxu0 0.0
    %7982 = vmatpush1.xpose.msra.mxu0 0.0
    %7983 = vmatprep.subr.mxu0 0.0
    %7984 = vmatpush1.xpose.msra.mxu0 0.0
    %7985 = vmatprep.subr.mxu0 0.0
    %7986 = vmatpush1.xpose.msra.mxu0 0.0
    %7987 = vmatprep.subr.mxu0 0.0
    %7988 = vmatpush1.xpose.msra.mxu0 0.0
    %7989 = vmatprep.subr.mxu0 0.0
    %7990 = vmatpush1.xpose.msra.mxu0 0.0
    %7991 = vmatprep.subr.mxu0 0.0
    %7992 = vmatpush1.xpose.msra.mxu0 0.0
    %7993 = vmatprep.subr.mxu0 0.0
    %7994 = vmatpush1.xpose.msra.mxu0 0.0
    %7995 = vmatprep.subr.mxu0 0.0
    %7996 = vmatpush1.xpose.msra.mxu0 0.0
    %7997 = vmatprep.subr.mxu0 0.0
    %7998 = vmatpush1.xpose.msra.mxu0 0.0
    %7999 = vmatprep.subr.mxu0 0.0
    %8000 = vmatpush1.xpose.msra.mxu0 0.0
    %8001 = vmatprep.subr.mxu0 0.0
    %8002 = vmatpush1.xpose.msra.mxu0 0.0
    %8003 = vmatprep.subr.mxu0 0.0
    %8004 = vmatpush1.xpose.msra.mxu0 0.0
    %8005 = vmatprep.subr.mxu0 0.0
    %8006 = vmatpush1.xpose.msra.mxu0 0.0
    %8007 = vmatprep.subr.mxu0 0.0
    %8008 = vmatpush1.xpose.msra.mxu0 0.0
    %8009 = vmatprep.subr.mxu0 0.0
    %8010 = vmatpush1.xpose.msra.mxu0 0.0
    %8011 = vmatprep.subr.mxu0 0.0
    %8012 = vmatpush1.xpose.msra.mxu0 0.0
    %8013 = vmatprep.subr.mxu0 0.0
    %8014 = vmatpush1.xpose.msra.mxu0 0.0
    %8015 = vmatprep.subr.mxu0 0.0
    %8016 = vmatpush1.xpose.msra.mxu0 0.0
    %8017 = vmatprep.subr.mxu0 0.0
    %8018 = vmatpush1.xpose.msra.mxu0 0.0
    %8019 = vmatprep.mubr.f32.mxu0 %v7524
    %8020 = vmatmul.mubr.f32.gmra.mrb[0].mxu0 %v7522
    %v8021 = vpop.f32.mrb[0].mxu0
    %v8022 = vadd.f32 %v7952, %v8021
    %v8023 = vpop.f32.mrb[0].mxu0
    %8024 = vdwg.mxu0
    %v8025 = vadd.f32 %v7424, %v8022
    %s8026 = scalar_lea.vmem [#allocation2], 68
    %v8027 = vld [vmem:[%s8026] ss:$8 sm:$0xf]
    %v8028 = vld [vmem:[%s8026] ss:$8 sm:$0xf0]
    %v8029 = vor.u32 %v8027, %v8028
    %s8030 = scalar_lea.vmem [#allocation2], 196
    %v8031 = vld [vmem:[%s8030] ss:$8 sm:$0xf]
    %v8032 = vld [vmem:[%s8030] ss:$8 sm:$0xf0]
    %v8033 = vor.u32 %v8031, %v8032
    %s8034 = scalar_lea.vmem %s3, 68
    %v8035 = vld [vmem:[%s8034] ss:$8 sm:$0xf]
    %v8036 = vld [vmem:[%s8034] ss:$8 sm:$0xf0]
    %v8037 = vor.u32 %v8035, %v8036
    %s8038 = scalar_lea.vmem %s3, 196
    %v8039 = vld [vmem:[%s8038] ss:$8 sm:$0xf]
    %v8040 = vld [vmem:[%s8038] ss:$8 sm:$0xf0]
    %v8041 = vor.u32 %v8039, %v8040
    %s8042 = scalar_lea.vmem %s3, 324
    %v8043 = vld [vmem:[%s8042] ss:$8 sm:$0xf]
    %v8044 = vld [vmem:[%s8042] ss:$8 sm:$0xf0]
    %v8045 = vor.u32 %v8043, %v8044
    %s8046 = scalar_lea.vmem %s3, 452
    %v8047 = vld [vmem:[%s8046] ss:$8 sm:$0xf]
    %v8048 = vld [vmem:[%s8046] ss:$8 sm:$0xf0]
    %v8049 = vor.u32 %v8047, %v8048
    %s8050 = scalar_lea.vmem %s3, 580
    %v8051 = vld [vmem:[%s8050] ss:$8 sm:$0xf]
    %v8052 = vld [vmem:[%s8050] ss:$8 sm:$0xf0]
    %v8053 = vor.u32 %v8051, %v8052
    %s8054 = scalar_lea.vmem %s3, 708
    %v8055 = vld [vmem:[%s8054] ss:$8 sm:$0xf]
    %v8056 = vld [vmem:[%s8054] ss:$8 sm:$0xf0]
    %v8057 = vor.u32 %v8055, %v8056
    %s8058 = scalar_lea.vmem %s3, 836
    %v8059 = vld [vmem:[%s8058] ss:$8 sm:$0xf]
    %v8060 = vld [vmem:[%s8058] ss:$8 sm:$0xf0]
    %v8061 = vor.u32 %v8059, %v8060
    %s8062 = scalar_lea.vmem %s3, 964
    %v8063 = vld [vmem:[%s8062] ss:$8 sm:$0xf]
    %v8064 = vld [vmem:[%s8062] ss:$8 sm:$0xf0]
    %v8065 = vor.u32 %v8063, %v8064
    %s8066 = scalar_lea.vmem %s3, 1092
    %v8067 = vld [vmem:[%s8066] ss:$8 sm:$0xf]
    %v8068 = vld [vmem:[%s8066] ss:$8 sm:$0xf0]
    %v8069 = vor.u32 %v8067, %v8068
    %s8070 = scalar_lea.vmem %s3, 1220
    %v8071 = vld [vmem:[%s8070] ss:$8 sm:$0xf]
    %v8072 = vld [vmem:[%s8070] ss:$8 sm:$0xf0]
    %v8073 = vor.u32 %v8071, %v8072
    %v8076 = vcombine.low %v8029, %v8033
    %v8077 = vcombine.high %v8029, %v8033
    %v8079 = vunpack.c.l.s4 1966171168
    %v8080 = vunpack.c.0.s8 %v8079
    %v8081 = vlaneseq
    %v8082 = vshrl.u32 %v8081, 7
    %v8083 = vsub.s32 %v8080, %v8082
    %v8084 = vrot.slane %v8076, %v8083
    %v8086 = vunpack.c.l.s4 1966171168
    %v8087 = vunpack.c.0.s8 %v8086
    %v8088 = vlaneseq
    %v8089 = vshrl.u32 %v8088, 7
    %v8090 = vsub.s32 %v8087, %v8089
    %v8091 = vrot.slane %v8077, %v8090
    %v8092 = vcombine.high %v8084, %v8084
    %v8093 = vcombine.high %v8091, %v8091
    %v8095 = vunpack.c.l.s4 1966171168
    %v8096 = vunpack.c.0.s8 %v8095
    %v8097 = vlaneseq
    %v8098 = vshrl.u32 %v8097, 7
    %v8099 = vsub.s32 %v8096, %v8098
    %v8100 = vrot.slane %v8084, %v8099
    %v8102 = vunpack.c.l.s4 1966171168
    %v8103 = vunpack.c.0.s8 %v8102
    %v8104 = vlaneseq
    %v8105 = vshrl.u32 %v8104, 7
    %v8106 = vsub.s32 %v8103, %v8105
    %v8107 = vrot.slane %v8091, %v8106
    %v8109 = vunpack.c.l.s4 1966171168
    %v8110 = vunpack.c.0.s8 %v8109
    %v8111 = vlaneseq
    %v8112 = vshrl.u32 %v8111, 7
    %v8113 = vsub.s32 %v8110, %v8112
    %v8114 = vrot.slane %v8092, %v8113
    %v8116 = vunpack.c.l.s4 1966171168
    %v8117 = vunpack.c.0.s8 %v8116
    %v8118 = vlaneseq
    %v8119 = vshrl.u32 %v8118, 7
    %v8120 = vsub.s32 %v8117, %v8119
    %v8121 = vrot.slane %v8093, %v8120
    %v8122 = vcombine.high %v8100, %v8100
    %v8123 = vcombine.high %v8107, %v8107
    %v8124 = vcombine.high %v8114, %v8114
    %v8125 = vcombine.high %v8121, %v8121
    %v8144 = vcombine.low %v8037, %v8041
    %v8145 = vcombine.high %v8037, %v8041
    %v8146 = vcombine.low %v8045, %v8049
    %v8147 = vcombine.high %v8045, %v8049
    %v8148 = vcombine.low %v8053, %v8057
    %v8149 = vcombine.high %v8053, %v8057
    %v8150 = vcombine.low %v8061, %v8065
    %v8151 = vcombine.high %v8061, %v8065
    %v8153 = vunpack.c.l.s4 1966171168
    %v8154 = vunpack.c.0.s8 %v8153
    %v8155 = vlaneseq
    %v8156 = vshrl.u32 %v8155, 7
    %v8157 = vsub.s32 %v8154, %v8156
    %v8158 = vrot.slane %v8144, %v8157
    %v8160 = vunpack.c.l.s4 1966171168
    %v8161 = vunpack.c.0.s8 %v8160
    %v8162 = vlaneseq
    %v8163 = vshrl.u32 %v8162, 7
    %v8164 = vsub.s32 %v8161, %v8163
    %v8165 = vrot.slane %v8145, %v8164
    %v8167 = vunpack.c.l.s4 1966171168
    %v8168 = vunpack.c.0.s8 %v8167
    %v8169 = vlaneseq
    %v8170 = vshrl.u32 %v8169, 7
    %v8171 = vsub.s32 %v8168, %v8170
    %v8172 = vrot.slane %v8146, %v8171
    %v8174 = vunpack.c.l.s4 1966171168
    %v8175 = vunpack.c.0.s8 %v8174
    %v8176 = vlaneseq
    %v8177 = vshrl.u32 %v8176, 7
    %v8178 = vsub.s32 %v8175, %v8177
    %v8179 = vrot.slane %v8147, %v8178
    %v8181 = vunpack.c.l.s4 1966171168
    %v8182 = vunpack.c.0.s8 %v8181
    %v8183 = vlaneseq
    %v8184 = vshrl.u32 %v8183, 7
    %v8185 = vsub.s32 %v8182, %v8184
    %v8186 = vrot.slane %v8148, %v8185
    %v8188 = vunpack.c.l.s4 1966171168
    %v8189 = vunpack.c.0.s8 %v8188
    %v8190 = vlaneseq
    %v8191 = vshrl.u32 %v8190, 7
    %v8192 = vsub.s32 %v8189, %v8191
    %v8193 = vrot.slane %v8149, %v8192
    %v8195 = vunpack.c.l.s4 1966171168
    %v8196 = vunpack.c.0.s8 %v8195
    %v8197 = vlaneseq
    %v8198 = vshrl.u32 %v8197, 7
    %v8199 = vsub.s32 %v8196, %v8198
    %v8200 = vrot.slane %v8150, %v8199
    %v8202 = vunpack.c.l.s4 1966171168
    %v8203 = vunpack.c.0.s8 %v8202
    %v8204 = vlaneseq
    %v8205 = vshrl.u32 %v8204, 7
    %v8206 = vsub.s32 %v8203, %v8205
    %v8207 = vrot.slane %v8151, %v8206
    %v8208 = vcombine.low %v8158, %v8172
    %v8209 = vcombine.high %v8158, %v8172
    %v8210 = vcombine.low %v8165, %v8179
    %v8211 = vcombine.high %v8165, %v8179
    %v8212 = vcombine.low %v8186, %v8200
    %v8213 = vcombine.high %v8186, %v8200
    %v8214 = vcombine.low %v8193, %v8207
    %v8215 = vcombine.high %v8193, %v8207
    %v8217 = vunpack.c.l.s4 1966171168
    %v8218 = vunpack.c.0.s8 %v8217
    %v8219 = vlaneseq
    %v8220 = vshrl.u32 %v8219, 7
    %v8221 = vsub.s32 %v8218, %v8220
    %v8222 = vrot.slane %v8208, %v8221
    %v8224 = vunpack.c.l.s4 1966171168
    %v8225 = vunpack.c.0.s8 %v8224
    %v8226 = vlaneseq
    %v8227 = vshrl.u32 %v8226, 7
    %v8228 = vsub.s32 %v8225, %v8227
    %v8229 = vrot.slane %v8210, %v8228
    %v8231 = vunpack.c.l.s4 1966171168
    %v8232 = vunpack.c.0.s8 %v8231
    %v8233 = vlaneseq
    %v8234 = vshrl.u32 %v8233, 7
    %v8235 = vsub.s32 %v8232, %v8234
    %v8236 = vrot.slane %v8209, %v8235
    %v8238 = vunpack.c.l.s4 1966171168
    %v8239 = vunpack.c.0.s8 %v8238
    %v8240 = vlaneseq
    %v8241 = vshrl.u32 %v8240, 7
    %v8242 = vsub.s32 %v8239, %v8241
    %v8243 = vrot.slane %v8211, %v8242
    %v8245 = vunpack.c.l.s4 1966171168
    %v8246 = vunpack.c.0.s8 %v8245
    %v8247 = vlaneseq
    %v8248 = vshrl.u32 %v8247, 7
    %v8249 = vsub.s32 %v8246, %v8248
    %v8250 = vrot.slane %v8212, %v8249
    %v8252 = vunpack.c.l.s4 1966171168
    %v8253 = vunpack.c.0.s8 %v8252
    %v8254 = vlaneseq
    %v8255 = vshrl.u32 %v8254, 7
    %v8256 = vsub.s32 %v8253, %v8255
    %v8257 = vrot.slane %v8214, %v8256
    %v8259 = vunpack.c.l.s4 1966171168
    %v8260 = vunpack.c.0.s8 %v8259
    %v8261 = vlaneseq
    %v8262 = vshrl.u32 %v8261, 7
    %v8263 = vsub.s32 %v8260, %v8262
    %v8264 = vrot.slane %v8213, %v8263
    %v8266 = vunpack.c.l.s4 1966171168
    %v8267 = vunpack.c.0.s8 %v8266
    %v8268 = vlaneseq
    %v8269 = vshrl.u32 %v8268, 7
    %v8270 = vsub.s32 %v8267, %v8269
    %v8271 = vrot.slane %v8215, %v8270
    %v8272 = vcombine.low %v8222, %v8250
    %v8273 = vcombine.high %v8222, %v8250
    %v8274 = vcombine.low %v8229, %v8257
    %v8275 = vcombine.high %v8229, %v8257
    %v8276 = vcombine.low %v8236, %v8264
    %v8277 = vcombine.high %v8236, %v8264
    %v8278 = vcombine.low %v8243, %v8271
    %v8279 = vcombine.high %v8243, %v8271
    %v8280 = vcombine.low %v8069, %v8073
    %v8281 = vcombine.high %v8069, %v8073
    %v8283 = vunpack.c.l.s4 1966171168
    %v8284 = vunpack.c.0.s8 %v8283
    %v8285 = vlaneseq
    %v8286 = vshrl.u32 %v8285, 7
    %v8287 = vsub.s32 %v8284, %v8286
    %v8288 = vrot.slane %v8280, %v8287
    %v8290 = vunpack.c.l.s4 1966171168
    %v8291 = vunpack.c.0.s8 %v8290
    %v8292 = vlaneseq
    %v8293 = vshrl.u32 %v8292, 7
    %v8294 = vsub.s32 %v8291, %v8293
    %v8295 = vrot.slane %v8281, %v8294
    %v8296 = vcombine.high %v8288, %v8288
    %v8297 = vcombine.high %v8295, %v8295
    %v8299 = vunpack.c.l.s4 1966171168
    %v8300 = vunpack.c.0.s8 %v8299
    %v8301 = vlaneseq
    %v8302 = vshrl.u32 %v8301, 7
    %v8303 = vsub.s32 %v8300, %v8302
    %v8304 = vrot.slane %v8288, %v8303
    %v8306 = vunpack.c.l.s4 1966171168
    %v8307 = vunpack.c.0.s8 %v8306
    %v8308 = vlaneseq
    %v8309 = vshrl.u32 %v8308, 7
    %v8310 = vsub.s32 %v8307, %v8309
    %v8311 = vrot.slane %v8295, %v8310
    %v8313 = vunpack.c.l.s4 1966171168
    %v8314 = vunpack.c.0.s8 %v8313
    %v8315 = vlaneseq
    %v8316 = vshrl.u32 %v8315, 7
    %v8317 = vsub.s32 %v8314, %v8316
    %v8318 = vrot.slane %v8296, %v8317
    %v8320 = vunpack.c.l.s4 1966171168
    %v8321 = vunpack.c.0.s8 %v8320
    %v8322 = vlaneseq
    %v8323 = vshrl.u32 %v8322, 7
    %v8324 = vsub.s32 %v8321, %v8323
    %v8325 = vrot.slane %v8297, %v8324
    %v8326 = vcombine.high %v8304, %v8304
    %v8327 = vcombine.high %v8311, %v8311
    %v8328 = vcombine.high %v8318, %v8318
    %v8329 = vcombine.high %v8325, %v8325
    %8346 = vmatprep.subr.mxu0 %v8276
    %8347 = vmatpush1.xpose.msra.mxu0 %v8272
    %8348 = vmatprep.subr.mxu0 %v8318
    %8349 = vmatpush1.xpose.msra.mxu0 %v8304
    %8350 = vmatprep.subr.mxu0 0.0
    %8351 = vmatpush1.xpose.msra.mxu0 0.0
    %8352 = vmatprep.subr.mxu0 0.0
    %8353 = vmatpush1.xpose.msra.mxu0 0.0
    %8354 = vmatprep.subr.mxu0 0.0
    %8355 = vmatpush1.xpose.msra.mxu0 0.0
    %8356 = vmatprep.subr.mxu0 0.0
    %8357 = vmatpush1.xpose.msra.mxu0 0.0
    %8358 = vmatprep.subr.mxu0 0.0
    %8359 = vmatpush1.xpose.msra.mxu0 0.0
    %8360 = vmatprep.subr.mxu0 0.0
    %8361 = vmatpush1.xpose.msra.mxu0 0.0
    %8362 = vmatprep.subr.mxu0 0.0
    %8363 = vmatpush1.xpose.msra.mxu0 0.0
    %8364 = vmatprep.subr.mxu0 0.0
    %8365 = vmatpush1.xpose.msra.mxu0 0.0
    %8366 = vmatprep.subr.mxu0 0.0
    %8367 = vmatpush1.xpose.msra.mxu0 0.0
    %8368 = vmatprep.subr.mxu0 0.0
    %8369 = vmatpush1.xpose.msra.mxu0 0.0
    %8370 = vmatprep.subr.mxu0 0.0
    %8371 = vmatpush1.xpose.msra.mxu0 0.0
    %8372 = vmatprep.subr.mxu0 0.0
    %8373 = vmatpush1.xpose.msra.mxu0 0.0
    %8374 = vmatprep.subr.mxu0 0.0
    %8375 = vmatpush1.xpose.msra.mxu0 0.0
    %8376 = vmatprep.subr.mxu0 0.0
    %8377 = vmatpush1.xpose.msra.mxu0 0.0
    %8378 = vmatprep.subr.mxu0 0.0
    %8379 = vmatpush1.xpose.msra.mxu0 0.0
    %8380 = vmatprep.subr.mxu0 0.0
    %8381 = vmatpush1.xpose.msra.mxu0 0.0
    %8382 = vmatprep.subr.mxu0 0.0
    %8383 = vmatpush1.xpose.msra.mxu0 0.0
    %8384 = vmatprep.subr.mxu0 0.0
    %8385 = vmatpush1.xpose.msra.mxu0 0.0
    %8386 = vmatprep.subr.mxu0 0.0
    %8387 = vmatpush1.xpose.msra.mxu0 0.0
    %8388 = vmatprep.subr.mxu0 0.0
    %8389 = vmatpush1.xpose.msra.mxu0 0.0
    %8390 = vmatprep.subr.mxu0 0.0
    %8391 = vmatpush1.xpose.msra.mxu0 0.0
    %8392 = vmatprep.subr.mxu0 0.0
    %8393 = vmatpush1.xpose.msra.mxu0 0.0
    %8394 = vmatprep.subr.mxu0 0.0
    %8395 = vmatpush1.xpose.msra.mxu0 0.0
    %8396 = vmatprep.subr.mxu0 0.0
    %8397 = vmatpush1.xpose.msra.mxu0 0.0
    %8398 = vmatprep.subr.mxu0 0.0
    %8399 = vmatpush1.xpose.msra.mxu0 0.0
    %8400 = vmatprep.subr.mxu0 0.0
    %8401 = vmatpush1.xpose.msra.mxu0 0.0
    %8402 = vmatprep.subr.mxu0 0.0
    %8403 = vmatpush1.xpose.msra.mxu0 0.0
    %8404 = vmatprep.subr.mxu0 0.0
    %8405 = vmatpush1.xpose.msra.mxu0 0.0
    %8406 = vmatprep.subr.mxu0 0.0
    %8407 = vmatpush1.xpose.msra.mxu0 0.0
    %8408 = vmatprep.subr.mxu0 0.0
    %8409 = vmatpush1.xpose.msra.mxu0 0.0
    %8410 = vmatprep.mubr.f32.mxu0 %v8114
    %8411 = vmatmul.mubr.f32.gmra.mrb[0].mxu0 %v8100
    %v8412 = vpop.f32.mrb[0].mxu0
    %v8413 = vadd.f32 0.0, %v8412
    %v8414 = vpop.f32.mrb[0].mxu0
    %8415 = vdwg.mxu0
    %8416 = vmatprep.subr.mxu0 %v8277
    %8417 = vmatpush1.xpose.msra.mxu0 %v8273
    %8418 = vmatprep.subr.mxu0 %v8328
    %8419 = vmatpush1.xpose.msra.mxu0 %v8326
    %8420 = vmatprep.subr.mxu0 0.0
    %8421 = vmatpush1.xpose.msra.mxu0 0.0
    %8422 = vmatprep.subr.mxu0 0.0
    %8423 = vmatpush1.xpose.msra.mxu0 0.0
    %8424 = vmatprep.subr.mxu0 0.0
    %8425 = vmatpush1.xpose.msra.mxu0 0.0
    %8426 = vmatprep.subr.mxu0 0.0
    %8427 = vmatpush1.xpose.msra.mxu0 0.0
    %8428 = vmatprep.subr.mxu0 0.0
    %8429 = vmatpush1.xpose.msra.mxu0 0.0
    %8430 = vmatprep.subr.mxu0 0.0
    %8431 = vmatpush1.xpose.msra.mxu0 0.0
    %8432 = vmatprep.subr.mxu0 0.0
    %8433 = vmatpush1.xpose.msra.mxu0 0.0
    %8434 = vmatprep.subr.mxu0 0.0
    %8435 = vmatpush1.xpose.msra.mxu0 0.0
    %8436 = vmatprep.subr.mxu0 0.0
    %8437 = vmatpush1.xpose.msra.mxu0 0.0
    %8438 = vmatprep.subr.mxu0 0.0
    %8439 = vmatpush1.xpose.msra.mxu0 0.0
    %8440 = vmatprep.subr.mxu0 0.0
    %8441 = vmatpush1.xpose.msra.mxu0 0.0
    %8442 = vmatprep.subr.mxu0 0.0
    %8443 = vmatpush1.xpose.msra.mxu0 0.0
    %8444 = vmatprep.subr.mxu0 0.0
    %8445 = vmatpush1.xpose.msra.mxu0 0.0
    %8446 = vmatprep.subr.mxu0 0.0
    %8447 = vmatpush1.xpose.msra.mxu0 0.0
    %8448 = vmatprep.subr.mxu0 0.0
    %8449 = vmatpush1.xpose.msra.mxu0 0.0
    %8450 = vmatprep.subr.mxu0 0.0
    %8451 = vmatpush1.xpose.msra.mxu0 0.0
    %8452 = vmatprep.subr.mxu0 0.0
    %8453 = vmatpush1.xpose.msra.mxu0 0.0
    %8454 = vmatprep.subr.mxu0 0.0
    %8455 = vmatpush1.xpose.msra.mxu0 0.0
    %8456 = vmatprep.subr.mxu0 0.0
    %8457 = vmatpush1.xpose.msra.mxu0 0.0
    %8458 = vmatprep.subr.mxu0 0.0
    %8459 = vmatpush1.xpose.msra.mxu0 0.0
    %8460 = vmatprep.subr.mxu0 0.0
    %8461 = vmatpush1.xpose.msra.mxu0 0.0
    %8462 = vmatprep.subr.mxu0 0.0
    %8463 = vmatpush1.xpose.msra.mxu0 0.0
    %8464 = vmatprep.subr.mxu0 0.0
    %8465 = vmatpush1.xpose.msra.mxu0 0.0
    %8466 = vmatprep.subr.mxu0 0.0
    %8467 = vmatpush1.xpose.msra.mxu0 0.0
    %8468 = vmatprep.subr.mxu0 0.0
    %8469 = vmatpush1.xpose.msra.mxu0 0.0
    %8470 = vmatprep.subr.mxu0 0.0
    %8471 = vmatpush1.xpose.msra.mxu0 0.0
    %8472 = vmatprep.subr.mxu0 0.0
    %8473 = vmatpush1.xpose.msra.mxu0 0.0
    %8474 = vmatprep.subr.mxu0 0.0
    %8475 = vmatpush1.xpose.msra.mxu0 0.0
    %8476 = vmatprep.subr.mxu0 0.0
    %8477 = vmatpush1.xpose.msra.mxu0 0.0
    %8478 = vmatprep.subr.mxu0 0.0
    %8479 = vmatpush1.xpose.msra.mxu0 0.0
    %8480 = vmatprep.mubr.f32.mxu0 %v8124
    %8481 = vmatmul.mubr.f32.gmra.mrb[0].mxu0 %v8122
    %v8482 = vpop.f32.mrb[0].mxu0
    %v8483 = vadd.f32 %v8413, %v8482
    %v8484 = vpop.f32.mrb[0].mxu0
    %8485 = vdwg.mxu0
    %8486 = vmatprep.subr.mxu0 %v8278
    %8487 = vmatpush1.xpose.msra.mxu0 %v8274
    %8488 = vmatprep.subr.mxu0 %v8325
    %8489 = vmatpush1.xpose.msra.mxu0 %v8311
    %8490 = vmatprep.subr.mxu0 0.0
    %8491 = vmatpush1.xpose.msra.mxu0 0.0
    %8492 = vmatprep.subr.mxu0 0.0
    %8493 = vmatpush1.xpose.msra.mxu0 0.0
    %8494 = vmatprep.subr.mxu0 0.0
    %8495 = vmatpush1.xpose.msra.mxu0 0.0
    %8496 = vmatprep.subr.mxu0 0.0
    %8497 = vmatpush1.xpose.msra.mxu0 0.0
    %8498 = vmatprep.subr.mxu0 0.0
    %8499 = vmatpush1.xpose.msra.mxu0 0.0
    %8500 = vmatprep.subr.mxu0 0.0
    %8501 = vmatpush1.xpose.msra.mxu0 0.0
    %8502 = vmatprep.subr.mxu0 0.0
    %8503 = vmatpush1.xpose.msra.mxu0 0.0
    %8504 = vmatprep.subr.mxu0 0.0
    %8505 = vmatpush1.xpose.msra.mxu0 0.0
    %8506 = vmatprep.subr.mxu0 0.0
    %8507 = vmatpush1.xpose.msra.mxu0 0.0
    %8508 = vmatprep.subr.mxu0 0.0
    %8509 = vmatpush1.xpose.msra.mxu0 0.0
    %8510 = vmatprep.subr.mxu0 0.0
    %8511 = vmatpush1.xpose.msra.mxu0 0.0
    %8512 = vmatprep.subr.mxu0 0.0
    %8513 = vmatpush1.xpose.msra.mxu0 0.0
    %8514 = vmatprep.subr.mxu0 0.0
    %8515 = vmatpush1.xpose.msra.mxu0 0.0
    %8516 = vmatprep.subr.mxu0 0.0
    %8517 = vmatpush1.xpose.msra.mxu0 0.0
    %8518 = vmatprep.subr.mxu0 0.0
    %8519 = vmatpush1.xpose.msra.mxu0 0.0
    %8520 = vmatprep.subr.mxu0 0.0
    %8521 = vmatpush1.xpose.msra.mxu0 0.0
    %8522 = vmatprep.subr.mxu0 0.0
    %8523 = vmatpush1.xpose.msra.mxu0 0.0
    %8524 = vmatprep.subr.mxu0 0.0
    %8525 = vmatpush1.xpose.msra.mxu0 0.0
    %8526 = vmatprep.subr.mxu0 0.0
    %8527 = vmatpush1.xpose.msra.mxu0 0.0
    %8528 = vmatprep.subr.mxu0 0.0
    %8529 = vmatpush1.xpose.msra.mxu0 0.0
    %8530 = vmatprep.subr.mxu0 0.0
    %8531 = vmatpush1.xpose.msra.mxu0 0.0
    %8532 = vmatprep.subr.mxu0 0.0
    %8533 = vmatpush1.xpose.msra.mxu0 0.0
    %8534 = vmatprep.subr.mxu0 0.0
    %8535 = vmatpush1.xpose.msra.mxu0 0.0
    %8536 = vmatprep.subr.mxu0 0.0
    %8537 = vmatpush1.xpose.msra.mxu0 0.0
    %8538 = vmatprep.subr.mxu0 0.0
    %8539 = vmatpush1.xpose.msra.mxu0 0.0
    %8540 = vmatprep.subr.mxu0 0.0
    %8541 = vmatpush1.xpose.msra.mxu0 0.0
    %8542 = vmatprep.subr.mxu0 0.0
    %8543 = vmatpush1.xpose.msra.mxu0 0.0
    %8544 = vmatprep.subr.mxu0 0.0
    %8545 = vmatpush1.xpose.msra.mxu0 0.0
    %8546 = vmatprep.subr.mxu0 0.0
    %8547 = vmatpush1.xpose.msra.mxu0 0.0
    %8548 = vmatprep.subr.mxu0 0.0
    %8549 = vmatpush1.xpose.msra.mxu0 0.0
    %8550 = vmatprep.mubr.f32.mxu0 %v8121
    %8551 = vmatmul.mubr.f32.gmra.mrb[0].mxu0 %v8107
    %v8552 = vpop.f32.mrb[0].mxu0
    %v8553 = vadd.f32 %v8483, %v8552
    %v8554 = vpop.f32.mrb[0].mxu0
    %8555 = vdwg.mxu0
    %8556 = vmatprep.subr.mxu0 %v8279
    %8557 = vmatpush1.xpose.msra.mxu0 %v8275
    %8558 = vmatprep.subr.mxu0 %v8329
    %8559 = vmatpush1.xpose.msra.mxu0 %v8327
    %8560 = vmatprep.subr.mxu0 0.0
    %8561 = vmatpush1.xpose.msra.mxu0 0.0
    %8562 = vmatprep.subr.mxu0 0.0
    %8563 = vmatpush1.xpose.msra.mxu0 0.0
    %8564 = vmatprep.subr.mxu0 0.0
    %8565 = vmatpush1.xpose.msra.mxu0 0.0
    %8566 = vmatprep.subr.mxu0 0.0
    %8567 = vmatpush1.xpose.msra.mxu0 0.0
    %8568 = vmatprep.subr.mxu0 0.0
    %8569 = vmatpush1.xpose.msra.mxu0 0.0
    %8570 = vmatprep.subr.mxu0 0.0
    %8571 = vmatpush1.xpose.msra.mxu0 0.0
    %8572 = vmatprep.subr.mxu0 0.0
    %8573 = vmatpush1.xpose.msra.mxu0 0.0
    %8574 = vmatprep.subr.mxu0 0.0
    %8575 = vmatpush1.xpose.msra.mxu0 0.0
    %8576 = vmatprep.subr.mxu0 0.0
    %8577 = vmatpush1.xpose.msra.mxu0 0.0
    %8578 = vmatprep.subr.mxu0 0.0
    %8579 = vmatpush1.xpose.msra.mxu0 0.0
    %8580 = vmatprep.subr.mxu0 0.0
    %8581 = vmatpush1.xpose.msra.mxu0 0.0
    %8582 = vmatprep.subr.mxu0 0.0
    %8583 = vmatpush1.xpose.msra.mxu0 0.0
    %8584 = vmatprep.subr.mxu0 0.0
    %8585 = vmatpush1.xpose.msra.mxu0 0.0
    %8586 = vmatprep.subr.mxu0 0.0
    %8587 = vmatpush1.xpose.msra.mxu0 0.0
    %8588 = vmatprep.subr.mxu0 0.0
    %8589 = vmatpush1.xpose.msra.mxu0 0.0
    %8590 = vmatprep.subr.mxu0 0.0
    %8591 = vmatpush1.xpose.msra.mxu0 0.0
    %8592 = vmatprep.subr.mxu0 0.0
    %8593 = vmatpush1.xpose.msra.mxu0 0.0
    %8594 = vmatprep.subr.mxu0 0.0
    %8595 = vmatpush1.xpose.msra.mxu0 0.0
    %8596 = vmatprep.subr.mxu0 0.0
    %8597 = vmatpush1.xpose.msra.mxu0 0.0
    %8598 = vmatprep.subr.mxu0 0.0
    %8599 = vmatpush1.xpose.msra.mxu0 0.0
    %8600 = vmatprep.subr.mxu0 0.0
    %8601 = vmatpush1.xpose.msra.mxu0 0.0
    %8602 = vmatprep.subr.mxu0 0.0
    %8603 = vmatpush1.xpose.msra.mxu0 0.0
    %8604 = vmatprep.subr.mxu0 0.0
    %8605 = vmatpush1.xpose.msra.mxu0 0.0
    %8606 = vmatprep.subr.mxu0 0.0
    %8607 = vmatpush1.xpose.msra.mxu0 0.0
    %8608 = vmatprep.subr.mxu0 0.0
    %8609 = vmatpush1.xpose.msra.mxu0 0.0
    %8610 = vmatprep.subr.mxu0 0.0
    %8611 = vmatpush1.xpose.msra.mxu0 0.0
    %8612 = vmatprep.subr.mxu0 0.0
    %8613 = vmatpush1.xpose.msra.mxu0 0.0
    %8614 = vmatprep.subr.mxu0 0.0
    %8615 = vmatpush1.xpose.msra.mxu0 0.0
    %8616 = vmatprep.subr.mxu0 0.0
    %8617 = vmatpush1.xpose.msra.mxu0 0.0
    %8618 = vmatprep.subr.mxu0 0.0
    %8619 = vmatpush1.xpose.msra.mxu0 0.0
    %8620 = vmatprep.mubr.f32.mxu0 %v8125
    %8621 = vmatmul.mubr.f32.gmra.mrb[0].mxu0 %v8123
    %v8622 = vpop.f32.mrb[0].mxu0
    %v8623 = vadd.f32 %v8553, %v8622
    %v8624 = vpop.f32.mrb[0].mxu0
    %8625 = vdwg.mxu0
    %v8626 = vadd.f32 %v8025, %v8623
    %s8627 = scalar_lea.vmem [#allocation2], 69
    %v8628 = vld [vmem:[%s8627] ss:$8 sm:$0xf]
    %v8629 = vld [vmem:[%s8627] ss:$8 sm:$0xf0]
    %v8630 = vor.u32 %v8628, %v8629
    %s8631 = scalar_lea.vmem [#allocation2], 197
    %v8632 = vld [vmem:[%s8631] ss:$8 sm:$0xf]
    %v8633 = vld [vmem:[%s8631] ss:$8 sm:$0xf0]
    %v8634 = vor.u32 %v8632, %v8633
    %s8635 = scalar_lea.vmem %s3, 69
    %v8636 = vld [vmem:[%s8635] ss:$8 sm:$0xf]
    %v8637 = vld [vmem:[%s8635] ss:$8 sm:$0xf0]
    %v8638 = vor.u32 %v8636, %v8637
    %s8639 = scalar_lea.vmem %s3, 197
    %v8640 = vld [vmem:[%s8639] ss:$8 sm:$0xf]
    %v8641 = vld [vmem:[%s8639] ss:$8 sm:$0xf0]
    %v8642 = vor.u32 %v8640, %v8641
    %s8643 = scalar_lea.vmem %s3, 325
    %v8644 = vld [vmem:[%s8643] ss:$8 sm:$0xf]
    %v8645 = vld [vmem:[%s8643] ss:$8 sm:$0xf0]
    %v8646 = vor.u32 %v8644, %v8645
    %s8647 = scalar_lea.vmem %s3, 453
    %v8648 = vld [vmem:[%s8647] ss:$8 sm:$0xf]
    %v8649 = vld [vmem:[%s8647] ss:$8 sm:$0xf0]
    %v8650 = vor.u32 %v8648, %v8649
    %s8651 = scalar_lea.vmem %s3, 581
    %v8652 = vld [vmem:[%s8651] ss:$8 sm:$0xf]
    %v8653 = vld [vmem:[%s8651] ss:$8 sm:$0xf0]
    %v8654 = vor.u32 %v8652, %v8653
    %s8655 = scalar_lea.vmem %s3, 709
    %v8656 = vld [vmem:[%s8655] ss:$8 sm:$0xf]
    %v8657 = vld [vmem:[%s8655] ss:$8 sm:$0xf0]
    %v8658 = vor.u32 %v8656, %v8657
    %s8659 = scalar_lea.vmem %s3, 837
    %v8660 = vld [vmem:[%s8659] ss:$8 sm:$0xf]
    %v8661 = vld [vmem:[%s8659] ss:$8 sm:$0xf0]
    %v8662 = vor.u32 %v8660, %v8661
    %s8663 = scalar_lea.vmem %s3, 965
    %v8664 = vld [vmem:[%s8663] ss:$8 sm:$0xf]
    %v8665 = vld [vmem:[%s8663] ss:$8 sm:$0xf0]
    %v8666 = vor.u32 %v8664, %v8665
    %s8667 = scalar_lea.vmem %s3, 1093
    %v8668 = vld [vmem:[%s8667] ss:$8 sm:$0xf]
    %v8669 = vld [vmem:[%s8667] ss:$8 sm:$0xf0]
    %v8670 = vor.u32 %v8668, %v8669
    %s8671 = scalar_lea.vmem %s3, 1221
    %v8672 = vld [vmem:[%s8671] ss:$8 sm:$0xf]
    %v8673 = vld [vmem:[%s8671] ss:$8 sm:$0xf0]
    %v8674 = vor.u32 %v8672, %v8673
    %v8677 = vcombine.low %v8630, %v8634
    %v8678 = vcombine.high %v8630, %v8634
    %v8680 = vunpack.c.l.s4 1966171168
    %v8681 = vunpack.c.0.s8 %v8680
    %v8682 = vlaneseq
    %v8683 = vshrl.u32 %v8682, 7
    %v8684 = vsub.s32 %v8681, %v8683
    %v8685 = vrot.slane %v8677, %v8684
    %v8687 = vunpack.c.l.s4 1966171168
    %v8688 = vunpack.c.0.s8 %v8687
    %v8689 = vlaneseq
    %v8690 = vshrl.u32 %v8689, 7
    %v8691 = vsub.s32 %v8688, %v8690
    %v8692 = vrot.slane %v8678, %v8691
    %v8693 = vcombine.high %v8685, %v8685
    %v8694 = vcombine.high %v8692, %v8692
    %v8696 = vunpack.c.l.s4 1966171168
    %v8697 = vunpack.c.0.s8 %v8696
    %v8698 = vlaneseq
    %v8699 = vshrl.u32 %v8698, 7
    %v8700 = vsub.s32 %v8697, %v8699
    %v8701 = vrot.slane %v8685, %v8700
    %v8703 = vunpack.c.l.s4 1966171168
    %v8704 = vunpack.c.0.s8 %v8703
    %v8705 = vlaneseq
    %v8706 = vshrl.u32 %v8705, 7
    %v8707 = vsub.s32 %v8704, %v8706
    %v8708 = vrot.slane %v8692, %v8707
    %v8710 = vunpack.c.l.s4 1966171168
    %v8711 = vunpack.c.0.s8 %v8710
    %v8712 = vlaneseq
    %v8713 = vshrl.u32 %v8712, 7
    %v8714 = vsub.s32 %v8711, %v8713
    %v8715 = vrot.slane %v8693, %v8714
    %v8717 = vunpack.c.l.s4 1966171168
    %v8718 = vunpack.c.0.s8 %v8717
    %v8719 = vlaneseq
    %v8720 = vshrl.u32 %v8719, 7
    %v8721 = vsub.s32 %v8718, %v8720
    %v8722 = vrot.slane %v8694, %v8721
    %v8723 = vcombine.high %v8701, %v8701
    %v8724 = vcombine.high %v8708, %v8708
    %v8725 = vcombine.high %v8715, %v8715
    %v8726 = vcombine.high %v8722, %v8722
    %v8745 = vcombine.low %v8638, %v8642
    %v8746 = vcombine.high %v8638, %v8642
    %v8747 = vcombine.low %v8646, %v8650
    %v8748 = vcombine.high %v8646, %v8650
    %v8749 = vcombine.low %v8654, %v8658
    %v8750 = vcombine.high %v8654, %v8658
    %v8751 = vcombine.low %v8662, %v8666
    %v8752 = vcombine.high %v8662, %v8666
    %v8754 = vunpack.c.l.s4 1966171168
    %v8755 = vunpack.c.0.s8 %v8754
    %v8756 = vlaneseq
    %v8757 = vshrl.u32 %v8756, 7
    %v8758 = vsub.s32 %v8755, %v8757
    %v8759 = vrot.slane %v8745, %v8758
    %v8761 = vunpack.c.l.s4 1966171168
    %v8762 = vunpack.c.0.s8 %v8761
    %v8763 = vlaneseq
    %v8764 = vshrl.u32 %v8763, 7
    %v8765 = vsub.s32 %v8762, %v8764
    %v8766 = vrot.slane %v8746, %v8765
    %v8768 = vunpack.c.l.s4 1966171168
    %v8769 = vunpack.c.0.s8 %v8768
    %v8770 = vlaneseq
    %v8771 = vshrl.u32 %v8770, 7
    %v8772 = vsub.s32 %v8769, %v8771
    %v8773 = vrot.slane %v8747, %v8772
    %v8775 = vunpack.c.l.s4 1966171168
    %v8776 = vunpack.c.0.s8 %v8775
    %v8777 = vlaneseq
    %v8778 = vshrl.u32 %v8777, 7
    %v8779 = vsub.s32 %v8776, %v8778
    %v8780 = vrot.slane %v8748, %v8779
    %v8782 = vunpack.c.l.s4 1966171168
    %v8783 = vunpack.c.0.s8 %v8782
    %v8784 = vlaneseq
    %v8785 = vshrl.u32 %v8784, 7
    %v8786 = vsub.s32 %v8783, %v8785
    %v8787 = vrot.slane %v8749, %v8786
    %v8789 = vunpack.c.l.s4 1966171168
    %v8790 = vunpack.c.0.s8 %v8789
    %v8791 = vlaneseq
    %v8792 = vshrl.u32 %v8791, 7
    %v8793 = vsub.s32 %v8790, %v8792
    %v8794 = vrot.slane %v8750, %v8793
    %v8796 = vunpack.c.l.s4 1966171168
    %v8797 = vunpack.c.0.s8 %v8796
    %v8798 = vlaneseq
    %v8799 = vshrl.u32 %v8798, 7
    %v8800 = vsub.s32 %v8797, %v8799
    %v8801 = vrot.slane %v8751, %v8800
    %v8803 = vunpack.c.l.s4 1966171168
    %v8804 = vunpack.c.0.s8 %v8803
    %v8805 = vlaneseq
    %v8806 = vshrl.u32 %v8805, 7
    %v8807 = vsub.s32 %v8804, %v8806
    %v8808 = vrot.slane %v8752, %v8807
    %v8809 = vcombine.low %v8759, %v8773
    %v8810 = vcombine.high %v8759, %v8773
    %v8811 = vcombine.low %v8766, %v8780
    %v8812 = vcombine.high %v8766, %v8780
    %v8813 = vcombine.low %v8787, %v8801
    %v8814 = vcombine.high %v8787, %v8801
    %v8815 = vcombine.low %v8794, %v8808
    %v8816 = vcombine.high %v8794, %v8808
    %v8818 = vunpack.c.l.s4 1966171168
    %v8819 = vunpack.c.0.s8 %v8818
    %v8820 = vlaneseq
    %v8821 = vshrl.u32 %v8820, 7
    %v8822 = vsub.s32 %v8819, %v8821
    %v8823 = vrot.slane %v8809, %v8822
    %v8825 = vunpack.c.l.s4 1966171168
    %v8826 = vunpack.c.0.s8 %v8825
    %v8827 = vlaneseq
    %v8828 = vshrl.u32 %v8827, 7
    %v8829 = vsub.s32 %v8826, %v8828
    %v8830 = vrot.slane %v8811, %v8829
    %v8832 = vunpack.c.l.s4 1966171168
    %v8833 = vunpack.c.0.s8 %v8832
    %v8834 = vlaneseq
    %v8835 = vshrl.u32 %v8834, 7
    %v8836 = vsub.s32 %v8833, %v8835
    %v8837 = vrot.slane %v8810, %v8836
    %v8839 = vunpack.c.l.s4 1966171168
    %v8840 = vunpack.c.0.s8 %v8839
    %v8841 = vlaneseq
    %v8842 = vshrl.u32 %v8841, 7
    %v8843 = vsub.s32 %v8840, %v8842
    %v8844 = vrot.slane %v8812, %v8843
    %v8846 = vunpack.c.l.s4 1966171168
    %v8847 = vunpack.c.0.s8 %v8846
    %v8848 = vlaneseq
    %v8849 = vshrl.u32 %v8848, 7
    %v8850 = vsub.s32 %v8847, %v8849
    %v8851 = vrot.slane %v8813, %v8850
    %v8853 = vunpack.c.l.s4 1966171168
    %v8854 = vunpack.c.0.s8 %v8853
    %v8855 = vlaneseq
    %v8856 = vshrl.u32 %v8855, 7
    %v8857 = vsub.s32 %v8854, %v8856
    %v8858 = vrot.slane %v8815, %v8857
    %v8860 = vunpack.c.l.s4 1966171168
    %v8861 = vunpack.c.0.s8 %v8860
    %v8862 = vlaneseq
    %v8863 = vshrl.u32 %v8862, 7
    %v8864 = vsub.s32 %v8861, %v8863
    %v8865 = vrot.slane %v8814, %v8864
    %v8867 = vunpack.c.l.s4 1966171168
    %v8868 = vunpack.c.0.s8 %v8867
    %v8869 = vlaneseq
    %v8870 = vshrl.u32 %v8869, 7
    %v8871 = vsub.s32 %v8868, %v8870
    %v8872 = vrot.slane %v8816, %v8871
    %v8873 = vcombine.low %v8823, %v8851
    %v8874 = vcombine.high %v8823, %v8851
    %v8875 = vcombine.low %v8830, %v8858
    %v8876 = vcombine.high %v8830, %v8858
    %v8877 = vcombine.low %v8837, %v8865
    %v8878 = vcombine.high %v8837, %v8865
    %v8879 = vcombine.low %v8844, %v8872
    %v8880 = vcombine.high %v8844, %v8872
    %v8881 = vcombine.low %v8670, %v8674
    %v8882 = vcombine.high %v8670, %v8674
    %v8884 = vunpack.c.l.s4 1966171168
    %v8885 = vunpack.c.0.s8 %v8884
    %v8886 = vlaneseq
    %v8887 = vshrl.u32 %v8886, 7
    %v8888 = vsub.s32 %v8885, %v8887
    %v8889 = vrot.slane %v8881, %v8888
    %v8891 = vunpack.c.l.s4 1966171168
    %v8892 = vunpack.c.0.s8 %v8891
    %v8893 = vlaneseq
    %v8894 = vshrl.u32 %v8893, 7
    %v8895 = vsub.s32 %v8892, %v8894
    %v8896 = vrot.slane %v8882, %v8895
    %v8897 = vcombine.high %v8889, %v8889
    %v8898 = vcombine.high %v8896, %v8896
    %v8900 = vunpack.c.l.s4 1966171168
    %v8901 = vunpack.c.0.s8 %v8900
    %v8902 = vlaneseq
    %v8903 = vshrl.u32 %v8902, 7
    %v8904 = vsub.s32 %v8901, %v8903
    %v8905 = vrot.slane %v8889, %v8904
    %v8907 = vunpack.c.l.s4 1966171168
    %v8908 = vunpack.c.0.s8 %v8907
    %v8909 = vlaneseq
    %v8910 = vshrl.u32 %v8909, 7
    %v8911 = vsub.s32 %v8908, %v8910
    %v8912 = vrot.slane %v8896, %v8911
    %v8914 = vunpack.c.l.s4 1966171168
    %v8915 = vunpack.c.0.s8 %v8914
    %v8916 = vlaneseq
    %v8917 = vshrl.u32 %v8916, 7
    %v8918 = vsub.s32 %v8915, %v8917
    %v8919 = vrot.slane %v8897, %v8918
    %v8921 = vunpack.c.l.s4 1966171168
    %v8922 = vunpack.c.0.s8 %v8921
    %v8923 = vlaneseq
    %v8924 = vshrl.u32 %v8923, 7
    %v8925 = vsub.s32 %v8922, %v8924
    %v8926 = vrot.slane %v8898, %v8925
    %v8927 = vcombine.high %v8905, %v8905
    %v8928 = vcombine.high %v8912, %v8912
    %v8929 = vcombine.high %v8919, %v8919
    %v8930 = vcombine.high %v8926, %v8926
    %8947 = vmatprep.subr.mxu0 %v8877
    %8948 = vmatpush1.xpose.msra.mxu0 %v8873
    %8949 = vmatprep.subr.mxu0 %v8919
    %8950 = vmatpush1.xpose.msra.mxu0 %v8905
    %8951 = vmatprep.subr.mxu0 0.0
    %8952 = vmatpush1.xpose.msra.mxu0 0.0
    %8953 = vmatprep.subr.mxu0 0.0
    %8954 = vmatpush1.xpose.msra.mxu0 0.0
    %8955 = vmatprep.subr.mxu0 0.0
    %8956 = vmatpush1.xpose.msra.mxu0 0.0
    %8957 = vmatprep.subr.mxu0 0.0
    %8958 = vmatpush1.xpose.msra.mxu0 0.0
    %8959 = vmatprep.subr.mxu0 0.0
    %8960 = vmatpush1.xpose.msra.mxu0 0.0
    %8961 = vmatprep.subr.mxu0 0.0
    %8962 = vmatpush1.xpose.msra.mxu0 0.0
    %8963 = vmatprep.subr.mxu0 0.0
    %8964 = vmatpush1.xpose.msra.mxu0 0.0
    %8965 = vmatprep.subr.mxu0 0.0
    %8966 = vmatpush1.xpose.msra.mxu0 0.0
    %8967 = vmatprep.subr.mxu0 0.0
    %8968 = vmatpush1.xpose.msra.mxu0 0.0
    %8969 = vmatprep.subr.mxu0 0.0
    %8970 = vmatpush1.xpose.msra.mxu0 0.0
    %8971 = vmatprep.subr.mxu0 0.0
    %8972 = vmatpush1.xpose.msra.mxu0 0.0
    %8973 = vmatprep.subr.mxu0 0.0
    %8974 = vmatpush1.xpose.msra.mxu0 0.0
    %8975 = vmatprep.subr.mxu0 0.0
    %8976 = vmatpush1.xpose.msra.mxu0 0.0
    %8977 = vmatprep.subr.mxu0 0.0
    %8978 = vmatpush1.xpose.msra.mxu0 0.0
    %8979 = vmatprep.subr.mxu0 0.0
    %8980 = vmatpush1.xpose.msra.mxu0 0.0
    %8981 = vmatprep.subr.mxu0 0.0
    %8982 = vmatpush1.xpose.msra.mxu0 0.0
    %8983 = vmatprep.subr.mxu0 0.0
    %8984 = vmatpush1.xpose.msra.mxu0 0.0
    %8985 = vmatprep.subr.mxu0 0.0
    %8986 = vmatpush1.xpose.msra.mxu0 0.0
    %8987 = vmatprep.subr.mxu0 0.0
    %8988 = vmatpush1.xpose.msra.mxu0 0.0
    %8989 = vmatprep.subr.mxu0 0.0
    %8990 = vmatpush1.xpose.msra.mxu0 0.0
    %8991 = vmatprep.subr.mxu0 0.0
    %8992 = vmatpush1.xpose.msra.mxu0 0.0
    %8993 = vmatprep.subr.mxu0 0.0
    %8994 = vmatpush1.xpose.msra.mxu0 0.0
    %8995 = vmatprep.subr.mxu0 0.0
    %8996 = vmatpush1.xpose.msra.mxu0 0.0
    %8997 = vmatprep.subr.mxu0 0.0
    %8998 = vmatpush1.xpose.msra.mxu0 0.0
    %8999 = vmatprep.subr.mxu0 0.0
    %9000 = vmatpush1.xpose.msra.mxu0 0.0
    %9001 = vmatprep.subr.mxu0 0.0
    %9002 = vmatpush1.xpose.msra.mxu0 0.0
    %9003 = vmatprep.subr.mxu0 0.0
    %9004 = vmatpush1.xpose.msra.mxu0 0.0
    %9005 = vmatprep.subr.mxu0 0.0
    %9006 = vmatpush1.xpose.msra.mxu0 0.0
    %9007 = vmatprep.subr.mxu0 0.0
    %9008 = vmatpush1.xpose.msra.mxu0 0.0
    %9009 = vmatprep.subr.mxu0 0.0
    %9010 = vmatpush1.xpose.msra.mxu0 0.0
    %9011 = vmatprep.mubr.f32.mxu0 %v8715
    %9012 = vmatmul.mubr.f32.gmra.mrb[0].mxu0 %v8701
    %v9013 = vpop.f32.mrb[0].mxu0
    %v9014 = vadd.f32 0.0, %v9013
    %v9015 = vpop.f32.mrb[0].mxu0
    %9016 = vdwg.mxu0
    %9017 = vmatprep.subr.mxu0 %v8878
    %9018 = vmatpush1.xpose.msra.mxu0 %v8874
    %9019 = vmatprep.subr.mxu0 %v8929
    %9020 = vmatpush1.xpose.msra.mxu0 %v8927
    %9021 = vmatprep.subr.mxu0 0.0
    %9022 = vmatpush1.xpose.msra.mxu0 0.0
    %9023 = vmatprep.subr.mxu0 0.0
    %9024 = vmatpush1.xpose.msra.mxu0 0.0
    %9025 = vmatprep.subr.mxu0 0.0
    %9026 = vmatpush1.xpose.msra.mxu0 0.0
    %9027 = vmatprep.subr.mxu0 0.0
    %9028 = vmatpush1.xpose.msra.mxu0 0.0
    %9029 = vmatprep.subr.mxu0 0.0
    %9030 = vmatpush1.xpose.msra.mxu0 0.0
    %9031 = vmatprep.subr.mxu0 0.0
    %9032 = vmatpush1.xpose.msra.mxu0 0.0
    %9033 = vmatprep.subr.mxu0 0.0
    %9034 = vmatpush1.xpose.msra.mxu0 0.0
    %9035 = vmatprep.subr.mxu0 0.0
    %9036 = vmatpush1.xpose.msra.mxu0 0.0
    %9037 = vmatprep.subr.mxu0 0.0
    %9038 = vmatpush1.xpose.msra.mxu0 0.0
    %9039 = vmatprep.subr.mxu0 0.0
    %9040 = vmatpush1.xpose.msra.mxu0 0.0
    %9041 = vmatprep.subr.mxu0 0.0
    %9042 = vmatpush1.xpose.msra.mxu0 0.0
    %9043 = vmatprep.subr.mxu0 0.0
    %9044 = vmatpush1.xpose.msra.mxu0 0.0
    %9045 = vmatprep.subr.mxu0 0.0
    %9046 = vmatpush1.xpose.msra.mxu0 0.0
    %9047 = vmatprep.subr.mxu0 0.0
    %9048 = vmatpush1.xpose.msra.mxu0 0.0
    %9049 = vmatprep.subr.mxu0 0.0
    %9050 = vmatpush1.xpose.msra.mxu0 0.0
    %9051 = vmatprep.subr.mxu0 0.0
    %9052 = vmatpush1.xpose.msra.mxu0 0.0
    %9053 = vmatprep.subr.mxu0 0.0
    %9054 = vmatpush1.xpose.msra.mxu0 0.0
    %9055 = vmatprep.subr.mxu0 0.0
    %9056 = vmatpush1.xpose.msra.mxu0 0.0
    %9057 = vmatprep.subr.mxu0 0.0
    %9058 = vmatpush1.xpose.msra.mxu0 0.0
    %9059 = vmatprep.subr.mxu0 0.0
    %9060 = vmatpush1.xpose.msra.mxu0 0.0
    %9061 = vmatprep.subr.mxu0 0.0
    %9062 = vmatpush1.xpose.msra.mxu0 0.0
    %9063 = vmatprep.subr.mxu0 0.0
    %9064 = vmatpush1.xpose.msra.mxu0 0.0
    %9065 = vmatprep.subr.mxu0 0.0
    %9066 = vmatpush1.xpose.msra.mxu0 0.0
    %9067 = vmatprep.subr.mxu0 0.0
    %9068 = vmatpush1.xpose.msra.mxu0 0.0
    %9069 = vmatprep.subr.mxu0 0.0
    %9070 = vmatpush1.xpose.msra.mxu0 0.0
    %9071 = vmatprep.subr.mxu0 0.0
    %9072 = vmatpush1.xpose.msra.mxu0 0.0
    %9073 = vmatprep.subr.mxu0 0.0
    %9074 = vmatpush1.xpose.msra.mxu0 0.0
    %9075 = vmatprep.subr.mxu0 0.0
    %9076 = vmatpush1.xpose.msra.mxu0 0.0
    %9077 = vmatprep.subr.mxu0 0.0
    %9078 = vmatpush1.xpose.msra.mxu0 0.0
    %9079 = vmatprep.subr.mxu0 0.0
    %9080 = vmatpush1.xpose.msra.mxu0 0.0
    %9081 = vmatprep.mubr.f32.mxu0 %v8725
    %9082 = vmatmul.mubr.f32.gmra.mrb[0].mxu0 %v8723
    %v9083 = vpop.f32.mrb[0].mxu0
    %v9084 = vadd.f32 %v9014, %v9083
    %v9085 = vpop.f32.mrb[0].mxu0
    %9086 = vdwg.mxu0
    %9087 = vmatprep.subr.mxu0 %v8879
    %9088 = vmatpush1.xpose.msra.mxu0 %v8875
    %9089 = vmatprep.subr.mxu0 %v8926
    %9090 = vmatpush1.xpose.msra.mxu0 %v8912
    %9091 = vmatprep.subr.mxu0 0.0
    %9092 = vmatpush1.xpose.msra.mxu0 0.0
    %9093 = vmatprep.subr.mxu0 0.0
    %9094 = vmatpush1.xpose.msra.mxu0 0.0
    %9095 = vmatprep.subr.mxu0 0.0
    %9096 = vmatpush1.xpose.msra.mxu0 0.0
    %9097 = vmatprep.subr.mxu0 0.0
    %9098 = vmatpush1.xpose.msra.mxu0 0.0
    %9099 = vmatprep.subr.mxu0 0.0
    %9100 = vmatpush1.xpose.msra.mxu0 0.0
    %9101 = vmatprep.subr.mxu0 0.0
    %9102 = vmatpush1.xpose.msra.mxu0 0.0
    %9103 = vmatprep.subr.mxu0 0.0
    %9104 = vmatpush1.xpose.msra.mxu0 0.0
    %9105 = vmatprep.subr.mxu0 0.0
    %9106 = vmatpush1.xpose.msra.mxu0 0.0
    %9107 = vmatprep.subr.mxu0 0.0
    %9108 = vmatpush1.xpose.msra.mxu0 0.0
    %9109 = vmatprep.subr.mxu0 0.0
    %9110 = vmatpush1.xpose.msra.mxu0 0.0
    %9111 = vmatprep.subr.mxu0 0.0
    %9112 = vmatpush1.xpose.msra.mxu0 0.0
    %9113 = vmatprep.subr.mxu0 0.0
    %9114 = vmatpush1.xpose.msra.mxu0 0.0
    %9115 = vmatprep.subr.mxu0 0.0
    %9116 = vmatpush1.xpose.msra.mxu0 0.0
    %9117 = vmatprep.subr.mxu0 0.0
    %9118 = vmatpush1.xpose.msra.mxu0 0.0
    %9119 = vmatprep.subr.mxu0 0.0
    %9120 = vmatpush1.xpose.msra.mxu0 0.0
    %9121 = vmatprep.subr.mxu0 0.0
    %9122 = vmatpush1.xpose.msra.mxu0 0.0
    %9123 = vmatprep.subr.mxu0 0.0
    %9124 = vmatpush1.xpose.msra.mxu0 0.0
    %9125 = vmatprep.subr.mxu0 0.0
    %9126 = vmatpush1.xpose.msra.mxu0 0.0
    %9127 = vmatprep.subr.mxu0 0.0
    %9128 = vmatpush1.xpose.msra.mxu0 0.0
    %9129 = vmatprep.subr.mxu0 0.0
    %9130 = vmatpush1.xpose.msra.mxu0 0.0
    %9131 = vmatprep.subr.mxu0 0.0
    %9132 = vmatpush1.xpose.msra.mxu0 0.0
    %9133 = vmatprep.subr.mxu0 0.0
    %9134 = vmatpush1.xpose.msra.mxu0 0.0
    %9135 = vmatprep.subr.mxu0 0.0
    %9136 = vmatpush1.xpose.msra.mxu0 0.0
    %9137 = vmatprep.subr.mxu0 0.0
    %9138 = vmatpush1.xpose.msra.mxu0 0.0
    %9139 = vmatprep.subr.mxu0 0.0
    %9140 = vmatpush1.xpose.msra.mxu0 0.0
    %9141 = vmatprep.subr.mxu0 0.0
    %9142 = vmatpush1.xpose.msra.mxu0 0.0
    %9143 = vmatprep.subr.mxu0 0.0
    %9144 = vmatpush1.xpose.msra.mxu0 0.0
    %9145 = vmatprep.subr.mxu0 0.0
    %9146 = vmatpush1.xpose.msra.mxu0 0.0
    %9147 = vmatprep.subr.mxu0 0.0
    %9148 = vmatpush1.xpose.msra.mxu0 0.0
    %9149 = vmatprep.subr.mxu0 0.0
    %9150 = vmatpush1.xpose.msra.mxu0 0.0
    %9151 = vmatprep.mubr.f32.mxu0 %v8722
    %9152 = vmatmul.mubr.f32.gmra.mrb[0].mxu0 %v8708
    %v9153 = vpop.f32.mrb[0].mxu0
    %v9154 = vadd.f32 %v9084, %v9153
    %v9155 = vpop.f32.mrb[0].mxu0
    %9156 = vdwg.mxu0
    %9157 = vmatprep.subr.mxu0 %v8880
    %9158 = vmatpush1.xpose.msra.mxu0 %v8876
    %9159 = vmatprep.subr.mxu0 %v8930
    %9160 = vmatpush1.xpose.msra.mxu0 %v8928
    %9161 = vmatprep.subr.mxu0 0.0
    %9162 = vmatpush1.xpose.msra.mxu0 0.0
    %9163 = vmatprep.subr.mxu0 0.0
    %9164 = vmatpush1.xpose.msra.mxu0 0.0
    %9165 = vmatprep.subr.mxu0 0.0
    %9166 = vmatpush1.xpose.msra.mxu0 0.0
    %9167 = vmatprep.subr.mxu0 0.0
    %9168 = vmatpush1.xpose.msra.mxu0 0.0
    %9169 = vmatprep.subr.mxu0 0.0
    %9170 = vmatpush1.xpose.msra.mxu0 0.0
    %9171 = vmatprep.subr.mxu0 0.0
    %9172 = vmatpush1.xpose.msra.mxu0 0.0
    %9173 = vmatprep.subr.mxu0 0.0
    %9174 = vmatpush1.xpose.msra.mxu0 0.0
    %9175 = vmatprep.subr.mxu0 0.0
    %9176 = vmatpush1.xpose.msra.mxu0 0.0
    %9177 = vmatprep.subr.mxu0 0.0
    %9178 = vmatpush1.xpose.msra.mxu0 0.0
    %9179 = vmatprep.subr.mxu0 0.0
    %9180 = vmatpush1.xpose.msra.mxu0 0.0
    %9181 = vmatprep.subr.mxu0 0.0
    %9182 = vmatpush1.xpose.msra.mxu0 0.0
    %9183 = vmatprep.subr.mxu0 0.0
    %9184 = vmatpush1.xpose.msra.mxu0 0.0
    %9185 = vmatprep.subr.mxu0 0.0
    %9186 = vmatpush1.xpose.msra.mxu0 0.0
    %9187 = vmatprep.subr.mxu0 0.0
    %9188 = vmatpush1.xpose.msra.mxu0 0.0
    %9189 = vmatprep.subr.mxu0 0.0
    %9190 = vmatpush1.xpose.msra.mxu0 0.0
    %9191 = vmatprep.subr.mxu0 0.0
    %9192 = vmatpush1.xpose.msra.mxu0 0.0
    %9193 = vmatprep.subr.mxu0 0.0
    %9194 = vmatpush1.xpose.msra.mxu0 0.0
    %9195 = vmatprep.subr.mxu0 0.0
    %9196 = vmatpush1.xpose.msra.mxu0 0.0
    %9197 = vmatprep.subr.mxu0 0.0
    %9198 = vmatpush1.xpose.msra.mxu0 0.0
    %9199 = vmatprep.subr.mxu0 0.0
    %9200 = vmatpush1.xpose.msra.mxu0 0.0
    %9201 = vmatprep.subr.mxu0 0.0
    %9202 = vmatpush1.xpose.msra.mxu0 0.0
    %9203 = vmatprep.subr.mxu0 0.0
    %9204 = vmatpush1.xpose.msra.mxu0 0.0
    %9205 = vmatprep.subr.mxu0 0.0
    %9206 = vmatpush1.xpose.msra.mxu0 0.0
    %9207 = vmatprep.subr.mxu0 0.0
    %9208 = vmatpush1.xpose.msra.mxu0 0.0
    %9209 = vmatprep.subr.mxu0 0.0
    %9210 = vmatpush1.xpose.msra.mxu0 0.0
    %9211 = vmatprep.subr.mxu0 0.0
    %9212 = vmatpush1.xpose.msra.mxu0 0.0
    %9213 = vmatprep.subr.mxu0 0.0
    %9214 = vmatpush1.xpose.msra.mxu0 0.0
    %9215 = vmatprep.subr.mxu0 0.0
    %9216 = vmatpush1.xpose.msra.mxu0 0.0
    %9217 = vmatprep.subr.mxu0 0.0
    %9218 = vmatpush1.xpose.msra.mxu0 0.0
    %9219 = vmatprep.subr.mxu0 0.0
    %9220 = vmatpush1.xpose.msra.mxu0 0.0
    %9221 = vmatprep.mubr.f32.mxu0 %v8726
    %9222 = vmatmul.mubr.f32.gmra.mrb[0].mxu0 %v8724
    %v9223 = vpop.f32.mrb[0].mxu0
    %v9224 = vadd.f32 %v9154, %v9223
    %v9225 = vpop.f32.mrb[0].mxu0
    %9226 = vdwg.mxu0
    %v9227 = vadd.f32 %v8626, %v9224
    %s9228 = scalar_lea.vmem [#allocation2], 70
    %v9229 = vld [vmem:[%s9228] ss:$8 sm:$0xf]
    %v9230 = vld [vmem:[%s9228] ss:$8 sm:$0xf0]
    %v9231 = vor.u32 %v9229, %v9230
    %s9232 = scalar_lea.vmem [#allocation2], 198
    %v9233 = vld [vmem:[%s9232] ss:$8 sm:$0xf]
    %v9234 = vld [vmem:[%s9232] ss:$8 sm:$0xf0]
    %v9235 = vor.u32 %v9233, %v9234
    %s9236 = scalar_lea.vmem %s3, 70
    %v9237 = vld [vmem:[%s9236] ss:$8 sm:$0xf]
    %v9238 = vld [vmem:[%s9236] ss:$8 sm:$0xf0]
    %v9239 = vor.u32 %v9237, %v9238
    %s9240 = scalar_lea.vmem %s3, 198
    %v9241 = vld [vmem:[%s9240] ss:$8 sm:$0xf]
    %v9242 = vld [vmem:[%s9240] ss:$8 sm:$0xf0]
    %v9243 = vor.u32 %v9241, %v9242
    %s9244 = scalar_lea.vmem %s3, 326
    %v9245 = vld [vmem:[%s9244] ss:$8 sm:$0xf]
    %v9246 = vld [vmem:[%s9244] ss:$8 sm:$0xf0]
    %v9247 = vor.u32 %v9245, %v9246
    %s9248 = scalar_lea.vmem %s3, 454
    %v9249 = vld [vmem:[%s9248] ss:$8 sm:$0xf]
    %v9250 = vld [vmem:[%s9248] ss:$8 sm:$0xf0]
    %v9251 = vor.u32 %v9249, %v9250
    %s9252 = scalar_lea.vmem %s3, 582
    %v9253 = vld [vmem:[%s9252] ss:$8 sm:$0xf]
    %v9254 = vld [vmem:[%s9252] ss:$8 sm:$0xf0]
    %v9255 = vor.u32 %v9253, %v9254
    %s9256 = scalar_lea.vmem %s3, 710
    %v9257 = vld [vmem:[%s9256] ss:$8 sm:$0xf]
    %v9258 = vld [vmem:[%s9256] ss:$8 sm:$0xf0]
    %v9259 = vor.u32 %v9257, %v9258
    %s9260 = scalar_lea.vmem %s3, 838
    %v9261 = vld [vmem:[%s9260] ss:$8 sm:$0xf]
    %v9262 = vld [vmem:[%s9260] ss:$8 sm:$0xf0]
    %v9263 = vor.u32 %v9261, %v9262
    %s9264 = scalar_lea.vmem %s3, 966
    %v9265 = vld [vmem:[%s9264] ss:$8 sm:$0xf]
    %v9266 = vld [vmem:[%s9264] ss:$8 sm:$0xf0]
    %v9267 = vor.u32 %v9265, %v9266
    %s9268 = scalar_lea.vmem %s3, 1094
    %v9269 = vld [vmem:[%s9268] ss:$8 sm:$0xf]
    %v9270 = vld [vmem:[%s9268] ss:$8 sm:$0xf0]
    %v9271 = vor.u32 %v9269, %v9270
    %s9272 = scalar_lea.vmem %s3, 1222
    %v9273 = vld [vmem:[%s9272] ss:$8 sm:$0xf]
    %v9274 = vld [vmem:[%s9272] ss:$8 sm:$0xf0]
    %v9275 = vor.u32 %v9273, %v9274
    %v9278 = vcombine.low %v9231, %v9235
    %v9279 = vcombine.high %v9231, %v9235
    %v9281 = vunpack.c.l.s4 1966171168
    %v9282 = vunpack.c.0.s8 %v9281
    %v9283 = vlaneseq
    %v9284 = vshrl.u32 %v9283, 7
    %v9285 = vsub.s32 %v9282, %v9284
    %v9286 = vrot.slane %v9278, %v9285
    %v9288 = vunpack.c.l.s4 1966171168
    %v9289 = vunpack.c.0.s8 %v9288
    %v9290 = vlaneseq
    %v9291 = vshrl.u32 %v9290, 7
    %v9292 = vsub.s32 %v9289, %v9291
    %v9293 = vrot.slane %v9279, %v9292
    %v9294 = vcombine.high %v9286, %v9286
    %v9295 = vcombine.high %v9293, %v9293
    %v9297 = vunpack.c.l.s4 1966171168
    %v9298 = vunpack.c.0.s8 %v9297
    %v9299 = vlaneseq
    %v9300 = vshrl.u32 %v9299, 7
    %v9301 = vsub.s32 %v9298, %v9300
    %v9302 = vrot.slane %v9286, %v9301
    %v9304 = vunpack.c.l.s4 1966171168
    %v9305 = vunpack.c.0.s8 %v9304
    %v9306 = vlaneseq
    %v9307 = vshrl.u32 %v9306, 7
    %v9308 = vsub.s32 %v9305, %v9307
    %v9309 = vrot.slane %v9293, %v9308
    %v9311 = vunpack.c.l.s4 1966171168
    %v9312 = vunpack.c.0.s8 %v9311
    %v9313 = vlaneseq
    %v9314 = vshrl.u32 %v9313, 7
    %v9315 = vsub.s32 %v9312, %v9314
    %v9316 = vrot.slane %v9294, %v9315
    %v9318 = vunpack.c.l.s4 1966171168
    %v9319 = vunpack.c.0.s8 %v9318
    %v9320 = vlaneseq
    %v9321 = vshrl.u32 %v9320, 7
    %v9322 = vsub.s32 %v9319, %v9321
    %v9323 = vrot.slane %v9295, %v9322
    %v9324 = vcombine.high %v9302, %v9302
    %v9325 = vcombine.high %v9309, %v9309
    %v9326 = vcombine.high %v9316, %v9316
    %v9327 = vcombine.high %v9323, %v9323
    %v9346 = vcombine.low %v9239, %v9243
    %v9347 = vcombine.high %v9239, %v9243
    %v9348 = vcombine.low %v9247, %v9251
    %v9349 = vcombine.high %v9247, %v9251
    %v9350 = vcombine.low %v9255, %v9259
    %v9351 = vcombine.high %v9255, %v9259
    %v9352 = vcombine.low %v9263, %v9267
    %v9353 = vcombine.high %v9263, %v9267
    %v9355 = vunpack.c.l.s4 1966171168
    %v9356 = vunpack.c.0.s8 %v9355
    %v9357 = vlaneseq
    %v9358 = vshrl.u32 %v9357, 7
    %v9359 = vsub.s32 %v9356, %v9358
    %v9360 = vrot.slane %v9346, %v9359
    %v9362 = vunpack.c.l.s4 1966171168
    %v9363 = vunpack.c.0.s8 %v9362
    %v9364 = vlaneseq
    %v9365 = vshrl.u32 %v9364, 7
    %v9366 = vsub.s32 %v9363, %v9365
    %v9367 = vrot.slane %v9347, %v9366
    %v9369 = vunpack.c.l.s4 1966171168
    %v9370 = vunpack.c.0.s8 %v9369
    %v9371 = vlaneseq
    %v9372 = vshrl.u32 %v9371, 7
    %v9373 = vsub.s32 %v9370, %v9372
    %v9374 = vrot.slane %v9348, %v9373
    %v9376 = vunpack.c.l.s4 1966171168
    %v9377 = vunpack.c.0.s8 %v9376
    %v9378 = vlaneseq
    %v9379 = vshrl.u32 %v9378, 7
    %v9380 = vsub.s32 %v9377, %v9379
    %v9381 = vrot.slane %v9349, %v9380
    %v9383 = vunpack.c.l.s4 1966171168
    %v9384 = vunpack.c.0.s8 %v9383
    %v9385 = vlaneseq
    %v9386 = vshrl.u32 %v9385, 7
    %v9387 = vsub.s32 %v9384, %v9386
    %v9388 = vrot.slane %v9350, %v9387
    %v9390 = vunpack.c.l.s4 1966171168
    %v9391 = vunpack.c.0.s8 %v9390
    %v9392 = vlaneseq
    %v9393 = vshrl.u32 %v9392, 7
    %v9394 = vsub.s32 %v9391, %v9393
    %v9395 = vrot.slane %v9351, %v9394
    %v9397 = vunpack.c.l.s4 1966171168
    %v9398 = vunpack.c.0.s8 %v9397
    %v9399 = vlaneseq
    %v9400 = vshrl.u32 %v9399, 7
    %v9401 = vsub.s32 %v9398, %v9400
    %v9402 = vrot.slane %v9352, %v9401
    %v9404 = vunpack.c.l.s4 1966171168
    %v9405 = vunpack.c.0.s8 %v9404
    %v9406 = vlaneseq
    %v9407 = vshrl.u32 %v9406, 7
    %v9408 = vsub.s32 %v9405, %v9407
    %v9409 = vrot.slane %v9353, %v9408
    %v9410 = vcombine.low %v9360, %v9374
    %v9411 = vcombine.high %v9360, %v9374
    %v9412 = vcombine.low %v9367, %v9381
    %v9413 = vcombine.high %v9367, %v9381
    %v9414 = vcombine.low %v9388, %v9402
    %v9415 = vcombine.high %v9388, %v9402
    %v9416 = vcombine.low %v9395, %v9409
    %v9417 = vcombine.high %v9395, %v9409
    %v9419 = vunpack.c.l.s4 1966171168
    %v9420 = vunpack.c.0.s8 %v9419
    %v9421 = vlaneseq
    %v9422 = vshrl.u32 %v9421, 7
    %v9423 = vsub.s32 %v9420, %v9422
    %v9424 = vrot.slane %v9410, %v9423
    %v9426 = vunpack.c.l.s4 1966171168
    %v9427 = vunpack.c.0.s8 %v9426
    %v9428 = vlaneseq
    %v9429 = vshrl.u32 %v9428, 7
    %v9430 = vsub.s32 %v9427, %v9429
    %v9431 = vrot.slane %v9412, %v9430
    %v9433 = vunpack.c.l.s4 1966171168
    %v9434 = vunpack.c.0.s8 %v9433
    %v9435 = vlaneseq
    %v9436 = vshrl.u32 %v9435, 7
    %v9437 = vsub.s32 %v9434, %v9436
    %v9438 = vrot.slane %v9411, %v9437
    %v9440 = vunpack.c.l.s4 1966171168
    %v9441 = vunpack.c.0.s8 %v9440
    %v9442 = vlaneseq
    %v9443 = vshrl.u32 %v9442, 7
    %v9444 = vsub.s32 %v9441, %v9443
    %v9445 = vrot.slane %v9413, %v9444
    %v9447 = vunpack.c.l.s4 1966171168
    %v9448 = vunpack.c.0.s8 %v9447
    %v9449 = vlaneseq
    %v9450 = vshrl.u32 %v9449, 7
    %v9451 = vsub.s32 %v9448, %v9450
    %v9452 = vrot.slane %v9414, %v9451
    %v9454 = vunpack.c.l.s4 1966171168
    %v9455 = vunpack.c.0.s8 %v9454
    %v9456 = vlaneseq
    %v9457 = vshrl.u32 %v9456, 7
    %v9458 = vsub.s32 %v9455, %v9457
    %v9459 = vrot.slane %v9416, %v9458
    %v9461 = vunpack.c.l.s4 1966171168
    %v9462 = vunpack.c.0.s8 %v9461
    %v9463 = vlaneseq
    %v9464 = vshrl.u32 %v9463, 7
    %v9465 = vsub.s32 %v9462, %v9464
    %v9466 = vrot.slane %v9415, %v9465
    %v9468 = vunpack.c.l.s4 1966171168
    %v9469 = vunpack.c.0.s8 %v9468
    %v9470 = vlaneseq
    %v9471 = vshrl.u32 %v9470, 7
    %v9472 = vsub.s32 %v9469, %v9471
    %v9473 = vrot.slane %v9417, %v9472
    %v9474 = vcombine.low %v9424, %v9452
    %v9475 = vcombine.high %v9424, %v9452
    %v9476 = vcombine.low %v9431, %v9459
    %v9477 = vcombine.high %v9431, %v9459
    %v9478 = vcombine.low %v9438, %v9466
    %v9479 = vcombine.high %v9438, %v9466
    %v9480 = vcombine.low %v9445, %v9473
    %v9481 = vcombine.high %v9445, %v9473
    %v9482 = vcombine.low %v9271, %v9275
    %v9483 = vcombine.high %v9271, %v9275
    %v9485 = vunpack.c.l.s4 1966171168
    %v9486 = vunpack.c.0.s8 %v9485
    %v9487 = vlaneseq
    %v9488 = vshrl.u32 %v9487, 7
    %v9489 = vsub.s32 %v9486, %v9488
    %v9490 = vrot.slane %v9482, %v9489
    %v9492 = vunpack.c.l.s4 1966171168
    %v9493 = vunpack.c.0.s8 %v9492
    %v9494 = vlaneseq
    %v9495 = vshrl.u32 %v9494, 7
    %v9496 = vsub.s32 %v9493, %v9495
    %v9497 = vrot.slane %v9483, %v9496
    %v9498 = vcombine.high %v9490, %v9490
    %v9499 = vcombine.high %v9497, %v9497
    %v9501 = vunpack.c.l.s4 1966171168
    %v9502 = vunpack.c.0.s8 %v9501
    %v9503 = vlaneseq
    %v9504 = vshrl.u32 %v9503, 7
    %v9505 = vsub.s32 %v9502, %v9504
    %v9506 = vrot.slane %v9490, %v9505
    %v9508 = vunpack.c.l.s4 1966171168
    %v9509 = vunpack.c.0.s8 %v9508
    %v9510 = vlaneseq
    %v9511 = vshrl.u32 %v9510, 7
    %v9512 = vsub.s32 %v9509, %v9511
    %v9513 = vrot.slane %v9497, %v9512
    %v9515 = vunpack.c.l.s4 1966171168
    %v9516 = vunpack.c.0.s8 %v9515
    %v9517 = vlaneseq
    %v9518 = vshrl.u32 %v9517, 7
    %v9519 = vsub.s32 %v9516, %v9518
    %v9520 = vrot.slane %v9498, %v9519
    %v9522 = vunpack.c.l.s4 1966171168
    %v9523 = vunpack.c.0.s8 %v9522
    %v9524 = vlaneseq
    %v9525 = vshrl.u32 %v9524, 7
    %v9526 = vsub.s32 %v9523, %v9525
    %v9527 = vrot.slane %v9499, %v9526
    %v9528 = vcombine.high %v9506, %v9506
    %v9529 = vcombine.high %v9513, %v9513
    %v9530 = vcombine.high %v9520, %v9520
    %v9531 = vcombine.high %v9527, %v9527
    %9548 = vmatprep.subr.mxu0 %v9478
    %9549 = vmatpush1.xpose.msra.mxu0 %v9474
    %9550 = vmatprep.subr.mxu0 %v9520
    %9551 = vmatpush1.xpose.msra.mxu0 %v9506
    %9552 = vmatprep.subr.mxu0 0.0
    %9553 = vmatpush1.xpose.msra.mxu0 0.0
    %9554 = vmatprep.subr.mxu0 0.0
    %9555 = vmatpush1.xpose.msra.mxu0 0.0
    %9556 = vmatprep.subr.mxu0 0.0
    %9557 = vmatpush1.xpose.msra.mxu0 0.0
    %9558 = vmatprep.subr.mxu0 0.0
    %9559 = vmatpush1.xpose.msra.mxu0 0.0
    %9560 = vmatprep.subr.mxu0 0.0
    %9561 = vmatpush1.xpose.msra.mxu0 0.0
    %9562 = vmatprep.subr.mxu0 0.0
    %9563 = vmatpush1.xpose.msra.mxu0 0.0
    %9564 = vmatprep.subr.mxu0 0.0
    %9565 = vmatpush1.xpose.msra.mxu0 0.0
    %9566 = vmatprep.subr.mxu0 0.0
    %9567 = vmatpush1.xpose.msra.mxu0 0.0
    %9568 = vmatprep.subr.mxu0 0.0
    %9569 = vmatpush1.xpose.msra.mxu0 0.0
    %9570 = vmatprep.subr.mxu0 0.0
    %9571 = vmatpush1.xpose.msra.mxu0 0.0
    %9572 = vmatprep.subr.mxu0 0.0
    %9573 = vmatpush1.xpose.msra.mxu0 0.0
    %9574 = vmatprep.subr.mxu0 0.0
    %9575 = vmatpush1.xpose.msra.mxu0 0.0
    %9576 = vmatprep.subr.mxu0 0.0
    %9577 = vmatpush1.xpose.msra.mxu0 0.0
    %9578 = vmatprep.subr.mxu0 0.0
    %9579 = vmatpush1.xpose.msra.mxu0 0.0
    %9580 = vmatprep.subr.mxu0 0.0
    %9581 = vmatpush1.xpose.msra.mxu0 0.0
    %9582 = vmatprep.subr.mxu0 0.0
    %9583 = vmatpush1.xpose.msra.mxu0 0.0
    %9584 = vmatprep.subr.mxu0 0.0
    %9585 = vmatpush1.xpose.msra.mxu0 0.0
    %9586 = vmatprep.subr.mxu0 0.0
    %9587 = vmatpush1.xpose.msra.mxu0 0.0
    %9588 = vmatprep.subr.mxu0 0.0
    %9589 = vmatpush1.xpose.msra.mxu0 0.0
    %9590 = vmatprep.subr.mxu0 0.0
    %9591 = vmatpush1.xpose.msra.mxu0 0.0
    %9592 = vmatprep.subr.mxu0 0.0
    %9593 = vmatpush1.xpose.msra.mxu0 0.0
    %9594 = vmatprep.subr.mxu0 0.0
    %9595 = vmatpush1.xpose.msra.mxu0 0.0
    %9596 = vmatprep.subr.mxu0 0.0
    %9597 = vmatpush1.xpose.msra.mxu0 0.0
    %9598 = vmatprep.subr.mxu0 0.0
    %9599 = vmatpush1.xpose.msra.mxu0 0.0
    %9600 = vmatprep.subr.mxu0 0.0
    %9601 = vmatpush1.xpose.msra.mxu0 0.0
    %9602 = vmatprep.subr.mxu0 0.0
    %9603 = vmatpush1.xpose.msra.mxu0 0.0
    %9604 = vmatprep.subr.mxu0 0.0
    %9605 = vmatpush1.xpose.msra.mxu0 0.0
    %9606 = vmatprep.subr.mxu0 0.0
    %9607 = vmatpush1.xpose.msra.mxu0 0.0
    %9608 = vmatprep.subr.mxu0 0.0
    %9609 = vmatpush1.xpose.msra.mxu0 0.0
    %9610 = vmatprep.subr.mxu0 0.0
    %9611 = vmatpush1.xpose.msra.mxu0 0.0
    %9612 = vmatprep.mubr.f32.mxu0 %v9316
    %9613 = vmatmul.mubr.f32.gmra.mrb[0].mxu0 %v9302
    %v9614 = vpop.f32.mrb[0].mxu0
    %v9615 = vadd.f32 0.0, %v9614
    %v9616 = vpop.f32.mrb[0].mxu0
    %9617 = vdwg.mxu0
    %9618 = vmatprep.subr.mxu0 %v9479
    %9619 = vmatpush1.xpose.msra.mxu0 %v9475
    %9620 = vmatprep.subr.mxu0 %v9530
    %9621 = vmatpush1.xpose.msra.mxu0 %v9528
    %9622 = vmatprep.subr.mxu0 0.0
    %9623 = vmatpush1.xpose.msra.mxu0 0.0
    %9624 = vmatprep.subr.mxu0 0.0
    %9625 = vmatpush1.xpose.msra.mxu0 0.0
    %9626 = vmatprep.subr.mxu0 0.0
    %9627 = vmatpush1.xpose.msra.mxu0 0.0
    %9628 = vmatprep.subr.mxu0 0.0
    %9629 = vmatpush1.xpose.msra.mxu0 0.0
    %9630 = vmatprep.subr.mxu0 0.0
    %9631 = vmatpush1.xpose.msra.mxu0 0.0
    %9632 = vmatprep.subr.mxu0 0.0
    %9633 = vmatpush1.xpose.msra.mxu0 0.0
    %9634 = vmatprep.subr.mxu0 0.0
    %9635 = vmatpush1.xpose.msra.mxu0 0.0
    %9636 = vmatprep.subr.mxu0 0.0
    %9637 = vmatpush1.xpose.msra.mxu0 0.0
    %9638 = vmatprep.subr.mxu0 0.0
    %9639 = vmatpush1.xpose.msra.mxu0 0.0
    %9640 = vmatprep.subr.mxu0 0.0
    %9641 = vmatpush1.xpose.msra.mxu0 0.0
    %9642 = vmatprep.subr.mxu0 0.0
    %9643 = vmatpush1.xpose.msra.mxu0 0.0
    %9644 = vmatprep.subr.mxu0 0.0
    %9645 = vmatpush1.xpose.msra.mxu0 0.0
    %9646 = vmatprep.subr.mxu0 0.0
    %9647 = vmatpush1.xpose.msra.mxu0 0.0
    %9648 = vmatprep.subr.mxu0 0.0
    %9649 = vmatpush1.xpose.msra.mxu0 0.0
    %9650 = vmatprep.subr.mxu0 0.0
    %9651 = vmatpush1.xpose.msra.mxu0 0.0
    %9652 = vmatprep.subr.mxu0 0.0
    %9653 = vmatpush1.xpose.msra.mxu0 0.0
    %9654 = vmatprep.subr.mxu0 0.0
    %9655 = vmatpush1.xpose.msra.mxu0 0.0
    %9656 = vmatprep.subr.mxu0 0.0
    %9657 = vmatpush1.xpose.msra.mxu0 0.0
    %9658 = vmatprep.subr.mxu0 0.0
    %9659 = vmatpush1.xpose.msra.mxu0 0.0
    %9660 = vmatprep.subr.mxu0 0.0
    %9661 = vmatpush1.xpose.msra.mxu0 0.0
    %9662 = vmatprep.subr.mxu0 0.0
    %9663 = vmatpush1.xpose.msra.mxu0 0.0
    %9664 = vmatprep.subr.mxu0 0.0
    %9665 = vmatpush1.xpose.msra.mxu0 0.0
    %9666 = vmatprep.subr.mxu0 0.0
    %9667 = vmatpush1.xpose.msra.mxu0 0.0
    %9668 = vmatprep.subr.mxu0 0.0
    %9669 = vmatpush1.xpose.msra.mxu0 0.0
    %9670 = vmatprep.subr.mxu0 0.0
    %9671 = vmatpush1.xpose.msra.mxu0 0.0
    %9672 = vmatprep.subr.mxu0 0.0
    %9673 = vmatpush1.xpose.msra.mxu0 0.0
    %9674 = vmatprep.subr.mxu0 0.0
    %9675 = vmatpush1.xpose.msra.mxu0 0.0
    %9676 = vmatprep.subr.mxu0 0.0
    %9677 = vmatpush1.xpose.msra.mxu0 0.0
    %9678 = vmatprep.subr.mxu0 0.0
    %9679 = vmatpush1.xpose.msra.mxu0 0.0
    %9680 = vmatprep.subr.mxu0 0.0
    %9681 = vmatpush1.xpose.msra.mxu0 0.0
    %9682 = vmatprep.mubr.f32.mxu0 %v9326
    %9683 = vmatmul.mubr.f32.gmra.mrb[0].mxu0 %v9324
    %v9684 = vpop.f32.mrb[0].mxu0
    %v9685 = vadd.f32 %v9615, %v9684
    %v9686 = vpop.f32.mrb[0].mxu0
    %9687 = vdwg.mxu0
    %9688 = vmatprep.subr.mxu0 %v9480
    %9689 = vmatpush1.xpose.msra.mxu0 %v9476
    %9690 = vmatprep.subr.mxu0 %v9527
    %9691 = vmatpush1.xpose.msra.mxu0 %v9513
    %9692 = vmatprep.subr.mxu0 0.0
    %9693 = vmatpush1.xpose.msra.mxu0 0.0
    %9694 = vmatprep.subr.mxu0 0.0
    %9695 = vmatpush1.xpose.msra.mxu0 0.0
    %9696 = vmatprep.subr.mxu0 0.0
    %9697 = vmatpush1.xpose.msra.mxu0 0.0
    %9698 = vmatprep.subr.mxu0 0.0
    %9699 = vmatpush1.xpose.msra.mxu0 0.0
    %9700 = vmatprep.subr.mxu0 0.0
    %9701 = vmatpush1.xpose.msra.mxu0 0.0
    %9702 = vmatprep.subr.mxu0 0.0
    %9703 = vmatpush1.xpose.msra.mxu0 0.0
    %9704 = vmatprep.subr.mxu0 0.0
    %9705 = vmatpush1.xpose.msra.mxu0 0.0
    %9706 = vmatprep.subr.mxu0 0.0
    %9707 = vmatpush1.xpose.msra.mxu0 0.0
    %9708 = vmatprep.subr.mxu0 0.0
    %9709 = vmatpush1.xpose.msra.mxu0 0.0
    %9710 = vmatprep.subr.mxu0 0.0
    %9711 = vmatpush1.xpose.msra.mxu0 0.0
    %9712 = vmatprep.subr.mxu0 0.0
    %9713 = vmatpush1.xpose.msra.mxu0 0.0
    %9714 = vmatprep.subr.mxu0 0.0
    %9715 = vmatpush1.xpose.msra.mxu0 0.0
    %9716 = vmatprep.subr.mxu0 0.0
    %9717 = vmatpush1.xpose.msra.mxu0 0.0
    %9718 = vmatprep.subr.mxu0 0.0
    %9719 = vmatpush1.xpose.msra.mxu0 0.0
    %9720 = vmatprep.subr.mxu0 0.0
    %9721 = vmatpush1.xpose.msra.mxu0 0.0
    %9722 = vmatprep.subr.mxu0 0.0
    %9723 = vmatpush1.xpose.msra.mxu0 0.0
    %9724 = vmatprep.subr.mxu0 0.0
    %9725 = vmatpush1.xpose.msra.mxu0 0.0
    %9726 = vmatprep.subr.mxu0 0.0
    %9727 = vmatpush1.xpose.msra.mxu0 0.0
    %9728 = vmatprep.subr.mxu0 0.0
    %9729 = vmatpush1.xpose.msra.mxu0 0.0
    %9730 = vmatprep.subr.mxu0 0.0
    %9731 = vmatpush1.xpose.msra.mxu0 0.0
    %9732 = vmatprep.subr.mxu0 0.0
    %9733 = vmatpush1.xpose.msra.mxu0 0.0
    %9734 = vmatprep.subr.mxu0 0.0
    %9735 = vmatpush1.xpose.msra.mxu0 0.0
    %9736 = vmatprep.subr.mxu0 0.0
    %9737 = vmatpush1.xpose.msra.mxu0 0.0
    %9738 = vmatprep.subr.mxu0 0.0
    %9739 = vmatpush1.xpose.msra.mxu0 0.0
    %9740 = vmatprep.subr.mxu0 0.0
    %9741 = vmatpush1.xpose.msra.mxu0 0.0
    %9742 = vmatprep.subr.mxu0 0.0
    %9743 = vmatpush1.xpose.msra.mxu0 0.0
    %9744 = vmatprep.subr.mxu0 0.0
    %9745 = vmatpush1.xpose.msra.mxu0 0.0
    %9746 = vmatprep.subr.mxu0 0.0
    %9747 = vmatpush1.xpose.msra.mxu0 0.0
    %9748 = vmatprep.subr.mxu0 0.0
    %9749 = vmatpush1.xpose.msra.mxu0 0.0
    %9750 = vmatprep.subr.mxu0 0.0
    %9751 = vmatpush1.xpose.msra.mxu0 0.0
    %9752 = vmatprep.mubr.f32.mxu0 %v9323
    %9753 = vmatmul.mubr.f32.gmra.mrb[0].mxu0 %v9309
    %v9754 = vpop.f32.mrb[0].mxu0
    %v9755 = vadd.f32 %v9685, %v9754
    %v9756 = vpop.f32.mrb[0].mxu0
    %9757 = vdwg.mxu0
    %9758 = vmatprep.subr.mxu0 %v9481
    %9759 = vmatpush1.xpose.msra.mxu0 %v9477
    %9760 = vmatprep.subr.mxu0 %v9531
    %9761 = vmatpush1.xpose.msra.mxu0 %v9529
    %9762 = vmatprep.subr.mxu0 0.0
    %9763 = vmatpush1.xpose.msra.mxu0 0.0
    %9764 = vmatprep.subr.mxu0 0.0
    %9765 = vmatpush1.xpose.msra.mxu0 0.0
    %9766 = vmatprep.subr.mxu0 0.0
    %9767 = vmatpush1.xpose.msra.mxu0 0.0
    %9768 = vmatprep.subr.mxu0 0.0
    %9769 = vmatpush1.xpose.msra.mxu0 0.0
    %9770 = vmatprep.subr.mxu0 0.0
    %9771 = vmatpush1.xpose.msra.mxu0 0.0
    %9772 = vmatprep.subr.mxu0 0.0
    %9773 = vmatpush1.xpose.msra.mxu0 0.0
    %9774 = vmatprep.subr.mxu0 0.0
    %9775 = vmatpush1.xpose.msra.mxu0 0.0
    %9776 = vmatprep.subr.mxu0 0.0
    %9777 = vmatpush1.xpose.msra.mxu0 0.0
    %9778 = vmatprep.subr.mxu0 0.0
    %9779 = vmatpush1.xpose.msra.mxu0 0.0
    %9780 = vmatprep.subr.mxu0 0.0
    %9781 = vmatpush1.xpose.msra.mxu0 0.0
    %9782 = vmatprep.subr.mxu0 0.0
    %9783 = vmatpush1.xpose.msra.mxu0 0.0
    %9784 = vmatprep.subr.mxu0 0.0
    %9785 = vmatpush1.xpose.msra.mxu0 0.0
    %9786 = vmatprep.subr.mxu0 0.0
    %9787 = vmatpush1.xpose.msra.mxu0 0.0
    %9788 = vmatprep.subr.mxu0 0.0
    %9789 = vmatpush1.xpose.msra.mxu0 0.0
    %9790 = vmatprep.subr.mxu0 0.0
    %9791 = vmatpush1.xpose.msra.mxu0 0.0
    %9792 = vmatprep.subr.mxu0 0.0
    %9793 = vmatpush1.xpose.msra.mxu0 0.0
    %9794 = vmatprep.subr.mxu0 0.0
    %9795 = vmatpush1.xpose.msra.mxu0 0.0
    %9796 = vmatprep.subr.mxu0 0.0
    %9797 = vmatpush1.xpose.msra.mxu0 0.0
    %9798 = vmatprep.subr.mxu0 0.0
    %9799 = vmatpush1.xpose.msra.mxu0 0.0
    %9800 = vmatprep.subr.mxu0 0.0
    %9801 = vmatpush1.xpose.msra.mxu0 0.0
    %9802 = vmatprep.subr.mxu0 0.0
    %9803 = vmatpush1.xpose.msra.mxu0 0.0
    %9804 = vmatprep.subr.mxu0 0.0
    %9805 = vmatpush1.xpose.msra.mxu0 0.0
    %9806 = vmatprep.subr.mxu0 0.0
    %9807 = vmatpush1.xpose.msra.mxu0 0.0
    %9808 = vmatprep.subr.mxu0 0.0
    %9809 = vmatpush1.xpose.msra.mxu0 0.0
    %9810 = vmatprep.subr.mxu0 0.0
    %9811 = vmatpush1.xpose.msra.mxu0 0.0
    %9812 = vmatprep.subr.mxu0 0.0
    %9813 = vmatpush1.xpose.msra.mxu0 0.0
    %9814 = vmatprep.subr.mxu0 0.0
    %9815 = vmatpush1.xpose.msra.mxu0 0.0
    %9816 = vmatprep.subr.mxu0 0.0
    %9817 = vmatpush1.xpose.msra.mxu0 0.0
    %9818 = vmatprep.subr.mxu0 0.0
    %9819 = vmatpush1.xpose.msra.mxu0 0.0
    %9820 = vmatprep.subr.mxu0 0.0
    %9821 = vmatpush1.xpose.msra.mxu0 0.0
    %9822 = vmatprep.mubr.f32.mxu0 %v9327
    %9823 = vmatmul.mubr.f32.gmra.mrb[0].mxu0 %v9325
    %v9824 = vpop.f32.mrb[0].mxu0
    %v9825 = vadd.f32 %v9755, %v9824
    %v9826 = vpop.f32.mrb[0].mxu0
    %9827 = vdwg.mxu0
    %v9828 = vadd.f32 %v9227, %v9825
    %s9829 = scalar_lea.vmem [#allocation2], 71
    %v9830 = vld [vmem:[%s9829] ss:$8 sm:$0xf]
    %v9831 = vld [vmem:[%s9829] ss:$8 sm:$0xf0]
    %v9832 = vor.u32 %v9830, %v9831
    %s9833 = scalar_lea.vmem [#allocation2], 199
    %v9834 = vld [vmem:[%s9833] ss:$8 sm:$0xf]
    %v9835 = vld [vmem:[%s9833] ss:$8 sm:$0xf0]
    %v9836 = vor.u32 %v9834, %v9835
    %s9837 = scalar_lea.vmem %s3, 71
    %v9838 = vld [vmem:[%s9837] ss:$8 sm:$0xf]
    %v9839 = vld [vmem:[%s9837] ss:$8 sm:$0xf0]
    %v9840 = vor.u32 %v9838, %v9839
    %s9841 = scalar_lea.vmem %s3, 199
    %v9842 = vld [vmem:[%s9841] ss:$8 sm:$0xf]
    %v9843 = vld [vmem:[%s9841] ss:$8 sm:$0xf0]
    %v9844 = vor.u32 %v9842, %v9843
    %s9845 = scalar_lea.vmem %s3, 327
    %v9846 = vld [vmem:[%s9845] ss:$8 sm:$0xf]
    %v9847 = vld [vmem:[%s9845] ss:$8 sm:$0xf0]
    %v9848 = vor.u32 %v9846, %v9847
    %s9849 = scalar_lea.vmem %s3, 455
    %v9850 = vld [vmem:[%s9849] ss:$8 sm:$0xf]
    %v9851 = vld [vmem:[%s9849] ss:$8 sm:$0xf0]
    %v9852 = vor.u32 %v9850, %v9851
    %s9853 = scalar_lea.vmem %s3, 583
    %v9854 = vld [vmem:[%s9853] ss:$8 sm:$0xf]
    %v9855 = vld [vmem:[%s9853] ss:$8 sm:$0xf0]
    %v9856 = vor.u32 %v9854, %v9855
    %s9857 = scalar_lea.vmem %s3, 711
    %v9858 = vld [vmem:[%s9857] ss:$8 sm:$0xf]
    %v9859 = vld [vmem:[%s9857] ss:$8 sm:$0xf0]
    %v9860 = vor.u32 %v9858, %v9859
    %s9861 = scalar_lea.vmem %s3, 839
    %v9862 = vld [vmem:[%s9861] ss:$8 sm:$0xf]
    %v9863 = vld [vmem:[%s9861] ss:$8 sm:$0xf0]
    %v9864 = vor.u32 %v9862, %v9863
    %s9865 = scalar_lea.vmem %s3, 967
    %v9866 = vld [vmem:[%s9865] ss:$8 sm:$0xf]
    %v9867 = vld [vmem:[%s9865] ss:$8 sm:$0xf0]
    %v9868 = vor.u32 %v9866, %v9867
    %s9869 = scalar_lea.vmem %s3, 1095
    %v9870 = vld [vmem:[%s9869] ss:$8 sm:$0xf]
    %v9871 = vld [vmem:[%s9869] ss:$8 sm:$0xf0]
    %v9872 = vor.u32 %v9870, %v9871
    %s9873 = scalar_lea.vmem %s3, 1223
    %v9874 = vld [vmem:[%s9873] ss:$8 sm:$0xf]
    %v9875 = vld [vmem:[%s9873] ss:$8 sm:$0xf0]
    %v9876 = vor.u32 %v9874, %v9875
    %v9879 = vcombine.low %v9832, %v9836
    %v9880 = vcombine.high %v9832, %v9836
    %v9882 = vunpack.c.l.s4 1966171168
    %v9883 = vunpack.c.0.s8 %v9882
    %v9884 = vlaneseq
    %v9885 = vshrl.u32 %v9884, 7
    %v9886 = vsub.s32 %v9883, %v9885
    %v9887 = vrot.slane %v9879, %v9886
    %v9889 = vunpack.c.l.s4 1966171168
    %v9890 = vunpack.c.0.s8 %v9889
    %v9891 = vlaneseq
    %v9892 = vshrl.u32 %v9891, 7
    %v9893 = vsub.s32 %v9890, %v9892
    %v9894 = vrot.slane %v9880, %v9893
    %v9895 = vcombine.high %v9887, %v9887
    %v9896 = vcombine.high %v9894, %v9894
    %v9898 = vunpack.c.l.s4 1966171168
    %v9899 = vunpack.c.0.s8 %v9898
    %v9900 = vlaneseq
    %v9901 = vshrl.u32 %v9900, 7
    %v9902 = vsub.s32 %v9899, %v9901
    %v9903 = vrot.slane %v9887, %v9902
    %v9905 = vunpack.c.l.s4 1966171168
    %v9906 = vunpack.c.0.s8 %v9905
    %v9907 = vlaneseq
    %v9908 = vshrl.u32 %v9907, 7
    %v9909 = vsub.s32 %v9906, %v9908
    %v9910 = vrot.slane %v9894, %v9909
    %v9912 = vunpack.c.l.s4 1966171168
    %v9913 = vunpack.c.0.s8 %v9912
    %v9914 = vlaneseq
    %v9915 = vshrl.u32 %v9914, 7
    %v9916 = vsub.s32 %v9913, %v9915
    %v9917 = vrot.slane %v9895, %v9916
    %v9919 = vunpack.c.l.s4 1966171168
    %v9920 = vunpack.c.0.s8 %v9919
    %v9921 = vlaneseq
    %v9922 = vshrl.u32 %v9921, 7
    %v9923 = vsub.s32 %v9920, %v9922
    %v9924 = vrot.slane %v9896, %v9923
    %v9925 = vcombine.high %v9903, %v9903
    %v9926 = vcombine.high %v9910, %v9910
    %v9927 = vcombine.high %v9917, %v9917
    %v9928 = vcombine.high %v9924, %v9924
    %v9947 = vcombine.low %v9840, %v9844
    %v9948 = vcombine.high %v9840, %v9844
    %v9949 = vcombine.low %v9848, %v9852
    %v9950 = vcombine.high %v9848, %v9852
    %v9951 = vcombine.low %v9856, %v9860
    %v9952 = vcombine.high %v9856, %v9860
    %v9953 = vcombine.low %v9864, %v9868
    %v9954 = vcombine.high %v9864, %v9868
    %v9956 = vunpack.c.l.s4 1966171168
    %v9957 = vunpack.c.0.s8 %v9956
    %v9958 = vlaneseq
    %v9959 = vshrl.u32 %v9958, 7
    %v9960 = vsub.s32 %v9957, %v9959
    %v9961 = vrot.slane %v9947, %v9960
    %v9963 = vunpack.c.l.s4 1966171168
    %v9964 = vunpack.c.0.s8 %v9963
    %v9965 = vlaneseq
    %v9966 = vshrl.u32 %v9965, 7
    %v9967 = vsub.s32 %v9964, %v9966
    %v9968 = vrot.slane %v9948, %v9967
    %v9970 = vunpack.c.l.s4 1966171168
    %v9971 = vunpack.c.0.s8 %v9970
    %v9972 = vlaneseq
    %v9973 = vshrl.u32 %v9972, 7
    %v9974 = vsub.s32 %v9971, %v9973
    %v9975 = vrot.slane %v9949, %v9974
    %v9977 = vunpack.c.l.s4 1966171168
    %v9978 = vunpack.c.0.s8 %v9977
    %v9979 = vlaneseq
    %v9980 = vshrl.u32 %v9979, 7
    %v9981 = vsub.s32 %v9978, %v9980
    %v9982 = vrot.slane %v9950, %v9981
    %v9984 = vunpack.c.l.s4 1966171168
    %v9985 = vunpack.c.0.s8 %v9984
    %v9986 = vlaneseq
    %v9987 = vshrl.u32 %v9986, 7
    %v9988 = vsub.s32 %v9985, %v9987
    %v9989 = vrot.slane %v9951, %v9988
    %v9991 = vunpack.c.l.s4 1966171168
    %v9992 = vunpack.c.0.s8 %v9991
    %v9993 = vlaneseq
    %v9994 = vshrl.u32 %v9993, 7
    %v9995 = vsub.s32 %v9992, %v9994
    %v9996 = vrot.slane %v9952, %v9995
    %v9998 = vunpack.c.l.s4 1966171168
    %v9999 = vunpack.c.0.s8 %v9998
    %v10000 = vlaneseq
    %v10001 = vshrl.u32 %v10000, 7
    %v10002 = vsub.s32 %v9999, %v10001
    %v10003 = vrot.slane %v9953, %v10002
    %v10005 = vunpack.c.l.s4 1966171168
    %v10006 = vunpack.c.0.s8 %v10005
    %v10007 = vlaneseq
    %v10008 = vshrl.u32 %v10007, 7
    %v10009 = vsub.s32 %v10006, %v10008
    %v10010 = vrot.slane %v9954, %v10009
    %v10011 = vcombine.low %v9961, %v9975
    %v10012 = vcombine.high %v9961, %v9975
    %v10013 = vcombine.low %v9968, %v9982
    %v10014 = vcombine.high %v9968, %v9982
    %v10015 = vcombine.low %v9989, %v10003
    %v10016 = vcombine.high %v9989, %v10003
    %v10017 = vcombine.low %v9996, %v10010
    %v10018 = vcombine.high %v9996, %v10010
    %v10020 = vunpack.c.l.s4 1966171168
    %v10021 = vunpack.c.0.s8 %v10020
    %v10022 = vlaneseq
    %v10023 = vshrl.u32 %v10022, 7
    %v10024 = vsub.s32 %v10021, %v10023
    %v10025 = vrot.slane %v10011, %v10024
    %v10027 = vunpack.c.l.s4 1966171168
    %v10028 = vunpack.c.0.s8 %v10027
    %v10029 = vlaneseq
    %v10030 = vshrl.u32 %v10029, 7
    %v10031 = vsub.s32 %v10028, %v10030
    %v10032 = vrot.slane %v10013, %v10031
    %v10034 = vunpack.c.l.s4 1966171168
    %v10035 = vunpack.c.0.s8 %v10034
    %v10036 = vlaneseq
    %v10037 = vshrl.u32 %v10036, 7
    %v10038 = vsub.s32 %v10035, %v10037
    %v10039 = vrot.slane %v10012, %v10038
    %v10041 = vunpack.c.l.s4 1966171168
    %v10042 = vunpack.c.0.s8 %v10041
    %v10043 = vlaneseq
    %v10044 = vshrl.u32 %v10043, 7
    %v10045 = vsub.s32 %v10042, %v10044
    %v10046 = vrot.slane %v10014, %v10045
    %v10048 = vunpack.c.l.s4 1966171168
    %v10049 = vunpack.c.0.s8 %v10048
    %v10050 = vlaneseq
    %v10051 = vshrl.u32 %v10050, 7
    %v10052 = vsub.s32 %v10049, %v10051
    %v10053 = vrot.slane %v10015, %v10052
    %v10055 = vunpack.c.l.s4 1966171168
    %v10056 = vunpack.c.0.s8 %v10055
    %v10057 = vlaneseq
    %v10058 = vshrl.u32 %v10057, 7
    %v10059 = vsub.s32 %v10056, %v10058
    %v10060 = vrot.slane %v10017, %v10059
    %v10062 = vunpack.c.l.s4 1966171168
    %v10063 = vunpack.c.0.s8 %v10062
    %v10064 = vlaneseq
    %v10065 = vshrl.u32 %v10064, 7
    %v10066 = vsub.s32 %v10063, %v10065
    %v10067 = vrot.slane %v10016, %v10066
    %v10069 = vunpack.c.l.s4 1966171168
    %v10070 = vunpack.c.0.s8 %v10069
    %v10071 = vlaneseq
    %v10072 = vshrl.u32 %v10071, 7
    %v10073 = vsub.s32 %v10070, %v10072
    %v10074 = vrot.slane %v10018, %v10073
    %v10075 = vcombine.low %v10025, %v10053
    %v10076 = vcombine.high %v10025, %v10053
    %v10077 = vcombine.low %v10032, %v10060
    %v10078 = vcombine.high %v10032, %v10060
    %v10079 = vcombine.low %v10039, %v10067
    %v10080 = vcombine.high %v10039, %v10067
    %v10081 = vcombine.low %v10046, %v10074
    %v10082 = vcombine.high %v10046, %v10074
    %v10083 = vcombine.low %v9872, %v9876
    %v10084 = vcombine.high %v9872, %v9876
    %v10086 = vunpack.c.l.s4 1966171168
    %v10087 = vunpack.c.0.s8 %v10086
    %v10088 = vlaneseq
    %v10089 = vshrl.u32 %v10088, 7
    %v10090 = vsub.s32 %v10087, %v10089
    %v10091 = vrot.slane %v10083, %v10090
    %v10093 = vunpack.c.l.s4 1966171168
    %v10094 = vunpack.c.0.s8 %v10093
    %v10095 = vlaneseq
    %v10096 = vshrl.u32 %v10095, 7
    %v10097 = vsub.s32 %v10094, %v10096
    %v10098 = vrot.slane %v10084, %v10097
    %v10099 = vcombine.high %v10091, %v10091
    %v10100 = vcombine.high %v10098, %v10098
    %v10102 = vunpack.c.l.s4 1966171168
    %v10103 = vunpack.c.0.s8 %v10102
    %v10104 = vlaneseq
    %v10105 = vshrl.u32 %v10104, 7
    %v10106 = vsub.s32 %v10103, %v10105
    %v10107 = vrot.slane %v10091, %v10106
    %v10109 = vunpack.c.l.s4 1966171168
    %v10110 = vunpack.c.0.s8 %v10109
    %v10111 = vlaneseq
    %v10112 = vshrl.u32 %v10111, 7
    %v10113 = vsub.s32 %v10110, %v10112
    %v10114 = vrot.slane %v10098, %v10113
    %v10116 = vunpack.c.l.s4 1966171168
    %v10117 = vunpack.c.0.s8 %v10116
    %v10118 = vlaneseq
    %v10119 = vshrl.u32 %v10118, 7
    %v10120 = vsub.s32 %v10117, %v10119
    %v10121 = vrot.slane %v10099, %v10120
    %v10123 = vunpack.c.l.s4 1966171168
    %v10124 = vunpack.c.0.s8 %v10123
    %v10125 = vlaneseq
    %v10126 = vshrl.u32 %v10125, 7
    %v10127 = vsub.s32 %v10124, %v10126
    %v10128 = vrot.slane %v10100, %v10127
    %v10129 = vcombine.high %v10107, %v10107
    %v10130 = vcombine.high %v10114, %v10114
    %v10131 = vcombine.high %v10121, %v10121
    %v10132 = vcombine.high %v10128, %v10128
    %10149 = vmatprep.subr.mxu0 %v10079
    %10150 = vmatpush1.xpose.msra.mxu0 %v10075
    %10151 = vmatprep.subr.mxu0 %v10121
    %10152 = vmatpush1.xpose.msra.mxu0 %v10107
    %10153 = vmatprep.subr.mxu0 0.0
    %10154 = vmatpush1.xpose.msra.mxu0 0.0
    %10155 = vmatprep.subr.mxu0 0.0
    %10156 = vmatpush1.xpose.msra.mxu0 0.0
    %10157 = vmatprep.subr.mxu0 0.0
    %10158 = vmatpush1.xpose.msra.mxu0 0.0
    %10159 = vmatprep.subr.mxu0 0.0
    %10160 = vmatpush1.xpose.msra.mxu0 0.0
    %10161 = vmatprep.subr.mxu0 0.0
    %10162 = vmatpush1.xpose.msra.mxu0 0.0
    %10163 = vmatprep.subr.mxu0 0.0
    %10164 = vmatpush1.xpose.msra.mxu0 0.0
    %10165 = vmatprep.subr.mxu0 0.0
    %10166 = vmatpush1.xpose.msra.mxu0 0.0
    %10167 = vmatprep.subr.mxu0 0.0
    %10168 = vmatpush1.xpose.msra.mxu0 0.0
    %10169 = vmatprep.subr.mxu0 0.0
    %10170 = vmatpush1.xpose.msra.mxu0 0.0
    %10171 = vmatprep.subr.mxu0 0.0
    %10172 = vmatpush1.xpose.msra.mxu0 0.0
    %10173 = vmatprep.subr.mxu0 0.0
    %10174 = vmatpush1.xpose.msra.mxu0 0.0
    %10175 = vmatprep.subr.mxu0 0.0
    %10176 = vmatpush1.xpose.msra.mxu0 0.0
    %10177 = vmatprep.subr.mxu0 0.0
    %10178 = vmatpush1.xpose.msra.mxu0 0.0
    %10179 = vmatprep.subr.mxu0 0.0
    %10180 = vmatpush1.xpose.msra.mxu0 0.0
    %10181 = vmatprep.subr.mxu0 0.0
    %10182 = vmatpush1.xpose.msra.mxu0 0.0
    %10183 = vmatprep.subr.mxu0 0.0
    %10184 = vmatpush1.xpose.msra.mxu0 0.0
    %10185 = vmatprep.subr.mxu0 0.0
    %10186 = vmatpush1.xpose.msra.mxu0 0.0
    %10187 = vmatprep.subr.mxu0 0.0
    %10188 = vmatpush1.xpose.msra.mxu0 0.0
    %10189 = vmatprep.subr.mxu0 0.0
    %10190 = vmatpush1.xpose.msra.mxu0 0.0
    %10191 = vmatprep.subr.mxu0 0.0
    %10192 = vmatpush1.xpose.msra.mxu0 0.0
    %10193 = vmatprep.subr.mxu0 0.0
    %10194 = vmatpush1.xpose.msra.mxu0 0.0
    %10195 = vmatprep.subr.mxu0 0.0
    %10196 = vmatpush1.xpose.msra.mxu0 0.0
    %10197 = vmatprep.subr.mxu0 0.0
    %10198 = vmatpush1.xpose.msra.mxu0 0.0
    %10199 = vmatprep.subr.mxu0 0.0
    %10200 = vmatpush1.xpose.msra.mxu0 0.0
    %10201 = vmatprep.subr.mxu0 0.0
    %10202 = vmatpush1.xpose.msra.mxu0 0.0
    %10203 = vmatprep.subr.mxu0 0.0
    %10204 = vmatpush1.xpose.msra.mxu0 0.0
    %10205 = vmatprep.subr.mxu0 0.0
    %10206 = vmatpush1.xpose.msra.mxu0 0.0
    %10207 = vmatprep.subr.mxu0 0.0
    %10208 = vmatpush1.xpose.msra.mxu0 0.0
    %10209 = vmatprep.subr.mxu0 0.0
    %10210 = vmatpush1.xpose.msra.mxu0 0.0
    %10211 = vmatprep.subr.mxu0 0.0
    %10212 = vmatpush1.xpose.msra.mxu0 0.0
    %10213 = vmatprep.mubr.f32.mxu0 %v9917
    %10214 = vmatmul.mubr.f32.gmra.mrb[0].mxu0 %v9903
    %v10215 = vpop.f32.mrb[0].mxu0
    %v10216 = vadd.f32 0.0, %v10215
    %v10217 = vpop.f32.mrb[0].mxu0
    %10218 = vdwg.mxu0
    %10219 = vmatprep.subr.mxu0 %v10080
    %10220 = vmatpush1.xpose.msra.mxu0 %v10076
    %10221 = vmatprep.subr.mxu0 %v10131
    %10222 = vmatpush1.xpose.msra.mxu0 %v10129
    %10223 = vmatprep.subr.mxu0 0.0
    %10224 = vmatpush1.xpose.msra.mxu0 0.0
    %10225 = vmatprep.subr.mxu0 0.0
    %10226 = vmatpush1.xpose.msra.mxu0 0.0
    %10227 = vmatprep.subr.mxu0 0.0
    %10228 = vmatpush1.xpose.msra.mxu0 0.0
    %10229 = vmatprep.subr.mxu0 0.0
    %10230 = vmatpush1.xpose.msra.mxu0 0.0
    %10231 = vmatprep.subr.mxu0 0.0
    %10232 = vmatpush1.xpose.msra.mxu0 0.0
    %10233 = vmatprep.subr.mxu0 0.0
    %10234 = vmatpush1.xpose.msra.mxu0 0.0
    %10235 = vmatprep.subr.mxu0 0.0
    %10236 = vmatpush1.xpose.msra.mxu0 0.0
    %10237 = vmatprep.subr.mxu0 0.0
    %10238 = vmatpush1.xpose.msra.mxu0 0.0
    %10239 = vmatprep.subr.mxu0 0.0
    %10240 = vmatpush1.xpose.msra.mxu0 0.0
    %10241 = vmatprep.subr.mxu0 0.0
    %10242 = vmatpush1.xpose.msra.mxu0 0.0
    %10243 = vmatprep.subr.mxu0 0.0
    %10244 = vmatpush1.xpose.msra.mxu0 0.0
    %10245 = vmatprep.subr.mxu0 0.0
    %10246 = vmatpush1.xpose.msra.mxu0 0.0
    %10247 = vmatprep.subr.mxu0 0.0
    %10248 = vmatpush1.xpose.msra.mxu0 0.0
    %10249 = vmatprep.subr.mxu0 0.0
    %10250 = vmatpush1.xpose.msra.mxu0 0.0
    %10251 = vmatprep.subr.mxu0 0.0
    %10252 = vmatpush1.xpose.msra.mxu0 0.0
    %10253 = vmatprep.subr.mxu0 0.0
    %10254 = vmatpush1.xpose.msra.mxu0 0.0
    %10255 = vmatprep.subr.mxu0 0.0
    %10256 = vmatpush1.xpose.msra.mxu0 0.0
    %10257 = vmatprep.subr.mxu0 0.0
    %10258 = vmatpush1.xpose.msra.mxu0 0.0
    %10259 = vmatprep.subr.mxu0 0.0
    %10260 = vmatpush1.xpose.msra.mxu0 0.0
    %10261 = vmatprep.subr.mxu0 0.0
    %10262 = vmatpush1.xpose.msra.mxu0 0.0
    %10263 = vmatprep.subr.mxu0 0.0
    %10264 = vmatpush1.xpose.msra.mxu0 0.0
    %10265 = vmatprep.subr.mxu0 0.0
    %10266 = vmatpush1.xpose.msra.mxu0 0.0
    %10267 = vmatprep.subr.mxu0 0.0
    %10268 = vmatpush1.xpose.msra.mxu0 0.0
    %10269 = vmatprep.subr.mxu0 0.0
    %10270 = vmatpush1.xpose.msra.mxu0 0.0
    %10271 = vmatprep.subr.mxu0 0.0
    %10272 = vmatpush1.xpose.msra.mxu0 0.0
    %10273 = vmatprep.subr.mxu0 0.0
    %10274 = vmatpush1.xpose.msra.mxu0 0.0
    %10275 = vmatprep.subr.mxu0 0.0
    %10276 = vmatpush1.xpose.msra.mxu0 0.0
    %10277 = vmatprep.subr.mxu0 0.0
    %10278 = vmatpush1.xpose.msra.mxu0 0.0
    %10279 = vmatprep.subr.mxu0 0.0
    %10280 = vmatpush1.xpose.msra.mxu0 0.0
    %10281 = vmatprep.subr.mxu0 0.0
    %10282 = vmatpush1.xpose.msra.mxu0 0.0
    %10283 = vmatprep.mubr.f32.mxu0 %v9927
    %10284 = vmatmul.mubr.f32.gmra.mrb[0].mxu0 %v9925
    %v10285 = vpop.f32.mrb[0].mxu0
    %v10286 = vadd.f32 %v10216, %v10285
    %v10287 = vpop.f32.mrb[0].mxu0
    %10288 = vdwg.mxu0
    %10289 = vmatprep.subr.mxu0 %v10081
    %10290 = vmatpush1.xpose.msra.mxu0 %v10077
    %10291 = vmatprep.subr.mxu0 %v10128
    %10292 = vmatpush1.xpose.msra.mxu0 %v10114
    %10293 = vmatprep.subr.mxu0 0.0
    %10294 = vmatpush1.xpose.msra.mxu0 0.0
    %10295 = vmatprep.subr.mxu0 0.0
    %10296 = vmatpush1.xpose.msra.mxu0 0.0
    %10297 = vmatprep.subr.mxu0 0.0
    %10298 = vmatpush1.xpose.msra.mxu0 0.0
    %10299 = vmatprep.subr.mxu0 0.0
    %10300 = vmatpush1.xpose.msra.mxu0 0.0
    %10301 = vmatprep.subr.mxu0 0.0
    %10302 = vmatpush1.xpose.msra.mxu0 0.0
    %10303 = vmatprep.subr.mxu0 0.0
    %10304 = vmatpush1.xpose.msra.mxu0 0.0
    %10305 = vmatprep.subr.mxu0 0.0
    %10306 = vmatpush1.xpose.msra.mxu0 0.0
    %10307 = vmatprep.subr.mxu0 0.0
    %10308 = vmatpush1.xpose.msra.mxu0 0.0
    %10309 = vmatprep.subr.mxu0 0.0
    %10310 = vmatpush1.xpose.msra.mxu0 0.0
    %10311 = vmatprep.subr.mxu0 0.0
    %10312 = vmatpush1.xpose.msra.mxu0 0.0
    %10313 = vmatprep.subr.mxu0 0.0
    %10314 = vmatpush1.xpose.msra.mxu0 0.0
    %10315 = vmatprep.subr.mxu0 0.0
    %10316 = vmatpush1.xpose.msra.mxu0 0.0
    %10317 = vmatprep.subr.mxu0 0.0
    %10318 = vmatpush1.xpose.msra.mxu0 0.0
    %10319 = vmatprep.subr.mxu0 0.0
    %10320 = vmatpush1.xpose.msra.mxu0 0.0
    %10321 = vmatprep.subr.mxu0 0.0
    %10322 = vmatpush1.xpose.msra.mxu0 0.0
    %10323 = vmatprep.subr.mxu0 0.0
    %10324 = vmatpush1.xpose.msra.mxu0 0.0
    %10325 = vmatprep.subr.mxu0 0.0
    %10326 = vmatpush1.xpose.msra.mxu0 0.0
    %10327 = vmatprep.subr.mxu0 0.0
    %10328 = vmatpush1.xpose.msra.mxu0 0.0
    %10329 = vmatprep.subr.mxu0 0.0
    %10330 = vmatpush1.xpose.msra.mxu0 0.0
    %10331 = vmatprep.subr.mxu0 0.0
    %10332 = vmatpush1.xpose.msra.mxu0 0.0
    %10333 = vmatprep.subr.mxu0 0.0
    %10334 = vmatpush1.xpose.msra.mxu0 0.0
    %10335 = vmatprep.subr.mxu0 0.0
    %10336 = vmatpush1.xpose.msra.mxu0 0.0
    %10337 = vmatprep.subr.mxu0 0.0
    %10338 = vmatpush1.xpose.msra.mxu0 0.0
    %10339 = vmatprep.subr.mxu0 0.0
    %10340 = vmatpush1.xpose.msra.mxu0 0.0
    %10341 = vmatprep.subr.mxu0 0.0
    %10342 = vmatpush1.xpose.msra.mxu0 0.0
    %10343 = vmatprep.subr.mxu0 0.0
    %10344 = vmatpush1.xpose.msra.mxu0 0.0
    %10345 = vmatprep.subr.mxu0 0.0
    %10346 = vmatpush1.xpose.msra.mxu0 0.0
    %10347 = vmatprep.subr.mxu0 0.0
    %10348 = vmatpush1.xpose.msra.mxu0 0.0
    %10349 = vmatprep.subr.mxu0 0.0
    %10350 = vmatpush1.xpose.msra.mxu0 0.0
    %10351 = vmatprep.subr.mxu0 0.0
    %10352 = vmatpush1.xpose.msra.mxu0 0.0
    %10353 = vmatprep.mubr.f32.mxu0 %v9924
    %10354 = vmatmul.mubr.f32.gmra.mrb[0].mxu0 %v9910
    %v10355 = vpop.f32.mrb[0].mxu0
    %v10356 = vadd.f32 %v10286, %v10355
    %v10357 = vpop.f32.mrb[0].mxu0
    %10358 = vdwg.mxu0
    %10359 = vmatprep.subr.mxu0 %v10082
    %10360 = vmatpush1.xpose.msra.mxu0 %v10078
    %10361 = vmatprep.subr.mxu0 %v10132
    %10362 = vmatpush1.xpose.msra.mxu0 %v10130
    %10363 = vmatprep.subr.mxu0 0.0
    %10364 = vmatpush1.xpose.msra.mxu0 0.0
    %10365 = vmatprep.subr.mxu0 0.0
    %10366 = vmatpush1.xpose.msra.mxu0 0.0
    %10367 = vmatprep.subr.mxu0 0.0
    %10368 = vmatpush1.xpose.msra.mxu0 0.0
    %10369 = vmatprep.subr.mxu0 0.0
    %10370 = vmatpush1.xpose.msra.mxu0 0.0
    %10371 = vmatprep.subr.mxu0 0.0
    %10372 = vmatpush1.xpose.msra.mxu0 0.0
    %10373 = vmatprep.subr.mxu0 0.0
    %10374 = vmatpush1.xpose.msra.mxu0 0.0
    %10375 = vmatprep.subr.mxu0 0.0
    %10376 = vmatpush1.xpose.msra.mxu0 0.0
    %10377 = vmatprep.subr.mxu0 0.0
    %10378 = vmatpush1.xpose.msra.mxu0 0.0
    %10379 = vmatprep.subr.mxu0 0.0
    %10380 = vmatpush1.xpose.msra.mxu0 0.0
    %10381 = vmatprep.subr.mxu0 0.0
    %10382 = vmatpush1.xpose.msra.mxu0 0.0
    %10383 = vmatprep.subr.mxu0 0.0
    %10384 = vmatpush1.xpose.msra.mxu0 0.0
    %10385 = vmatprep.subr.mxu0 0.0
    %10386 = vmatpush1.xpose.msra.mxu0 0.0
    %10387 = vmatprep.subr.mxu0 0.0
    %10388 = vmatpush1.xpose.msra.mxu0 0.0
    %10389 = vmatprep.subr.mxu0 0.0
    %10390 = vmatpush1.xpose.msra.mxu0 0.0
    %10391 = vmatprep.subr.mxu0 0.0
    %10392 = vmatpush1.xpose.msra.mxu0 0.0
    %10393 = vmatprep.subr.mxu0 0.0
    %10394 = vmatpush1.xpose.msra.mxu0 0.0
    %10395 = vmatprep.subr.mxu0 0.0
    %10396 = vmatpush1.xpose.msra.mxu0 0.0
    %10397 = vmatprep.subr.mxu0 0.0
    %10398 = vmatpush1.xpose.msra.mxu0 0.0
    %10399 = vmatprep.subr.mxu0 0.0
    %10400 = vmatpush1.xpose.msra.mxu0 0.0
    %10401 = vmatprep.subr.mxu0 0.0
    %10402 = vmatpush1.xpose.msra.mxu0 0.0
    %10403 = vmatprep.subr.mxu0 0.0
    %10404 = vmatpush1.xpose.msra.mxu0 0.0
    %10405 = vmatprep.subr.mxu0 0.0
    %10406 = vmatpush1.xpose.msra.mxu0 0.0
    %10407 = vmatprep.subr.mxu0 0.0
    %10408 = vmatpush1.xpose.msra.mxu0 0.0
    %10409 = vmatprep.subr.mxu0 0.0
    %10410 = vmatpush1.xpose.msra.mxu0 0.0
    %10411 = vmatprep.subr.mxu0 0.0
    %10412 = vmatpush1.xpose.msra.mxu0 0.0
    %10413 = vmatprep.subr.mxu0 0.0
    %10414 = vmatpush1.xpose.msra.mxu0 0.0
    %10415 = vmatprep.subr.mxu0 0.0
    %10416 = vmatpush1.xpose.msra.mxu0 0.0
    %10417 = vmatprep.subr.mxu0 0.0
    %10418 = vmatpush1.xpose.msra.mxu0 0.0
    %10419 = vmatprep.subr.mxu0 0.0
    %10420 = vmatpush1.xpose.msra.mxu0 0.0
    %10421 = vmatprep.subr.mxu0 0.0
    %10422 = vmatpush1.xpose.msra.mxu0 0.0
    %10423 = vmatprep.mubr.f32.mxu0 %v9928
    %10424 = vmatmul.mubr.f32.gmra.mrb[0].mxu0 %v9926
    %v10425 = vpop.f32.mrb[0].mxu0
    %v10426 = vadd.f32 %v10356, %v10425
    %v10427 = vpop.f32.mrb[0].mxu0
    %10428 = vdwg.mxu0
    %v10429 = vadd.f32 %v9828, %v10426
    %vm10430 = vcmask 74752
    %10431 = vst.msk [vmem:[#allocation3] sm:$0x3] %vm10430, %v10429
    // Predicated region
    $region22: #{shallow_cnn_forward.1} parent=1 // pred_check
      _
    $region23: #{shallow_cnn_forward.1} parent=1 // pred_check_branch
      %10433 = sbr.rel (0) target = $region25
    $region24: #{shallow_cnn_forward.1} parent=1 // pred_region
      %s10435 = ssub.s32 32, 32
      %10436 = vsyncadd [#allocation4], %s10435
      %s10438 = sshll.u32 [#allocation3], 4
      %s10439 = int_to_ptr.vmem [resolvable:$true] %s10438
      %10441 = dma.vmem_to_hbm [thread:$0]  %s10439, 32, %s5, [#allocation4]
    $region25: #{shallow_cnn_forward.1} parent=1 // pred_fallthru
      _
    // Predicated region
    $region26: #{shallow_cnn_forward.1} parent=1 // pred_check
      _
    $region27: #{shallow_cnn_forward.1} parent=1 // pred_check_branch
      %10443 = sbr.rel (0) target = $region29
    $region28: #{shallow_cnn_forward.1} parent=1 // pred_region
      %10444 = dma.done [#allocation4], 32
    $region29: #{shallow_cnn_forward.1} parent=1 // pred_fallthru
      _
    %10445 = vsyncpa [#allocation4], 1

</llo_original>
